<compile_context>
chip_gen: v7x
topology: tpu7x:2x2x1
jax: 0.10.0
libtpu: 0.0.40
codegen_flags: <defaults>
</compile_context>

<pallas_src>
import jax
import jax.numpy as jnp
from jax.experimental import pallas as pl
from jax.experimental.pallas import tpu as pltpu

# ----------------------------- config ---------------------------------------
B = 2      # batch
TX = 8     # source length
TY = 8     # target length
E = 32     # emb_size
H = 32     # hidden_size (== emb_size, required by tied embeddings)
L = 16     # latent_size
V = 64     # vocab size (src == tgt here)
PAD = 0

F32 = jnp.float32


def _vmem():
    return pl.BlockSpec(memory_space=pltpu.MemorySpace.VMEM)


# ------------------------------ fused kernel ---------------------------------
def aevnmt_fused_kernel(
    # activations / latent
    x_emb_ref, y_emb_ref, x_mask_ref, z_ref,
    # init layers
    enc_init_wt_ref, enc_init_b_ref,
    dec_init_wt_ref, dec_init_b_ref,
    lm_init_wt_ref, lm_init_b_ref,
    # encoder: bidirectional GRU (weights pre-transposed)
    enc_f_wih_ref, enc_f_whh_ref, enc_f_bih_ref, enc_f_bhh_ref,
    enc_b_wih_ref, enc_b_whh_ref, enc_b_bih_ref, enc_b_bhh_ref,
    # decoder: Bahdanau attention + GRU cell + pre_output (split weights)
    att_wk_ref, att_wq_ref, att_v_ref,
    dec_wih_e_ref, dec_wih_c_ref, dec_wih_z_ref,
    dec_whh_ref, dec_bih_ref, dec_bhh_ref,
    dec_wpre_e_ref, dec_wpre_h_ref, dec_wpre_c_ref, dec_bpre_ref,
    # language model: GRU over [emb_x, z] (split weights)
    lm_wih_e_ref, lm_wih_z_ref, lm_whh_ref, lm_bih_ref, lm_bhh_ref,
    # tied output projections (pre-transposed at init) + z-vocab heads
    emb_tgt_t_ref, emb_src_t_ref,
    z_src_wt_ref, z_src_b_ref, z_tgt_wt_ref, z_tgt_b_ref,
    # outputs
    tm_logits_ref, lm_logits_ref, z_src_ref, z_tgt_ref,
    # VMEM scratch
    enc_fwd_sc, enc_bwd_sc, pre_sc, lmh_sc):

    def mm(a, b):
        return jnp.dot(a, b, preferred_element_type=jnp.float32)

    x_emb = x_emb_ref[...]     # [B, Tx, E]
    y_emb = y_emb_ref[...]     # [B, Ty, E]
    x_mask = x_mask_ref[...]   # [B, Tx] float (1 = valid)
    z = z_ref[...]             # [B, L]
    Bc, Tx, Ec = x_emb.shape
    Ty = y_emb.shape[1]
    Hc = enc_init_wt_ref.shape[1]

    def gru_cell(gi, h, whh, bhh_full):
        # PyTorch nn.GRU cell; gi already contains x @ W_ih^T + b_ih.
        gh = mm(h, whh) + bhh_full
        i_r, i_z, i_n = gi[:, :Hc], gi[:, Hc:2 * Hc], gi[:, 2 * Hc:]
        h_r, h_z, h_n = gh[:, :Hc], gh[:, Hc:2 * Hc], gh[:, 2 * Hc:]
        r = jax.nn.sigmoid(i_r + h_r)
        u = jax.nn.sigmoid(i_z + h_z)
        n = jnp.tanh(i_n + r * h_n)
        return (1.0 - u) * n + u * h

    # ---- hidden = tanh(init_layer(z)); tile_rnn_hidden -> same init both dirs
    h_enc0 = jnp.tanh(mm(z, enc_init_wt_ref[...]) + enc_init_b_ref[...])
    h_dec = jnp.tanh(mm(z, dec_init_wt_ref[...]) + dec_init_b_ref[...])
    h_lm = jnp.tanh(mm(z, lm_init_wt_ref[...]) + lm_init_b_ref[...])

    # =================== encoder: 1-layer bidirectional GRU ===================
    # Batched input-to-hidden projections for all timesteps (one MXU matmul per
    # direction); only the recurrent h @ W_hh matmul stays inside the loop.
    x_flat = x_emb.reshape(Bc * Tx, Ec)
    gi_f_all = (mm(x_flat, enc_f_wih_ref[...]) + enc_f_bih_ref[...]
                ).reshape(Bc, Tx, 3 * Hc)
    gi_b_all = (mm(x_flat, enc_b_wih_ref[...]) + enc_b_bih_ref[...]
                ).reshape(Bc, Tx, 3 * Hc)
    whh_f = enc_f_whh_ref[...]
    whh_b = enc_b_whh_ref[...]
    bhh_f = jnp.broadcast_to(enc_f_bhh_ref[...], (Bc, 3 * Hc))
    bhh_b = jnp.broadcast_to(enc_b_bhh_ref[...], (Bc, 3 * Hc))

    h_f = h_enc0
    for t in range(Tx):                    # forward direction
        h_f = gru_cell(gi_f_all[:, t, :], h_f, whh_f, bhh_f)
        enc_fwd_sc[:, t, :] = h_f
    h_b = h_enc0
    for t in range(Tx - 1, -1, -1):        # backward direction
        h_b = gru_cell(gi_b_all[:, t, :], h_b, whh_b, bhh_b)
        enc_bwd_sc[:, t, :] = h_b
    # single lane-dense concat instead of per-step partial stores
    enc_out = jnp.concatenate([enc_fwd_sc[...], enc_bwd_sc[...]], axis=-1)
    # TODO(synk): pack_padded_sequence(x_len) handling is approximated by
    # attention masking downstream; the backward GRU still runs over PAD
    # positions of the shorter sequence.

    # ============ decoder: Bahdanau attention + GRU + pre_output =============
    # decoder.initialize(): projected attention keys  [B, Tx, H]
    proj_keys = mm(enc_out.reshape(Bc * Tx, 2 * Hc),
                   att_wk_ref[...]).reshape(Bc, Tx, Hc)
    att_v = att_v_ref[...]                 # [1, 1, H]  (loop-invariant)
    wq = att_wq_ref[...]
    mask_valid = x_mask > 0.0              # computed once

    y_flat = y_emb.reshape(Bc * Ty, Ec)
    # split GRU input projections: emb_y term batched, z term loop-invariant
    gi_e_all = mm(y_flat, dec_wih_e_ref[...]).reshape(Bc, Ty, 3 * Hc)
    gi_const = mm(z, dec_wih_z_ref[...]) + dec_bih_ref[...]       # [B, 3H]
    wih_c = dec_wih_c_ref[...]
    whh_d = dec_whh_ref[...]
    bhh_d = jnp.broadcast_to(dec_bhh_ref[...], (Bc, 3 * Hc))
    # split pre_output projections: emb_y term batched (includes bias)
    pre_e_all = (mm(y_flat, dec_wpre_e_ref[...]) + dec_bpre_ref[...]
                 ).reshape(Bc, Ty, Hc)
    wpre_h = dec_wpre_h_ref[...]
    wpre_c = dec_wpre_c_ref[...]

    h = h_dec
    for t in range(Ty):
        # Bahdanau attention
        q = mm(h, wq)                                            # [B, H]
        energy = jnp.tanh(proj_keys + q[:, None, :])             # [B, Tx, H]
        scores = jnp.sum(energy * att_v, axis=-1)                # [B, Tx]
        scores = jnp.where(mask_valid, scores, -1e9)
        alpha = jax.nn.softmax(scores, axis=-1)
        context = jnp.sum(alpha[:, :, None] * enc_out, axis=1)   # [B, 2H]
        # GRU step on [emb_y, context, z] via split (concat-free) projections
        gi = gi_e_all[:, t, :] + gi_const + mm(context, wih_c)
        h = gru_cell(gi, h, whh_d, bhh_d)
        # pre_output = tanh(Linear([emb_y, h, context])), split the same way
        pre_sc[:, t, :] = jnp.tanh(
            pre_e_all[:, t, :] + mm(h, wpre_h) + mm(context, wpre_c))
    # tied-embedding output projection (generate_tm), one batched matmul
    tm_logits_ref[...] = mm(pre_sc[...].reshape(Bc * Ty, Hc),
                            emb_tgt_t_ref[...]).reshape(Bc, Ty, -1)

    # =================== language model: GRU over [emb_x, z] ==================
    gi_lm_all = mm(x_flat, lm_wih_e_ref[...]).reshape(Bc, Tx, 3 * Hc)
    gi_lm_const = mm(z, lm_wih_z_ref[...]) + lm_bih_ref[...]      # [B, 3H]
    whh_l = lm_whh_ref[...]
    bhh_l = jnp.broadcast_to(lm_bhh_ref[...], (Bc, 3 * Hc))
    h = h_lm
    for t in range(Tx):
        h = gru_cell(gi_lm_all[:, t, :] + gi_lm_const, h, whh_l, bhh_l)
        lmh_sc[:, t, :] = h
    # TODO(synk): LM pre_output layer is unspecified in aevnmt.py; the hidden
    # state is used directly as pre_output (H == E so tied embeddings work).
    lm_logits_ref[...] = mm(lmh_sc[...].reshape(Bc * Tx, Hc),
                            emb_src_t_ref[...]).reshape(Bc, Tx, -1)

    # =========================== z_vocab_loss heads ===========================
    z_src_ref[...] = mm(z, z_src_wt_ref[...]) + z_src_b_ref[...]
    z_tgt_ref[...] = mm(z, z_tgt_wt_ref[...]) + z_tgt_b_ref[...]


# --------------------------- forward (AEVNMT.forward) ------------------------
@jax.jit
def aevnmt_forward(p, x, x_len, x_mask, y, z):
    del x_len  # see TODO in kernel (masking handled via x_mask)

    # src_embed / tgt_embed (dropout == identity at eval)
    x_emb = jnp.take(p['emb_src'], x, axis=0).astype(F32)    # [B, Tx, E]
    y_emb = jnp.take(p['emb_tgt'], y, axis=0).astype(F32)    # [B, Ty, E]

    operands = (
        x_emb, y_emb, x_mask, z,
        p['enc_init_wt'], p['enc_init_b'],
        p['dec_init_wt'], p['dec_init_b'],
        p['lm_init_wt'], p['lm_init_b'],
        p['enc_f_wih_t'], p['enc_f_whh_t'], p['enc_f_bih'], p['enc_f_bhh'],
        p['enc_b_wih_t'], p['enc_b_whh_t'], p['enc_b_bih'], p['enc_b_bhh'],
        p['att_wk_t'], p['att_wq_t'], p['att_v'],
        p['dec_wih_e_t'], p['dec_wih_c_t'], p['dec_wih_z_t'],
        p['dec_whh_t'], p['dec_bih'], p['dec_bhh'],
        p['dec_wpre_e_t'], p['dec_wpre_h_t'], p['dec_wpre_c_t'], p['dec_bpre'],
        p['lm_wih_e_t'], p['lm_wih_z_t'], p['lm_whh_t'], p['lm_bih'], p['lm_bhh'],
        p['emb_tgt_t'], p['emb_src_t'],
        p['z_src_wt'], p['z_src_b'], p['z_tgt_wt'], p['z_tgt_b'],
    )

    return pl.pallas_call(
        aevnmt_fused_kernel,
        out_shape=(jax.ShapeDtypeStruct((B, TY, V), F32),   # tm_logits
                   jax.ShapeDtypeStruct((B, TX, V), F32),   # lm_logits
                   jax.ShapeDtypeStruct((B, V), F32),       # z_src_logits
                   jax.ShapeDtypeStruct((B, V), F32)),      # z_tgt_logits
        in_specs=[_vmem()] * len(operands),
        out_specs=(_vmem(), _vmem(), _vmem(), _vmem()),
        scratch_shapes=[
            pltpu.VMEM((B, TX, H), F32),   # encoder forward states
            pltpu.VMEM((B, TX, H), F32),   # encoder backward states
            pltpu.VMEM((B, TY, H), F32),   # decoder pre_output states
            pltpu.VMEM((B, TX, H), F32),   # LM hidden states
        ],
    )(*operands)


# --------------------------- parameter init ----------------------------------
def init_params(key):
    keys = iter(jax.random.split(key, 64))

    def u(shape, scale=0.1):
        return jax.random.uniform(next(keys), shape, F32, -scale, scale)

    p = {}
    p['emb_src'] = u((V, E)).at[PAD].set(0.0)
    p['emb_tgt'] = u((V, E)).at[PAD].set(0.0)
    # tied-embedding output projections, pre-transposed once here (not in jit)
    p['emb_src_t'] = p['emb_src'].T
    p['emb_tgt_t'] = p['emb_tgt'].T

    for name in ('enc_init', 'dec_init', 'lm_init'):
        p[f'{name}_wt'] = u((L, H))        # Linear(L, H), stored transposed
        p[f'{name}_b'] = u((1, H))

    # encoder: bidirectional GRU (weights stored transposed for in-kernel dot)
    for d in ('f', 'b'):
        p[f'enc_{d}_wih_t'] = u((E, 3 * H))
        p[f'enc_{d}_whh_t'] = u((H, 3 * H))
        p[f'enc_{d}_bih'] = u((1, 3 * H))
        p[f'enc_{d}_bhh'] = u((1, 3 * H))

    # decoder: Bahdanau attention + GRU cell + pre_output layer.
    # GRU input weights split by input component (emb_y | context | z)
    p['att_wk_t'] = u((2 * H, H))
    p['att_wq_t'] = u((H, H))
    p['att_v'] = u((1, 1, H))
    p['dec_wih_e_t'] = u((E, 3 * H))
    p['dec_wih_c_t'] = u((2 * H, 3 * H))
    p['dec_wih_z_t'] = u((L, 3 * H))
    p['dec_whh_t'] = u((H, 3 * H))
    p['dec_bih'] = u((1, 3 * H))
    p['dec_bhh'] = u((1, 3 * H))
    # pre_output weights split by input component (emb_y | h | context)
    p['dec_wpre_e_t'] = u((E, H))
    p['dec_wpre_h_t'] = u((H, H))
    p['dec_wpre_c_t'] = u((2 * H, H))
    p['dec_bpre'] = u((1, H))

    # language model: GRU over [emb_x, z]; input weights split (emb_x | z)
    p['lm_wih_e_t'] = u((E, 3 * H))
    p['lm_wih_z_t'] = u((L, 3 * H))
    p['lm_whh_t'] = u((H, 3 * H))
    p['lm_bih'] = u((1, 3 * H))
    p['lm_bhh'] = u((1, 3 * H))

    # z_vocab_loss heads
    p['z_src_wt'] = u((L, V))
    p['z_src_b'] = u((1, V))
    p['z_tgt_wt'] = u((L, V))
    p['z_tgt_b'] = u((1, V))
    return p


# ------------------------------- main -----------------------------------------
if __name__ == "__main__":
    key = jax.random.PRNGKey(0)
    k_p, k_x, k_y, k_z = jax.random.split(key, 4)

    params = init_params(k_p)

    x = jax.random.randint(k_x, (B, TX), 1, V, dtype=jnp.int32)
    y = jax.random.randint(k_y, (B, TY), 1, V, dtype=jnp.int32)
    # pad the tail of the second source sentence
    x = x.at[1, TX - 2:].set(PAD)
    x_len = jnp.array([TX, TX - 2], dtype=jnp.int32)
    x_mask = (x != PAD).astype(F32)                     # [B, Tx]
    z = jax.random.normal(k_z, (B, L), dtype=F32)

    tm_logits, lm_logits, z_src_logits, z_tgt_logits = jax.block_until_ready(
        aevnmt_forward(params, x, x_len, x_mask, y, z))

    assert tm_logits.shape == (B, TY, V)
    assert lm_logits.shape == (B, TX, V)
    assert z_src_logits.shape == (B, V)
    assert z_tgt_logits.shape == (B, V)
    assert bool(jnp.all(jnp.isfinite(tm_logits)))
    assert bool(jnp.all(jnp.isfinite(lm_logits)))
    assert bool(jnp.all(jnp.isfinite(z_src_logits)))
    assert bool(jnp.all(jnp.isfinite(z_tgt_logits)))

    print("KERNEL_OK")
</pallas_src>

<mosaic_0001>
module attributes {stable_mosaic.version = 11 : i64} {
  func.func @aevnmt_fused_kernel(%arg0: memref<2x8x32xf32, #tpu.memory_space<vmem>>, %arg1: memref<2x8x32xf32, #tpu.memory_space<vmem>>, %arg2: memref<2x8xf32, #tpu.memory_space<vmem>>, %arg3: memref<2x16xf32, #tpu.memory_space<vmem>>, %arg4: memref<16x32xf32, #tpu.memory_space<vmem>>, %arg5: memref<1x32xf32, #tpu.memory_space<vmem>>, %arg6: memref<16x32xf32, #tpu.memory_space<vmem>>, %arg7: memref<1x32xf32, #tpu.memory_space<vmem>>, %arg8: memref<16x32xf32, #tpu.memory_space<vmem>>, %arg9: memref<1x32xf32, #tpu.memory_space<vmem>>, %arg10: memref<32x96xf32, #tpu.memory_space<vmem>>, %arg11: memref<32x96xf32, #tpu.memory_space<vmem>>, %arg12: memref<1x96xf32, #tpu.memory_space<vmem>>, %arg13: memref<1x96xf32, #tpu.memory_space<vmem>>, %arg14: memref<32x96xf32, #tpu.memory_space<vmem>>, %arg15: memref<32x96xf32, #tpu.memory_space<vmem>>, %arg16: memref<1x96xf32, #tpu.memory_space<vmem>>, %arg17: memref<1x96xf32, #tpu.memory_space<vmem>>, %arg18: memref<64x32xf32, #tpu.memory_space<vmem>>, %arg19: memref<32x32xf32, #tpu.memory_space<vmem>>, %arg20: memref<1x1x32xf32, #tpu.memory_space<vmem>>, %arg21: memref<32x96xf32, #tpu.memory_space<vmem>>, %arg22: memref<64x96xf32, #tpu.memory_space<vmem>>, %arg23: memref<16x96xf32, #tpu.memory_space<vmem>>, %arg24: memref<32x96xf32, #tpu.memory_space<vmem>>, %arg25: memref<1x96xf32, #tpu.memory_space<vmem>>, %arg26: memref<1x96xf32, #tpu.memory_space<vmem>>, %arg27: memref<32x32xf32, #tpu.memory_space<vmem>>, %arg28: memref<32x32xf32, #tpu.memory_space<vmem>>, %arg29: memref<64x32xf32, #tpu.memory_space<vmem>>, %arg30: memref<1x32xf32, #tpu.memory_space<vmem>>, %arg31: memref<32x96xf32, #tpu.memory_space<vmem>>, %arg32: memref<16x96xf32, #tpu.memory_space<vmem>>, %arg33: memref<32x96xf32, #tpu.memory_space<vmem>>, %arg34: memref<1x96xf32, #tpu.memory_space<vmem>>, %arg35: memref<1x96xf32, #tpu.memory_space<vmem>>, %arg36: memref<32x64xf32, #tpu.memory_space<vmem>>, %arg37: memref<32x64xf32, #tpu.memory_space<vmem>>, %arg38: memref<16x64xf32, #tpu.memory_space<vmem>>, %arg39: memref<1x64xf32, #tpu.memory_space<vmem>>, %arg40: memref<16x64xf32, #tpu.memory_space<vmem>>, %arg41: memref<1x64xf32, #tpu.memory_space<vmem>>, %arg42: memref<2x8x64xf32, #tpu.memory_space<vmem>>, %arg43: memref<2x8x64xf32, #tpu.memory_space<vmem>>, %arg44: memref<2x64xf32, #tpu.memory_space<vmem>>, %arg45: memref<2x64xf32, #tpu.memory_space<vmem>>, %arg46: memref<2x8x32xf32, #tpu.memory_space<vmem>>, %arg47: memref<2x8x32xf32, #tpu.memory_space<vmem>>, %arg48: memref<2x8x32xf32, #tpu.memory_space<vmem>>, %arg49: memref<2x8x32xf32, #tpu.memory_space<vmem>>) attributes {dimension_semantics = [], scalar_prefetch = 0 : i64, scratch_operands = 4 : i64, tpu.core_type = #tpu.core_type<tc>} {
    %c0 = arith.constant 0 : index
    %c0_0 = arith.constant 0 : index
    %c0_1 = arith.constant 0 : index
    %0 = vector.load %arg0[%c0, %c0_0, %c0_1] : memref<2x8x32xf32, #tpu.memory_space<vmem>>, vector<2x8x32xf32>
    %c0_2 = arith.constant 0 : index
    %c0_3 = arith.constant 0 : index
    %c0_4 = arith.constant 0 : index
    %1 = vector.load %arg1[%c0_2, %c0_3, %c0_4] : memref<2x8x32xf32, #tpu.memory_space<vmem>>, vector<2x8x32xf32>
    %c0_5 = arith.constant 0 : index
    %c0_6 = arith.constant 0 : index
    %2 = vector.load %arg2[%c0_5, %c0_6] : memref<2x8xf32, #tpu.memory_space<vmem>>, vector<2x8xf32>
    %c0_7 = arith.constant 0 : index
    %c0_8 = arith.constant 0 : index
    %3 = vector.load %arg3[%c0_7, %c0_8] : memref<2x16xf32, #tpu.memory_space<vmem>>, vector<2x16xf32>
    %c0_9 = arith.constant 0 : index
    %c0_10 = arith.constant 0 : index
    %4 = vector.load %arg4[%c0_9, %c0_10] : memref<16x32xf32, #tpu.memory_space<vmem>>, vector<16x32xf32>
    %cst = arith.constant dense<0.000000e+00> : vector<2x32xf32>
    %5 = tpu.matmul %3, %4, %cst {dimension_numbers = #tpu.dot_dimension_numbers<[1], [0], [0], [1], [0, 0, 1, 1], [], []>} : vector<2x16xf32>, vector<16x32xf32>, vector<2x32xf32> -> vector<2x32xf32>
    %c0_11 = arith.constant 0 : index
    %c0_12 = arith.constant 0 : index
    %6 = vector.load %arg5[%c0_11, %c0_12] : memref<1x32xf32, #tpu.memory_space<vmem>>, vector<1x32xf32>
    %7 = vector.broadcast %6 : vector<1x32xf32> to vector<2x32xf32>
    %8 = arith.addf %5, %7 : vector<2x32xf32>
    %9 = math.tanh %8 : vector<2x32xf32>
    %c0_13 = arith.constant 0 : index
    %c0_14 = arith.constant 0 : index
    %10 = vector.load %arg6[%c0_13, %c0_14] : memref<16x32xf32, #tpu.memory_space<vmem>>, vector<16x32xf32>
    %cst_15 = arith.constant dense<0.000000e+00> : vector<2x32xf32>
    %11 = tpu.matmul %3, %10, %cst_15 {dimension_numbers = #tpu.dot_dimension_numbers<[1], [0], [0], [1], [0, 0, 1, 1], [], []>} : vector<2x16xf32>, vector<16x32xf32>, vector<2x32xf32> -> vector<2x32xf32>
    %c0_16 = arith.constant 0 : index
    %c0_17 = arith.constant 0 : index
    %12 = vector.load %arg7[%c0_16, %c0_17] : memref<1x32xf32, #tpu.memory_space<vmem>>, vector<1x32xf32>
    %13 = vector.broadcast %12 : vector<1x32xf32> to vector<2x32xf32>
    %14 = arith.addf %11, %13 : vector<2x32xf32>
    %15 = math.tanh %14 : vector<2x32xf32>
    %c0_18 = arith.constant 0 : index
    %c0_19 = arith.constant 0 : index
    %16 = vector.load %arg8[%c0_18, %c0_19] : memref<16x32xf32, #tpu.memory_space<vmem>>, vector<16x32xf32>
    %cst_20 = arith.constant dense<0.000000e+00> : vector<2x32xf32>
    %17 = tpu.matmul %3, %16, %cst_20 {dimension_numbers = #tpu.dot_dimension_numbers<[1], [0], [0], [1], [0, 0, 1, 1], [], []>} : vector<2x16xf32>, vector<16x32xf32>, vector<2x32xf32> -> vector<2x32xf32>
    %c0_21 = arith.constant 0 : index
    %c0_22 = arith.constant 0 : index
    %18 = vector.load %arg9[%c0_21, %c0_22] : memref<1x32xf32, #tpu.memory_space<vmem>>, vector<1x32xf32>
    %19 = vector.broadcast %18 : vector<1x32xf32> to vector<2x32xf32>
    %20 = arith.addf %17, %19 : vector<2x32xf32>
    %21 = math.tanh %20 : vector<2x32xf32>
    %22 = vector.shape_cast %0 : vector<2x8x32xf32> to vector<16x32xf32>
    %c0_23 = arith.constant 0 : index
    %c0_24 = arith.constant 0 : index
    %23 = vector.load %arg10[%c0_23, %c0_24] : memref<32x96xf32, #tpu.memory_space<vmem>>, vector<32x96xf32>
    %cst_25 = arith.constant dense<0.000000e+00> : vector<16x96xf32>
    %24 = tpu.matmul %22, %23, %cst_25 {dimension_numbers = #tpu.dot_dimension_numbers<[1], [0], [0], [1], [0, 0, 1, 1], [], []>} : vector<16x32xf32>, vector<32x96xf32>, vector<16x96xf32> -> vector<16x96xf32>
    %c0_26 = arith.constant 0 : index
    %c0_27 = arith.constant 0 : index
    %25 = vector.load %arg12[%c0_26, %c0_27] : memref<1x96xf32, #tpu.memory_space<vmem>>, vector<1x96xf32>
    %26 = vector.broadcast %25 : vector<1x96xf32> to vector<16x96xf32>
    %27 = arith.addf %24, %26 : vector<16x96xf32>
    %28 = vector.shape_cast %27 : vector<16x96xf32> to vector<2x8x96xf32>
    %c0_28 = arith.constant 0 : index
    %c0_29 = arith.constant 0 : index
    %29 = vector.load %arg14[%c0_28, %c0_29] : memref<32x96xf32, #tpu.memory_space<vmem>>, vector<32x96xf32>
    %cst_30 = arith.constant dense<0.000000e+00> : vector<16x96xf32>
    %30 = tpu.matmul %22, %29, %cst_30 {dimension_numbers = #tpu.dot_dimension_numbers<[1], [0], [0], [1], [0, 0, 1, 1], [], []>} : vector<16x32xf32>, vector<32x96xf32>, vector<16x96xf32> -> vector<16x96xf32>
    %c0_31 = arith.constant 0 : index
    %c0_32 = arith.constant 0 : index
    %31 = vector.load %arg16[%c0_31, %c0_32] : memref<1x96xf32, #tpu.memory_space<vmem>>, vector<1x96xf32>
    %32 = vector.broadcast %31 : vector<1x96xf32> to vector<16x96xf32>
    %33 = arith.addf %30, %32 : vector<16x96xf32>
    %34 = vector.shape_cast %33 : vector<16x96xf32> to vector<2x8x96xf32>
    %c0_33 = arith.constant 0 : index
    %c0_34 = arith.constant 0 : index
    %35 = vector.load %arg11[%c0_33, %c0_34] : memref<32x96xf32, #tpu.memory_space<vmem>>, vector<32x96xf32>
    %c0_35 = arith.constant 0 : index
    %c0_36 = arith.constant 0 : index
    %36 = vector.load %arg15[%c0_35, %c0_36] : memref<32x96xf32, #tpu.memory_space<vmem>>, vector<32x96xf32>
    %c0_37 = arith.constant 0 : index
    %c0_38 = arith.constant 0 : index
    %37 = vector.load %arg13[%c0_37, %c0_38] : memref<1x96xf32, #tpu.memory_space<vmem>>, vector<1x96xf32>
    %38 = vector.shape_cast %37 : vector<1x96xf32> to vector<1x96xf32>
    %39 = vector.broadcast %38 : vector<1x96xf32> to vector<2x96xf32>
    %c0_39 = arith.constant 0 : index
    %c0_40 = arith.constant 0 : index
    %40 = vector.load %arg17[%c0_39, %c0_40] : memref<1x96xf32, #tpu.memory_space<vmem>>, vector<1x96xf32>
    %41 = vector.shape_cast %40 : vector<1x96xf32> to vector<1x96xf32>
    %42 = vector.broadcast %41 : vector<1x96xf32> to vector<2x96xf32>
    %43 = vector.extract_strided_slice %28 {offsets = [0, 0, 0], sizes = [2, 1, 96], strides = [1, 1, 1]} : vector<2x8x96xf32> to vector<2x1x96xf32>
    %44 = vector.shape_cast %43 : vector<2x1x96xf32> to vector<2x96xf32>
    %cst_41 = arith.constant dense<0.000000e+00> : vector<2x96xf32>
    %45 = tpu.matmul %9, %35, %cst_41 {dimension_numbers = #tpu.dot_dimension_numbers<[1], [0], [0], [1], [0, 0, 1, 1], [], []>} : vector<2x32xf32>, vector<32x96xf32>, vector<2x96xf32> -> vector<2x96xf32>
    %46 = arith.addf %45, %39 : vector<2x96xf32>
    %47 = vector.extract_strided_slice %44 {offsets = [0, 0], sizes = [2, 32], strides = [1, 1]} : vector<2x96xf32> to vector<2x32xf32>
    %48 = vector.extract_strided_slice %44 {offsets = [0, 32], sizes = [2, 32], strides = [1, 1]} : vector<2x96xf32> to vector<2x32xf32>
    %49 = vector.extract_strided_slice %44 {offsets = [0, 64], sizes = [2, 32], strides = [1, 1]} : vector<2x96xf32> to vector<2x32xf32>
    %50 = vector.extract_strided_slice %46 {offsets = [0, 0], sizes = [2, 32], strides = [1, 1]} : vector<2x96xf32> to vector<2x32xf32>
    %51 = vector.extract_strided_slice %46 {offsets = [0, 32], sizes = [2, 32], strides = [1, 1]} : vector<2x96xf32> to vector<2x32xf32>
    %52 = vector.extract_strided_slice %46 {offsets = [0, 64], sizes = [2, 32], strides = [1, 1]} : vector<2x96xf32> to vector<2x32xf32>
    %53 = arith.addf %47, %50 : vector<2x32xf32>
    %54 = arith.negf %53 : vector<2x32xf32>
    %55 = math.exp %54 : vector<2x32xf32>
    %cst_42 = arith.constant 1.000000e+00 : f32
    %56 = vector.broadcast %cst_42 : f32 to vector<2x32xf32>
    %57 = arith.addf %56, %55 : vector<2x32xf32>
    %58 = arith.divf %56, %57 : vector<2x32xf32>
    %59 = arith.addf %48, %51 : vector<2x32xf32>
    %60 = arith.negf %59 : vector<2x32xf32>
    %61 = math.exp %60 : vector<2x32xf32>
    %cst_43 = arith.constant 1.000000e+00 : f32
    %62 = vector.broadcast %cst_43 : f32 to vector<2x32xf32>
    %63 = arith.addf %62, %61 : vector<2x32xf32>
    %64 = arith.divf %62, %63 : vector<2x32xf32>
    %65 = arith.mulf %58, %52 : vector<2x32xf32>
    %66 = arith.addf %49, %65 : vector<2x32xf32>
    %67 = math.tanh %66 : vector<2x32xf32>
    %cst_44 = arith.constant 1.000000e+00 : f32
    %68 = vector.broadcast %cst_44 : f32 to vector<2x32xf32>
    %69 = arith.subf %68, %64 : vector<2x32xf32>
    %70 = arith.mulf %69, %67 : vector<2x32xf32>
    %71 = arith.mulf %64, %9 : vector<2x32xf32>
    %72 = arith.addf %70, %71 : vector<2x32xf32>
    %c0_45 = arith.constant 0 : index
    %c0_46 = arith.constant 0 : index
    %c0_47 = arith.constant 0 : index
    %73 = vector.load %arg46[%c0_45, %c0_46, %c0_47] : memref<2x8x32xf32, #tpu.memory_space<vmem>>, vector<2x1x32xf32>
    %74 = vector.shape_cast %73 : vector<2x1x32xf32> to vector<2x32xf32>
    %75 = vector.shape_cast %72 : vector<2x32xf32> to vector<2x1x32xf32>
    tpu.vector_store %arg46[%c0_45, %c0_46, %c0_47], %75 {strides = array<i32>} : memref<2x8x32xf32, #tpu.memory_space<vmem>>, vector<2x1x32xf32>,
    %76 = vector.extract_strided_slice %28 {offsets = [0, 1, 0], sizes = [2, 1, 96], strides = [1, 1, 1]} : vector<2x8x96xf32> to vector<2x1x96xf32>
    %77 = vector.shape_cast %76 : vector<2x1x96xf32> to vector<2x96xf32>
    %cst_48 = arith.constant dense<0.000000e+00> : vector<2x96xf32>
    %78 = tpu.matmul %72, %35, %cst_48 {dimension_numbers = #tpu.dot_dimension_numbers<[1], [0], [0], [1], [0, 0, 1, 1], [], []>} : vector<2x32xf32>, vector<32x96xf32>, vector<2x96xf32> -> vector<2x96xf32>
    %79 = arith.addf %78, %39 : vector<2x96xf32>
    %80 = vector.extract_strided_slice %77 {offsets = [0, 0], sizes = [2, 32], strides = [1, 1]} : vector<2x96xf32> to vector<2x32xf32>
    %81 = vector.extract_strided_slice %77 {offsets = [0, 32], sizes = [2, 32], strides = [1, 1]} : vector<2x96xf32> to vector<2x32xf32>
    %82 = vector.extract_strided_slice %77 {offsets = [0, 64], sizes = [2, 32], strides = [1, 1]} : vector<2x96xf32> to vector<2x32xf32>
    %83 = vector.extract_strided_slice %79 {offsets = [0, 0], sizes = [2, 32], strides = [1, 1]} : vector<2x96xf32> to vector<2x32xf32>
    %84 = vector.extract_strided_slice %79 {offsets = [0, 32], sizes = [2, 32], strides = [1, 1]} : vector<2x96xf32> to vector<2x32xf32>
    %85 = vector.extract_strided_slice %79 {offsets = [0, 64], sizes = [2, 32], strides = [1, 1]} : vector<2x96xf32> to vector<2x32xf32>
    %86 = arith.addf %80, %83 : vector<2x32xf32>
    %87 = arith.negf %86 : vector<2x32xf32>
    %88 = math.exp %87 : vector<2x32xf32>
    %cst_49 = arith.constant 1.000000e+00 : f32
    %89 = vector.broadcast %cst_49 : f32 to vector<2x32xf32>
    %90 = arith.addf %89, %88 : vector<2x32xf32>
    %91 = arith.divf %89, %90 : vector<2x32xf32>
    %92 = arith.addf %81, %84 : vector<2x32xf32>
    %93 = arith.negf %92 : vector<2x32xf32>
    %94 = math.exp %93 : vector<2x32xf32>
    %cst_50 = arith.constant 1.000000e+00 : f32
    %95 = vector.broadcast %cst_50 : f32 to vector<2x32xf32>
    %96 = arith.addf %95, %94 : vector<2x32xf32>
    %97 = arith.divf %95, %96 : vector<2x32xf32>
    %98 = arith.mulf %91, %85 : vector<2x32xf32>
    %99 = arith.addf %82, %98 : vector<2x32xf32>
    %100 = math.tanh %99 : vector<2x32xf32>
    %cst_51 = arith.constant 1.000000e+00 : f32
    %101 = vector.broadcast %cst_51 : f32 to vector<2x32xf32>
    %102 = arith.subf %101, %97 : vector<2x32xf32>
    %103 = arith.mulf %102, %100 : vector<2x32xf32>
    %104 = arith.mulf %97, %72 : vector<2x32xf32>
    %105 = arith.addf %103, %104 : vector<2x32xf32>
    %c0_52 = arith.constant 0 : index
    %c1 = arith.constant 1 : index
    %c0_53 = arith.constant 0 : index
    %106 = vector.load %arg46[%c0_52, %c1, %c0_53] : memref<2x8x32xf32, #tpu.memory_space<vmem>>, vector<2x1x32xf32>
    %107 = vector.shape_cast %106 : vector<2x1x32xf32> to vector<2x32xf32>
    %108 = vector.shape_cast %105 : vector<2x32xf32> to vector<2x1x32xf32>
    tpu.vector_store %arg46[%c0_52, %c1, %c0_53], %108 {strides = array<i32>} : memref<2x8x32xf32, #tpu.memory_space<vmem>>, vector<2x1x32xf32>,
    %109 = vector.extract_strided_slice %28 {offsets = [0, 2, 0], sizes = [2, 1, 96], strides = [1, 1, 1]} : vector<2x8x96xf32> to vector<2x1x96xf32>
    %110 = vector.shape_cast %109 : vector<2x1x96xf32> to vector<2x96xf32>
    %cst_54 = arith.constant dense<0.000000e+00> : vector<2x96xf32>
    %111 = tpu.matmul %105, %35, %cst_54 {dimension_numbers = #tpu.dot_dimension_numbers<[1], [0], [0], [1], [0, 0, 1, 1], [], []>} : vector<2x32xf32>, vector<32x96xf32>, vector<2x96xf32> -> vector<2x96xf32>
    %112 = arith.addf %111, %39 : vector<2x96xf32>
    %113 = vector.extract_strided_slice %110 {offsets = [0, 0], sizes = [2, 32], strides = [1, 1]} : vector<2x96xf32> to vector<2x32xf32>
    %114 = vector.extract_strided_slice %110 {offsets = [0, 32], sizes = [2, 32], strides = [1, 1]} : vector<2x96xf32> to vector<2x32xf32>
    %115 = vector.extract_strided_slice %110 {offsets = [0, 64], sizes = [2, 32], strides = [1, 1]} : vector<2x96xf32> to vector<2x32xf32>
    %116 = vector.extract_strided_slice %112 {offsets = [0, 0], sizes = [2, 32], strides = [1, 1]} : vector<2x96xf32> to vector<2x32xf32>
    %117 = vector.extract_strided_slice %112 {offsets = [0, 32], sizes = [2, 32], strides = [1, 1]} : vector<2x96xf32> to vector<2x32xf32>
    %118 = vector.extract_strided_slice %112 {offsets = [0, 64], sizes = [2, 32], strides = [1, 1]} : vector<2x96xf32> to vector<2x32xf32>
    %119 = arith.addf %113, %116 : vector<2x32xf32>
    %120 = arith.negf %119 : vector<2x32xf32>
    %121 = math.exp %120 : vector<2x32xf32>
    %cst_55 = arith.constant 1.000000e+00 : f32
    %122 = vector.broadcast %cst_55 : f32 to vector<2x32xf32>
    %123 = arith.addf %122, %121 : vector<2x32xf32>
    %124 = arith.divf %122, %123 : vector<2x32xf32>
    %125 = arith.addf %114, %117 : vector<2x32xf32>
    %126 = arith.negf %125 : vector<2x32xf32>
    %127 = math.exp %126 : vector<2x32xf32>
    %cst_56 = arith.constant 1.000000e+00 : f32
    %128 = vector.broadcast %cst_56 : f32 to vector<2x32xf32>
    %129 = arith.addf %128, %127 : vector<2x32xf32>
    %130 = arith.divf %128, %129 : vector<2x32xf32>
    %131 = arith.mulf %124, %118 : vector<2x32xf32>
    %132 = arith.addf %115, %131 : vector<2x32xf32>
    %133 = math.tanh %132 : vector<2x32xf32>
    %cst_57 = arith.constant 1.000000e+00 : f32
    %134 = vector.broadcast %cst_57 : f32 to vector<2x32xf32>
    %135 = arith.subf %134, %130 : vector<2x32xf32>
    %136 = arith.mulf %135, %133 : vector<2x32xf32>
    %137 = arith.mulf %130, %105 : vector<2x32xf32>
    %138 = arith.addf %136, %137 : vector<2x32xf32>
    %c0_58 = arith.constant 0 : index
    %c2 = arith.constant 2 : index
    %c0_59 = arith.constant 0 : index
    %139 = vector.load %arg46[%c0_58, %c2, %c0_59] : memref<2x8x32xf32, #tpu.memory_space<vmem>>, vector<2x1x32xf32>
    %140 = vector.shape_cast %139 : vector<2x1x32xf32> to vector<2x32xf32>
    %141 = vector.shape_cast %138 : vector<2x32xf32> to vector<2x1x32xf32>
    tpu.vector_store %arg46[%c0_58, %c2, %c0_59], %141 {strides = array<i32>} : memref<2x8x32xf32, #tpu.memory_space<vmem>>, vector<2x1x32xf32>,
    %142 = vector.extract_strided_slice %28 {offsets = [0, 3, 0], sizes = [2, 1, 96], strides = [1, 1, 1]} : vector<2x8x96xf32> to vector<2x1x96xf32>
    %143 = vector.shape_cast %142 : vector<2x1x96xf32> to vector<2x96xf32>
    %cst_60 = arith.constant dense<0.000000e+00> : vector<2x96xf32>
    %144 = tpu.matmul %138, %35, %cst_60 {dimension_numbers = #tpu.dot_dimension_numbers<[1], [0], [0], [1], [0, 0, 1, 1], [], []>} : vector<2x32xf32>, vector<32x96xf32>, vector<2x96xf32> -> vector<2x96xf32>
    %145 = arith.addf %144, %39 : vector<2x96xf32>
    %146 = vector.extract_strided_slice %143 {offsets = [0, 0], sizes = [2, 32], strides = [1, 1]} : vector<2x96xf32> to vector<2x32xf32>
    %147 = vector.extract_strided_slice %143 {offsets = [0, 32], sizes = [2, 32], strides = [1, 1]} : vector<2x96xf32> to vector<2x32xf32>
    %148 = vector.extract_strided_slice %143 {offsets = [0, 64], sizes = [2, 32], strides = [1, 1]} : vector<2x96xf32> to vector<2x32xf32>
    %149 = vector.extract_strided_slice %145 {offsets = [0, 0], sizes = [2, 32], strides = [1, 1]} : vector<2x96xf32> to vector<2x32xf32>
    %150 = vector.extract_strided_slice %145 {offsets = [0, 32], sizes = [2, 32], strides = [1, 1]} : vector<2x96xf32> to vector<2x32xf32>
    %151 = vector.extract_strided_slice %145 {offsets = [0, 64], sizes = [2, 32], strides = [1, 1]} : vector<2x96xf32> to vector<2x32xf32>
    %152 = arith.addf %146, %149 : vector<2x32xf32>
    %153 = arith.negf %152 : vector<2x32xf32>
    %154 = math.exp %153 : vector<2x32xf32>
    %cst_61 = arith.constant 1.000000e+00 : f32
    %155 = vector.broadcast %cst_61 : f32 to vector<2x32xf32>
    %156 = arith.addf %155, %154 : vector<2x32xf32>
    %157 = arith.divf %155, %156 : vector<2x32xf32>
    %158 = arith.addf %147, %150 : vector<2x32xf32>
    %159 = arith.negf %158 : vector<2x32xf32>
    %160 = math.exp %159 : vector<2x32xf32>
    %cst_62 = arith.constant 1.000000e+00 : f32
    %161 = vector.broadcast %cst_62 : f32 to vector<2x32xf32>
    %162 = arith.addf %161, %160 : vector<2x32xf32>
    %163 = arith.divf %161, %162 : vector<2x32xf32>
    %164 = arith.mulf %157, %151 : vector<2x32xf32>
    %165 = arith.addf %148, %164 : vector<2x32xf32>
    %166 = math.tanh %165 : vector<2x32xf32>
    %cst_63 = arith.constant 1.000000e+00 : f32
    %167 = vector.broadcast %cst_63 : f32 to vector<2x32xf32>
    %168 = arith.subf %167, %163 : vector<2x32xf32>
    %169 = arith.mulf %168, %166 : vector<2x32xf32>
    %170 = arith.mulf %163, %138 : vector<2x32xf32>
    %171 = arith.addf %169, %170 : vector<2x32xf32>
    %c0_64 = arith.constant 0 : index
    %c3 = arith.constant 3 : index
    %c0_65 = arith.constant 0 : index
    %172 = vector.load %arg46[%c0_64, %c3, %c0_65] : memref<2x8x32xf32, #tpu.memory_space<vmem>>, vector<2x1x32xf32>
    %173 = vector.shape_cast %172 : vector<2x1x32xf32> to vector<2x32xf32>
    %174 = vector.shape_cast %171 : vector<2x32xf32> to vector<2x1x32xf32>
    tpu.vector_store %arg46[%c0_64, %c3, %c0_65], %174 {strides = array<i32>} : memref<2x8x32xf32, #tpu.memory_space<vmem>>, vector<2x1x32xf32>,
    %175 = vector.extract_strided_slice %28 {offsets = [0, 4, 0], sizes = [2, 1, 96], strides = [1, 1, 1]} : vector<2x8x96xf32> to vector<2x1x96xf32>
    %176 = vector.shape_cast %175 : vector<2x1x96xf32> to vector<2x96xf32>
    %cst_66 = arith.constant dense<0.000000e+00> : vector<2x96xf32>
    %177 = tpu.matmul %171, %35, %cst_66 {dimension_numbers = #tpu.dot_dimension_numbers<[1], [0], [0], [1], [0, 0, 1, 1], [], []>} : vector<2x32xf32>, vector<32x96xf32>, vector<2x96xf32> -> vector<2x96xf32>
    %178 = arith.addf %177, %39 : vector<2x96xf32>
    %179 = vector.extract_strided_slice %176 {offsets = [0, 0], sizes = [2, 32], strides = [1, 1]} : vector<2x96xf32> to vector<2x32xf32>
    %180 = vector.extract_strided_slice %176 {offsets = [0, 32], sizes = [2, 32], strides = [1, 1]} : vector<2x96xf32> to vector<2x32xf32>
    %181 = vector.extract_strided_slice %176 {offsets = [0, 64], sizes = [2, 32], strides = [1, 1]} : vector<2x96xf32> to vector<2x32xf32>
    %182 = vector.extract_strided_slice %178 {offsets = [0, 0], sizes = [2, 32], strides = [1, 1]} : vector<2x96xf32> to vector<2x32xf32>
    %183 = vector.extract_strided_slice %178 {offsets = [0, 32], sizes = [2, 32], strides = [1, 1]} : vector<2x96xf32> to vector<2x32xf32>
    %184 = vector.extract_strided_slice %178 {offsets = [0, 64], sizes = [2, 32], strides = [1, 1]} : vector<2x96xf32> to vector<2x32xf32>
    %185 = arith.addf %179, %182 : vector<2x32xf32>
    %186 = arith.negf %185 : vector<2x32xf32>
    %187 = math.exp %186 : vector<2x32xf32>
    %cst_67 = arith.constant 1.000000e+00 : f32
    %188 = vector.broadcast %cst_67 : f32 to vector<2x32xf32>
    %189 = arith.addf %188, %187 : vector<2x32xf32>
    %190 = arith.divf %188, %189 : vector<2x32xf32>
    %191 = arith.addf %180, %183 : vector<2x32xf32>
    %192 = arith.negf %191 : vector<2x32xf32>
    %193 = math.exp %192 : vector<2x32xf32>
    %cst_68 = arith.constant 1.000000e+00 : f32
    %194 = vector.broadcast %cst_68 : f32 to vector<2x32xf32>
    %195 = arith.addf %194, %193 : vector<2x32xf32>
    %196 = arith.divf %194, %195 : vector<2x32xf32>
    %197 = arith.mulf %190, %184 : vector<2x32xf32>
    %198 = arith.addf %181, %197 : vector<2x32xf32>
    %199 = math.tanh %198 : vector<2x32xf32>
    %cst_69 = arith.constant 1.000000e+00 : f32
    %200 = vector.broadcast %cst_69 : f32 to vector<2x32xf32>
    %201 = arith.subf %200, %196 : vector<2x32xf32>
    %202 = arith.mulf %201, %199 : vector<2x32xf32>
    %203 = arith.mulf %196, %171 : vector<2x32xf32>
    %204 = arith.addf %202, %203 : vector<2x32xf32>
    %c0_70 = arith.constant 0 : index
    %c4 = arith.constant 4 : index
    %c0_71 = arith.constant 0 : index
    %205 = vector.load %arg46[%c0_70, %c4, %c0_71] : memref<2x8x32xf32, #tpu.memory_space<vmem>>, vector<2x1x32xf32>
    %206 = vector.shape_cast %205 : vector<2x1x32xf32> to vector<2x32xf32>
    %207 = vector.shape_cast %204 : vector<2x32xf32> to vector<2x1x32xf32>
    tpu.vector_store %arg46[%c0_70, %c4, %c0_71], %207 {strides = array<i32>} : memref<2x8x32xf32, #tpu.memory_space<vmem>>, vector<2x1x32xf32>,
    %208 = vector.extract_strided_slice %28 {offsets = [0, 5, 0], sizes = [2, 1, 96], strides = [1, 1, 1]} : vector<2x8x96xf32> to vector<2x1x96xf32>
    %209 = vector.shape_cast %208 : vector<2x1x96xf32> to vector<2x96xf32>
    %cst_72 = arith.constant dense<0.000000e+00> : vector<2x96xf32>
    %210 = tpu.matmul %204, %35, %cst_72 {dimension_numbers = #tpu.dot_dimension_numbers<[1], [0], [0], [1], [0, 0, 1, 1], [], []>} : vector<2x32xf32>, vector<32x96xf32>, vector<2x96xf32> -> vector<2x96xf32>
    %211 = arith.addf %210, %39 : vector<2x96xf32>
    %212 = vector.extract_strided_slice %209 {offsets = [0, 0], sizes = [2, 32], strides = [1, 1]} : vector<2x96xf32> to vector<2x32xf32>
    %213 = vector.extract_strided_slice %209 {offsets = [0, 32], sizes = [2, 32], strides = [1, 1]} : vector<2x96xf32> to vector<2x32xf32>
    %214 = vector.extract_strided_slice %209 {offsets = [0, 64], sizes = [2, 32], strides = [1, 1]} : vector<2x96xf32> to vector<2x32xf32>
    %215 = vector.extract_strided_slice %211 {offsets = [0, 0], sizes = [2, 32], strides = [1, 1]} : vector<2x96xf32> to vector<2x32xf32>
    %216 = vector.extract_strided_slice %211 {offsets = [0, 32], sizes = [2, 32], strides = [1, 1]} : vector<2x96xf32> to vector<2x32xf32>
    %217 = vector.extract_strided_slice %211 {offsets = [0, 64], sizes = [2, 32], strides = [1, 1]} : vector<2x96xf32> to vector<2x32xf32>
    %218 = arith.addf %212, %215 : vector<2x32xf32>
    %219 = arith.negf %218 : vector<2x32xf32>
    %220 = math.exp %219 : vector<2x32xf32>
    %cst_73 = arith.constant 1.000000e+00 : f32
    %221 = vector.broadcast %cst_73 : f32 to vector<2x32xf32>
    %222 = arith.addf %221, %220 : vector<2x32xf32>
    %223 = arith.divf %221, %222 : vector<2x32xf32>
    %224 = arith.addf %213, %216 : vector<2x32xf32>
    %225 = arith.negf %224 : vector<2x32xf32>
    %226 = math.exp %225 : vector<2x32xf32>
    %cst_74 = arith.constant 1.000000e+00 : f32
    %227 = vector.broadcast %cst_74 : f32 to vector<2x32xf32>
    %228 = arith.addf %227, %226 : vector<2x32xf32>
    %229 = arith.divf %227, %228 : vector<2x32xf32>
    %230 = arith.mulf %223, %217 : vector<2x32xf32>
    %231 = arith.addf %214, %230 : vector<2x32xf32>
    %232 = math.tanh %231 : vector<2x32xf32>
    %cst_75 = arith.constant 1.000000e+00 : f32
    %233 = vector.broadcast %cst_75 : f32 to vector<2x32xf32>
    %234 = arith.subf %233, %229 : vector<2x32xf32>
    %235 = arith.mulf %234, %232 : vector<2x32xf32>
    %236 = arith.mulf %229, %204 : vector<2x32xf32>
    %237 = arith.addf %235, %236 : vector<2x32xf32>
    %c0_76 = arith.constant 0 : index
    %c5 = arith.constant 5 : index
    %c0_77 = arith.constant 0 : index
    %238 = vector.load %arg46[%c0_76, %c5, %c0_77] : memref<2x8x32xf32, #tpu.memory_space<vmem>>, vector<2x1x32xf32>
    %239 = vector.shape_cast %238 : vector<2x1x32xf32> to vector<2x32xf32>
    %240 = vector.shape_cast %237 : vector<2x32xf32> to vector<2x1x32xf32>
    tpu.vector_store %arg46[%c0_76, %c5, %c0_77], %240 {strides = array<i32>} : memref<2x8x32xf32, #tpu.memory_space<vmem>>, vector<2x1x32xf32>,
    %241 = vector.extract_strided_slice %28 {offsets = [0, 6, 0], sizes = [2, 1, 96], strides = [1, 1, 1]} : vector<2x8x96xf32> to vector<2x1x96xf32>
    %242 = vector.shape_cast %241 : vector<2x1x96xf32> to vector<2x96xf32>
    %cst_78 = arith.constant dense<0.000000e+00> : vector<2x96xf32>
    %243 = tpu.matmul %237, %35, %cst_78 {dimension_numbers = #tpu.dot_dimension_numbers<[1], [0], [0], [1], [0, 0, 1, 1], [], []>} : vector<2x32xf32>, vector<32x96xf32>, vector<2x96xf32> -> vector<2x96xf32>
    %244 = arith.addf %243, %39 : vector<2x96xf32>
    %245 = vector.extract_strided_slice %242 {offsets = [0, 0], sizes = [2, 32], strides = [1, 1]} : vector<2x96xf32> to vector<2x32xf32>
    %246 = vector.extract_strided_slice %242 {offsets = [0, 32], sizes = [2, 32], strides = [1, 1]} : vector<2x96xf32> to vector<2x32xf32>
    %247 = vector.extract_strided_slice %242 {offsets = [0, 64], sizes = [2, 32], strides = [1, 1]} : vector<2x96xf32> to vector<2x32xf32>
    %248 = vector.extract_strided_slice %244 {offsets = [0, 0], sizes = [2, 32], strides = [1, 1]} : vector<2x96xf32> to vector<2x32xf32>
    %249 = vector.extract_strided_slice %244 {offsets = [0, 32], sizes = [2, 32], strides = [1, 1]} : vector<2x96xf32> to vector<2x32xf32>
    %250 = vector.extract_strided_slice %244 {offsets = [0, 64], sizes = [2, 32], strides = [1, 1]} : vector<2x96xf32> to vector<2x32xf32>
    %251 = arith.addf %245, %248 : vector<2x32xf32>
    %252 = arith.negf %251 : vector<2x32xf32>
    %253 = math.exp %252 : vector<2x32xf32>
    %cst_79 = arith.constant 1.000000e+00 : f32
    %254 = vector.broadcast %cst_79 : f32 to vector<2x32xf32>
    %255 = arith.addf %254, %253 : vector<2x32xf32>
    %256 = arith.divf %254, %255 : vector<2x32xf32>
    %257 = arith.addf %246, %249 : vector<2x32xf32>
    %258 = arith.negf %257 : vector<2x32xf32>
    %259 = math.exp %258 : vector<2x32xf32>
    %cst_80 = arith.constant 1.000000e+00 : f32
    %260 = vector.broadcast %cst_80 : f32 to vector<2x32xf32>
    %261 = arith.addf %260, %259 : vector<2x32xf32>
    %262 = arith.divf %260, %261 : vector<2x32xf32>
    %263 = arith.mulf %256, %250 : vector<2x32xf32>
    %264 = arith.addf %247, %263 : vector<2x32xf32>
    %265 = math.tanh %264 : vector<2x32xf32>
    %cst_81 = arith.constant 1.000000e+00 : f32
    %266 = vector.broadcast %cst_81 : f32 to vector<2x32xf32>
    %267 = arith.subf %266, %262 : vector<2x32xf32>
    %268 = arith.mulf %267, %265 : vector<2x32xf32>
    %269 = arith.mulf %262, %237 : vector<2x32xf32>
    %270 = arith.addf %268, %269 : vector<2x32xf32>
    %c0_82 = arith.constant 0 : index
    %c6 = arith.constant 6 : index
    %c0_83 = arith.constant 0 : index
    %271 = vector.load %arg46[%c0_82, %c6, %c0_83] : memref<2x8x32xf32, #tpu.memory_space<vmem>>, vector<2x1x32xf32>
    %272 = vector.shape_cast %271 : vector<2x1x32xf32> to vector<2x32xf32>
    %273 = vector.shape_cast %270 : vector<2x32xf32> to vector<2x1x32xf32>
    tpu.vector_store %arg46[%c0_82, %c6, %c0_83], %273 {strides = array<i32>} : memref<2x8x32xf32, #tpu.memory_space<vmem>>, vector<2x1x32xf32>,
    %274 = vector.extract_strided_slice %28 {offsets = [0, 7, 0], sizes = [2, 1, 96], strides = [1, 1, 1]} : vector<2x8x96xf32> to vector<2x1x96xf32>
    %275 = vector.shape_cast %274 : vector<2x1x96xf32> to vector<2x96xf32>
    %cst_84 = arith.constant dense<0.000000e+00> : vector<2x96xf32>
    %276 = tpu.matmul %270, %35, %cst_84 {dimension_numbers = #tpu.dot_dimension_numbers<[1], [0], [0], [1], [0, 0, 1, 1], [], []>} : vector<2x32xf32>, vector<32x96xf32>, vector<2x96xf32> -> vector<2x96xf32>
    %277 = arith.addf %276, %39 : vector<2x96xf32>
    %278 = vector.extract_strided_slice %275 {offsets = [0, 0], sizes = [2, 32], strides = [1, 1]} : vector<2x96xf32> to vector<2x32xf32>
    %279 = vector.extract_strided_slice %275 {offsets = [0, 32], sizes = [2, 32], strides = [1, 1]} : vector<2x96xf32> to vector<2x32xf32>
    %280 = vector.extract_strided_slice %275 {offsets = [0, 64], sizes = [2, 32], strides = [1, 1]} : vector<2x96xf32> to vector<2x32xf32>
    %281 = vector.extract_strided_slice %277 {offsets = [0, 0], sizes = [2, 32], strides = [1, 1]} : vector<2x96xf32> to vector<2x32xf32>
    %282 = vector.extract_strided_slice %277 {offsets = [0, 32], sizes = [2, 32], strides = [1, 1]} : vector<2x96xf32> to vector<2x32xf32>
    %283 = vector.extract_strided_slice %277 {offsets = [0, 64], sizes = [2, 32], strides = [1, 1]} : vector<2x96xf32> to vector<2x32xf32>
    %284 = arith.addf %278, %281 : vector<2x32xf32>
    %285 = arith.negf %284 : vector<2x32xf32>
    %286 = math.exp %285 : vector<2x32xf32>
    %cst_85 = arith.constant 1.000000e+00 : f32
    %287 = vector.broadcast %cst_85 : f32 to vector<2x32xf32>
    %288 = arith.addf %287, %286 : vector<2x32xf32>
    %289 = arith.divf %287, %288 : vector<2x32xf32>
    %290 = arith.addf %279, %282 : vector<2x32xf32>
    %291 = arith.negf %290 : vector<2x32xf32>
    %292 = math.exp %291 : vector<2x32xf32>
    %cst_86 = arith.constant 1.000000e+00 : f32
    %293 = vector.broadcast %cst_86 : f32 to vector<2x32xf32>
    %294 = arith.addf %293, %292 : vector<2x32xf32>
    %295 = arith.divf %293, %294 : vector<2x32xf32>
    %296 = arith.mulf %289, %283 : vector<2x32xf32>
    %297 = arith.addf %280, %296 : vector<2x32xf32>
    %298 = math.tanh %297 : vector<2x32xf32>
    %cst_87 = arith.constant 1.000000e+00 : f32
    %299 = vector.broadcast %cst_87 : f32 to vector<2x32xf32>
    %300 = arith.subf %299, %295 : vector<2x32xf32>
    %301 = arith.mulf %300, %298 : vector<2x32xf32>
    %302 = arith.mulf %295, %270 : vector<2x32xf32>
    %303 = arith.addf %301, %302 : vector<2x32xf32>
    %c0_88 = arith.constant 0 : index
    %c7 = arith.constant 7 : index
    %c0_89 = arith.constant 0 : index
    %304 = vector.load %arg46[%c0_88, %c7, %c0_89] : memref<2x8x32xf32, #tpu.memory_space<vmem>>, vector<2x1x32xf32>
    %305 = vector.shape_cast %304 : vector<2x1x32xf32> to vector<2x32xf32>
    %306 = vector.shape_cast %303 : vector<2x32xf32> to vector<2x1x32xf32>
    tpu.vector_store %arg46[%c0_88, %c7, %c0_89], %306 {strides = array<i32>} : memref<2x8x32xf32, #tpu.memory_space<vmem>>, vector<2x1x32xf32>,
    %307 = vector.extract_strided_slice %34 {offsets = [0, 7, 0], sizes = [2, 1, 96], strides = [1, 1, 1]} : vector<2x8x96xf32> to vector<2x1x96xf32>
    %308 = vector.shape_cast %307 : vector<2x1x96xf32> to vector<2x96xf32>
    %cst_90 = arith.constant dense<0.000000e+00> : vector<2x96xf32>
    %309 = tpu.matmul %9, %36, %cst_90 {dimension_numbers = #tpu.dot_dimension_numbers<[1], [0], [0], [1], [0, 0, 1, 1], [], []>} : vector<2x32xf32>, vector<32x96xf32>, vector<2x96xf32> -> vector<2x96xf32>
    %310 = arith.addf %309, %42 : vector<2x96xf32>
    %311 = vector.extract_strided_slice %308 {offsets = [0, 0], sizes = [2, 32], strides = [1, 1]} : vector<2x96xf32> to vector<2x32xf32>
    %312 = vector.extract_strided_slice %308 {offsets = [0, 32], sizes = [2, 32], strides = [1, 1]} : vector<2x96xf32> to vector<2x32xf32>
    %313 = vector.extract_strided_slice %308 {offsets = [0, 64], sizes = [2, 32], strides = [1, 1]} : vector<2x96xf32> to vector<2x32xf32>
    %314 = vector.extract_strided_slice %310 {offsets = [0, 0], sizes = [2, 32], strides = [1, 1]} : vector<2x96xf32> to vector<2x32xf32>
    %315 = vector.extract_strided_slice %310 {offsets = [0, 32], sizes = [2, 32], strides = [1, 1]} : vector<2x96xf32> to vector<2x32xf32>
    %316 = vector.extract_strided_slice %310 {offsets = [0, 64], sizes = [2, 32], strides = [1, 1]} : vector<2x96xf32> to vector<2x32xf32>
    %317 = arith.addf %311, %314 : vector<2x32xf32>
    %318 = arith.negf %317 : vector<2x32xf32>
    %319 = math.exp %318 : vector<2x32xf32>
    %cst_91 = arith.constant 1.000000e+00 : f32
    %320 = vector.broadcast %cst_91 : f32 to vector<2x32xf32>
    %321 = arith.addf %320, %319 : vector<2x32xf32>
    %322 = arith.divf %320, %321 : vector<2x32xf32>
    %323 = arith.addf %312, %315 : vector<2x32xf32>
    %324 = arith.negf %323 : vector<2x32xf32>
    %325 = math.exp %324 : vector<2x32xf32>
    %cst_92 = arith.constant 1.000000e+00 : f32
    %326 = vector.broadcast %cst_92 : f32 to vector<2x32xf32>
    %327 = arith.addf %326, %325 : vector<2x32xf32>
    %328 = arith.divf %326, %327 : vector<2x32xf32>
    %329 = arith.mulf %322, %316 : vector<2x32xf32>
    %330 = arith.addf %313, %329 : vector<2x32xf32>
    %331 = math.tanh %330 : vector<2x32xf32>
    %cst_93 = arith.constant 1.000000e+00 : f32
    %332 = vector.broadcast %cst_93 : f32 to vector<2x32xf32>
    %333 = arith.subf %332, %328 : vector<2x32xf32>
    %334 = arith.mulf %333, %331 : vector<2x32xf32>
    %335 = arith.mulf %328, %9 : vector<2x32xf32>
    %336 = arith.addf %334, %335 : vector<2x32xf32>
    %c0_94 = arith.constant 0 : index
    %c7_95 = arith.constant 7 : index
    %c0_96 = arith.constant 0 : index
    %337 = vector.load %arg47[%c0_94, %c7_95, %c0_96] : memref<2x8x32xf32, #tpu.memory_space<vmem>>, vector<2x1x32xf32>
    %338 = vector.shape_cast %337 : vector<2x1x32xf32> to vector<2x32xf32>
    %339 = vector.shape_cast %336 : vector<2x32xf32> to vector<2x1x32xf32>
    tpu.vector_store %arg47[%c0_94, %c7_95, %c0_96], %339 {strides = array<i32>} : memref<2x8x32xf32, #tpu.memory_space<vmem>>, vector<2x1x32xf32>,
    %340 = vector.extract_strided_slice %34 {offsets = [0, 6, 0], sizes = [2, 1, 96], strides = [1, 1, 1]} : vector<2x8x96xf32> to vector<2x1x96xf32>
    %341 = vector.shape_cast %340 : vector<2x1x96xf32> to vector<2x96xf32>
    %cst_97 = arith.constant dense<0.000000e+00> : vector<2x96xf32>
    %342 = tpu.matmul %336, %36, %cst_97 {dimension_numbers = #tpu.dot_dimension_numbers<[1], [0], [0], [1], [0, 0, 1, 1], [], []>} : vector<2x32xf32>, vector<32x96xf32>, vector<2x96xf32> -> vector<2x96xf32>
    %343 = arith.addf %342, %42 : vector<2x96xf32>
    %344 = vector.extract_strided_slice %341 {offsets = [0, 0], sizes = [2, 32], strides = [1, 1]} : vector<2x96xf32> to vector<2x32xf32>
    %345 = vector.extract_strided_slice %341 {offsets = [0, 32], sizes = [2, 32], strides = [1, 1]} : vector<2x96xf32> to vector<2x32xf32>
    %346 = vector.extract_strided_slice %341 {offsets = [0, 64], sizes = [2, 32], strides = [1, 1]} : vector<2x96xf32> to vector<2x32xf32>
    %347 = vector.extract_strided_slice %343 {offsets = [0, 0], sizes = [2, 32], strides = [1, 1]} : vector<2x96xf32> to vector<2x32xf32>
    %348 = vector.extract_strided_slice %343 {offsets = [0, 32], sizes = [2, 32], strides = [1, 1]} : vector<2x96xf32> to vector<2x32xf32>
    %349 = vector.extract_strided_slice %343 {offsets = [0, 64], sizes = [2, 32], strides = [1, 1]} : vector<2x96xf32> to vector<2x32xf32>
    %350 = arith.addf %344, %347 : vector<2x32xf32>
    %351 = arith.negf %350 : vector<2x32xf32>
    %352 = math.exp %351 : vector<2x32xf32>
    %cst_98 = arith.constant 1.000000e+00 : f32
    %353 = vector.broadcast %cst_98 : f32 to vector<2x32xf32>
    %354 = arith.addf %353, %352 : vector<2x32xf32>
    %355 = arith.divf %353, %354 : vector<2x32xf32>
    %356 = arith.addf %345, %348 : vector<2x32xf32>
    %357 = arith.negf %356 : vector<2x32xf32>
    %358 = math.exp %357 : vector<2x32xf32>
    %cst_99 = arith.constant 1.000000e+00 : f32
    %359 = vector.broadcast %cst_99 : f32 to vector<2x32xf32>
    %360 = arith.addf %359, %358 : vector<2x32xf32>
    %361 = arith.divf %359, %360 : vector<2x32xf32>
    %362 = arith.mulf %355, %349 : vector<2x32xf32>
    %363 = arith.addf %346, %362 : vector<2x32xf32>
    %364 = math.tanh %363 : vector<2x32xf32>
    %cst_100 = arith.constant 1.000000e+00 : f32
    %365 = vector.broadcast %cst_100 : f32 to vector<2x32xf32>
    %366 = arith.subf %365, %361 : vector<2x32xf32>
    %367 = arith.mulf %366, %364 : vector<2x32xf32>
    %368 = arith.mulf %361, %336 : vector<2x32xf32>
    %369 = arith.addf %367, %368 : vector<2x32xf32>
    %c0_101 = arith.constant 0 : index
    %c6_102 = arith.constant 6 : index
    %c0_103 = arith.constant 0 : index
    %370 = vector.load %arg47[%c0_101, %c6_102, %c0_103] : memref<2x8x32xf32, #tpu.memory_space<vmem>>, vector<2x1x32xf32>
    %371 = vector.shape_cast %370 : vector<2x1x32xf32> to vector<2x32xf32>
    %372 = vector.shape_cast %369 : vector<2x32xf32> to vector<2x1x32xf32>
    tpu.vector_store %arg47[%c0_101, %c6_102, %c0_103], %372 {strides = array<i32>} : memref<2x8x32xf32, #tpu.memory_space<vmem>>, vector<2x1x32xf32>,
    %373 = vector.extract_strided_slice %34 {offsets = [0, 5, 0], sizes = [2, 1, 96], strides = [1, 1, 1]} : vector<2x8x96xf32> to vector<2x1x96xf32>
    %374 = vector.shape_cast %373 : vector<2x1x96xf32> to vector<2x96xf32>
    %cst_104 = arith.constant dense<0.000000e+00> : vector<2x96xf32>
    %375 = tpu.matmul %369, %36, %cst_104 {dimension_numbers = #tpu.dot_dimension_numbers<[1], [0], [0], [1], [0, 0, 1, 1], [], []>} : vector<2x32xf32>, vector<32x96xf32>, vector<2x96xf32> -> vector<2x96xf32>
    %376 = arith.addf %375, %42 : vector<2x96xf32>
    %377 = vector.extract_strided_slice %374 {offsets = [0, 0], sizes = [2, 32], strides = [1, 1]} : vector<2x96xf32> to vector<2x32xf32>
    %378 = vector.extract_strided_slice %374 {offsets = [0, 32], sizes = [2, 32], strides = [1, 1]} : vector<2x96xf32> to vector<2x32xf32>
    %379 = vector.extract_strided_slice %374 {offsets = [0, 64], sizes = [2, 32], strides = [1, 1]} : vector<2x96xf32> to vector<2x32xf32>
    %380 = vector.extract_strided_slice %376 {offsets = [0, 0], sizes = [2, 32], strides = [1, 1]} : vector<2x96xf32> to vector<2x32xf32>
    %381 = vector.extract_strided_slice %376 {offsets = [0, 32], sizes = [2, 32], strides = [1, 1]} : vector<2x96xf32> to vector<2x32xf32>
    %382 = vector.extract_strided_slice %376 {offsets = [0, 64], sizes = [2, 32], strides = [1, 1]} : vector<2x96xf32> to vector<2x32xf32>
    %383 = arith.addf %377, %380 : vector<2x32xf32>
    %384 = arith.negf %383 : vector<2x32xf32>
    %385 = math.exp %384 : vector<2x32xf32>
    %cst_105 = arith.constant 1.000000e+00 : f32
    %386 = vector.broadcast %cst_105 : f32 to vector<2x32xf32>
    %387 = arith.addf %386, %385 : vector<2x32xf32>
    %388 = arith.divf %386, %387 : vector<2x32xf32>
    %389 = arith.addf %378, %381 : vector<2x32xf32>
    %390 = arith.negf %389 : vector<2x32xf32>
    %391 = math.exp %390 : vector<2x32xf32>
    %cst_106 = arith.constant 1.000000e+00 : f32
    %392 = vector.broadcast %cst_106 : f32 to vector<2x32xf32>
    %393 = arith.addf %392, %391 : vector<2x32xf32>
    %394 = arith.divf %392, %393 : vector<2x32xf32>
    %395 = arith.mulf %388, %382 : vector<2x32xf32>
    %396 = arith.addf %379, %395 : vector<2x32xf32>
    %397 = math.tanh %396 : vector<2x32xf32>
    %cst_107 = arith.constant 1.000000e+00 : f32
    %398 = vector.broadcast %cst_107 : f32 to vector<2x32xf32>
    %399 = arith.subf %398, %394 : vector<2x32xf32>
    %400 = arith.mulf %399, %397 : vector<2x32xf32>
    %401 = arith.mulf %394, %369 : vector<2x32xf32>
    %402 = arith.addf %400, %401 : vector<2x32xf32>
    %c0_108 = arith.constant 0 : index
    %c5_109 = arith.constant 5 : index
    %c0_110 = arith.constant 0 : index
    %403 = vector.load %arg47[%c0_108, %c5_109, %c0_110] : memref<2x8x32xf32, #tpu.memory_space<vmem>>, vector<2x1x32xf32>
    %404 = vector.shape_cast %403 : vector<2x1x32xf32> to vector<2x32xf32>
    %405 = vector.shape_cast %402 : vector<2x32xf32> to vector<2x1x32xf32>
    tpu.vector_store %arg47[%c0_108, %c5_109, %c0_110], %405 {strides = array<i32>} : memref<2x8x32xf32, #tpu.memory_space<vmem>>, vector<2x1x32xf32>,
    %406 = vector.extract_strided_slice %34 {offsets = [0, 4, 0], sizes = [2, 1, 96], strides = [1, 1, 1]} : vector<2x8x96xf32> to vector<2x1x96xf32>
    %407 = vector.shape_cast %406 : vector<2x1x96xf32> to vector<2x96xf32>
    %cst_111 = arith.constant dense<0.000000e+00> : vector<2x96xf32>
    %408 = tpu.matmul %402, %36, %cst_111 {dimension_numbers = #tpu.dot_dimension_numbers<[1], [0], [0], [1], [0, 0, 1, 1], [], []>} : vector<2x32xf32>, vector<32x96xf32>, vector<2x96xf32> -> vector<2x96xf32>
    %409 = arith.addf %408, %42 : vector<2x96xf32>
    %410 = vector.extract_strided_slice %407 {offsets = [0, 0], sizes = [2, 32], strides = [1, 1]} : vector<2x96xf32> to vector<2x32xf32>
    %411 = vector.extract_strided_slice %407 {offsets = [0, 32], sizes = [2, 32], strides = [1, 1]} : vector<2x96xf32> to vector<2x32xf32>
    %412 = vector.extract_strided_slice %407 {offsets = [0, 64], sizes = [2, 32], strides = [1, 1]} : vector<2x96xf32> to vector<2x32xf32>
    %413 = vector.extract_strided_slice %409 {offsets = [0, 0], sizes = [2, 32], strides = [1, 1]} : vector<2x96xf32> to vector<2x32xf32>
    %414 = vector.extract_strided_slice %409 {offsets = [0, 32], sizes = [2, 32], strides = [1, 1]} : vector<2x96xf32> to vector<2x32xf32>
    %415 = vector.extract_strided_slice %409 {offsets = [0, 64], sizes = [2, 32], strides = [1, 1]} : vector<2x96xf32> to vector<2x32xf32>
    %416 = arith.addf %410, %413 : vector<2x32xf32>
    %417 = arith.negf %416 : vector<2x32xf32>
    %418 = math.exp %417 : vector<2x32xf32>
    %cst_112 = arith.constant 1.000000e+00 : f32
    %419 = vector.broadcast %cst_112 : f32 to vector<2x32xf32>
    %420 = arith.addf %419, %418 : vector<2x32xf32>
    %421 = arith.divf %419, %420 : vector<2x32xf32>
    %422 = arith.addf %411, %414 : vector<2x32xf32>
    %423 = arith.negf %422 : vector<2x32xf32>
    %424 = math.exp %423 : vector<2x32xf32>
    %cst_113 = arith.constant 1.000000e+00 : f32
    %425 = vector.broadcast %cst_113 : f32 to vector<2x32xf32>
    %426 = arith.addf %425, %424 : vector<2x32xf32>
    %427 = arith.divf %425, %426 : vector<2x32xf32>
    %428 = arith.mulf %421, %415 : vector<2x32xf32>
    %429 = arith.addf %412, %428 : vector<2x32xf32>
    %430 = math.tanh %429 : vector<2x32xf32>
    %cst_114 = arith.constant 1.000000e+00 : f32
    %431 = vector.broadcast %cst_114 : f32 to vector<2x32xf32>
    %432 = arith.subf %431, %427 : vector<2x32xf32>
    %433 = arith.mulf %432, %430 : vector<2x32xf32>
    %434 = arith.mulf %427, %402 : vector<2x32xf32>
    %435 = arith.addf %433, %434 : vector<2x32xf32>
    %c0_115 = arith.constant 0 : index
    %c4_116 = arith.constant 4 : index
    %c0_117 = arith.constant 0 : index
    %436 = vector.load %arg47[%c0_115, %c4_116, %c0_117] : memref<2x8x32xf32, #tpu.memory_space<vmem>>, vector<2x1x32xf32>
    %437 = vector.shape_cast %436 : vector<2x1x32xf32> to vector<2x32xf32>
    %438 = vector.shape_cast %435 : vector<2x32xf32> to vector<2x1x32xf32>
    tpu.vector_store %arg47[%c0_115, %c4_116, %c0_117], %438 {strides = array<i32>} : memref<2x8x32xf32, #tpu.memory_space<vmem>>, vector<2x1x32xf32>,
    %439 = vector.extract_strided_slice %34 {offsets = [0, 3, 0], sizes = [2, 1, 96], strides = [1, 1, 1]} : vector<2x8x96xf32> to vector<2x1x96xf32>
    %440 = vector.shape_cast %439 : vector<2x1x96xf32> to vector<2x96xf32>
    %cst_118 = arith.constant dense<0.000000e+00> : vector<2x96xf32>
    %441 = tpu.matmul %435, %36, %cst_118 {dimension_numbers = #tpu.dot_dimension_numbers<[1], [0], [0], [1], [0, 0, 1, 1], [], []>} : vector<2x32xf32>, vector<32x96xf32>, vector<2x96xf32> -> vector<2x96xf32>
    %442 = arith.addf %441, %42 : vector<2x96xf32>
    %443 = vector.extract_strided_slice %440 {offsets = [0, 0], sizes = [2, 32], strides = [1, 1]} : vector<2x96xf32> to vector<2x32xf32>
    %444 = vector.extract_strided_slice %440 {offsets = [0, 32], sizes = [2, 32], strides = [1, 1]} : vector<2x96xf32> to vector<2x32xf32>
    %445 = vector.extract_strided_slice %440 {offsets = [0, 64], sizes = [2, 32], strides = [1, 1]} : vector<2x96xf32> to vector<2x32xf32>
    %446 = vector.extract_strided_slice %442 {offsets = [0, 0], sizes = [2, 32], strides = [1, 1]} : vector<2x96xf32> to vector<2x32xf32>
    %447 = vector.extract_strided_slice %442 {offsets = [0, 32], sizes = [2, 32], strides = [1, 1]} : vector<2x96xf32> to vector<2x32xf32>
    %448 = vector.extract_strided_slice %442 {offsets = [0, 64], sizes = [2, 32], strides = [1, 1]} : vector<2x96xf32> to vector<2x32xf32>
    %449 = arith.addf %443, %446 : vector<2x32xf32>
    %450 = arith.negf %449 : vector<2x32xf32>
    %451 = math.exp %450 : vector<2x32xf32>
    %cst_119 = arith.constant 1.000000e+00 : f32
    %452 = vector.broadcast %cst_119 : f32 to vector<2x32xf32>
    %453 = arith.addf %452, %451 : vector<2x32xf32>
    %454 = arith.divf %452, %453 : vector<2x32xf32>
    %455 = arith.addf %444, %447 : vector<2x32xf32>
    %456 = arith.negf %455 : vector<2x32xf32>
    %457 = math.exp %456 : vector<2x32xf32>
    %cst_120 = arith.constant 1.000000e+00 : f32
    %458 = vector.broadcast %cst_120 : f32 to vector<2x32xf32>
    %459 = arith.addf %458, %457 : vector<2x32xf32>
    %460 = arith.divf %458, %459 : vector<2x32xf32>
    %461 = arith.mulf %454, %448 : vector<2x32xf32>
    %462 = arith.addf %445, %461 : vector<2x32xf32>
    %463 = math.tanh %462 : vector<2x32xf32>
    %cst_121 = arith.constant 1.000000e+00 : f32
    %464 = vector.broadcast %cst_121 : f32 to vector<2x32xf32>
    %465 = arith.subf %464, %460 : vector<2x32xf32>
    %466 = arith.mulf %465, %463 : vector<2x32xf32>
    %467 = arith.mulf %460, %435 : vector<2x32xf32>
    %468 = arith.addf %466, %467 : vector<2x32xf32>
    %c0_122 = arith.constant 0 : index
    %c3_123 = arith.constant 3 : index
    %c0_124 = arith.constant 0 : index
    %469 = vector.load %arg47[%c0_122, %c3_123, %c0_124] : memref<2x8x32xf32, #tpu.memory_space<vmem>>, vector<2x1x32xf32>
    %470 = vector.shape_cast %469 : vector<2x1x32xf32> to vector<2x32xf32>
    %471 = vector.shape_cast %468 : vector<2x32xf32> to vector<2x1x32xf32>
    tpu.vector_store %arg47[%c0_122, %c3_123, %c0_124], %471 {strides = array<i32>} : memref<2x8x32xf32, #tpu.memory_space<vmem>>, vector<2x1x32xf32>,
    %472 = vector.extract_strided_slice %34 {offsets = [0, 2, 0], sizes = [2, 1, 96], strides = [1, 1, 1]} : vector<2x8x96xf32> to vector<2x1x96xf32>
    %473 = vector.shape_cast %472 : vector<2x1x96xf32> to vector<2x96xf32>
    %cst_125 = arith.constant dense<0.000000e+00> : vector<2x96xf32>
    %474 = tpu.matmul %468, %36, %cst_125 {dimension_numbers = #tpu.dot_dimension_numbers<[1], [0], [0], [1], [0, 0, 1, 1], [], []>} : vector<2x32xf32>, vector<32x96xf32>, vector<2x96xf32> -> vector<2x96xf32>
    %475 = arith.addf %474, %42 : vector<2x96xf32>
    %476 = vector.extract_strided_slice %473 {offsets = [0, 0], sizes = [2, 32], strides = [1, 1]} : vector<2x96xf32> to vector<2x32xf32>
    %477 = vector.extract_strided_slice %473 {offsets = [0, 32], sizes = [2, 32], strides = [1, 1]} : vector<2x96xf32> to vector<2x32xf32>
    %478 = vector.extract_strided_slice %473 {offsets = [0, 64], sizes = [2, 32], strides = [1, 1]} : vector<2x96xf32> to vector<2x32xf32>
    %479 = vector.extract_strided_slice %475 {offsets = [0, 0], sizes = [2, 32], strides = [1, 1]} : vector<2x96xf32> to vector<2x32xf32>
    %480 = vector.extract_strided_slice %475 {offsets = [0, 32], sizes = [2, 32], strides = [1, 1]} : vector<2x96xf32> to vector<2x32xf32>
    %481 = vector.extract_strided_slice %475 {offsets = [0, 64], sizes = [2, 32], strides = [1, 1]} : vector<2x96xf32> to vector<2x32xf32>
    %482 = arith.addf %476, %479 : vector<2x32xf32>
    %483 = arith.negf %482 : vector<2x32xf32>
    %484 = math.exp %483 : vector<2x32xf32>
    %cst_126 = arith.constant 1.000000e+00 : f32
    %485 = vector.broadcast %cst_126 : f32 to vector<2x32xf32>
    %486 = arith.addf %485, %484 : vector<2x32xf32>
    %487 = arith.divf %485, %486 : vector<2x32xf32>
    %488 = arith.addf %477, %480 : vector<2x32xf32>
    %489 = arith.negf %488 : vector<2x32xf32>
    %490 = math.exp %489 : vector<2x32xf32>
    %cst_127 = arith.constant 1.000000e+00 : f32
    %491 = vector.broadcast %cst_127 : f32 to vector<2x32xf32>
    %492 = arith.addf %491, %490 : vector<2x32xf32>
    %493 = arith.divf %491, %492 : vector<2x32xf32>
    %494 = arith.mulf %487, %481 : vector<2x32xf32>
    %495 = arith.addf %478, %494 : vector<2x32xf32>
    %496 = math.tanh %495 : vector<2x32xf32>
    %cst_128 = arith.constant 1.000000e+00 : f32
    %497 = vector.broadcast %cst_128 : f32 to vector<2x32xf32>
    %498 = arith.subf %497, %493 : vector<2x32xf32>
    %499 = arith.mulf %498, %496 : vector<2x32xf32>
    %500 = arith.mulf %493, %468 : vector<2x32xf32>
    %501 = arith.addf %499, %500 : vector<2x32xf32>
    %c0_129 = arith.constant 0 : index
    %c2_130 = arith.constant 2 : index
    %c0_131 = arith.constant 0 : index
    %502 = vector.load %arg47[%c0_129, %c2_130, %c0_131] : memref<2x8x32xf32, #tpu.memory_space<vmem>>, vector<2x1x32xf32>
    %503 = vector.shape_cast %502 : vector<2x1x32xf32> to vector<2x32xf32>
    %504 = vector.shape_cast %501 : vector<2x32xf32> to vector<2x1x32xf32>
    tpu.vector_store %arg47[%c0_129, %c2_130, %c0_131], %504 {strides = array<i32>} : memref<2x8x32xf32, #tpu.memory_space<vmem>>, vector<2x1x32xf32>,
    %505 = vector.extract_strided_slice %34 {offsets = [0, 1, 0], sizes = [2, 1, 96], strides = [1, 1, 1]} : vector<2x8x96xf32> to vector<2x1x96xf32>
    %506 = vector.shape_cast %505 : vector<2x1x96xf32> to vector<2x96xf32>
    %cst_132 = arith.constant dense<0.000000e+00> : vector<2x96xf32>
    %507 = tpu.matmul %501, %36, %cst_132 {dimension_numbers = #tpu.dot_dimension_numbers<[1], [0], [0], [1], [0, 0, 1, 1], [], []>} : vector<2x32xf32>, vector<32x96xf32>, vector<2x96xf32> -> vector<2x96xf32>
    %508 = arith.addf %507, %42 : vector<2x96xf32>
    %509 = vector.extract_strided_slice %506 {offsets = [0, 0], sizes = [2, 32], strides = [1, 1]} : vector<2x96xf32> to vector<2x32xf32>
    %510 = vector.extract_strided_slice %506 {offsets = [0, 32], sizes = [2, 32], strides = [1, 1]} : vector<2x96xf32> to vector<2x32xf32>
    %511 = vector.extract_strided_slice %506 {offsets = [0, 64], sizes = [2, 32], strides = [1, 1]} : vector<2x96xf32> to vector<2x32xf32>
    %512 = vector.extract_strided_slice %508 {offsets = [0, 0], sizes = [2, 32], strides = [1, 1]} : vector<2x96xf32> to vector<2x32xf32>
    %513 = vector.extract_strided_slice %508 {offsets = [0, 32], sizes = [2, 32], strides = [1, 1]} : vector<2x96xf32> to vector<2x32xf32>
    %514 = vector.extract_strided_slice %508 {offsets = [0, 64], sizes = [2, 32], strides = [1, 1]} : vector<2x96xf32> to vector<2x32xf32>
    %515 = arith.addf %509, %512 : vector<2x32xf32>
    %516 = arith.negf %515 : vector<2x32xf32>
    %517 = math.exp %516 : vector<2x32xf32>
    %cst_133 = arith.constant 1.000000e+00 : f32
    %518 = vector.broadcast %cst_133 : f32 to vector<2x32xf32>
    %519 = arith.addf %518, %517 : vector<2x32xf32>
    %520 = arith.divf %518, %519 : vector<2x32xf32>
    %521 = arith.addf %510, %513 : vector<2x32xf32>
    %522 = arith.negf %521 : vector<2x32xf32>
    %523 = math.exp %522 : vector<2x32xf32>
    %cst_134 = arith.constant 1.000000e+00 : f32
    %524 = vector.broadcast %cst_134 : f32 to vector<2x32xf32>
    %525 = arith.addf %524, %523 : vector<2x32xf32>
    %526 = arith.divf %524, %525 : vector<2x32xf32>
    %527 = arith.mulf %520, %514 : vector<2x32xf32>
    %528 = arith.addf %511, %527 : vector<2x32xf32>
    %529 = math.tanh %528 : vector<2x32xf32>
    %cst_135 = arith.constant 1.000000e+00 : f32
    %530 = vector.broadcast %cst_135 : f32 to vector<2x32xf32>
    %531 = arith.subf %530, %526 : vector<2x32xf32>
    %532 = arith.mulf %531, %529 : vector<2x32xf32>
    %533 = arith.mulf %526, %501 : vector<2x32xf32>
    %534 = arith.addf %532, %533 : vector<2x32xf32>
    %c0_136 = arith.constant 0 : index
    %c1_137 = arith.constant 1 : index
    %c0_138 = arith.constant 0 : index
    %535 = vector.load %arg47[%c0_136, %c1_137, %c0_138] : memref<2x8x32xf32, #tpu.memory_space<vmem>>, vector<2x1x32xf32>
    %536 = vector.shape_cast %535 : vector<2x1x32xf32> to vector<2x32xf32>
    %537 = vector.shape_cast %534 : vector<2x32xf32> to vector<2x1x32xf32>
    tpu.vector_store %arg47[%c0_136, %c1_137, %c0_138], %537 {strides = array<i32>} : memref<2x8x32xf32, #tpu.memory_space<vmem>>, vector<2x1x32xf32>,
    %538 = vector.extract_strided_slice %34 {offsets = [0, 0, 0], sizes = [2, 1, 96], strides = [1, 1, 1]} : vector<2x8x96xf32> to vector<2x1x96xf32>
    %539 = vector.shape_cast %538 : vector<2x1x96xf32> to vector<2x96xf32>
    %cst_139 = arith.constant dense<0.000000e+00> : vector<2x96xf32>
    %540 = tpu.matmul %534, %36, %cst_139 {dimension_numbers = #tpu.dot_dimension_numbers<[1], [0], [0], [1], [0, 0, 1, 1], [], []>} : vector<2x32xf32>, vector<32x96xf32>, vector<2x96xf32> -> vector<2x96xf32>
    %541 = arith.addf %540, %42 : vector<2x96xf32>
    %542 = vector.extract_strided_slice %539 {offsets = [0, 0], sizes = [2, 32], strides = [1, 1]} : vector<2x96xf32> to vector<2x32xf32>
    %543 = vector.extract_strided_slice %539 {offsets = [0, 32], sizes = [2, 32], strides = [1, 1]} : vector<2x96xf32> to vector<2x32xf32>
    %544 = vector.extract_strided_slice %539 {offsets = [0, 64], sizes = [2, 32], strides = [1, 1]} : vector<2x96xf32> to vector<2x32xf32>
    %545 = vector.extract_strided_slice %541 {offsets = [0, 0], sizes = [2, 32], strides = [1, 1]} : vector<2x96xf32> to vector<2x32xf32>
    %546 = vector.extract_strided_slice %541 {offsets = [0, 32], sizes = [2, 32], strides = [1, 1]} : vector<2x96xf32> to vector<2x32xf32>
    %547 = vector.extract_strided_slice %541 {offsets = [0, 64], sizes = [2, 32], strides = [1, 1]} : vector<2x96xf32> to vector<2x32xf32>
    %548 = arith.addf %542, %545 : vector<2x32xf32>
    %549 = arith.negf %548 : vector<2x32xf32>
    %550 = math.exp %549 : vector<2x32xf32>
    %cst_140 = arith.constant 1.000000e+00 : f32
    %551 = vector.broadcast %cst_140 : f32 to vector<2x32xf32>
    %552 = arith.addf %551, %550 : vector<2x32xf32>
    %553 = arith.divf %551, %552 : vector<2x32xf32>
    %554 = arith.addf %543, %546 : vector<2x32xf32>
    %555 = arith.negf %554 : vector<2x32xf32>
    %556 = math.exp %555 : vector<2x32xf32>
    %cst_141 = arith.constant 1.000000e+00 : f32
    %557 = vector.broadcast %cst_141 : f32 to vector<2x32xf32>
    %558 = arith.addf %557, %556 : vector<2x32xf32>
    %559 = arith.divf %557, %558 : vector<2x32xf32>
    %560 = arith.mulf %553, %547 : vector<2x32xf32>
    %561 = arith.addf %544, %560 : vector<2x32xf32>
    %562 = math.tanh %561 : vector<2x32xf32>
    %cst_142 = arith.constant 1.000000e+00 : f32
    %563 = vector.broadcast %cst_142 : f32 to vector<2x32xf32>
    %564 = arith.subf %563, %559 : vector<2x32xf32>
    %565 = arith.mulf %564, %562 : vector<2x32xf32>
    %566 = arith.mulf %559, %534 : vector<2x32xf32>
    %567 = arith.addf %565, %566 : vector<2x32xf32>
    %c0_143 = arith.constant 0 : index
    %c0_144 = arith.constant 0 : index
    %c0_145 = arith.constant 0 : index
    %568 = vector.load %arg47[%c0_143, %c0_144, %c0_145] : memref<2x8x32xf32, #tpu.memory_space<vmem>>, vector<2x1x32xf32>
    %569 = vector.shape_cast %568 : vector<2x1x32xf32> to vector<2x32xf32>
    %570 = vector.shape_cast %567 : vector<2x32xf32> to vector<2x1x32xf32>
    tpu.vector_store %arg47[%c0_143, %c0_144, %c0_145], %570 {strides = array<i32>} : memref<2x8x32xf32, #tpu.memory_space<vmem>>, vector<2x1x32xf32>,
    %c0_146 = arith.constant 0 : index
    %c0_147 = arith.constant 0 : index
    %c0_148 = arith.constant 0 : index
    %571 = vector.load %arg46[%c0_146, %c0_147, %c0_148] : memref<2x8x32xf32, #tpu.memory_space<vmem>>, vector<2x8x32xf32>
    %c0_149 = arith.constant 0 : index
    %c0_150 = arith.constant 0 : index
    %c0_151 = arith.constant 0 : index
    %572 = vector.load %arg47[%c0_149, %c0_150, %c0_151] : memref<2x8x32xf32, #tpu.memory_space<vmem>>, vector<2x8x32xf32>
    %573 = tpu.concatenate %571, %572 in 2 : vector<2x8x32xf32>, vector<2x8x32xf32> -> vector<2x8x64xf32>
    %574 = vector.shape_cast %573 : vector<2x8x64xf32> to vector<16x64xf32>
    %c0_152 = arith.constant 0 : index
    %c0_153 = arith.constant 0 : index
    %575 = vector.load %arg18[%c0_152, %c0_153] : memref<64x32xf32, #tpu.memory_space<vmem>>, vector<64x32xf32>
    %cst_154 = arith.constant dense<0.000000e+00> : vector<16x32xf32>
    %576 = tpu.matmul %574, %575, %cst_154 {dimension_numbers = #tpu.dot_dimension_numbers<[1], [0], [0], [1], [0, 0, 1, 1], [], []>} : vector<16x64xf32>, vector<64x32xf32>, vector<16x32xf32> -> vector<16x32xf32>
    %577 = vector.shape_cast %576 : vector<16x32xf32> to vector<2x8x32xf32>
    %c0_155 = arith.constant 0 : index
    %c0_156 = arith.constant 0 : index
    %c0_157 = arith.constant 0 : index
    %578 = vector.load %arg20[%c0_155, %c0_156, %c0_157] : memref<1x1x32xf32, #tpu.memory_space<vmem>>, vector<1x1x32xf32>
    %c0_158 = arith.constant 0 : index
    %c0_159 = arith.constant 0 : index
    %579 = vector.load %arg19[%c0_158, %c0_159] : memref<32x32xf32, #tpu.memory_space<vmem>>, vector<32x32xf32>
    %cst_160 = arith.constant 0.000000e+00 : f32
    %580 = vector.broadcast %cst_160 : f32 to vector<2x8xf32>
    %581 = arith.cmpf ogt, %2, %580 : vector<2x8xf32>
    %582 = vector.shape_cast %1 : vector<2x8x32xf32> to vector<16x32xf32>
    %c0_161 = arith.constant 0 : index
    %c0_162 = arith.constant 0 : index
    %583 = vector.load %arg21[%c0_161, %c0_162] : memref<32x96xf32, #tpu.memory_space<vmem>>, vector<32x96xf32>
    %cst_163 = arith.constant dense<0.000000e+00> : vector<16x96xf32>
    %584 = tpu.matmul %582, %583, %cst_163 {dimension_numbers = #tpu.dot_dimension_numbers<[1], [0], [0], [1], [0, 0, 1, 1], [], []>} : vector<16x32xf32>, vector<32x96xf32>, vector<16x96xf32> -> vector<16x96xf32>
    %585 = vector.shape_cast %584 : vector<16x96xf32> to vector<2x8x96xf32>
    %c0_164 = arith.constant 0 : index
    %c0_165 = arith.constant 0 : index
    %586 = vector.load %arg23[%c0_164, %c0_165] : memref<16x96xf32, #tpu.memory_space<vmem>>, vector<16x96xf32>
    %cst_166 = arith.constant dense<0.000000e+00> : vector<2x96xf32>
    %587 = tpu.matmul %3, %586, %cst_166 {dimension_numbers = #tpu.dot_dimension_numbers<[1], [0], [0], [1], [0, 0, 1, 1], [], []>} : vector<2x16xf32>, vector<16x96xf32>, vector<2x96xf32> -> vector<2x96xf32>
    %c0_167 = arith.constant 0 : index
    %c0_168 = arith.constant 0 : index
    %588 = vector.load %arg25[%c0_167, %c0_168] : memref<1x96xf32, #tpu.memory_space<vmem>>, vector<1x96xf32>
    %589 = vector.broadcast %588 : vector<1x96xf32> to vector<2x96xf32>
    %590 = arith.addf %587, %589 : vector<2x96xf32>
    %c0_169 = arith.constant 0 : index
    %c0_170 = arith.constant 0 : index
    %591 = vector.load %arg22[%c0_169, %c0_170] : memref<64x96xf32, #tpu.memory_space<vmem>>, vector<64x96xf32>
    %c0_171 = arith.constant 0 : index
    %c0_172 = arith.constant 0 : index
    %592 = vector.load %arg24[%c0_171, %c0_172] : memref<32x96xf32, #tpu.memory_space<vmem>>, vector<32x96xf32>
    %c0_173 = arith.constant 0 : index
    %c0_174 = arith.constant 0 : index
    %593 = vector.load %arg26[%c0_173, %c0_174] : memref<1x96xf32, #tpu.memory_space<vmem>>, vector<1x96xf32>
    %594 = vector.shape_cast %593 : vector<1x96xf32> to vector<1x96xf32>
    %595 = vector.broadcast %594 : vector<1x96xf32> to vector<2x96xf32>
    %c0_175 = arith.constant 0 : index
    %c0_176 = arith.constant 0 : index
    %596 = vector.load %arg27[%c0_175, %c0_176] : memref<32x32xf32, #tpu.memory_space<vmem>>, vector<32x32xf32>
    %cst_177 = arith.constant dense<0.000000e+00> : vector<16x32xf32>
    %597 = tpu.matmul %582, %596, %cst_177 {dimension_numbers = #tpu.dot_dimension_numbers<[1], [0], [0], [1], [0, 0, 1, 1], [], []>} : vector<16x32xf32>, vector<32x32xf32>, vector<16x32xf32> -> vector<16x32xf32>
    %c0_178 = arith.constant 0 : index
    %c0_179 = arith.constant 0 : index
    %598 = vector.load %arg30[%c0_178, %c0_179] : memref<1x32xf32, #tpu.memory_space<vmem>>, vector<1x32xf32>
    %599 = vector.broadcast %598 : vector<1x32xf32> to vector<16x32xf32>
    %600 = arith.addf %597, %599 : vector<16x32xf32>
    %601 = vector.shape_cast %600 : vector<16x32xf32> to vector<2x8x32xf32>
    %c0_180 = arith.constant 0 : index
    %c0_181 = arith.constant 0 : index
    %602 = vector.load %arg28[%c0_180, %c0_181] : memref<32x32xf32, #tpu.memory_space<vmem>>, vector<32x32xf32>
    %c0_182 = arith.constant 0 : index
    %c0_183 = arith.constant 0 : index
    %603 = vector.load %arg29[%c0_182, %c0_183] : memref<64x32xf32, #tpu.memory_space<vmem>>, vector<64x32xf32>
    %cst_184 = arith.constant dense<0.000000e+00> : vector<2x32xf32>
    %604 = tpu.matmul %15, %579, %cst_184 {dimension_numbers = #tpu.dot_dimension_numbers<[1], [0], [0], [1], [0, 0, 1, 1], [], []>} : vector<2x32xf32>, vector<32x32xf32>, vector<2x32xf32> -> vector<2x32xf32>
    %605 = vector.shape_cast %604 : vector<2x32xf32> to vector<2x1x32xf32>
    %606 = vector.broadcast %605 : vector<2x1x32xf32> to vector<2x8x32xf32>
    %607 = arith.addf %577, %606 : vector<2x8x32xf32>
    %608 = math.tanh %607 : vector<2x8x32xf32>
    %609 = vector.broadcast %578 : vector<1x1x32xf32> to vector<2x8x32xf32>
    %610 = arith.mulf %608, %609 : vector<2x8x32xf32>
    %cst_185 = arith.constant dense<0.000000e+00> : vector<2x8xf32>
    %611 = vector.multi_reduction <add>, %610, %cst_185 [2] : vector<2x8x32xf32> to vector<2x8xf32>
    %cst_186 = arith.constant -1.000000e+09 : f32
    %612 = vector.broadcast %cst_186 : f32 to vector<2x8xf32>
    %613 = arith.select %581, %611, %612 : vector<2x8xi1>, vector<2x8xf32>
    %cst_187 = arith.constant dense<0xFF800000> : vector<2xf32>
    %614 = vector.multi_reduction <maximumf>, %613, %cst_187 [1] : vector<2x8xf32> to vector<2xf32>
    %cst_188 = arith.constant 0xFF800000 : f32
    %615 = vector.broadcast %cst_188 : f32 to vector<2xf32>
    %616 = arith.maximumf %615, %614 : vector<2xf32>
    %617 = vector.shape_cast %616 : vector<2xf32> to vector<2x1xf32>
    %618 = vector.broadcast %617 : vector<2x1xf32> to vector<2x8xf32>
    %619 = arith.subf %613, %618 : vector<2x8xf32>
    %620 = math.exp %619 : vector<2x8xf32>
    %cst_189 = arith.constant dense<0.000000e+00> : vector<2xf32>
    %621 = vector.multi_reduction <add>, %620, %cst_189 [1] : vector<2x8xf32> to vector<2xf32>
    %622 = vector.shape_cast %621 : vector<2xf32> to vector<2x1xf32>
    %623 = vector.broadcast %622 : vector<2x1xf32> to vector<2x8xf32>
    %624 = arith.divf %620, %623 : vector<2x8xf32>
    %625 = vector.shape_cast %624 : vector<2x8xf32> to vector<2x8x1xf32>
    %626 = vector.broadcast %625 : vector<2x8x1xf32> to vector<2x8x64xf32>
    %627 = arith.mulf %626, %573 : vector<2x8x64xf32>
    %cst_190 = arith.constant dense<0.000000e+00> : vector<2x64xf32>
    %628 = vector.multi_reduction <add>, %627, %cst_190 [1] : vector<2x8x64xf32> to vector<2x64xf32>
    %629 = vector.extract_strided_slice %585 {offsets = [0, 0, 0], sizes = [2, 1, 96], strides = [1, 1, 1]} : vector<2x8x96xf32> to vector<2x1x96xf32>
    %630 = vector.shape_cast %629 : vector<2x1x96xf32> to vector<2x96xf32>
    %631 = arith.addf %630, %590 : vector<2x96xf32>
    %cst_191 = arith.constant dense<0.000000e+00> : vector<2x96xf32>
    %632 = tpu.matmul %628, %591, %cst_191 {dimension_numbers = #tpu.dot_dimension_numbers<[1], [0], [0], [1], [0, 0, 1, 1], [], []>} : vector<2x64xf32>, vector<64x96xf32>, vector<2x96xf32> -> vector<2x96xf32>
    %633 = arith.addf %631, %632 : vector<2x96xf32>
    %cst_192 = arith.constant dense<0.000000e+00> : vector<2x96xf32>
    %634 = tpu.matmul %15, %592, %cst_192 {dimension_numbers = #tpu.dot_dimension_numbers<[1], [0], [0], [1], [0, 0, 1, 1], [], []>} : vector<2x32xf32>, vector<32x96xf32>, vector<2x96xf32> -> vector<2x96xf32>
    %635 = arith.addf %634, %595 : vector<2x96xf32>
    %636 = vector.extract_strided_slice %633 {offsets = [0, 0], sizes = [2, 32], strides = [1, 1]} : vector<2x96xf32> to vector<2x32xf32>
    %637 = vector.extract_strided_slice %633 {offsets = [0, 32], sizes = [2, 32], strides = [1, 1]} : vector<2x96xf32> to vector<2x32xf32>
    %638 = vector.extract_strided_slice %633 {offsets = [0, 64], sizes = [2, 32], strides = [1, 1]} : vector<2x96xf32> to vector<2x32xf32>
    %639 = vector.extract_strided_slice %635 {offsets = [0, 0], sizes = [2, 32], strides = [1, 1]} : vector<2x96xf32> to vector<2x32xf32>
    %640 = vector.extract_strided_slice %635 {offsets = [0, 32], sizes = [2, 32], strides = [1, 1]} : vector<2x96xf32> to vector<2x32xf32>
    %641 = vector.extract_strided_slice %635 {offsets = [0, 64], sizes = [2, 32], strides = [1, 1]} : vector<2x96xf32> to vector<2x32xf32>
    %642 = arith.addf %636, %639 : vector<2x32xf32>
    %643 = arith.negf %642 : vector<2x32xf32>
    %644 = math.exp %643 : vector<2x32xf32>
    %cst_193 = arith.constant 1.000000e+00 : f32
    %645 = vector.broadcast %cst_193 : f32 to vector<2x32xf32>
    %646 = arith.addf %645, %644 : vector<2x32xf32>
    %647 = arith.divf %645, %646 : vector<2x32xf32>
    %648 = arith.addf %637, %640 : vector<2x32xf32>
    %649 = arith.negf %648 : vector<2x32xf32>
    %650 = math.exp %649 : vector<2x32xf32>
    %cst_194 = arith.constant 1.000000e+00 : f32
    %651 = vector.broadcast %cst_194 : f32 to vector<2x32xf32>
    %652 = arith.addf %651, %650 : vector<2x32xf32>
    %653 = arith.divf %651, %652 : vector<2x32xf32>
    %654 = arith.mulf %647, %641 : vector<2x32xf32>
    %655 = arith.addf %638, %654 : vector<2x32xf32>
    %656 = math.tanh %655 : vector<2x32xf32>
    %cst_195 = arith.constant 1.000000e+00 : f32
    %657 = vector.broadcast %cst_195 : f32 to vector<2x32xf32>
    %658 = arith.subf %657, %653 : vector<2x32xf32>
    %659 = arith.mulf %658, %656 : vector<2x32xf32>
    %660 = arith.mulf %653, %15 : vector<2x32xf32>
    %661 = arith.addf %659, %660 : vector<2x32xf32>
    %662 = vector.extract_strided_slice %601 {offsets = [0, 0, 0], sizes = [2, 1, 32], strides = [1, 1, 1]} : vector<2x8x32xf32> to vector<2x1x32xf32>
    %663 = vector.shape_cast %662 : vector<2x1x32xf32> to vector<2x32xf32>
    %cst_196 = arith.constant dense<0.000000e+00> : vector<2x32xf32>
    %664 = tpu.matmul %661, %602, %cst_196 {dimension_numbers = #tpu.dot_dimension_numbers<[1], [0], [0], [1], [0, 0, 1, 1], [], []>} : vector<2x32xf32>, vector<32x32xf32>, vector<2x32xf32> -> vector<2x32xf32>
    %665 = arith.addf %663, %664 : vector<2x32xf32>
    %cst_197 = arith.constant dense<0.000000e+00> : vector<2x32xf32>
    %666 = tpu.matmul %628, %603, %cst_197 {dimension_numbers = #tpu.dot_dimension_numbers<[1], [0], [0], [1], [0, 0, 1, 1], [], []>} : vector<2x64xf32>, vector<64x32xf32>, vector<2x32xf32> -> vector<2x32xf32>
    %667 = arith.addf %665, %666 : vector<2x32xf32>
    %668 = math.tanh %667 : vector<2x32xf32>
    %c0_198 = arith.constant 0 : index
    %c0_199 = arith.constant 0 : index
    %c0_200 = arith.constant 0 : index
    %669 = vector.load %arg48[%c0_198, %c0_199, %c0_200] : memref<2x8x32xf32, #tpu.memory_space<vmem>>, vector<2x1x32xf32>
    %670 = vector.shape_cast %669 : vector<2x1x32xf32> to vector<2x32xf32>
    %671 = vector.shape_cast %668 : vector<2x32xf32> to vector<2x1x32xf32>
    tpu.vector_store %arg48[%c0_198, %c0_199, %c0_200], %671 {strides = array<i32>} : memref<2x8x32xf32, #tpu.memory_space<vmem>>, vector<2x1x32xf32>,
    %cst_201 = arith.constant dense<0.000000e+00> : vector<2x32xf32>
    %672 = tpu.matmul %661, %579, %cst_201 {dimension_numbers = #tpu.dot_dimension_numbers<[1], [0], [0], [1], [0, 0, 1, 1], [], []>} : vector<2x32xf32>, vector<32x32xf32>, vector<2x32xf32> -> vector<2x32xf32>
    %673 = vector.shape_cast %672 : vector<2x32xf32> to vector<2x1x32xf32>
    %674 = vector.broadcast %673 : vector<2x1x32xf32> to vector<2x8x32xf32>
    %675 = arith.addf %577, %674 : vector<2x8x32xf32>
    %676 = math.tanh %675 : vector<2x8x32xf32>
    %677 = vector.broadcast %578 : vector<1x1x32xf32> to vector<2x8x32xf32>
    %678 = arith.mulf %676, %677 : vector<2x8x32xf32>
    %cst_202 = arith.constant dense<0.000000e+00> : vector<2x8xf32>
    %679 = vector.multi_reduction <add>, %678, %cst_202 [2] : vector<2x8x32xf32> to vector<2x8xf32>
    %cst_203 = arith.constant -1.000000e+09 : f32
    %680 = vector.broadcast %cst_203 : f32 to vector<2x8xf32>
    %681 = arith.select %581, %679, %680 : vector<2x8xi1>, vector<2x8xf32>
    %cst_204 = arith.constant dense<0xFF800000> : vector<2xf32>
    %682 = vector.multi_reduction <maximumf>, %681, %cst_204 [1] : vector<2x8xf32> to vector<2xf32>
    %cst_205 = arith.constant 0xFF800000 : f32
    %683 = vector.broadcast %cst_205 : f32 to vector<2xf32>
    %684 = arith.maximumf %683, %682 : vector<2xf32>
    %685 = vector.shape_cast %684 : vector<2xf32> to vector<2x1xf32>
    %686 = vector.broadcast %685 : vector<2x1xf32> to vector<2x8xf32>
    %687 = arith.subf %681, %686 : vector<2x8xf32>
    %688 = math.exp %687 : vector<2x8xf32>
    %cst_206 = arith.constant dense<0.000000e+00> : vector<2xf32>
    %689 = vector.multi_reduction <add>, %688, %cst_206 [1] : vector<2x8xf32> to vector<2xf32>
    %690 = vector.shape_cast %689 : vector<2xf32> to vector<2x1xf32>
    %691 = vector.broadcast %690 : vector<2x1xf32> to vector<2x8xf32>
    %692 = arith.divf %688, %691 : vector<2x8xf32>
    %693 = vector.shape_cast %692 : vector<2x8xf32> to vector<2x8x1xf32>
    %694 = vector.broadcast %693 : vector<2x8x1xf32> to vector<2x8x64xf32>
    %695 = arith.mulf %694, %573 : vector<2x8x64xf32>
    %cst_207 = arith.constant dense<0.000000e+00> : vector<2x64xf32>
    %696 = vector.multi_reduction <add>, %695, %cst_207 [1] : vector<2x8x64xf32> to vector<2x64xf32>
    %697 = vector.extract_strided_slice %585 {offsets = [0, 1, 0], sizes = [2, 1, 96], strides = [1, 1, 1]} : vector<2x8x96xf32> to vector<2x1x96xf32>
    %698 = vector.shape_cast %697 : vector<2x1x96xf32> to vector<2x96xf32>
    %699 = arith.addf %698, %590 : vector<2x96xf32>
    %cst_208 = arith.constant dense<0.000000e+00> : vector<2x96xf32>
    %700 = tpu.matmul %696, %591, %cst_208 {dimension_numbers = #tpu.dot_dimension_numbers<[1], [0], [0], [1], [0, 0, 1, 1], [], []>} : vector<2x64xf32>, vector<64x96xf32>, vector<2x96xf32> -> vector<2x96xf32>
    %701 = arith.addf %699, %700 : vector<2x96xf32>
    %cst_209 = arith.constant dense<0.000000e+00> : vector<2x96xf32>
    %702 = tpu.matmul %661, %592, %cst_209 {dimension_numbers = #tpu.dot_dimension_numbers<[1], [0], [0], [1], [0, 0, 1, 1], [], []>} : vector<2x32xf32>, vector<32x96xf32>, vector<2x96xf32> -> vector<2x96xf32>
    %703 = arith.addf %702, %595 : vector<2x96xf32>
    %704 = vector.extract_strided_slice %701 {offsets = [0, 0], sizes = [2, 32], strides = [1, 1]} : vector<2x96xf32> to vector<2x32xf32>
    %705 = vector.extract_strided_slice %701 {offsets = [0, 32], sizes = [2, 32], strides = [1, 1]} : vector<2x96xf32> to vector<2x32xf32>
    %706 = vector.extract_strided_slice %701 {offsets = [0, 64], sizes = [2, 32], strides = [1, 1]} : vector<2x96xf32> to vector<2x32xf32>
    %707 = vector.extract_strided_slice %703 {offsets = [0, 0], sizes = [2, 32], strides = [1, 1]} : vector<2x96xf32> to vector<2x32xf32>
    %708 = vector.extract_strided_slice %703 {offsets = [0, 32], sizes = [2, 32], strides = [1, 1]} : vector<2x96xf32> to vector<2x32xf32>
    %709 = vector.extract_strided_slice %703 {offsets = [0, 64], sizes = [2, 32], strides = [1, 1]} : vector<2x96xf32> to vector<2x32xf32>
    %710 = arith.addf %704, %707 : vector<2x32xf32>
    %711 = arith.negf %710 : vector<2x32xf32>
    %712 = math.exp %711 : vector<2x32xf32>
    %cst_210 = arith.constant 1.000000e+00 : f32
    %713 = vector.broadcast %cst_210 : f32 to vector<2x32xf32>
    %714 = arith.addf %713, %712 : vector<2x32xf32>
    %715 = arith.divf %713, %714 : vector<2x32xf32>
    %716 = arith.addf %705, %708 : vector<2x32xf32>
    %717 = arith.negf %716 : vector<2x32xf32>
    %718 = math.exp %717 : vector<2x32xf32>
    %cst_211 = arith.constant 1.000000e+00 : f32
    %719 = vector.broadcast %cst_211 : f32 to vector<2x32xf32>
    %720 = arith.addf %719, %718 : vector<2x32xf32>
    %721 = arith.divf %719, %720 : vector<2x32xf32>
    %722 = arith.mulf %715, %709 : vector<2x32xf32>
    %723 = arith.addf %706, %722 : vector<2x32xf32>
    %724 = math.tanh %723 : vector<2x32xf32>
    %cst_212 = arith.constant 1.000000e+00 : f32
    %725 = vector.broadcast %cst_212 : f32 to vector<2x32xf32>
    %726 = arith.subf %725, %721 : vector<2x32xf32>
    %727 = arith.mulf %726, %724 : vector<2x32xf32>
    %728 = arith.mulf %721, %661 : vector<2x32xf32>
    %729 = arith.addf %727, %728 : vector<2x32xf32>
    %730 = vector.extract_strided_slice %601 {offsets = [0, 1, 0], sizes = [2, 1, 32], strides = [1, 1, 1]} : vector<2x8x32xf32> to vector<2x1x32xf32>
    %731 = vector.shape_cast %730 : vector<2x1x32xf32> to vector<2x32xf32>
    %cst_213 = arith.constant dense<0.000000e+00> : vector<2x32xf32>
    %732 = tpu.matmul %729, %602, %cst_213 {dimension_numbers = #tpu.dot_dimension_numbers<[1], [0], [0], [1], [0, 0, 1, 1], [], []>} : vector<2x32xf32>, vector<32x32xf32>, vector<2x32xf32> -> vector<2x32xf32>
    %733 = arith.addf %731, %732 : vector<2x32xf32>
    %cst_214 = arith.constant dense<0.000000e+00> : vector<2x32xf32>
    %734 = tpu.matmul %696, %603, %cst_214 {dimension_numbers = #tpu.dot_dimension_numbers<[1], [0], [0], [1], [0, 0, 1, 1], [], []>} : vector<2x64xf32>, vector<64x32xf32>, vector<2x32xf32> -> vector<2x32xf32>
    %735 = arith.addf %733, %734 : vector<2x32xf32>
    %736 = math.tanh %735 : vector<2x32xf32>
    %c0_215 = arith.constant 0 : index
    %c1_216 = arith.constant 1 : index
    %c0_217 = arith.constant 0 : index
    %737 = vector.load %arg48[%c0_215, %c1_216, %c0_217] : memref<2x8x32xf32, #tpu.memory_space<vmem>>, vector<2x1x32xf32>
    %738 = vector.shape_cast %737 : vector<2x1x32xf32> to vector<2x32xf32>
    %739 = vector.shape_cast %736 : vector<2x32xf32> to vector<2x1x32xf32>
    tpu.vector_store %arg48[%c0_215, %c1_216, %c0_217], %739 {strides = array<i32>} : memref<2x8x32xf32, #tpu.memory_space<vmem>>, vector<2x1x32xf32>,
    %cst_218 = arith.constant dense<0.000000e+00> : vector<2x32xf32>
    %740 = tpu.matmul %729, %579, %cst_218 {dimension_numbers = #tpu.dot_dimension_numbers<[1], [0], [0], [1], [0, 0, 1, 1], [], []>} : vector<2x32xf32>, vector<32x32xf32>, vector<2x32xf32> -> vector<2x32xf32>
    %741 = vector.shape_cast %740 : vector<2x32xf32> to vector<2x1x32xf32>
    %742 = vector.broadcast %741 : vector<2x1x32xf32> to vector<2x8x32xf32>
    %743 = arith.addf %577, %742 : vector<2x8x32xf32>
    %744 = math.tanh %743 : vector<2x8x32xf32>
    %745 = vector.broadcast %578 : vector<1x1x32xf32> to vector<2x8x32xf32>
    %746 = arith.mulf %744, %745 : vector<2x8x32xf32>
    %cst_219 = arith.constant dense<0.000000e+00> : vector<2x8xf32>
    %747 = vector.multi_reduction <add>, %746, %cst_219 [2] : vector<2x8x32xf32> to vector<2x8xf32>
    %cst_220 = arith.constant -1.000000e+09 : f32
    %748 = vector.broadcast %cst_220 : f32 to vector<2x8xf32>
    %749 = arith.select %581, %747, %748 : vector<2x8xi1>, vector<2x8xf32>
    %cst_221 = arith.constant dense<0xFF800000> : vector<2xf32>
    %750 = vector.multi_reduction <maximumf>, %749, %cst_221 [1] : vector<2x8xf32> to vector<2xf32>
    %cst_222 = arith.constant 0xFF800000 : f32
    %751 = vector.broadcast %cst_222 : f32 to vector<2xf32>
    %752 = arith.maximumf %751, %750 : vector<2xf32>
    %753 = vector.shape_cast %752 : vector<2xf32> to vector<2x1xf32>
    %754 = vector.broadcast %753 : vector<2x1xf32> to vector<2x8xf32>
    %755 = arith.subf %749, %754 : vector<2x8xf32>
    %756 = math.exp %755 : vector<2x8xf32>
    %cst_223 = arith.constant dense<0.000000e+00> : vector<2xf32>
    %757 = vector.multi_reduction <add>, %756, %cst_223 [1] : vector<2x8xf32> to vector<2xf32>
    %758 = vector.shape_cast %757 : vector<2xf32> to vector<2x1xf32>
    %759 = vector.broadcast %758 : vector<2x1xf32> to vector<2x8xf32>
    %760 = arith.divf %756, %759 : vector<2x8xf32>
    %761 = vector.shape_cast %760 : vector<2x8xf32> to vector<2x8x1xf32>
    %762 = vector.broadcast %761 : vector<2x8x1xf32> to vector<2x8x64xf32>
    %763 = arith.mulf %762, %573 : vector<2x8x64xf32>
    %cst_224 = arith.constant dense<0.000000e+00> : vector<2x64xf32>
    %764 = vector.multi_reduction <add>, %763, %cst_224 [1] : vector<2x8x64xf32> to vector<2x64xf32>
    %765 = vector.extract_strided_slice %585 {offsets = [0, 2, 0], sizes = [2, 1, 96], strides = [1, 1, 1]} : vector<2x8x96xf32> to vector<2x1x96xf32>
    %766 = vector.shape_cast %765 : vector<2x1x96xf32> to vector<2x96xf32>
    %767 = arith.addf %766, %590 : vector<2x96xf32>
    %cst_225 = arith.constant dense<0.000000e+00> : vector<2x96xf32>
    %768 = tpu.matmul %764, %591, %cst_225 {dimension_numbers = #tpu.dot_dimension_numbers<[1], [0], [0], [1], [0, 0, 1, 1], [], []>} : vector<2x64xf32>, vector<64x96xf32>, vector<2x96xf32> -> vector<2x96xf32>
    %769 = arith.addf %767, %768 : vector<2x96xf32>
    %cst_226 = arith.constant dense<0.000000e+00> : vector<2x96xf32>
    %770 = tpu.matmul %729, %592, %cst_226 {dimension_numbers = #tpu.dot_dimension_numbers<[1], [0], [0], [1], [0, 0, 1, 1], [], []>} : vector<2x32xf32>, vector<32x96xf32>, vector<2x96xf32> -> vector<2x96xf32>
    %771 = arith.addf %770, %595 : vector<2x96xf32>
    %772 = vector.extract_strided_slice %769 {offsets = [0, 0], sizes = [2, 32], strides = [1, 1]} : vector<2x96xf32> to vector<2x32xf32>
    %773 = vector.extract_strided_slice %769 {offsets = [0, 32], sizes = [2, 32], strides = [1, 1]} : vector<2x96xf32> to vector<2x32xf32>
    %774 = vector.extract_strided_slice %769 {offsets = [0, 64], sizes = [2, 32], strides = [1, 1]} : vector<2x96xf32> to vector<2x32xf32>
    %775 = vector.extract_strided_slice %771 {offsets = [0, 0], sizes = [2, 32], strides = [1, 1]} : vector<2x96xf32> to vector<2x32xf32>
    %776 = vector.extract_strided_slice %771 {offsets = [0, 32], sizes = [2, 32], strides = [1, 1]} : vector<2x96xf32> to vector<2x32xf32>
    %777 = vector.extract_strided_slice %771 {offsets = [0, 64], sizes = [2, 32], strides = [1, 1]} : vector<2x96xf32> to vector<2x32xf32>
    %778 = arith.addf %772, %775 : vector<2x32xf32>
    %779 = arith.negf %778 : vector<2x32xf32>
    %780 = math.exp %779 : vector<2x32xf32>
    %cst_227 = arith.constant 1.000000e+00 : f32
    %781 = vector.broadcast %cst_227 : f32 to vector<2x32xf32>
    %782 = arith.addf %781, %780 : vector<2x32xf32>
    %783 = arith.divf %781, %782 : vector<2x32xf32>
    %784 = arith.addf %773, %776 : vector<2x32xf32>
    %785 = arith.negf %784 : vector<2x32xf32>
    %786 = math.exp %785 : vector<2x32xf32>
    %cst_228 = arith.constant 1.000000e+00 : f32
    %787 = vector.broadcast %cst_228 : f32 to vector<2x32xf32>
    %788 = arith.addf %787, %786 : vector<2x32xf32>
    %789 = arith.divf %787, %788 : vector<2x32xf32>
    %790 = arith.mulf %783, %777 : vector<2x32xf32>
    %791 = arith.addf %774, %790 : vector<2x32xf32>
    %792 = math.tanh %791 : vector<2x32xf32>
    %cst_229 = arith.constant 1.000000e+00 : f32
    %793 = vector.broadcast %cst_229 : f32 to vector<2x32xf32>
    %794 = arith.subf %793, %789 : vector<2x32xf32>
    %795 = arith.mulf %794, %792 : vector<2x32xf32>
    %796 = arith.mulf %789, %729 : vector<2x32xf32>
    %797 = arith.addf %795, %796 : vector<2x32xf32>
    %798 = vector.extract_strided_slice %601 {offsets = [0, 2, 0], sizes = [2, 1, 32], strides = [1, 1, 1]} : vector<2x8x32xf32> to vector<2x1x32xf32>
    %799 = vector.shape_cast %798 : vector<2x1x32xf32> to vector<2x32xf32>
    %cst_230 = arith.constant dense<0.000000e+00> : vector<2x32xf32>
    %800 = tpu.matmul %797, %602, %cst_230 {dimension_numbers = #tpu.dot_dimension_numbers<[1], [0], [0], [1], [0, 0, 1, 1], [], []>} : vector<2x32xf32>, vector<32x32xf32>, vector<2x32xf32> -> vector<2x32xf32>
    %801 = arith.addf %799, %800 : vector<2x32xf32>
    %cst_231 = arith.constant dense<0.000000e+00> : vector<2x32xf32>
    %802 = tpu.matmul %764, %603, %cst_231 {dimension_numbers = #tpu.dot_dimension_numbers<[1], [0], [0], [1], [0, 0, 1, 1], [], []>} : vector<2x64xf32>, vector<64x32xf32>, vector<2x32xf32> -> vector<2x32xf32>
    %803 = arith.addf %801, %802 : vector<2x32xf32>
    %804 = math.tanh %803 : vector<2x32xf32>
    %c0_232 = arith.constant 0 : index
    %c2_233 = arith.constant 2 : index
    %c0_234 = arith.constant 0 : index
    %805 = vector.load %arg48[%c0_232, %c2_233, %c0_234] : memref<2x8x32xf32, #tpu.memory_space<vmem>>, vector<2x1x32xf32>
    %806 = vector.shape_cast %805 : vector<2x1x32xf32> to vector<2x32xf32>
    %807 = vector.shape_cast %804 : vector<2x32xf32> to vector<2x1x32xf32>
    tpu.vector_store %arg48[%c0_232, %c2_233, %c0_234], %807 {strides = array<i32>} : memref<2x8x32xf32, #tpu.memory_space<vmem>>, vector<2x1x32xf32>,
    %cst_235 = arith.constant dense<0.000000e+00> : vector<2x32xf32>
    %808 = tpu.matmul %797, %579, %cst_235 {dimension_numbers = #tpu.dot_dimension_numbers<[1], [0], [0], [1], [0, 0, 1, 1], [], []>} : vector<2x32xf32>, vector<32x32xf32>, vector<2x32xf32> -> vector<2x32xf32>
    %809 = vector.shape_cast %808 : vector<2x32xf32> to vector<2x1x32xf32>
    %810 = vector.broadcast %809 : vector<2x1x32xf32> to vector<2x8x32xf32>
    %811 = arith.addf %577, %810 : vector<2x8x32xf32>
    %812 = math.tanh %811 : vector<2x8x32xf32>
    %813 = vector.broadcast %578 : vector<1x1x32xf32> to vector<2x8x32xf32>
    %814 = arith.mulf %812, %813 : vector<2x8x32xf32>
    %cst_236 = arith.constant dense<0.000000e+00> : vector<2x8xf32>
    %815 = vector.multi_reduction <add>, %814, %cst_236 [2] : vector<2x8x32xf32> to vector<2x8xf32>
    %cst_237 = arith.constant -1.000000e+09 : f32
    %816 = vector.broadcast %cst_237 : f32 to vector<2x8xf32>
    %817 = arith.select %581, %815, %816 : vector<2x8xi1>, vector<2x8xf32>
    %cst_238 = arith.constant dense<0xFF800000> : vector<2xf32>
    %818 = vector.multi_reduction <maximumf>, %817, %cst_238 [1] : vector<2x8xf32> to vector<2xf32>
    %cst_239 = arith.constant 0xFF800000 : f32
    %819 = vector.broadcast %cst_239 : f32 to vector<2xf32>
    %820 = arith.maximumf %819, %818 : vector<2xf32>
    %821 = vector.shape_cast %820 : vector<2xf32> to vector<2x1xf32>
    %822 = vector.broadcast %821 : vector<2x1xf32> to vector<2x8xf32>
    %823 = arith.subf %817, %822 : vector<2x8xf32>
    %824 = math.exp %823 : vector<2x8xf32>
    %cst_240 = arith.constant dense<0.000000e+00> : vector<2xf32>
    %825 = vector.multi_reduction <add>, %824, %cst_240 [1] : vector<2x8xf32> to vector<2xf32>
    %826 = vector.shape_cast %825 : vector<2xf32> to vector<2x1xf32>
    %827 = vector.broadcast %826 : vector<2x1xf32> to vector<2x8xf32>
    %828 = arith.divf %824, %827 : vector<2x8xf32>
    %829 = vector.shape_cast %828 : vector<2x8xf32> to vector<2x8x1xf32>
    %830 = vector.broadcast %829 : vector<2x8x1xf32> to vector<2x8x64xf32>
    %831 = arith.mulf %830, %573 : vector<2x8x64xf32>
    %cst_241 = arith.constant dense<0.000000e+00> : vector<2x64xf32>
    %832 = vector.multi_reduction <add>, %831, %cst_241 [1] : vector<2x8x64xf32> to vector<2x64xf32>
    %833 = vector.extract_strided_slice %585 {offsets = [0, 3, 0], sizes = [2, 1, 96], strides = [1, 1, 1]} : vector<2x8x96xf32> to vector<2x1x96xf32>
    %834 = vector.shape_cast %833 : vector<2x1x96xf32> to vector<2x96xf32>
    %835 = arith.addf %834, %590 : vector<2x96xf32>
    %cst_242 = arith.constant dense<0.000000e+00> : vector<2x96xf32>
    %836 = tpu.matmul %832, %591, %cst_242 {dimension_numbers = #tpu.dot_dimension_numbers<[1], [0], [0], [1], [0, 0, 1, 1], [], []>} : vector<2x64xf32>, vector<64x96xf32>, vector<2x96xf32> -> vector<2x96xf32>
    %837 = arith.addf %835, %836 : vector<2x96xf32>
    %cst_243 = arith.constant dense<0.000000e+00> : vector<2x96xf32>
    %838 = tpu.matmul %797, %592, %cst_243 {dimension_numbers = #tpu.dot_dimension_numbers<[1], [0], [0], [1], [0, 0, 1, 1], [], []>} : vector<2x32xf32>, vector<32x96xf32>, vector<2x96xf32> -> vector<2x96xf32>
    %839 = arith.addf %838, %595 : vector<2x96xf32>
    %840 = vector.extract_strided_slice %837 {offsets = [0, 0], sizes = [2, 32], strides = [1, 1]} : vector<2x96xf32> to vector<2x32xf32>
    %841 = vector.extract_strided_slice %837 {offsets = [0, 32], sizes = [2, 32], strides = [1, 1]} : vector<2x96xf32> to vector<2x32xf32>
    %842 = vector.extract_strided_slice %837 {offsets = [0, 64], sizes = [2, 32], strides = [1, 1]} : vector<2x96xf32> to vector<2x32xf32>
    %843 = vector.extract_strided_slice %839 {offsets = [0, 0], sizes = [2, 32], strides = [1, 1]} : vector<2x96xf32> to vector<2x32xf32>
    %844 = vector.extract_strided_slice %839 {offsets = [0, 32], sizes = [2, 32], strides = [1, 1]} : vector<2x96xf32> to vector<2x32xf32>
    %845 = vector.extract_strided_slice %839 {offsets = [0, 64], sizes = [2, 32], strides = [1, 1]} : vector<2x96xf32> to vector<2x32xf32>
    %846 = arith.addf %840, %843 : vector<2x32xf32>
    %847 = arith.negf %846 : vector<2x32xf32>
    %848 = math.exp %847 : vector<2x32xf32>
    %cst_244 = arith.constant 1.000000e+00 : f32
    %849 = vector.broadcast %cst_244 : f32 to vector<2x32xf32>
    %850 = arith.addf %849, %848 : vector<2x32xf32>
    %851 = arith.divf %849, %850 : vector<2x32xf32>
    %852 = arith.addf %841, %844 : vector<2x32xf32>
    %853 = arith.negf %852 : vector<2x32xf32>
    %854 = math.exp %853 : vector<2x32xf32>
    %cst_245 = arith.constant 1.000000e+00 : f32
    %855 = vector.broadcast %cst_245 : f32 to vector<2x32xf32>
    %856 = arith.addf %855, %854 : vector<2x32xf32>
    %857 = arith.divf %855, %856 : vector<2x32xf32>
    %858 = arith.mulf %851, %845 : vector<2x32xf32>
    %859 = arith.addf %842, %858 : vector<2x32xf32>
    %860 = math.tanh %859 : vector<2x32xf32>
    %cst_246 = arith.constant 1.000000e+00 : f32
    %861 = vector.broadcast %cst_246 : f32 to vector<2x32xf32>
    %862 = arith.subf %861, %857 : vector<2x32xf32>
    %863 = arith.mulf %862, %860 : vector<2x32xf32>
    %864 = arith.mulf %857, %797 : vector<2x32xf32>
    %865 = arith.addf %863, %864 : vector<2x32xf32>
    %866 = vector.extract_strided_slice %601 {offsets = [0, 3, 0], sizes = [2, 1, 32], strides = [1, 1, 1]} : vector<2x8x32xf32> to vector<2x1x32xf32>
    %867 = vector.shape_cast %866 : vector<2x1x32xf32> to vector<2x32xf32>
    %cst_247 = arith.constant dense<0.000000e+00> : vector<2x32xf32>
    %868 = tpu.matmul %865, %602, %cst_247 {dimension_numbers = #tpu.dot_dimension_numbers<[1], [0], [0], [1], [0, 0, 1, 1], [], []>} : vector<2x32xf32>, vector<32x32xf32>, vector<2x32xf32> -> vector<2x32xf32>
    %869 = arith.addf %867, %868 : vector<2x32xf32>
    %cst_248 = arith.constant dense<0.000000e+00> : vector<2x32xf32>
    %870 = tpu.matmul %832, %603, %cst_248 {dimension_numbers = #tpu.dot_dimension_numbers<[1], [0], [0], [1], [0, 0, 1, 1], [], []>} : vector<2x64xf32>, vector<64x32xf32>, vector<2x32xf32> -> vector<2x32xf32>
    %871 = arith.addf %869, %870 : vector<2x32xf32>
    %872 = math.tanh %871 : vector<2x32xf32>
    %c0_249 = arith.constant 0 : index
    %c3_250 = arith.constant 3 : index
    %c0_251 = arith.constant 0 : index
    %873 = vector.load %arg48[%c0_249, %c3_250, %c0_251] : memref<2x8x32xf32, #tpu.memory_space<vmem>>, vector<2x1x32xf32>
    %874 = vector.shape_cast %873 : vector<2x1x32xf32> to vector<2x32xf32>
    %875 = vector.shape_cast %872 : vector<2x32xf32> to vector<2x1x32xf32>
    tpu.vector_store %arg48[%c0_249, %c3_250, %c0_251], %875 {strides = array<i32>} : memref<2x8x32xf32, #tpu.memory_space<vmem>>, vector<2x1x32xf32>,
    %cst_252 = arith.constant dense<0.000000e+00> : vector<2x32xf32>
    %876 = tpu.matmul %865, %579, %cst_252 {dimension_numbers = #tpu.dot_dimension_numbers<[1], [0], [0], [1], [0, 0, 1, 1], [], []>} : vector<2x32xf32>, vector<32x32xf32>, vector<2x32xf32> -> vector<2x32xf32>
    %877 = vector.shape_cast %876 : vector<2x32xf32> to vector<2x1x32xf32>
    %878 = vector.broadcast %877 : vector<2x1x32xf32> to vector<2x8x32xf32>
    %879 = arith.addf %577, %878 : vector<2x8x32xf32>
    %880 = math.tanh %879 : vector<2x8x32xf32>
    %881 = vector.broadcast %578 : vector<1x1x32xf32> to vector<2x8x32xf32>
    %882 = arith.mulf %880, %881 : vector<2x8x32xf32>
    %cst_253 = arith.constant dense<0.000000e+00> : vector<2x8xf32>
    %883 = vector.multi_reduction <add>, %882, %cst_253 [2] : vector<2x8x32xf32> to vector<2x8xf32>
    %cst_254 = arith.constant -1.000000e+09 : f32
    %884 = vector.broadcast %cst_254 : f32 to vector<2x8xf32>
    %885 = arith.select %581, %883, %884 : vector<2x8xi1>, vector<2x8xf32>
    %cst_255 = arith.constant dense<0xFF800000> : vector<2xf32>
    %886 = vector.multi_reduction <maximumf>, %885, %cst_255 [1] : vector<2x8xf32> to vector<2xf32>
    %cst_256 = arith.constant 0xFF800000 : f32
    %887 = vector.broadcast %cst_256 : f32 to vector<2xf32>
    %888 = arith.maximumf %887, %886 : vector<2xf32>
    %889 = vector.shape_cast %888 : vector<2xf32> to vector<2x1xf32>
    %890 = vector.broadcast %889 : vector<2x1xf32> to vector<2x8xf32>
    %891 = arith.subf %885, %890 : vector<2x8xf32>
    %892 = math.exp %891 : vector<2x8xf32>
    %cst_257 = arith.constant dense<0.000000e+00> : vector<2xf32>
    %893 = vector.multi_reduction <add>, %892, %cst_257 [1] : vector<2x8xf32> to vector<2xf32>
    %894 = vector.shape_cast %893 : vector<2xf32> to vector<2x1xf32>
    %895 = vector.broadcast %894 : vector<2x1xf32> to vector<2x8xf32>
    %896 = arith.divf %892, %895 : vector<2x8xf32>
    %897 = vector.shape_cast %896 : vector<2x8xf32> to vector<2x8x1xf32>
    %898 = vector.broadcast %897 : vector<2x8x1xf32> to vector<2x8x64xf32>
    %899 = arith.mulf %898, %573 : vector<2x8x64xf32>
    %cst_258 = arith.constant dense<0.000000e+00> : vector<2x64xf32>
    %900 = vector.multi_reduction <add>, %899, %cst_258 [1] : vector<2x8x64xf32> to vector<2x64xf32>
    %901 = vector.extract_strided_slice %585 {offsets = [0, 4, 0], sizes = [2, 1, 96], strides = [1, 1, 1]} : vector<2x8x96xf32> to vector<2x1x96xf32>
    %902 = vector.shape_cast %901 : vector<2x1x96xf32> to vector<2x96xf32>
    %903 = arith.addf %902, %590 : vector<2x96xf32>
    %cst_259 = arith.constant dense<0.000000e+00> : vector<2x96xf32>
    %904 = tpu.matmul %900, %591, %cst_259 {dimension_numbers = #tpu.dot_dimension_numbers<[1], [0], [0], [1], [0, 0, 1, 1], [], []>} : vector<2x64xf32>, vector<64x96xf32>, vector<2x96xf32> -> vector<2x96xf32>
    %905 = arith.addf %903, %904 : vector<2x96xf32>
    %cst_260 = arith.constant dense<0.000000e+00> : vector<2x96xf32>
    %906 = tpu.matmul %865, %592, %cst_260 {dimension_numbers = #tpu.dot_dimension_numbers<[1], [0], [0], [1], [0, 0, 1, 1], [], []>} : vector<2x32xf32>, vector<32x96xf32>, vector<2x96xf32> -> vector<2x96xf32>
    %907 = arith.addf %906, %595 : vector<2x96xf32>
    %908 = vector.extract_strided_slice %905 {offsets = [0, 0], sizes = [2, 32], strides = [1, 1]} : vector<2x96xf32> to vector<2x32xf32>
    %909 = vector.extract_strided_slice %905 {offsets = [0, 32], sizes = [2, 32], strides = [1, 1]} : vector<2x96xf32> to vector<2x32xf32>
    %910 = vector.extract_strided_slice %905 {offsets = [0, 64], sizes = [2, 32], strides = [1, 1]} : vector<2x96xf32> to vector<2x32xf32>
    %911 = vector.extract_strided_slice %907 {offsets = [0, 0], sizes = [2, 32], strides = [1, 1]} : vector<2x96xf32> to vector<2x32xf32>
    %912 = vector.extract_strided_slice %907 {offsets = [0, 32], sizes = [2, 32], strides = [1, 1]} : vector<2x96xf32> to vector<2x32xf32>
    %913 = vector.extract_strided_slice %907 {offsets = [0, 64], sizes = [2, 32], strides = [1, 1]} : vector<2x96xf32> to vector<2x32xf32>
    %914 = arith.addf %908, %911 : vector<2x32xf32>
    %915 = arith.negf %914 : vector<2x32xf32>
    %916 = math.exp %915 : vector<2x32xf32>
    %cst_261 = arith.constant 1.000000e+00 : f32
    %917 = vector.broadcast %cst_261 : f32 to vector<2x32xf32>
    %918 = arith.addf %917, %916 : vector<2x32xf32>
    %919 = arith.divf %917, %918 : vector<2x32xf32>
    %920 = arith.addf %909, %912 : vector<2x32xf32>
    %921 = arith.negf %920 : vector<2x32xf32>
    %922 = math.exp %921 : vector<2x32xf32>
    %cst_262 = arith.constant 1.000000e+00 : f32
    %923 = vector.broadcast %cst_262 : f32 to vector<2x32xf32>
    %924 = arith.addf %923, %922 : vector<2x32xf32>
    %925 = arith.divf %923, %924 : vector<2x32xf32>
    %926 = arith.mulf %919, %913 : vector<2x32xf32>
    %927 = arith.addf %910, %926 : vector<2x32xf32>
    %928 = math.tanh %927 : vector<2x32xf32>
    %cst_263 = arith.constant 1.000000e+00 : f32
    %929 = vector.broadcast %cst_263 : f32 to vector<2x32xf32>
    %930 = arith.subf %929, %925 : vector<2x32xf32>
    %931 = arith.mulf %930, %928 : vector<2x32xf32>
    %932 = arith.mulf %925, %865 : vector<2x32xf32>
    %933 = arith.addf %931, %932 : vector<2x32xf32>
    %934 = vector.extract_strided_slice %601 {offsets = [0, 4, 0], sizes = [2, 1, 32], strides = [1, 1, 1]} : vector<2x8x32xf32> to vector<2x1x32xf32>
    %935 = vector.shape_cast %934 : vector<2x1x32xf32> to vector<2x32xf32>
    %cst_264 = arith.constant dense<0.000000e+00> : vector<2x32xf32>
    %936 = tpu.matmul %933, %602, %cst_264 {dimension_numbers = #tpu.dot_dimension_numbers<[1], [0], [0], [1], [0, 0, 1, 1], [], []>} : vector<2x32xf32>, vector<32x32xf32>, vector<2x32xf32> -> vector<2x32xf32>
    %937 = arith.addf %935, %936 : vector<2x32xf32>
    %cst_265 = arith.constant dense<0.000000e+00> : vector<2x32xf32>
    %938 = tpu.matmul %900, %603, %cst_265 {dimension_numbers = #tpu.dot_dimension_numbers<[1], [0], [0], [1], [0, 0, 1, 1], [], []>} : vector<2x64xf32>, vector<64x32xf32>, vector<2x32xf32> -> vector<2x32xf32>
    %939 = arith.addf %937, %938 : vector<2x32xf32>
    %940 = math.tanh %939 : vector<2x32xf32>
    %c0_266 = arith.constant 0 : index
    %c4_267 = arith.constant 4 : index
    %c0_268 = arith.constant 0 : index
    %941 = vector.load %arg48[%c0_266, %c4_267, %c0_268] : memref<2x8x32xf32, #tpu.memory_space<vmem>>, vector<2x1x32xf32>
    %942 = vector.shape_cast %941 : vector<2x1x32xf32> to vector<2x32xf32>
    %943 = vector.shape_cast %940 : vector<2x32xf32> to vector<2x1x32xf32>
    tpu.vector_store %arg48[%c0_266, %c4_267, %c0_268], %943 {strides = array<i32>} : memref<2x8x32xf32, #tpu.memory_space<vmem>>, vector<2x1x32xf32>,
    %cst_269 = arith.constant dense<0.000000e+00> : vector<2x32xf32>
    %944 = tpu.matmul %933, %579, %cst_269 {dimension_numbers = #tpu.dot_dimension_numbers<[1], [0], [0], [1], [0, 0, 1, 1], [], []>} : vector<2x32xf32>, vector<32x32xf32>, vector<2x32xf32> -> vector<2x32xf32>
    %945 = vector.shape_cast %944 : vector<2x32xf32> to vector<2x1x32xf32>
    %946 = vector.broadcast %945 : vector<2x1x32xf32> to vector<2x8x32xf32>
    %947 = arith.addf %577, %946 : vector<2x8x32xf32>
    %948 = math.tanh %947 : vector<2x8x32xf32>
    %949 = vector.broadcast %578 : vector<1x1x32xf32> to vector<2x8x32xf32>
    %950 = arith.mulf %948, %949 : vector<2x8x32xf32>
    %cst_270 = arith.constant dense<0.000000e+00> : vector<2x8xf32>
    %951 = vector.multi_reduction <add>, %950, %cst_270 [2] : vector<2x8x32xf32> to vector<2x8xf32>
    %cst_271 = arith.constant -1.000000e+09 : f32
    %952 = vector.broadcast %cst_271 : f32 to vector<2x8xf32>
    %953 = arith.select %581, %951, %952 : vector<2x8xi1>, vector<2x8xf32>
    %cst_272 = arith.constant dense<0xFF800000> : vector<2xf32>
    %954 = vector.multi_reduction <maximumf>, %953, %cst_272 [1] : vector<2x8xf32> to vector<2xf32>
    %cst_273 = arith.constant 0xFF800000 : f32
    %955 = vector.broadcast %cst_273 : f32 to vector<2xf32>
    %956 = arith.maximumf %955, %954 : vector<2xf32>
    %957 = vector.shape_cast %956 : vector<2xf32> to vector<2x1xf32>
    %958 = vector.broadcast %957 : vector<2x1xf32> to vector<2x8xf32>
    %959 = arith.subf %953, %958 : vector<2x8xf32>
    %960 = math.exp %959 : vector<2x8xf32>
    %cst_274 = arith.constant dense<0.000000e+00> : vector<2xf32>
    %961 = vector.multi_reduction <add>, %960, %cst_274 [1] : vector<2x8xf32> to vector<2xf32>
    %962 = vector.shape_cast %961 : vector<2xf32> to vector<2x1xf32>
    %963 = vector.broadcast %962 : vector<2x1xf32> to vector<2x8xf32>
    %964 = arith.divf %960, %963 : vector<2x8xf32>
    %965 = vector.shape_cast %964 : vector<2x8xf32> to vector<2x8x1xf32>
    %966 = vector.broadcast %965 : vector<2x8x1xf32> to vector<2x8x64xf32>
    %967 = arith.mulf %966, %573 : vector<2x8x64xf32>
    %cst_275 = arith.constant dense<0.000000e+00> : vector<2x64xf32>
    %968 = vector.multi_reduction <add>, %967, %cst_275 [1] : vector<2x8x64xf32> to vector<2x64xf32>
    %969 = vector.extract_strided_slice %585 {offsets = [0, 5, 0], sizes = [2, 1, 96], strides = [1, 1, 1]} : vector<2x8x96xf32> to vector<2x1x96xf32>
    %970 = vector.shape_cast %969 : vector<2x1x96xf32> to vector<2x96xf32>
    %971 = arith.addf %970, %590 : vector<2x96xf32>
    %cst_276 = arith.constant dense<0.000000e+00> : vector<2x96xf32>
    %972 = tpu.matmul %968, %591, %cst_276 {dimension_numbers = #tpu.dot_dimension_numbers<[1], [0], [0], [1], [0, 0, 1, 1], [], []>} : vector<2x64xf32>, vector<64x96xf32>, vector<2x96xf32> -> vector<2x96xf32>
    %973 = arith.addf %971, %972 : vector<2x96xf32>
    %cst_277 = arith.constant dense<0.000000e+00> : vector<2x96xf32>
    %974 = tpu.matmul %933, %592, %cst_277 {dimension_numbers = #tpu.dot_dimension_numbers<[1], [0], [0], [1], [0, 0, 1, 1], [], []>} : vector<2x32xf32>, vector<32x96xf32>, vector<2x96xf32> -> vector<2x96xf32>
    %975 = arith.addf %974, %595 : vector<2x96xf32>
    %976 = vector.extract_strided_slice %973 {offsets = [0, 0], sizes = [2, 32], strides = [1, 1]} : vector<2x96xf32> to vector<2x32xf32>
    %977 = vector.extract_strided_slice %973 {offsets = [0, 32], sizes = [2, 32], strides = [1, 1]} : vector<2x96xf32> to vector<2x32xf32>
    %978 = vector.extract_strided_slice %973 {offsets = [0, 64], sizes = [2, 32], strides = [1, 1]} : vector<2x96xf32> to vector<2x32xf32>
    %979 = vector.extract_strided_slice %975 {offsets = [0, 0], sizes = [2, 32], strides = [1, 1]} : vector<2x96xf32> to vector<2x32xf32>
    %980 = vector.extract_strided_slice %975 {offsets = [0, 32], sizes = [2, 32], strides = [1, 1]} : vector<2x96xf32> to vector<2x32xf32>
    %981 = vector.extract_strided_slice %975 {offsets = [0, 64], sizes = [2, 32], strides = [1, 1]} : vector<2x96xf32> to vector<2x32xf32>
    %982 = arith.addf %976, %979 : vector<2x32xf32>
    %983 = arith.negf %982 : vector<2x32xf32>
    %984 = math.exp %983 : vector<2x32xf32>
    %cst_278 = arith.constant 1.000000e+00 : f32
    %985 = vector.broadcast %cst_278 : f32 to vector<2x32xf32>
    %986 = arith.addf %985, %984 : vector<2x32xf32>
    %987 = arith.divf %985, %986 : vector<2x32xf32>
    %988 = arith.addf %977, %980 : vector<2x32xf32>
    %989 = arith.negf %988 : vector<2x32xf32>
    %990 = math.exp %989 : vector<2x32xf32>
    %cst_279 = arith.constant 1.000000e+00 : f32
    %991 = vector.broadcast %cst_279 : f32 to vector<2x32xf32>
    %992 = arith.addf %991, %990 : vector<2x32xf32>
    %993 = arith.divf %991, %992 : vector<2x32xf32>
    %994 = arith.mulf %987, %981 : vector<2x32xf32>
    %995 = arith.addf %978, %994 : vector<2x32xf32>
    %996 = math.tanh %995 : vector<2x32xf32>
    %cst_280 = arith.constant 1.000000e+00 : f32
    %997 = vector.broadcast %cst_280 : f32 to vector<2x32xf32>
    %998 = arith.subf %997, %993 : vector<2x32xf32>
    %999 = arith.mulf %998, %996 : vector<2x32xf32>
    %1000 = arith.mulf %993, %933 : vector<2x32xf32>
    %1001 = arith.addf %999, %1000 : vector<2x32xf32>
    %1002 = vector.extract_strided_slice %601 {offsets = [0, 5, 0], sizes = [2, 1, 32], strides = [1, 1, 1]} : vector<2x8x32xf32> to vector<2x1x32xf32>
    %1003 = vector.shape_cast %1002 : vector<2x1x32xf32> to vector<2x32xf32>
    %cst_281 = arith.constant dense<0.000000e+00> : vector<2x32xf32>
    %1004 = tpu.matmul %1001, %602, %cst_281 {dimension_numbers = #tpu.dot_dimension_numbers<[1], [0], [0], [1], [0, 0, 1, 1], [], []>} : vector<2x32xf32>, vector<32x32xf32>, vector<2x32xf32> -> vector<2x32xf32>
    %1005 = arith.addf %1003, %1004 : vector<2x32xf32>
    %cst_282 = arith.constant dense<0.000000e+00> : vector<2x32xf32>
    %1006 = tpu.matmul %968, %603, %cst_282 {dimension_numbers = #tpu.dot_dimension_numbers<[1], [0], [0], [1], [0, 0, 1, 1], [], []>} : vector<2x64xf32>, vector<64x32xf32>, vector<2x32xf32> -> vector<2x32xf32>
    %1007 = arith.addf %1005, %1006 : vector<2x32xf32>
    %1008 = math.tanh %1007 : vector<2x32xf32>
    %c0_283 = arith.constant 0 : index
    %c5_284 = arith.constant 5 : index
    %c0_285 = arith.constant 0 : index
    %1009 = vector.load %arg48[%c0_283, %c5_284, %c0_285] : memref<2x8x32xf32, #tpu.memory_space<vmem>>, vector<2x1x32xf32>
    %1010 = vector.shape_cast %1009 : vector<2x1x32xf32> to vector<2x32xf32>
    %1011 = vector.shape_cast %1008 : vector<2x32xf32> to vector<2x1x32xf32>
    tpu.vector_store %arg48[%c0_283, %c5_284, %c0_285], %1011 {strides = array<i32>} : memref<2x8x32xf32, #tpu.memory_space<vmem>>, vector<2x1x32xf32>,
    %cst_286 = arith.constant dense<0.000000e+00> : vector<2x32xf32>
    %1012 = tpu.matmul %1001, %579, %cst_286 {dimension_numbers = #tpu.dot_dimension_numbers<[1], [0], [0], [1], [0, 0, 1, 1], [], []>} : vector<2x32xf32>, vector<32x32xf32>, vector<2x32xf32> -> vector<2x32xf32>
    %1013 = vector.shape_cast %1012 : vector<2x32xf32> to vector<2x1x32xf32>
    %1014 = vector.broadcast %1013 : vector<2x1x32xf32> to vector<2x8x32xf32>
    %1015 = arith.addf %577, %1014 : vector<2x8x32xf32>
    %1016 = math.tanh %1015 : vector<2x8x32xf32>
    %1017 = vector.broadcast %578 : vector<1x1x32xf32> to vector<2x8x32xf32>
    %1018 = arith.mulf %1016, %1017 : vector<2x8x32xf32>
    %cst_287 = arith.constant dense<0.000000e+00> : vector<2x8xf32>
    %1019 = vector.multi_reduction <add>, %1018, %cst_287 [2] : vector<2x8x32xf32> to vector<2x8xf32>
    %cst_288 = arith.constant -1.000000e+09 : f32
    %1020 = vector.broadcast %cst_288 : f32 to vector<2x8xf32>
    %1021 = arith.select %581, %1019, %1020 : vector<2x8xi1>, vector<2x8xf32>
    %cst_289 = arith.constant dense<0xFF800000> : vector<2xf32>
    %1022 = vector.multi_reduction <maximumf>, %1021, %cst_289 [1] : vector<2x8xf32> to vector<2xf32>
    %cst_290 = arith.constant 0xFF800000 : f32
    %1023 = vector.broadcast %cst_290 : f32 to vector<2xf32>
    %1024 = arith.maximumf %1023, %1022 : vector<2xf32>
    %1025 = vector.shape_cast %1024 : vector<2xf32> to vector<2x1xf32>
    %1026 = vector.broadcast %1025 : vector<2x1xf32> to vector<2x8xf32>
    %1027 = arith.subf %1021, %1026 : vector<2x8xf32>
    %1028 = math.exp %1027 : vector<2x8xf32>
    %cst_291 = arith.constant dense<0.000000e+00> : vector<2xf32>
    %1029 = vector.multi_reduction <add>, %1028, %cst_291 [1] : vector<2x8xf32> to vector<2xf32>
    %1030 = vector.shape_cast %1029 : vector<2xf32> to vector<2x1xf32>
    %1031 = vector.broadcast %1030 : vector<2x1xf32> to vector<2x8xf32>
    %1032 = arith.divf %1028, %1031 : vector<2x8xf32>
    %1033 = vector.shape_cast %1032 : vector<2x8xf32> to vector<2x8x1xf32>
    %1034 = vector.broadcast %1033 : vector<2x8x1xf32> to vector<2x8x64xf32>
    %1035 = arith.mulf %1034, %573 : vector<2x8x64xf32>
    %cst_292 = arith.constant dense<0.000000e+00> : vector<2x64xf32>
    %1036 = vector.multi_reduction <add>, %1035, %cst_292 [1] : vector<2x8x64xf32> to vector<2x64xf32>
    %1037 = vector.extract_strided_slice %585 {offsets = [0, 6, 0], sizes = [2, 1, 96], strides = [1, 1, 1]} : vector<2x8x96xf32> to vector<2x1x96xf32>
    %1038 = vector.shape_cast %1037 : vector<2x1x96xf32> to vector<2x96xf32>
    %1039 = arith.addf %1038, %590 : vector<2x96xf32>
    %cst_293 = arith.constant dense<0.000000e+00> : vector<2x96xf32>
    %1040 = tpu.matmul %1036, %591, %cst_293 {dimension_numbers = #tpu.dot_dimension_numbers<[1], [0], [0], [1], [0, 0, 1, 1], [], []>} : vector<2x64xf32>, vector<64x96xf32>, vector<2x96xf32> -> vector<2x96xf32>
    %1041 = arith.addf %1039, %1040 : vector<2x96xf32>
    %cst_294 = arith.constant dense<0.000000e+00> : vector<2x96xf32>
    %1042 = tpu.matmul %1001, %592, %cst_294 {dimension_numbers = #tpu.dot_dimension_numbers<[1], [0], [0], [1], [0, 0, 1, 1], [], []>} : vector<2x32xf32>, vector<32x96xf32>, vector<2x96xf32> -> vector<2x96xf32>
    %1043 = arith.addf %1042, %595 : vector<2x96xf32>
    %1044 = vector.extract_strided_slice %1041 {offsets = [0, 0], sizes = [2, 32], strides = [1, 1]} : vector<2x96xf32> to vector<2x32xf32>
    %1045 = vector.extract_strided_slice %1041 {offsets = [0, 32], sizes = [2, 32], strides = [1, 1]} : vector<2x96xf32> to vector<2x32xf32>
    %1046 = vector.extract_strided_slice %1041 {offsets = [0, 64], sizes = [2, 32], strides = [1, 1]} : vector<2x96xf32> to vector<2x32xf32>
    %1047 = vector.extract_strided_slice %1043 {offsets = [0, 0], sizes = [2, 32], strides = [1, 1]} : vector<2x96xf32> to vector<2x32xf32>
    %1048 = vector.extract_strided_slice %1043 {offsets = [0, 32], sizes = [2, 32], strides = [1, 1]} : vector<2x96xf32> to vector<2x32xf32>
    %1049 = vector.extract_strided_slice %1043 {offsets = [0, 64], sizes = [2, 32], strides = [1, 1]} : vector<2x96xf32> to vector<2x32xf32>
    %1050 = arith.addf %1044, %1047 : vector<2x32xf32>
    %1051 = arith.negf %1050 : vector<2x32xf32>
    %1052 = math.exp %1051 : vector<2x32xf32>
    %cst_295 = arith.constant 1.000000e+00 : f32
    %1053 = vector.broadcast %cst_295 : f32 to vector<2x32xf32>
    %1054 = arith.addf %1053, %1052 : vector<2x32xf32>
    %1055 = arith.divf %1053, %1054 : vector<2x32xf32>
    %1056 = arith.addf %1045, %1048 : vector<2x32xf32>
    %1057 = arith.negf %1056 : vector<2x32xf32>
    %1058 = math.exp %1057 : vector<2x32xf32>
    %cst_296 = arith.constant 1.000000e+00 : f32
    %1059 = vector.broadcast %cst_296 : f32 to vector<2x32xf32>
    %1060 = arith.addf %1059, %1058 : vector<2x32xf32>
    %1061 = arith.divf %1059, %1060 : vector<2x32xf32>
    %1062 = arith.mulf %1055, %1049 : vector<2x32xf32>
    %1063 = arith.addf %1046, %1062 : vector<2x32xf32>
    %1064 = math.tanh %1063 : vector<2x32xf32>
    %cst_297 = arith.constant 1.000000e+00 : f32
    %1065 = vector.broadcast %cst_297 : f32 to vector<2x32xf32>
    %1066 = arith.subf %1065, %1061 : vector<2x32xf32>
    %1067 = arith.mulf %1066, %1064 : vector<2x32xf32>
    %1068 = arith.mulf %1061, %1001 : vector<2x32xf32>
    %1069 = arith.addf %1067, %1068 : vector<2x32xf32>
    %1070 = vector.extract_strided_slice %601 {offsets = [0, 6, 0], sizes = [2, 1, 32], strides = [1, 1, 1]} : vector<2x8x32xf32> to vector<2x1x32xf32>
    %1071 = vector.shape_cast %1070 : vector<2x1x32xf32> to vector<2x32xf32>
    %cst_298 = arith.constant dense<0.000000e+00> : vector<2x32xf32>
    %1072 = tpu.matmul %1069, %602, %cst_298 {dimension_numbers = #tpu.dot_dimension_numbers<[1], [0], [0], [1], [0, 0, 1, 1], [], []>} : vector<2x32xf32>, vector<32x32xf32>, vector<2x32xf32> -> vector<2x32xf32>
    %1073 = arith.addf %1071, %1072 : vector<2x32xf32>
    %cst_299 = arith.constant dense<0.000000e+00> : vector<2x32xf32>
    %1074 = tpu.matmul %1036, %603, %cst_299 {dimension_numbers = #tpu.dot_dimension_numbers<[1], [0], [0], [1], [0, 0, 1, 1], [], []>} : vector<2x64xf32>, vector<64x32xf32>, vector<2x32xf32> -> vector<2x32xf32>
    %1075 = arith.addf %1073, %1074 : vector<2x32xf32>
    %1076 = math.tanh %1075 : vector<2x32xf32>
    %c0_300 = arith.constant 0 : index
    %c6_301 = arith.constant 6 : index
    %c0_302 = arith.constant 0 : index
    %1077 = vector.load %arg48[%c0_300, %c6_301, %c0_302] : memref<2x8x32xf32, #tpu.memory_space<vmem>>, vector<2x1x32xf32>
    %1078 = vector.shape_cast %1077 : vector<2x1x32xf32> to vector<2x32xf32>
    %1079 = vector.shape_cast %1076 : vector<2x32xf32> to vector<2x1x32xf32>
    tpu.vector_store %arg48[%c0_300, %c6_301, %c0_302], %1079 {strides = array<i32>} : memref<2x8x32xf32, #tpu.memory_space<vmem>>, vector<2x1x32xf32>,
    %cst_303 = arith.constant dense<0.000000e+00> : vector<2x32xf32>
    %1080 = tpu.matmul %1069, %579, %cst_303 {dimension_numbers = #tpu.dot_dimension_numbers<[1], [0], [0], [1], [0, 0, 1, 1], [], []>} : vector<2x32xf32>, vector<32x32xf32>, vector<2x32xf32> -> vector<2x32xf32>
    %1081 = vector.shape_cast %1080 : vector<2x32xf32> to vector<2x1x32xf32>
    %1082 = vector.broadcast %1081 : vector<2x1x32xf32> to vector<2x8x32xf32>
    %1083 = arith.addf %577, %1082 : vector<2x8x32xf32>
    %1084 = math.tanh %1083 : vector<2x8x32xf32>
    %1085 = vector.broadcast %578 : vector<1x1x32xf32> to vector<2x8x32xf32>
    %1086 = arith.mulf %1084, %1085 : vector<2x8x32xf32>
    %cst_304 = arith.constant dense<0.000000e+00> : vector<2x8xf32>
    %1087 = vector.multi_reduction <add>, %1086, %cst_304 [2] : vector<2x8x32xf32> to vector<2x8xf32>
    %cst_305 = arith.constant -1.000000e+09 : f32
    %1088 = vector.broadcast %cst_305 : f32 to vector<2x8xf32>
    %1089 = arith.select %581, %1087, %1088 : vector<2x8xi1>, vector<2x8xf32>
    %cst_306 = arith.constant dense<0xFF800000> : vector<2xf32>
    %1090 = vector.multi_reduction <maximumf>, %1089, %cst_306 [1] : vector<2x8xf32> to vector<2xf32>
    %cst_307 = arith.constant 0xFF800000 : f32
    %1091 = vector.broadcast %cst_307 : f32 to vector<2xf32>
    %1092 = arith.maximumf %1091, %1090 : vector<2xf32>
    %1093 = vector.shape_cast %1092 : vector<2xf32> to vector<2x1xf32>
    %1094 = vector.broadcast %1093 : vector<2x1xf32> to vector<2x8xf32>
    %1095 = arith.subf %1089, %1094 : vector<2x8xf32>
    %1096 = math.exp %1095 : vector<2x8xf32>
    %cst_308 = arith.constant dense<0.000000e+00> : vector<2xf32>
    %1097 = vector.multi_reduction <add>, %1096, %cst_308 [1] : vector<2x8xf32> to vector<2xf32>
    %1098 = vector.shape_cast %1097 : vector<2xf32> to vector<2x1xf32>
    %1099 = vector.broadcast %1098 : vector<2x1xf32> to vector<2x8xf32>
    %1100 = arith.divf %1096, %1099 : vector<2x8xf32>
    %1101 = vector.shape_cast %1100 : vector<2x8xf32> to vector<2x8x1xf32>
    %1102 = vector.broadcast %1101 : vector<2x8x1xf32> to vector<2x8x64xf32>
    %1103 = arith.mulf %1102, %573 : vector<2x8x64xf32>
    %cst_309 = arith.constant dense<0.000000e+00> : vector<2x64xf32>
    %1104 = vector.multi_reduction <add>, %1103, %cst_309 [1] : vector<2x8x64xf32> to vector<2x64xf32>
    %1105 = vector.extract_strided_slice %585 {offsets = [0, 7, 0], sizes = [2, 1, 96], strides = [1, 1, 1]} : vector<2x8x96xf32> to vector<2x1x96xf32>
    %1106 = vector.shape_cast %1105 : vector<2x1x96xf32> to vector<2x96xf32>
    %1107 = arith.addf %1106, %590 : vector<2x96xf32>
    %cst_310 = arith.constant dense<0.000000e+00> : vector<2x96xf32>
    %1108 = tpu.matmul %1104, %591, %cst_310 {dimension_numbers = #tpu.dot_dimension_numbers<[1], [0], [0], [1], [0, 0, 1, 1], [], []>} : vector<2x64xf32>, vector<64x96xf32>, vector<2x96xf32> -> vector<2x96xf32>
    %1109 = arith.addf %1107, %1108 : vector<2x96xf32>
    %cst_311 = arith.constant dense<0.000000e+00> : vector<2x96xf32>
    %1110 = tpu.matmul %1069, %592, %cst_311 {dimension_numbers = #tpu.dot_dimension_numbers<[1], [0], [0], [1], [0, 0, 1, 1], [], []>} : vector<2x32xf32>, vector<32x96xf32>, vector<2x96xf32> -> vector<2x96xf32>
    %1111 = arith.addf %1110, %595 : vector<2x96xf32>
    %1112 = vector.extract_strided_slice %1109 {offsets = [0, 0], sizes = [2, 32], strides = [1, 1]} : vector<2x96xf32> to vector<2x32xf32>
    %1113 = vector.extract_strided_slice %1109 {offsets = [0, 32], sizes = [2, 32], strides = [1, 1]} : vector<2x96xf32> to vector<2x32xf32>
    %1114 = vector.extract_strided_slice %1109 {offsets = [0, 64], sizes = [2, 32], strides = [1, 1]} : vector<2x96xf32> to vector<2x32xf32>
    %1115 = vector.extract_strided_slice %1111 {offsets = [0, 0], sizes = [2, 32], strides = [1, 1]} : vector<2x96xf32> to vector<2x32xf32>
    %1116 = vector.extract_strided_slice %1111 {offsets = [0, 32], sizes = [2, 32], strides = [1, 1]} : vector<2x96xf32> to vector<2x32xf32>
    %1117 = vector.extract_strided_slice %1111 {offsets = [0, 64], sizes = [2, 32], strides = [1, 1]} : vector<2x96xf32> to vector<2x32xf32>
    %1118 = arith.addf %1112, %1115 : vector<2x32xf32>
    %1119 = arith.negf %1118 : vector<2x32xf32>
    %1120 = math.exp %1119 : vector<2x32xf32>
    %cst_312 = arith.constant 1.000000e+00 : f32
    %1121 = vector.broadcast %cst_312 : f32 to vector<2x32xf32>
    %1122 = arith.addf %1121, %1120 : vector<2x32xf32>
    %1123 = arith.divf %1121, %1122 : vector<2x32xf32>
    %1124 = arith.addf %1113, %1116 : vector<2x32xf32>
    %1125 = arith.negf %1124 : vector<2x32xf32>
    %1126 = math.exp %1125 : vector<2x32xf32>
    %cst_313 = arith.constant 1.000000e+00 : f32
    %1127 = vector.broadcast %cst_313 : f32 to vector<2x32xf32>
    %1128 = arith.addf %1127, %1126 : vector<2x32xf32>
    %1129 = arith.divf %1127, %1128 : vector<2x32xf32>
    %1130 = arith.mulf %1123, %1117 : vector<2x32xf32>
    %1131 = arith.addf %1114, %1130 : vector<2x32xf32>
    %1132 = math.tanh %1131 : vector<2x32xf32>
    %cst_314 = arith.constant 1.000000e+00 : f32
    %1133 = vector.broadcast %cst_314 : f32 to vector<2x32xf32>
    %1134 = arith.subf %1133, %1129 : vector<2x32xf32>
    %1135 = arith.mulf %1134, %1132 : vector<2x32xf32>
    %1136 = arith.mulf %1129, %1069 : vector<2x32xf32>
    %1137 = arith.addf %1135, %1136 : vector<2x32xf32>
    %1138 = vector.extract_strided_slice %601 {offsets = [0, 7, 0], sizes = [2, 1, 32], strides = [1, 1, 1]} : vector<2x8x32xf32> to vector<2x1x32xf32>
    %1139 = vector.shape_cast %1138 : vector<2x1x32xf32> to vector<2x32xf32>
    %cst_315 = arith.constant dense<0.000000e+00> : vector<2x32xf32>
    %1140 = tpu.matmul %1137, %602, %cst_315 {dimension_numbers = #tpu.dot_dimension_numbers<[1], [0], [0], [1], [0, 0, 1, 1], [], []>} : vector<2x32xf32>, vector<32x32xf32>, vector<2x32xf32> -> vector<2x32xf32>
    %1141 = arith.addf %1139, %1140 : vector<2x32xf32>
    %cst_316 = arith.constant dense<0.000000e+00> : vector<2x32xf32>
    %1142 = tpu.matmul %1104, %603, %cst_316 {dimension_numbers = #tpu.dot_dimension_numbers<[1], [0], [0], [1], [0, 0, 1, 1], [], []>} : vector<2x64xf32>, vector<64x32xf32>, vector<2x32xf32> -> vector<2x32xf32>
    %1143 = arith.addf %1141, %1142 : vector<2x32xf32>
    %1144 = math.tanh %1143 : vector<2x32xf32>
    %c0_317 = arith.constant 0 : index
    %c7_318 = arith.constant 7 : index
    %c0_319 = arith.constant 0 : index
    %1145 = vector.load %arg48[%c0_317, %c7_318, %c0_319] : memref<2x8x32xf32, #tpu.memory_space<vmem>>, vector<2x1x32xf32>
    %1146 = vector.shape_cast %1145 : vector<2x1x32xf32> to vector<2x32xf32>
    %1147 = vector.shape_cast %1144 : vector<2x32xf32> to vector<2x1x32xf32>
    tpu.vector_store %arg48[%c0_317, %c7_318, %c0_319], %1147 {strides = array<i32>} : memref<2x8x32xf32, #tpu.memory_space<vmem>>, vector<2x1x32xf32>,
    %c0_320 = arith.constant 0 : index
    %c0_321 = arith.constant 0 : index
    %c0_322 = arith.constant 0 : index
    %1148 = vector.load %arg48[%c0_320, %c0_321, %c0_322] : memref<2x8x32xf32, #tpu.memory_space<vmem>>, vector<2x8x32xf32>
    %1149 = vector.shape_cast %1148 : vector<2x8x32xf32> to vector<16x32xf32>
    %c0_323 = arith.constant 0 : index
    %c0_324 = arith.constant 0 : index
    %1150 = vector.load %arg36[%c0_323, %c0_324] : memref<32x64xf32, #tpu.memory_space<vmem>>, vector<32x64xf32>
    %cst_325 = arith.constant dense<0.000000e+00> : vector<16x64xf32>
    %1151 = tpu.matmul %1149, %1150, %cst_325 {dimension_numbers = #tpu.dot_dimension_numbers<[1], [0], [0], [1], [0, 0, 1, 1], [], []>} : vector<16x32xf32>, vector<32x64xf32>, vector<16x64xf32> -> vector<16x64xf32>
    %1152 = vector.shape_cast %1151 : vector<16x64xf32> to vector<2x8x64xf32>
    %c0_326 = arith.constant 0 : index
    %c0_327 = arith.constant 0 : index
    %c0_328 = arith.constant 0 : index
    %1153 = vector.load %arg42[%c0_326, %c0_327, %c0_328] : memref<2x8x64xf32, #tpu.memory_space<vmem>>, vector<2x8x64xf32>
    tpu.vector_store %arg42[%c0_326, %c0_327, %c0_328], %1152 {strides = array<i32>} : memref<2x8x64xf32, #tpu.memory_space<vmem>>, vector<2x8x64xf32>,
    %c0_329 = arith.constant 0 : index
    %c0_330 = arith.constant 0 : index
    %1154 = vector.load %arg31[%c0_329, %c0_330] : memref<32x96xf32, #tpu.memory_space<vmem>>, vector<32x96xf32>
    %cst_331 = arith.constant dense<0.000000e+00> : vector<16x96xf32>
    %1155 = tpu.matmul %22, %1154, %cst_331 {dimension_numbers = #tpu.dot_dimension_numbers<[1], [0], [0], [1], [0, 0, 1, 1], [], []>} : vector<16x32xf32>, vector<32x96xf32>, vector<16x96xf32> -> vector<16x96xf32>
    %1156 = vector.shape_cast %1155 : vector<16x96xf32> to vector<2x8x96xf32>
    %c0_332 = arith.constant 0 : index
    %c0_333 = arith.constant 0 : index
    %1157 = vector.load %arg32[%c0_332, %c0_333] : memref<16x96xf32, #tpu.memory_space<vmem>>, vector<16x96xf32>
    %cst_334 = arith.constant dense<0.000000e+00> : vector<2x96xf32>
    %1158 = tpu.matmul %3, %1157, %cst_334 {dimension_numbers = #tpu.dot_dimension_numbers<[1], [0], [0], [1], [0, 0, 1, 1], [], []>} : vector<2x16xf32>, vector<16x96xf32>, vector<2x96xf32> -> vector<2x96xf32>
    %c0_335 = arith.constant 0 : index
    %c0_336 = arith.constant 0 : index
    %1159 = vector.load %arg34[%c0_335, %c0_336] : memref<1x96xf32, #tpu.memory_space<vmem>>, vector<1x96xf32>
    %1160 = vector.broadcast %1159 : vector<1x96xf32> to vector<2x96xf32>
    %1161 = arith.addf %1158, %1160 : vector<2x96xf32>
    %c0_337 = arith.constant 0 : index
    %c0_338 = arith.constant 0 : index
    %1162 = vector.load %arg33[%c0_337, %c0_338] : memref<32x96xf32, #tpu.memory_space<vmem>>, vector<32x96xf32>
    %c0_339 = arith.constant 0 : index
    %c0_340 = arith.constant 0 : index
    %1163 = vector.load %arg35[%c0_339, %c0_340] : memref<1x96xf32, #tpu.memory_space<vmem>>, vector<1x96xf32>
    %1164 = vector.shape_cast %1163 : vector<1x96xf32> to vector<1x96xf32>
    %1165 = vector.broadcast %1164 : vector<1x96xf32> to vector<2x96xf32>
    %1166 = vector.extract_strided_slice %1156 {offsets = [0, 0, 0], sizes = [2, 1, 96], strides = [1, 1, 1]} : vector<2x8x96xf32> to vector<2x1x96xf32>
    %1167 = vector.shape_cast %1166 : vector<2x1x96xf32> to vector<2x96xf32>
    %1168 = arith.addf %1167, %1161 : vector<2x96xf32>
    %cst_341 = arith.constant dense<0.000000e+00> : vector<2x96xf32>
    %1169 = tpu.matmul %21, %1162, %cst_341 {dimension_numbers = #tpu.dot_dimension_numbers<[1], [0], [0], [1], [0, 0, 1, 1], [], []>} : vector<2x32xf32>, vector<32x96xf32>, vector<2x96xf32> -> vector<2x96xf32>
    %1170 = arith.addf %1169, %1165 : vector<2x96xf32>
    %1171 = vector.extract_strided_slice %1168 {offsets = [0, 0], sizes = [2, 32], strides = [1, 1]} : vector<2x96xf32> to vector<2x32xf32>
    %1172 = vector.extract_strided_slice %1168 {offsets = [0, 32], sizes = [2, 32], strides = [1, 1]} : vector<2x96xf32> to vector<2x32xf32>
    %1173 = vector.extract_strided_slice %1168 {offsets = [0, 64], sizes = [2, 32], strides = [1, 1]} : vector<2x96xf32> to vector<2x32xf32>
    %1174 = vector.extract_strided_slice %1170 {offsets = [0, 0], sizes = [2, 32], strides = [1, 1]} : vector<2x96xf32> to vector<2x32xf32>
    %1175 = vector.extract_strided_slice %1170 {offsets = [0, 32], sizes = [2, 32], strides = [1, 1]} : vector<2x96xf32> to vector<2x32xf32>
    %1176 = vector.extract_strided_slice %1170 {offsets = [0, 64], sizes = [2, 32], strides = [1, 1]} : vector<2x96xf32> to vector<2x32xf32>
    %1177 = arith.addf %1171, %1174 : vector<2x32xf32>
    %1178 = arith.negf %1177 : vector<2x32xf32>
    %1179 = math.exp %1178 : vector<2x32xf32>
    %cst_342 = arith.constant 1.000000e+00 : f32
    %1180 = vector.broadcast %cst_342 : f32 to vector<2x32xf32>
    %1181 = arith.addf %1180, %1179 : vector<2x32xf32>
    %1182 = arith.divf %1180, %1181 : vector<2x32xf32>
    %1183 = arith.addf %1172, %1175 : vector<2x32xf32>
    %1184 = arith.negf %1183 : vector<2x32xf32>
    %1185 = math.exp %1184 : vector<2x32xf32>
    %cst_343 = arith.constant 1.000000e+00 : f32
    %1186 = vector.broadcast %cst_343 : f32 to vector<2x32xf32>
    %1187 = arith.addf %1186, %1185 : vector<2x32xf32>
    %1188 = arith.divf %1186, %1187 : vector<2x32xf32>
    %1189 = arith.mulf %1182, %1176 : vector<2x32xf32>
    %1190 = arith.addf %1173, %1189 : vector<2x32xf32>
    %1191 = math.tanh %1190 : vector<2x32xf32>
    %cst_344 = arith.constant 1.000000e+00 : f32
    %1192 = vector.broadcast %cst_344 : f32 to vector<2x32xf32>
    %1193 = arith.subf %1192, %1188 : vector<2x32xf32>
    %1194 = arith.mulf %1193, %1191 : vector<2x32xf32>
    %1195 = arith.mulf %1188, %21 : vector<2x32xf32>
    %1196 = arith.addf %1194, %1195 : vector<2x32xf32>
    %c0_345 = arith.constant 0 : index
    %c0_346 = arith.constant 0 : index
    %c0_347 = arith.constant 0 : index
    %1197 = vector.load %arg49[%c0_345, %c0_346, %c0_347] : memref<2x8x32xf32, #tpu.memory_space<vmem>>, vector<2x1x32xf32>
    %1198 = vector.shape_cast %1197 : vector<2x1x32xf32> to vector<2x32xf32>
    %1199 = vector.shape_cast %1196 : vector<2x32xf32> to vector<2x1x32xf32>
    tpu.vector_store %arg49[%c0_345, %c0_346, %c0_347], %1199 {strides = array<i32>} : memref<2x8x32xf32, #tpu.memory_space<vmem>>, vector<2x1x32xf32>,
    %1200 = vector.extract_strided_slice %1156 {offsets = [0, 1, 0], sizes = [2, 1, 96], strides = [1, 1, 1]} : vector<2x8x96xf32> to vector<2x1x96xf32>
    %1201 = vector.shape_cast %1200 : vector<2x1x96xf32> to vector<2x96xf32>
    %1202 = arith.addf %1201, %1161 : vector<2x96xf32>
    %cst_348 = arith.constant dense<0.000000e+00> : vector<2x96xf32>
    %1203 = tpu.matmul %1196, %1162, %cst_348 {dimension_numbers = #tpu.dot_dimension_numbers<[1], [0], [0], [1], [0, 0, 1, 1], [], []>} : vector<2x32xf32>, vector<32x96xf32>, vector<2x96xf32> -> vector<2x96xf32>
    %1204 = arith.addf %1203, %1165 : vector<2x96xf32>
    %1205 = vector.extract_strided_slice %1202 {offsets = [0, 0], sizes = [2, 32], strides = [1, 1]} : vector<2x96xf32> to vector<2x32xf32>
    %1206 = vector.extract_strided_slice %1202 {offsets = [0, 32], sizes = [2, 32], strides = [1, 1]} : vector<2x96xf32> to vector<2x32xf32>
    %1207 = vector.extract_strided_slice %1202 {offsets = [0, 64], sizes = [2, 32], strides = [1, 1]} : vector<2x96xf32> to vector<2x32xf32>
    %1208 = vector.extract_strided_slice %1204 {offsets = [0, 0], sizes = [2, 32], strides = [1, 1]} : vector<2x96xf32> to vector<2x32xf32>
    %1209 = vector.extract_strided_slice %1204 {offsets = [0, 32], sizes = [2, 32], strides = [1, 1]} : vector<2x96xf32> to vector<2x32xf32>
    %1210 = vector.extract_strided_slice %1204 {offsets = [0, 64], sizes = [2, 32], strides = [1, 1]} : vector<2x96xf32> to vector<2x32xf32>
    %1211 = arith.addf %1205, %1208 : vector<2x32xf32>
    %1212 = arith.negf %1211 : vector<2x32xf32>
    %1213 = math.exp %1212 : vector<2x32xf32>
    %cst_349 = arith.constant 1.000000e+00 : f32
    %1214 = vector.broadcast %cst_349 : f32 to vector<2x32xf32>
    %1215 = arith.addf %1214, %1213 : vector<2x32xf32>
    %1216 = arith.divf %1214, %1215 : vector<2x32xf32>
    %1217 = arith.addf %1206, %1209 : vector<2x32xf32>
    %1218 = arith.negf %1217 : vector<2x32xf32>
    %1219 = math.exp %1218 : vector<2x32xf32>
    %cst_350 = arith.constant 1.000000e+00 : f32
    %1220 = vector.broadcast %cst_350 : f32 to vector<2x32xf32>
    %1221 = arith.addf %1220, %1219 : vector<2x32xf32>
    %1222 = arith.divf %1220, %1221 : vector<2x32xf32>
    %1223 = arith.mulf %1216, %1210 : vector<2x32xf32>
    %1224 = arith.addf %1207, %1223 : vector<2x32xf32>
    %1225 = math.tanh %1224 : vector<2x32xf32>
    %cst_351 = arith.constant 1.000000e+00 : f32
    %1226 = vector.broadcast %cst_351 : f32 to vector<2x32xf32>
    %1227 = arith.subf %1226, %1222 : vector<2x32xf32>
    %1228 = arith.mulf %1227, %1225 : vector<2x32xf32>
    %1229 = arith.mulf %1222, %1196 : vector<2x32xf32>
    %1230 = arith.addf %1228, %1229 : vector<2x32xf32>
    %c0_352 = arith.constant 0 : index
    %c1_353 = arith.constant 1 : index
    %c0_354 = arith.constant 0 : index
    %1231 = vector.load %arg49[%c0_352, %c1_353, %c0_354] : memref<2x8x32xf32, #tpu.memory_space<vmem>>, vector<2x1x32xf32>
    %1232 = vector.shape_cast %1231 : vector<2x1x32xf32> to vector<2x32xf32>
    %1233 = vector.shape_cast %1230 : vector<2x32xf32> to vector<2x1x32xf32>
    tpu.vector_store %arg49[%c0_352, %c1_353, %c0_354], %1233 {strides = array<i32>} : memref<2x8x32xf32, #tpu.memory_space<vmem>>, vector<2x1x32xf32>,
    %1234 = vector.extract_strided_slice %1156 {offsets = [0, 2, 0], sizes = [2, 1, 96], strides = [1, 1, 1]} : vector<2x8x96xf32> to vector<2x1x96xf32>
    %1235 = vector.shape_cast %1234 : vector<2x1x96xf32> to vector<2x96xf32>
    %1236 = arith.addf %1235, %1161 : vector<2x96xf32>
    %cst_355 = arith.constant dense<0.000000e+00> : vector<2x96xf32>
    %1237 = tpu.matmul %1230, %1162, %cst_355 {dimension_numbers = #tpu.dot_dimension_numbers<[1], [0], [0], [1], [0, 0, 1, 1], [], []>} : vector<2x32xf32>, vector<32x96xf32>, vector<2x96xf32> -> vector<2x96xf32>
    %1238 = arith.addf %1237, %1165 : vector<2x96xf32>
    %1239 = vector.extract_strided_slice %1236 {offsets = [0, 0], sizes = [2, 32], strides = [1, 1]} : vector<2x96xf32> to vector<2x32xf32>
    %1240 = vector.extract_strided_slice %1236 {offsets = [0, 32], sizes = [2, 32], strides = [1, 1]} : vector<2x96xf32> to vector<2x32xf32>
    %1241 = vector.extract_strided_slice %1236 {offsets = [0, 64], sizes = [2, 32], strides = [1, 1]} : vector<2x96xf32> to vector<2x32xf32>
    %1242 = vector.extract_strided_slice %1238 {offsets = [0, 0], sizes = [2, 32], strides = [1, 1]} : vector<2x96xf32> to vector<2x32xf32>
    %1243 = vector.extract_strided_slice %1238 {offsets = [0, 32], sizes = [2, 32], strides = [1, 1]} : vector<2x96xf32> to vector<2x32xf32>
    %1244 = vector.extract_strided_slice %1238 {offsets = [0, 64], sizes = [2, 32], strides = [1, 1]} : vector<2x96xf32> to vector<2x32xf32>
    %1245 = arith.addf %1239, %1242 : vector<2x32xf32>
    %1246 = arith.negf %1245 : vector<2x32xf32>
    %1247 = math.exp %1246 : vector<2x32xf32>
    %cst_356 = arith.constant 1.000000e+00 : f32
    %1248 = vector.broadcast %cst_356 : f32 to vector<2x32xf32>
    %1249 = arith.addf %1248, %1247 : vector<2x32xf32>
    %1250 = arith.divf %1248, %1249 : vector<2x32xf32>
    %1251 = arith.addf %1240, %1243 : vector<2x32xf32>
    %1252 = arith.negf %1251 : vector<2x32xf32>
    %1253 = math.exp %1252 : vector<2x32xf32>
    %cst_357 = arith.constant 1.000000e+00 : f32
    %1254 = vector.broadcast %cst_357 : f32 to vector<2x32xf32>
    %1255 = arith.addf %1254, %1253 : vector<2x32xf32>
    %1256 = arith.divf %1254, %1255 : vector<2x32xf32>
    %1257 = arith.mulf %1250, %1244 : vector<2x32xf32>
    %1258 = arith.addf %1241, %1257 : vector<2x32xf32>
    %1259 = math.tanh %1258 : vector<2x32xf32>
    %cst_358 = arith.constant 1.000000e+00 : f32
    %1260 = vector.broadcast %cst_358 : f32 to vector<2x32xf32>
    %1261 = arith.subf %1260, %1256 : vector<2x32xf32>
    %1262 = arith.mulf %1261, %1259 : vector<2x32xf32>
    %1263 = arith.mulf %1256, %1230 : vector<2x32xf32>
    %1264 = arith.addf %1262, %1263 : vector<2x32xf32>
    %c0_359 = arith.constant 0 : index
    %c2_360 = arith.constant 2 : index
    %c0_361 = arith.constant 0 : index
    %1265 = vector.load %arg49[%c0_359, %c2_360, %c0_361] : memref<2x8x32xf32, #tpu.memory_space<vmem>>, vector<2x1x32xf32>
    %1266 = vector.shape_cast %1265 : vector<2x1x32xf32> to vector<2x32xf32>
    %1267 = vector.shape_cast %1264 : vector<2x32xf32> to vector<2x1x32xf32>
    tpu.vector_store %arg49[%c0_359, %c2_360, %c0_361], %1267 {strides = array<i32>} : memref<2x8x32xf32, #tpu.memory_space<vmem>>, vector<2x1x32xf32>,
    %1268 = vector.extract_strided_slice %1156 {offsets = [0, 3, 0], sizes = [2, 1, 96], strides = [1, 1, 1]} : vector<2x8x96xf32> to vector<2x1x96xf32>
    %1269 = vector.shape_cast %1268 : vector<2x1x96xf32> to vector<2x96xf32>
    %1270 = arith.addf %1269, %1161 : vector<2x96xf32>
    %cst_362 = arith.constant dense<0.000000e+00> : vector<2x96xf32>
    %1271 = tpu.matmul %1264, %1162, %cst_362 {dimension_numbers = #tpu.dot_dimension_numbers<[1], [0], [0], [1], [0, 0, 1, 1], [], []>} : vector<2x32xf32>, vector<32x96xf32>, vector<2x96xf32> -> vector<2x96xf32>
    %1272 = arith.addf %1271, %1165 : vector<2x96xf32>
    %1273 = vector.extract_strided_slice %1270 {offsets = [0, 0], sizes = [2, 32], strides = [1, 1]} : vector<2x96xf32> to vector<2x32xf32>
    %1274 = vector.extract_strided_slice %1270 {offsets = [0, 32], sizes = [2, 32], strides = [1, 1]} : vector<2x96xf32> to vector<2x32xf32>
    %1275 = vector.extract_strided_slice %1270 {offsets = [0, 64], sizes = [2, 32], strides = [1, 1]} : vector<2x96xf32> to vector<2x32xf32>
    %1276 = vector.extract_strided_slice %1272 {offsets = [0, 0], sizes = [2, 32], strides = [1, 1]} : vector<2x96xf32> to vector<2x32xf32>
    %1277 = vector.extract_strided_slice %1272 {offsets = [0, 32], sizes = [2, 32], strides = [1, 1]} : vector<2x96xf32> to vector<2x32xf32>
    %1278 = vector.extract_strided_slice %1272 {offsets = [0, 64], sizes = [2, 32], strides = [1, 1]} : vector<2x96xf32> to vector<2x32xf32>
    %1279 = arith.addf %1273, %1276 : vector<2x32xf32>
    %1280 = arith.negf %1279 : vector<2x32xf32>
    %1281 = math.exp %1280 : vector<2x32xf32>
    %cst_363 = arith.constant 1.000000e+00 : f32
    %1282 = vector.broadcast %cst_363 : f32 to vector<2x32xf32>
    %1283 = arith.addf %1282, %1281 : vector<2x32xf32>
    %1284 = arith.divf %1282, %1283 : vector<2x32xf32>
    %1285 = arith.addf %1274, %1277 : vector<2x32xf32>
    %1286 = arith.negf %1285 : vector<2x32xf32>
    %1287 = math.exp %1286 : vector<2x32xf32>
    %cst_364 = arith.constant 1.000000e+00 : f32
    %1288 = vector.broadcast %cst_364 : f32 to vector<2x32xf32>
    %1289 = arith.addf %1288, %1287 : vector<2x32xf32>
    %1290 = arith.divf %1288, %1289 : vector<2x32xf32>
    %1291 = arith.mulf %1284, %1278 : vector<2x32xf32>
    %1292 = arith.addf %1275, %1291 : vector<2x32xf32>
    %1293 = math.tanh %1292 : vector<2x32xf32>
    %cst_365 = arith.constant 1.000000e+00 : f32
    %1294 = vector.broadcast %cst_365 : f32 to vector<2x32xf32>
    %1295 = arith.subf %1294, %1290 : vector<2x32xf32>
    %1296 = arith.mulf %1295, %1293 : vector<2x32xf32>
    %1297 = arith.mulf %1290, %1264 : vector<2x32xf32>
    %1298 = arith.addf %1296, %1297 : vector<2x32xf32>
    %c0_366 = arith.constant 0 : index
    %c3_367 = arith.constant 3 : index
    %c0_368 = arith.constant 0 : index
    %1299 = vector.load %arg49[%c0_366, %c3_367, %c0_368] : memref<2x8x32xf32, #tpu.memory_space<vmem>>, vector<2x1x32xf32>
    %1300 = vector.shape_cast %1299 : vector<2x1x32xf32> to vector<2x32xf32>
    %1301 = vector.shape_cast %1298 : vector<2x32xf32> to vector<2x1x32xf32>
    tpu.vector_store %arg49[%c0_366, %c3_367, %c0_368], %1301 {strides = array<i32>} : memref<2x8x32xf32, #tpu.memory_space<vmem>>, vector<2x1x32xf32>,
    %1302 = vector.extract_strided_slice %1156 {offsets = [0, 4, 0], sizes = [2, 1, 96], strides = [1, 1, 1]} : vector<2x8x96xf32> to vector<2x1x96xf32>
    %1303 = vector.shape_cast %1302 : vector<2x1x96xf32> to vector<2x96xf32>
    %1304 = arith.addf %1303, %1161 : vector<2x96xf32>
    %cst_369 = arith.constant dense<0.000000e+00> : vector<2x96xf32>
    %1305 = tpu.matmul %1298, %1162, %cst_369 {dimension_numbers = #tpu.dot_dimension_numbers<[1], [0], [0], [1], [0, 0, 1, 1], [], []>} : vector<2x32xf32>, vector<32x96xf32>, vector<2x96xf32> -> vector<2x96xf32>
    %1306 = arith.addf %1305, %1165 : vector<2x96xf32>
    %1307 = vector.extract_strided_slice %1304 {offsets = [0, 0], sizes = [2, 32], strides = [1, 1]} : vector<2x96xf32> to vector<2x32xf32>
    %1308 = vector.extract_strided_slice %1304 {offsets = [0, 32], sizes = [2, 32], strides = [1, 1]} : vector<2x96xf32> to vector<2x32xf32>
    %1309 = vector.extract_strided_slice %1304 {offsets = [0, 64], sizes = [2, 32], strides = [1, 1]} : vector<2x96xf32> to vector<2x32xf32>
    %1310 = vector.extract_strided_slice %1306 {offsets = [0, 0], sizes = [2, 32], strides = [1, 1]} : vector<2x96xf32> to vector<2x32xf32>
    %1311 = vector.extract_strided_slice %1306 {offsets = [0, 32], sizes = [2, 32], strides = [1, 1]} : vector<2x96xf32> to vector<2x32xf32>
    %1312 = vector.extract_strided_slice %1306 {offsets = [0, 64], sizes = [2, 32], strides = [1, 1]} : vector<2x96xf32> to vector<2x32xf32>
    %1313 = arith.addf %1307, %1310 : vector<2x32xf32>
    %1314 = arith.negf %1313 : vector<2x32xf32>
    %1315 = math.exp %1314 : vector<2x32xf32>
    %cst_370 = arith.constant 1.000000e+00 : f32
    %1316 = vector.broadcast %cst_370 : f32 to vector<2x32xf32>
    %1317 = arith.addf %1316, %1315 : vector<2x32xf32>
    %1318 = arith.divf %1316, %1317 : vector<2x32xf32>
    %1319 = arith.addf %1308, %1311 : vector<2x32xf32>
    %1320 = arith.negf %1319 : vector<2x32xf32>
    %1321 = math.exp %1320 : vector<2x32xf32>
    %cst_371 = arith.constant 1.000000e+00 : f32
    %1322 = vector.broadcast %cst_371 : f32 to vector<2x32xf32>
    %1323 = arith.addf %1322, %1321 : vector<2x32xf32>
    %1324 = arith.divf %1322, %1323 : vector<2x32xf32>
    %1325 = arith.mulf %1318, %1312 : vector<2x32xf32>
    %1326 = arith.addf %1309, %1325 : vector<2x32xf32>
    %1327 = math.tanh %1326 : vector<2x32xf32>
    %cst_372 = arith.constant 1.000000e+00 : f32
    %1328 = vector.broadcast %cst_372 : f32 to vector<2x32xf32>
    %1329 = arith.subf %1328, %1324 : vector<2x32xf32>
    %1330 = arith.mulf %1329, %1327 : vector<2x32xf32>
    %1331 = arith.mulf %1324, %1298 : vector<2x32xf32>
    %1332 = arith.addf %1330, %1331 : vector<2x32xf32>
    %c0_373 = arith.constant 0 : index
    %c4_374 = arith.constant 4 : index
    %c0_375 = arith.constant 0 : index
    %1333 = vector.load %arg49[%c0_373, %c4_374, %c0_375] : memref<2x8x32xf32, #tpu.memory_space<vmem>>, vector<2x1x32xf32>
    %1334 = vector.shape_cast %1333 : vector<2x1x32xf32> to vector<2x32xf32>
    %1335 = vector.shape_cast %1332 : vector<2x32xf32> to vector<2x1x32xf32>
    tpu.vector_store %arg49[%c0_373, %c4_374, %c0_375], %1335 {strides = array<i32>} : memref<2x8x32xf32, #tpu.memory_space<vmem>>, vector<2x1x32xf32>,
    %1336 = vector.extract_strided_slice %1156 {offsets = [0, 5, 0], sizes = [2, 1, 96], strides = [1, 1, 1]} : vector<2x8x96xf32> to vector<2x1x96xf32>
    %1337 = vector.shape_cast %1336 : vector<2x1x96xf32> to vector<2x96xf32>
    %1338 = arith.addf %1337, %1161 : vector<2x96xf32>
    %cst_376 = arith.constant dense<0.000000e+00> : vector<2x96xf32>
    %1339 = tpu.matmul %1332, %1162, %cst_376 {dimension_numbers = #tpu.dot_dimension_numbers<[1], [0], [0], [1], [0, 0, 1, 1], [], []>} : vector<2x32xf32>, vector<32x96xf32>, vector<2x96xf32> -> vector<2x96xf32>
    %1340 = arith.addf %1339, %1165 : vector<2x96xf32>
    %1341 = vector.extract_strided_slice %1338 {offsets = [0, 0], sizes = [2, 32], strides = [1, 1]} : vector<2x96xf32> to vector<2x32xf32>
    %1342 = vector.extract_strided_slice %1338 {offsets = [0, 32], sizes = [2, 32], strides = [1, 1]} : vector<2x96xf32> to vector<2x32xf32>
    %1343 = vector.extract_strided_slice %1338 {offsets = [0, 64], sizes = [2, 32], strides = [1, 1]} : vector<2x96xf32> to vector<2x32xf32>
    %1344 = vector.extract_strided_slice %1340 {offsets = [0, 0], sizes = [2, 32], strides = [1, 1]} : vector<2x96xf32> to vector<2x32xf32>
    %1345 = vector.extract_strided_slice %1340 {offsets = [0, 32], sizes = [2, 32], strides = [1, 1]} : vector<2x96xf32> to vector<2x32xf32>
    %1346 = vector.extract_strided_slice %1340 {offsets = [0, 64], sizes = [2, 32], strides = [1, 1]} : vector<2x96xf32> to vector<2x32xf32>
    %1347 = arith.addf %1341, %1344 : vector<2x32xf32>
    %1348 = arith.negf %1347 : vector<2x32xf32>
    %1349 = math.exp %1348 : vector<2x32xf32>
    %cst_377 = arith.constant 1.000000e+00 : f32
    %1350 = vector.broadcast %cst_377 : f32 to vector<2x32xf32>
    %1351 = arith.addf %1350, %1349 : vector<2x32xf32>
    %1352 = arith.divf %1350, %1351 : vector<2x32xf32>
    %1353 = arith.addf %1342, %1345 : vector<2x32xf32>
    %1354 = arith.negf %1353 : vector<2x32xf32>
    %1355 = math.exp %1354 : vector<2x32xf32>
    %cst_378 = arith.constant 1.000000e+00 : f32
    %1356 = vector.broadcast %cst_378 : f32 to vector<2x32xf32>
    %1357 = arith.addf %1356, %1355 : vector<2x32xf32>
    %1358 = arith.divf %1356, %1357 : vector<2x32xf32>
    %1359 = arith.mulf %1352, %1346 : vector<2x32xf32>
    %1360 = arith.addf %1343, %1359 : vector<2x32xf32>
    %1361 = math.tanh %1360 : vector<2x32xf32>
    %cst_379 = arith.constant 1.000000e+00 : f32
    %1362 = vector.broadcast %cst_379 : f32 to vector<2x32xf32>
    %1363 = arith.subf %1362, %1358 : vector<2x32xf32>
    %1364 = arith.mulf %1363, %1361 : vector<2x32xf32>
    %1365 = arith.mulf %1358, %1332 : vector<2x32xf32>
    %1366 = arith.addf %1364, %1365 : vector<2x32xf32>
    %c0_380 = arith.constant 0 : index
    %c5_381 = arith.constant 5 : index
    %c0_382 = arith.constant 0 : index
    %1367 = vector.load %arg49[%c0_380, %c5_381, %c0_382] : memref<2x8x32xf32, #tpu.memory_space<vmem>>, vector<2x1x32xf32>
    %1368 = vector.shape_cast %1367 : vector<2x1x32xf32> to vector<2x32xf32>
    %1369 = vector.shape_cast %1366 : vector<2x32xf32> to vector<2x1x32xf32>
    tpu.vector_store %arg49[%c0_380, %c5_381, %c0_382], %1369 {strides = array<i32>} : memref<2x8x32xf32, #tpu.memory_space<vmem>>, vector<2x1x32xf32>,
    %1370 = vector.extract_strided_slice %1156 {offsets = [0, 6, 0], sizes = [2, 1, 96], strides = [1, 1, 1]} : vector<2x8x96xf32> to vector<2x1x96xf32>
    %1371 = vector.shape_cast %1370 : vector<2x1x96xf32> to vector<2x96xf32>
    %1372 = arith.addf %1371, %1161 : vector<2x96xf32>
    %cst_383 = arith.constant dense<0.000000e+00> : vector<2x96xf32>
    %1373 = tpu.matmul %1366, %1162, %cst_383 {dimension_numbers = #tpu.dot_dimension_numbers<[1], [0], [0], [1], [0, 0, 1, 1], [], []>} : vector<2x32xf32>, vector<32x96xf32>, vector<2x96xf32> -> vector<2x96xf32>
    %1374 = arith.addf %1373, %1165 : vector<2x96xf32>
    %1375 = vector.extract_strided_slice %1372 {offsets = [0, 0], sizes = [2, 32], strides = [1, 1]} : vector<2x96xf32> to vector<2x32xf32>
    %1376 = vector.extract_strided_slice %1372 {offsets = [0, 32], sizes = [2, 32], strides = [1, 1]} : vector<2x96xf32> to vector<2x32xf32>
    %1377 = vector.extract_strided_slice %1372 {offsets = [0, 64], sizes = [2, 32], strides = [1, 1]} : vector<2x96xf32> to vector<2x32xf32>
    %1378 = vector.extract_strided_slice %1374 {offsets = [0, 0], sizes = [2, 32], strides = [1, 1]} : vector<2x96xf32> to vector<2x32xf32>
    %1379 = vector.extract_strided_slice %1374 {offsets = [0, 32], sizes = [2, 32], strides = [1, 1]} : vector<2x96xf32> to vector<2x32xf32>
    %1380 = vector.extract_strided_slice %1374 {offsets = [0, 64], sizes = [2, 32], strides = [1, 1]} : vector<2x96xf32> to vector<2x32xf32>
    %1381 = arith.addf %1375, %1378 : vector<2x32xf32>
    %1382 = arith.negf %1381 : vector<2x32xf32>
    %1383 = math.exp %1382 : vector<2x32xf32>
    %cst_384 = arith.constant 1.000000e+00 : f32
    %1384 = vector.broadcast %cst_384 : f32 to vector<2x32xf32>
    %1385 = arith.addf %1384, %1383 : vector<2x32xf32>
    %1386 = arith.divf %1384, %1385 : vector<2x32xf32>
    %1387 = arith.addf %1376, %1379 : vector<2x32xf32>
    %1388 = arith.negf %1387 : vector<2x32xf32>
    %1389 = math.exp %1388 : vector<2x32xf32>
    %cst_385 = arith.constant 1.000000e+00 : f32
    %1390 = vector.broadcast %cst_385 : f32 to vector<2x32xf32>
    %1391 = arith.addf %1390, %1389 : vector<2x32xf32>
    %1392 = arith.divf %1390, %1391 : vector<2x32xf32>
    %1393 = arith.mulf %1386, %1380 : vector<2x32xf32>
    %1394 = arith.addf %1377, %1393 : vector<2x32xf32>
    %1395 = math.tanh %1394 : vector<2x32xf32>
    %cst_386 = arith.constant 1.000000e+00 : f32
    %1396 = vector.broadcast %cst_386 : f32 to vector<2x32xf32>
    %1397 = arith.subf %1396, %1392 : vector<2x32xf32>
    %1398 = arith.mulf %1397, %1395 : vector<2x32xf32>
    %1399 = arith.mulf %1392, %1366 : vector<2x32xf32>
    %1400 = arith.addf %1398, %1399 : vector<2x32xf32>
    %c0_387 = arith.constant 0 : index
    %c6_388 = arith.constant 6 : index
    %c0_389 = arith.constant 0 : index
    %1401 = vector.load %arg49[%c0_387, %c6_388, %c0_389] : memref<2x8x32xf32, #tpu.memory_space<vmem>>, vector<2x1x32xf32>
    %1402 = vector.shape_cast %1401 : vector<2x1x32xf32> to vector<2x32xf32>
    %1403 = vector.shape_cast %1400 : vector<2x32xf32> to vector<2x1x32xf32>
    tpu.vector_store %arg49[%c0_387, %c6_388, %c0_389], %1403 {strides = array<i32>} : memref<2x8x32xf32, #tpu.memory_space<vmem>>, vector<2x1x32xf32>,
    %1404 = vector.extract_strided_slice %1156 {offsets = [0, 7, 0], sizes = [2, 1, 96], strides = [1, 1, 1]} : vector<2x8x96xf32> to vector<2x1x96xf32>
    %1405 = vector.shape_cast %1404 : vector<2x1x96xf32> to vector<2x96xf32>
    %1406 = arith.addf %1405, %1161 : vector<2x96xf32>
    %cst_390 = arith.constant dense<0.000000e+00> : vector<2x96xf32>
    %1407 = tpu.matmul %1400, %1162, %cst_390 {dimension_numbers = #tpu.dot_dimension_numbers<[1], [0], [0], [1], [0, 0, 1, 1], [], []>} : vector<2x32xf32>, vector<32x96xf32>, vector<2x96xf32> -> vector<2x96xf32>
    %1408 = arith.addf %1407, %1165 : vector<2x96xf32>
    %1409 = vector.extract_strided_slice %1406 {offsets = [0, 0], sizes = [2, 32], strides = [1, 1]} : vector<2x96xf32> to vector<2x32xf32>
    %1410 = vector.extract_strided_slice %1406 {offsets = [0, 32], sizes = [2, 32], strides = [1, 1]} : vector<2x96xf32> to vector<2x32xf32>
    %1411 = vector.extract_strided_slice %1406 {offsets = [0, 64], sizes = [2, 32], strides = [1, 1]} : vector<2x96xf32> to vector<2x32xf32>
    %1412 = vector.extract_strided_slice %1408 {offsets = [0, 0], sizes = [2, 32], strides = [1, 1]} : vector<2x96xf32> to vector<2x32xf32>
    %1413 = vector.extract_strided_slice %1408 {offsets = [0, 32], sizes = [2, 32], strides = [1, 1]} : vector<2x96xf32> to vector<2x32xf32>
    %1414 = vector.extract_strided_slice %1408 {offsets = [0, 64], sizes = [2, 32], strides = [1, 1]} : vector<2x96xf32> to vector<2x32xf32>
    %1415 = arith.addf %1409, %1412 : vector<2x32xf32>
    %1416 = arith.negf %1415 : vector<2x32xf32>
    %1417 = math.exp %1416 : vector<2x32xf32>
    %cst_391 = arith.constant 1.000000e+00 : f32
    %1418 = vector.broadcast %cst_391 : f32 to vector<2x32xf32>
    %1419 = arith.addf %1418, %1417 : vector<2x32xf32>
    %1420 = arith.divf %1418, %1419 : vector<2x32xf32>
    %1421 = arith.addf %1410, %1413 : vector<2x32xf32>
    %1422 = arith.negf %1421 : vector<2x32xf32>
    %1423 = math.exp %1422 : vector<2x32xf32>
    %cst_392 = arith.constant 1.000000e+00 : f32
    %1424 = vector.broadcast %cst_392 : f32 to vector<2x32xf32>
    %1425 = arith.addf %1424, %1423 : vector<2x32xf32>
    %1426 = arith.divf %1424, %1425 : vector<2x32xf32>
    %1427 = arith.mulf %1420, %1414 : vector<2x32xf32>
    %1428 = arith.addf %1411, %1427 : vector<2x32xf32>
    %1429 = math.tanh %1428 : vector<2x32xf32>
    %cst_393 = arith.constant 1.000000e+00 : f32
    %1430 = vector.broadcast %cst_393 : f32 to vector<2x32xf32>
    %1431 = arith.subf %1430, %1426 : vector<2x32xf32>
    %1432 = arith.mulf %1431, %1429 : vector<2x32xf32>
    %1433 = arith.mulf %1426, %1400 : vector<2x32xf32>
    %1434 = arith.addf %1432, %1433 : vector<2x32xf32>
    %c0_394 = arith.constant 0 : index
    %c7_395 = arith.constant 7 : index
    %c0_396 = arith.constant 0 : index
    %1435 = vector.load %arg49[%c0_394, %c7_395, %c0_396] : memref<2x8x32xf32, #tpu.memory_space<vmem>>, vector<2x1x32xf32>
    %1436 = vector.shape_cast %1435 : vector<2x1x32xf32> to vector<2x32xf32>
    %1437 = vector.shape_cast %1434 : vector<2x32xf32> to vector<2x1x32xf32>
    tpu.vector_store %arg49[%c0_394, %c7_395, %c0_396], %1437 {strides = array<i32>} : memref<2x8x32xf32, #tpu.memory_space<vmem>>, vector<2x1x32xf32>,
    %c0_397 = arith.constant 0 : index
    %c0_398 = arith.constant 0 : index
    %c0_399 = arith.constant 0 : index
    %1438 = vector.load %arg49[%c0_397, %c0_398, %c0_399] : memref<2x8x32xf32, #tpu.memory_space<vmem>>, vector<2x8x32xf32>
    %1439 = vector.shape_cast %1438 : vector<2x8x32xf32> to vector<16x32xf32>
    %c0_400 = arith.constant 0 : index
    %c0_401 = arith.constant 0 : index
    %1440 = vector.load %arg37[%c0_400, %c0_401] : memref<32x64xf32, #tpu.memory_space<vmem>>, vector<32x64xf32>
    %cst_402 = arith.constant dense<0.000000e+00> : vector<16x64xf32>
    %1441 = tpu.matmul %1439, %1440, %cst_402 {dimension_numbers = #tpu.dot_dimension_numbers<[1], [0], [0], [1], [0, 0, 1, 1], [], []>} : vector<16x32xf32>, vector<32x64xf32>, vector<16x64xf32> -> vector<16x64xf32>
    %1442 = vector.shape_cast %1441 : vector<16x64xf32> to vector<2x8x64xf32>
    %c0_403 = arith.constant 0 : index
    %c0_404 = arith.constant 0 : index
    %c0_405 = arith.constant 0 : index
    %1443 = vector.load %arg43[%c0_403, %c0_404, %c0_405] : memref<2x8x64xf32, #tpu.memory_space<vmem>>, vector<2x8x64xf32>
    tpu.vector_store %arg43[%c0_403, %c0_404, %c0_405], %1442 {strides = array<i32>} : memref<2x8x64xf32, #tpu.memory_space<vmem>>, vector<2x8x64xf32>,
    %c0_406 = arith.constant 0 : index
    %c0_407 = arith.constant 0 : index
    %1444 = vector.load %arg38[%c0_406, %c0_407] : memref<16x64xf32, #tpu.memory_space<vmem>>, vector<16x64xf32>
    %cst_408 = arith.constant dense<0.000000e+00> : vector<2x64xf32>
    %1445 = tpu.matmul %3, %1444, %cst_408 {dimension_numbers = #tpu.dot_dimension_numbers<[1], [0], [0], [1], [0, 0, 1, 1], [], []>} : vector<2x16xf32>, vector<16x64xf32>, vector<2x64xf32> -> vector<2x64xf32>
    %c0_409 = arith.constant 0 : index
    %c0_410 = arith.constant 0 : index
    %1446 = vector.load %arg39[%c0_409, %c0_410] : memref<1x64xf32, #tpu.memory_space<vmem>>, vector<1x64xf32>
    %1447 = vector.broadcast %1446 : vector<1x64xf32> to vector<2x64xf32>
    %1448 = arith.addf %1445, %1447 : vector<2x64xf32>
    %c0_411 = arith.constant 0 : index
    %c0_412 = arith.constant 0 : index
    %1449 = vector.load %arg44[%c0_411, %c0_412] : memref<2x64xf32, #tpu.memory_space<vmem>>, vector<2x64xf32>
    tpu.vector_store %arg44[%c0_411, %c0_412], %1448 {strides = array<i32>} : memref<2x64xf32, #tpu.memory_space<vmem>>, vector<2x64xf32>,
    %c0_413 = arith.constant 0 : index
    %c0_414 = arith.constant 0 : index
    %1450 = vector.load %arg40[%c0_413, %c0_414] : memref<16x64xf32, #tpu.memory_space<vmem>>, vector<16x64xf32>
    %cst_415 = arith.constant dense<0.000000e+00> : vector<2x64xf32>
    %1451 = tpu.matmul %3, %1450, %cst_415 {dimension_numbers = #tpu.dot_dimension_numbers<[1], [0], [0], [1], [0, 0, 1, 1], [], []>} : vector<2x16xf32>, vector<16x64xf32>, vector<2x64xf32> -> vector<2x64xf32>
    %c0_416 = arith.constant 0 : index
    %c0_417 = arith.constant 0 : index
    %1452 = vector.load %arg41[%c0_416, %c0_417] : memref<1x64xf32, #tpu.memory_space<vmem>>, vector<1x64xf32>
    %1453 = vector.broadcast %1452 : vector<1x64xf32> to vector<2x64xf32>
    %1454 = arith.addf %1451, %1453 : vector<2x64xf32>
    %c0_418 = arith.constant 0 : index
    %c0_419 = arith.constant 0 : index
    %1455 = vector.load %arg45[%c0_418, %c0_419] : memref<2x64xf32, #tpu.memory_space<vmem>>, vector<2x64xf32>
    tpu.vector_store %arg45[%c0_418, %c0_419], %1454 {strides = array<i32>} : memref<2x64xf32, #tpu.memory_space<vmem>>, vector<2x64xf32>,
    return
  }
}

</mosaic_0001>

<llo_original>
// kernel: aevnmt_forward.1
$region0: #{aevnmt_forward.1}
  #allocation0 [shape = 'u32[]', space=smem, size = 0x4, offset = 0x4, fixed_abs, tag = 'smem constant byte address 0x4 - core index']
  #allocation1 [shape = 'u32[144,128]{1,0:T(1,128)}', space=vmem, size = 0x12000, scoped, tag = 'internal scratch']
  #allocation2 [shape = 'f32[2,8,32]{2,1,0:T(8,128)}', space=vmem, size = 0x2000, scoped, tag = 'scratch operand']
  #allocation3 [shape = 'f32[2,8,32]{2,1,0:T(8,128)}', space=vmem, size = 0x2000, scoped, tag = 'scratch operand']
  #allocation4 [shape = 'f32[2,8,32]{2,1,0:T(8,128)}', space=vmem, size = 0x2000, scoped, tag = 'scratch operand']
  #allocation5 [shape = 'f32[2,8,32]{2,1,0:T(8,128)}', space=vmem, size = 0x2000, scoped, tag = 'scratch operand']
  %s0 = inlined_call_operand.smem [shape: u32[46], index: -1, kind: input, shape index: {}]
  %s1 = sld [smem:[%s0]]
  %s2 = scalar_lea.smem %s0, 1
  %s3 = sld [smem:[%s2]]
  %s4 = scalar_lea.smem %s0, 2
  %s5 = sld [smem:[%s4]]
  %s6 = scalar_lea.smem %s0, 3
  %s7 = sld [smem:[%s6]]
  %s8 = scalar_lea.smem %s0, 4
  %s9 = sld [smem:[%s8]]
  %s10 = scalar_lea.smem %s0, 5
  %s11 = sld [smem:[%s10]]
  %s12 = scalar_lea.smem %s0, 6
  %s13 = sld [smem:[%s12]]
  %s14 = scalar_lea.smem %s0, 7
  %s15 = sld [smem:[%s14]]
  %s16 = scalar_lea.smem %s0, 8
  %s17 = sld [smem:[%s16]]
  %s18 = scalar_lea.smem %s0, 9
  %s19 = sld [smem:[%s18]]
  %s20 = scalar_lea.smem %s0, 10
  %s21 = sld [smem:[%s20]]
  %s22 = scalar_lea.smem %s0, 11
  %s23 = sld [smem:[%s22]]
  %s24 = scalar_lea.smem %s0, 12
  %s25 = sld [smem:[%s24]]
  %s26 = scalar_lea.smem %s0, 13
  %s27 = sld [smem:[%s26]]
  %s28 = scalar_lea.smem %s0, 14
  %s29 = sld [smem:[%s28]]
  %s30 = scalar_lea.smem %s0, 15
  %s31 = sld [smem:[%s30]]
  %s32 = scalar_lea.smem %s0, 16
  %s33 = sld [smem:[%s32]]
  %s34 = scalar_lea.smem %s0, 17
  %s35 = sld [smem:[%s34]]
  %s36 = scalar_lea.smem %s0, 18
  %s37 = sld [smem:[%s36]]
  %s38 = scalar_lea.smem %s0, 19
  %s39 = sld [smem:[%s38]]
  %s40 = scalar_lea.smem %s0, 20
  %s41 = sld [smem:[%s40]]
  %s42 = scalar_lea.smem %s0, 21
  %s43 = sld [smem:[%s42]]
  %s44 = scalar_lea.smem %s0, 22
  %s45 = sld [smem:[%s44]]
  %s46 = scalar_lea.smem %s0, 23
  %s47 = sld [smem:[%s46]]
  %s48 = scalar_lea.smem %s0, 24
  %s49 = sld [smem:[%s48]]
  %s50 = scalar_lea.smem %s0, 25
  %s51 = sld [smem:[%s50]]
  %s52 = scalar_lea.smem %s0, 26
  %s53 = sld [smem:[%s52]]
  %s54 = scalar_lea.smem %s0, 27
  %s55 = sld [smem:[%s54]]
  %s56 = scalar_lea.smem %s0, 28
  %s57 = sld [smem:[%s56]]
  %s58 = scalar_lea.smem %s0, 29
  %s59 = sld [smem:[%s58]]
  %s60 = scalar_lea.smem %s0, 30
  %s61 = sld [smem:[%s60]]
  %s62 = scalar_lea.smem %s0, 31
  %s63 = sld [smem:[%s62]]
  %s64 = scalar_lea.smem %s0, 32
  %s65 = sld [smem:[%s64]]
  %s66 = scalar_lea.smem %s0, 33
  %s67 = sld [smem:[%s66]]
  %s68 = scalar_lea.smem %s0, 34
  %s69 = sld [smem:[%s68]]
  %s70 = scalar_lea.smem %s0, 35
  %s71 = sld [smem:[%s70]]
  %s72 = scalar_lea.smem %s0, 36
  %s73 = sld [smem:[%s72]]
  %s74 = scalar_lea.smem %s0, 37
  %s75 = sld [smem:[%s74]]
  %s76 = scalar_lea.smem %s0, 38
  %s77 = sld [smem:[%s76]]
  %s78 = scalar_lea.smem %s0, 39
  %s79 = sld [smem:[%s78]]
  %s80 = scalar_lea.smem %s0, 40
  %s81 = sld [smem:[%s80]]
  %s82 = scalar_lea.smem %s0, 41
  %s83 = sld [smem:[%s82]]
  %s84 = scalar_lea.smem %s0, 42
  %s85 = sld [smem:[%s84]]
  %s86 = scalar_lea.smem %s0, 43
  %s87 = sld [smem:[%s86]]
  %s88 = scalar_lea.smem %s0, 44
  %s89 = sld [smem:[%s88]]
  %s90 = scalar_lea.smem %s0, 45
  %s91 = sld [smem:[%s90]]
  %92 = xla_tuple %s85, %s87, %s89, %s91
  %s93 = sld [smem:[#allocation0]]
  $region214: #{aevnmt_forward.1} parent=0
    _
  %s95 = ssub.s32 1, %s93
  %s96 = scalar_select 0, %s95, %s93
  $region1: #{aevnmt_forward.1} parent=0
    #allocation6 [shape = 'u8[512]{0}', space=vmem, size = 0x400, scoped, tag = 'input window, operand 35, single buffered']
    #allocation7 [shape = 's32[1]{0}', space=sflag, size = 0x4, scoped, tag = 'scoped memory for aevnmt_forward.1']
    #allocation8 [shape = 's32[1]{0}', space=sflag, size = 0x4, scoped, tag = 'scoped memory for aevnmt_forward.1']
    #allocation9 [shape = 'u8[512]{0}', space=vmem, size = 0x400, scoped, tag = 'input window, operand 39, single buffered']
    #allocation10 [shape = 's32[1]{0}', space=sflag, size = 0x4, scoped, tag = 'scoped memory for aevnmt_forward.1']
    #allocation11 [shape = 'u8[512]{0}', space=vmem, size = 0x400, scoped, tag = 'input window, operand 41, single buffered']
    #allocation12 [shape = 'u8[8192]{0}', space=vmem, size = 0x2000, scoped, tag = 'output window, operand 0, single buffered']
    #allocation13 [shape = 'u8[8192]{0}', space=vmem, size = 0x2000, scoped, tag = 'output window, operand 1, single buffered']
    #allocation14 [shape = 's32[1]{0}', space=sflag, size = 0x4, scoped, tag = 'scoped memory for aevnmt_forward.1']
    #allocation15 [shape = 'u8[1024]{0}', space=vmem, size = 0x400, scoped, tag = 'output window, operand 2, single buffered']
    #allocation16 [shape = 'u8[1024]{0}', space=vmem, size = 0x400, scoped, tag = 'output window, operand 3, single buffered']
    #allocation17 [shape = 's32[1]{0}', space=sflag, size = 0x4, scoped, tag = 'scoped memory for aevnmt_forward.1']
    %97 = vsyncpa [#allocation7], 0
    %98 = vsyncpa [#allocation10], 0
    %99 = vsyncpa [#allocation8], 0
    %100 = vsyncpa [#allocation14], 0
    %101 = vsyncpa [#allocation17], 0
    // Predicated region
    $region2: #{aevnmt_forward.1} parent=1 // pred_check
      _
    $region3: #{aevnmt_forward.1} parent=1 // pred_check_branch
      %103 = sbr.rel (0) target = $region5
    $region4: #{aevnmt_forward.1} parent=1 // pred_region
      _
    $region5: #{aevnmt_forward.1} parent=1 // pred_fallthru
      _
    // Predicated region
    $region6: #{aevnmt_forward.1} parent=1 // pred_check
      _
    $region7: #{aevnmt_forward.1} parent=1 // pred_check_branch
      %105 = sbr.rel (0) target = $region9
    $region8: #{aevnmt_forward.1} parent=1 // pred_region
      _
    $region9: #{aevnmt_forward.1} parent=1 // pred_fallthru
      _
    // Predicated region
    $region10: #{aevnmt_forward.1} parent=1 // pred_check
      _
    $region11: #{aevnmt_forward.1} parent=1 // pred_check_branch
      %107 = sbr.rel (0) target = $region13
    $region12: #{aevnmt_forward.1} parent=1 // pred_region
      _
    $region13: #{aevnmt_forward.1} parent=1 // pred_fallthru
      _
    // Predicated region
    $region14: #{aevnmt_forward.1} parent=1 // pred_check
      _
    $region15: #{aevnmt_forward.1} parent=1 // pred_check_branch
      %109 = sbr.rel (0) target = $region17
    $region16: #{aevnmt_forward.1} parent=1 // pred_region
      _
    $region17: #{aevnmt_forward.1} parent=1 // pred_fallthru
      _
    // Predicated region
    $region18: #{aevnmt_forward.1} parent=1 // pred_check
      _
    $region19: #{aevnmt_forward.1} parent=1 // pred_check_branch
      %111 = sbr.rel (0) target = $region21
    $region20: #{aevnmt_forward.1} parent=1 // pred_region
      _
    $region21: #{aevnmt_forward.1} parent=1 // pred_fallthru
      _
    // Predicated region
    $region22: #{aevnmt_forward.1} parent=1 // pred_check
      _
    $region23: #{aevnmt_forward.1} parent=1 // pred_check_branch
      %113 = sbr.rel (0) target = $region25
    $region24: #{aevnmt_forward.1} parent=1 // pred_region
      _
    $region25: #{aevnmt_forward.1} parent=1 // pred_fallthru
      _
    // Predicated region
    $region26: #{aevnmt_forward.1} parent=1 // pred_check
      _
    $region27: #{aevnmt_forward.1} parent=1 // pred_check_branch
      %115 = sbr.rel (0) target = $region29
    $region28: #{aevnmt_forward.1} parent=1 // pred_region
      _
    $region29: #{aevnmt_forward.1} parent=1 // pred_fallthru
      _
    // Predicated region
    $region30: #{aevnmt_forward.1} parent=1 // pred_check
      _
    $region31: #{aevnmt_forward.1} parent=1 // pred_check_branch
      %117 = sbr.rel (0) target = $region33
    $region32: #{aevnmt_forward.1} parent=1 // pred_region
      _
    $region33: #{aevnmt_forward.1} parent=1 // pred_fallthru
      _
    // Predicated region
    $region34: #{aevnmt_forward.1} parent=1 // pred_check
      _
    $region35: #{aevnmt_forward.1} parent=1 // pred_check_branch
      %119 = sbr.rel (0) target = $region37
    $region36: #{aevnmt_forward.1} parent=1 // pred_region
      _
    $region37: #{aevnmt_forward.1} parent=1 // pred_fallthru
      _
    // Predicated region
    $region38: #{aevnmt_forward.1} parent=1 // pred_check
      _
    $region39: #{aevnmt_forward.1} parent=1 // pred_check_branch
      %121 = sbr.rel (0) target = $region41
    $region40: #{aevnmt_forward.1} parent=1 // pred_region
      _
    $region41: #{aevnmt_forward.1} parent=1 // pred_fallthru
      _
    // Predicated region
    $region42: #{aevnmt_forward.1} parent=1 // pred_check
      _
    $region43: #{aevnmt_forward.1} parent=1 // pred_check_branch
      %123 = sbr.rel (0) target = $region45
    $region44: #{aevnmt_forward.1} parent=1 // pred_region
      _
    $region45: #{aevnmt_forward.1} parent=1 // pred_fallthru
      _
    // Predicated region
    $region46: #{aevnmt_forward.1} parent=1 // pred_check
      _
    $region47: #{aevnmt_forward.1} parent=1 // pred_check_branch
      %125 = sbr.rel (0) target = $region49
    $region48: #{aevnmt_forward.1} parent=1 // pred_region
      _
    $region49: #{aevnmt_forward.1} parent=1 // pred_fallthru
      _
    // Predicated region
    $region50: #{aevnmt_forward.1} parent=1 // pred_check
      _
    $region51: #{aevnmt_forward.1} parent=1 // pred_check_branch
      %127 = sbr.rel (0) target = $region53
    $region52: #{aevnmt_forward.1} parent=1 // pred_region
      _
    $region53: #{aevnmt_forward.1} parent=1 // pred_fallthru
      _
    // Predicated region
    $region54: #{aevnmt_forward.1} parent=1 // pred_check
      _
    $region55: #{aevnmt_forward.1} parent=1 // pred_check_branch
      %129 = sbr.rel (0) target = $region57
    $region56: #{aevnmt_forward.1} parent=1 // pred_region
      _
    $region57: #{aevnmt_forward.1} parent=1 // pred_fallthru
      _
    // Predicated region
    $region58: #{aevnmt_forward.1} parent=1 // pred_check
      _
    $region59: #{aevnmt_forward.1} parent=1 // pred_check_branch
      %131 = sbr.rel (0) target = $region61
    $region60: #{aevnmt_forward.1} parent=1 // pred_region
      _
    $region61: #{aevnmt_forward.1} parent=1 // pred_fallthru
      _
    // Predicated region
    $region62: #{aevnmt_forward.1} parent=1 // pred_check
      _
    $region63: #{aevnmt_forward.1} parent=1 // pred_check_branch
      %133 = sbr.rel (0) target = $region65
    $region64: #{aevnmt_forward.1} parent=1 // pred_region
      _
    $region65: #{aevnmt_forward.1} parent=1 // pred_fallthru
      _
    // Predicated region
    $region66: #{aevnmt_forward.1} parent=1 // pred_check
      _
    $region67: #{aevnmt_forward.1} parent=1 // pred_check_branch
      %135 = sbr.rel (0) target = $region69
    $region68: #{aevnmt_forward.1} parent=1 // pred_region
      _
    $region69: #{aevnmt_forward.1} parent=1 // pred_fallthru
      _
    // Predicated region
    $region70: #{aevnmt_forward.1} parent=1 // pred_check
      _
    $region71: #{aevnmt_forward.1} parent=1 // pred_check_branch
      %137 = sbr.rel (0) target = $region73
    $region72: #{aevnmt_forward.1} parent=1 // pred_region
      _
    $region73: #{aevnmt_forward.1} parent=1 // pred_fallthru
      _
    // Predicated region
    $region74: #{aevnmt_forward.1} parent=1 // pred_check
      _
    $region75: #{aevnmt_forward.1} parent=1 // pred_check_branch
      %139 = sbr.rel (0) target = $region77
    $region76: #{aevnmt_forward.1} parent=1 // pred_region
      _
    $region77: #{aevnmt_forward.1} parent=1 // pred_fallthru
      _
    // Predicated region
    $region78: #{aevnmt_forward.1} parent=1 // pred_check
      _
    $region79: #{aevnmt_forward.1} parent=1 // pred_check_branch
      %141 = sbr.rel (0) target = $region81
    $region80: #{aevnmt_forward.1} parent=1 // pred_region
      _
    $region81: #{aevnmt_forward.1} parent=1 // pred_fallthru
      _
    // Predicated region
    $region82: #{aevnmt_forward.1} parent=1 // pred_check
      _
    $region83: #{aevnmt_forward.1} parent=1 // pred_check_branch
      %143 = sbr.rel (0) target = $region85
    $region84: #{aevnmt_forward.1} parent=1 // pred_region
      _
    $region85: #{aevnmt_forward.1} parent=1 // pred_fallthru
      _
    // Predicated region
    $region86: #{aevnmt_forward.1} parent=1 // pred_check
      _
    $region87: #{aevnmt_forward.1} parent=1 // pred_check_branch
      %145 = sbr.rel (0) target = $region89
    $region88: #{aevnmt_forward.1} parent=1 // pred_region
      _
    $region89: #{aevnmt_forward.1} parent=1 // pred_fallthru
      _
    // Predicated region
    $region90: #{aevnmt_forward.1} parent=1 // pred_check
      _
    $region91: #{aevnmt_forward.1} parent=1 // pred_check_branch
      %147 = sbr.rel (0) target = $region93
    $region92: #{aevnmt_forward.1} parent=1 // pred_region
      _
    $region93: #{aevnmt_forward.1} parent=1 // pred_fallthru
      _
    // Predicated region
    $region94: #{aevnmt_forward.1} parent=1 // pred_check
      _
    $region95: #{aevnmt_forward.1} parent=1 // pred_check_branch
      %149 = sbr.rel (0) target = $region97
    $region96: #{aevnmt_forward.1} parent=1 // pred_region
      _
    $region97: #{aevnmt_forward.1} parent=1 // pred_fallthru
      _
    // Predicated region
    $region98: #{aevnmt_forward.1} parent=1 // pred_check
      _
    $region99: #{aevnmt_forward.1} parent=1 // pred_check_branch
      %151 = sbr.rel (0) target = $region101
    $region100: #{aevnmt_forward.1} parent=1 // pred_region
      _
    $region101: #{aevnmt_forward.1} parent=1 // pred_fallthru
      _
    // Predicated region
    $region102: #{aevnmt_forward.1} parent=1 // pred_check
      _
    $region103: #{aevnmt_forward.1} parent=1 // pred_check_branch
      %153 = sbr.rel (0) target = $region105
    $region104: #{aevnmt_forward.1} parent=1 // pred_region
      _
    $region105: #{aevnmt_forward.1} parent=1 // pred_fallthru
      _
    // Predicated region
    $region106: #{aevnmt_forward.1} parent=1 // pred_check
      _
    $region107: #{aevnmt_forward.1} parent=1 // pred_check_branch
      %155 = sbr.rel (0) target = $region109
    $region108: #{aevnmt_forward.1} parent=1 // pred_region
      _
    $region109: #{aevnmt_forward.1} parent=1 // pred_fallthru
      _
    // Predicated region
    $region110: #{aevnmt_forward.1} parent=1 // pred_check
      _
    $region111: #{aevnmt_forward.1} parent=1 // pred_check_branch
      %157 = sbr.rel (0) target = $region113
    $region112: #{aevnmt_forward.1} parent=1 // pred_region
      _
    $region113: #{aevnmt_forward.1} parent=1 // pred_fallthru
      _
    // Predicated region
    $region114: #{aevnmt_forward.1} parent=1 // pred_check
      _
    $region115: #{aevnmt_forward.1} parent=1 // pred_check_branch
      %159 = sbr.rel (0) target = $region117
    $region116: #{aevnmt_forward.1} parent=1 // pred_region
      _
    $region117: #{aevnmt_forward.1} parent=1 // pred_fallthru
      _
    // Predicated region
    $region118: #{aevnmt_forward.1} parent=1 // pred_check
      _
    $region119: #{aevnmt_forward.1} parent=1 // pred_check_branch
      %161 = sbr.rel (0) target = $region121
    $region120: #{aevnmt_forward.1} parent=1 // pred_region
      _
    $region121: #{aevnmt_forward.1} parent=1 // pred_fallthru
      _
    // Predicated region
    $region122: #{aevnmt_forward.1} parent=1 // pred_check
      _
    $region123: #{aevnmt_forward.1} parent=1 // pred_check_branch
      %163 = sbr.rel (0) target = $region125
    $region124: #{aevnmt_forward.1} parent=1 // pred_region
      _
    $region125: #{aevnmt_forward.1} parent=1 // pred_fallthru
      _
    // Predicated region
    $region126: #{aevnmt_forward.1} parent=1 // pred_check
      _
    $region127: #{aevnmt_forward.1} parent=1 // pred_check_branch
      %165 = sbr.rel (0) target = $region129
    $region128: #{aevnmt_forward.1} parent=1 // pred_region
      _
    $region129: #{aevnmt_forward.1} parent=1 // pred_fallthru
      _
    // Predicated region
    $region130: #{aevnmt_forward.1} parent=1 // pred_check
      _
    $region131: #{aevnmt_forward.1} parent=1 // pred_check_branch
      %167 = sbr.rel (0) target = $region133
    $region132: #{aevnmt_forward.1} parent=1 // pred_region
      _
    $region133: #{aevnmt_forward.1} parent=1 // pred_fallthru
      _
    // Predicated region
    $region134: #{aevnmt_forward.1} parent=1 // pred_check
      _
    $region135: #{aevnmt_forward.1} parent=1 // pred_check_branch
      %169 = sbr.rel (0) target = $region137
    $region136: #{aevnmt_forward.1} parent=1 // pred_region
      _
    $region137: #{aevnmt_forward.1} parent=1 // pred_fallthru
      _
    // Predicated region
    $region138: #{aevnmt_forward.1} parent=1 // pred_check
      _
    $region139: #{aevnmt_forward.1} parent=1 // pred_check_branch
      %171 = sbr.rel (0) target = $region141
    $region140: #{aevnmt_forward.1} parent=1 // pred_region
      _
    $region141: #{aevnmt_forward.1} parent=1 // pred_fallthru
      _
    // Predicated region
    $region142: #{aevnmt_forward.1} parent=1 // pred_check
      _
    $region143: #{aevnmt_forward.1} parent=1 // pred_check_branch
      %173 = sbr.rel (0) target = $region145
    $region144: #{aevnmt_forward.1} parent=1 // pred_region
      %s175 = ssub.s32 16, 16
      %176 = vsyncadd [#allocation7], %s175
      %s178 = sshll.u32 [#allocation6], 4
      %s179 = int_to_ptr.vmem [resolvable:$true] %s178
      %181 = dma.hbm_to_vmem [thread:$0]  %s71, 16, %s179, [#allocation7]
    $region145: #{aevnmt_forward.1} parent=1 // pred_fallthru
      _
    // Predicated region
    $region146: #{aevnmt_forward.1} parent=1 // pred_check
      _
    $region147: #{aevnmt_forward.1} parent=1 // pred_check_branch
      %183 = sbr.rel (0) target = $region149
    $region148: #{aevnmt_forward.1} parent=1 // pred_region
      _
    $region149: #{aevnmt_forward.1} parent=1 // pred_fallthru
      _
    // Predicated region
    $region150: #{aevnmt_forward.1} parent=1 // pred_check
      _
    $region151: #{aevnmt_forward.1} parent=1 // pred_check_branch
      %185 = sbr.rel (0) target = $region153
    $region152: #{aevnmt_forward.1} parent=1 // pred_region
      _
    $region153: #{aevnmt_forward.1} parent=1 // pred_fallthru
      _
    // Predicated region
    $region154: #{aevnmt_forward.1} parent=1 // pred_check
      _
    $region155: #{aevnmt_forward.1} parent=1 // pred_check_branch
      %187 = sbr.rel (0) target = $region157
    $region156: #{aevnmt_forward.1} parent=1 // pred_region
      _
    $region157: #{aevnmt_forward.1} parent=1 // pred_fallthru
      _
    // Predicated region
    $region158: #{aevnmt_forward.1} parent=1 // pred_check
      _
    $region159: #{aevnmt_forward.1} parent=1 // pred_check_branch
      %189 = sbr.rel (0) target = $region161
    $region160: #{aevnmt_forward.1} parent=1 // pred_region
      %s191 = ssub.s32 16, 16
      %192 = vsyncadd [#allocation10], %s191
      %s194 = sshll.u32 [#allocation9], 4
      %s195 = int_to_ptr.vmem [resolvable:$true] %s194
      %197 = dma.hbm_to_vmem [thread:$0]  %s79, 16, %s195, [#allocation10]
    $region161: #{aevnmt_forward.1} parent=1 // pred_fallthru
      _
    // Predicated region
    $region162: #{aevnmt_forward.1} parent=1 // pred_check
      _
    $region163: #{aevnmt_forward.1} parent=1 // pred_check_branch
      %199 = sbr.rel (0) target = $region165
    $region164: #{aevnmt_forward.1} parent=1 // pred_region
      _
    $region165: #{aevnmt_forward.1} parent=1 // pred_fallthru
      _
    // Predicated region
    $region166: #{aevnmt_forward.1} parent=1 // pred_check
      _
    $region167: #{aevnmt_forward.1} parent=1 // pred_check_branch
      %201 = sbr.rel (0) target = $region169
    $region168: #{aevnmt_forward.1} parent=1 // pred_region
      %s203 = ssub.s32 16, 16
      %204 = vsyncadd [#allocation10], %s203
      %s206 = sshll.u32 [#allocation11], 4
      %s207 = int_to_ptr.vmem [resolvable:$true] %s206
      %209 = dma.hbm_to_vmem [thread:$0]  %s83, 16, %s207, [#allocation10]
    $region169: #{aevnmt_forward.1} parent=1 // pred_fallthru
      _
    // Predicated region
    $region170: #{aevnmt_forward.1} parent=1 // pred_check
      _
    $region171: #{aevnmt_forward.1} parent=1 // pred_check_branch
      %211 = sbr.rel (0) target = $region173
    $region172: #{aevnmt_forward.1} parent=1 // pred_region
      %212 = dma.done [#allocation7], 16
    $region173: #{aevnmt_forward.1} parent=1 // pred_fallthru
      _
    // Predicated region
    $region174: #{aevnmt_forward.1} parent=1 // pred_check
      _
    $region175: #{aevnmt_forward.1} parent=1 // pred_check_branch
      %214 = sbr.rel (0) target = $region177
    $region176: #{aevnmt_forward.1} parent=1 // pred_region
      %215 = dma.done [#allocation10], 16
    $region177: #{aevnmt_forward.1} parent=1 // pred_fallthru
      _
    // Predicated region
    $region178: #{aevnmt_forward.1} parent=1 // pred_check
      _
    $region179: #{aevnmt_forward.1} parent=1 // pred_check_branch
      %217 = sbr.rel (0) target = $region181
    $region180: #{aevnmt_forward.1} parent=1 // pred_region
      %218 = dma.done [#allocation10], 16
    $region181: #{aevnmt_forward.1} parent=1 // pred_fallthru
      _
    %v219 = vld [vmem:[%s1] sm:$0xff]
    %v220 = vld [vmem:[%s1 + $0x8] sm:$0xff]
    %v221 = vld [vmem:[%s3] sm:$0xff]
    %v222 = vld [vmem:[%s3 + $0x8] sm:$0xff]
    %v223 = vld [vmem:[%s5] sm:$0x3]
    %v224 = vld [vmem:[%s7] sm:$0x3]
    %v225 = vld [vmem:[%s9] sm:$0xff]
    %v226 = vld [vmem:[%s9 + $0x8] sm:$0xff]
    %v227 = vld [vmem:[%s11] sm:$0x1]
    %v229 = vlaneseq
    %v230 = vshrl.u32 %v229, 7
    %v231 = vsub.s32 0, %v230
    %v232 = vrot.slane %v227, %v231
    %vm234 = vcmask 130048
    %v236 = vsel %vm234, %v224, 0
    %238 = vmatprep.subr.mxu0 0.0
    %239 = vmatpush1.msra.mxu0 %v225
    %240 = vmatprep.subr.mxu0 0.0
    %241 = vmatpush1.msra.mxu0 %v226
    %242 = vmatprep.subr.mxu0 0.0
    %243 = vmatpush1.msra.mxu0 0.0
    %244 = vmatprep.subr.mxu0 0.0
    %245 = vmatpush1.msra.mxu0 0.0
    %246 = vmatprep.subr.mxu0 0.0
    %247 = vmatpush1.msra.mxu0 0.0
    %248 = vmatprep.subr.mxu0 0.0
    %249 = vmatpush1.msra.mxu0 0.0
    %250 = vmatprep.subr.mxu0 0.0
    %251 = vmatpush1.msra.mxu0 0.0
    %252 = vmatprep.subr.mxu0 0.0
    %253 = vmatpush1.msra.mxu0 0.0
    %254 = vmatprep.subr.mxu0 0.0
    %255 = vmatpush1.msra.mxu0 0.0
    %256 = vmatprep.subr.mxu0 0.0
    %257 = vmatpush1.msra.mxu0 0.0
    %258 = vmatprep.subr.mxu0 0.0
    %259 = vmatpush1.msra.mxu0 0.0
    %260 = vmatprep.subr.mxu0 0.0
    %261 = vmatpush1.msra.mxu0 0.0
    %262 = vmatprep.subr.mxu0 0.0
    %263 = vmatpush1.msra.mxu0 0.0
    %264 = vmatprep.subr.mxu0 0.0
    %265 = vmatpush1.msra.mxu0 0.0
    %266 = vmatprep.subr.mxu0 0.0
    %267 = vmatpush1.msra.mxu0 0.0
    %268 = vmatprep.subr.mxu0 0.0
    %269 = vmatpush1.msra.mxu0 0.0
    %270 = vmatprep.subr.mxu0 0.0
    %271 = vmatpush1.msra.mxu0 0.0
    %272 = vmatprep.subr.mxu0 0.0
    %273 = vmatpush1.msra.mxu0 0.0
    %274 = vmatprep.subr.mxu0 0.0
    %275 = vmatpush1.msra.mxu0 0.0
    %276 = vmatprep.subr.mxu0 0.0
    %277 = vmatpush1.msra.mxu0 0.0
    %278 = vmatprep.subr.mxu0 0.0
    %279 = vmatpush1.msra.mxu0 0.0
    %280 = vmatprep.subr.mxu0 0.0
    %281 = vmatpush1.msra.mxu0 0.0
    %282 = vmatprep.subr.mxu0 0.0
    %283 = vmatpush1.msra.mxu0 0.0
    %284 = vmatprep.subr.mxu0 0.0
    %285 = vmatpush1.msra.mxu0 0.0
    %286 = vmatprep.subr.mxu0 0.0
    %287 = vmatpush1.msra.mxu0 0.0
    %288 = vmatprep.subr.mxu0 0.0
    %289 = vmatpush1.msra.mxu0 0.0
    %290 = vmatprep.subr.mxu0 0.0
    %291 = vmatpush1.msra.mxu0 0.0
    %292 = vmatprep.subr.mxu0 0.0
    %293 = vmatpush1.msra.mxu0 0.0
    %294 = vmatprep.subr.mxu0 0.0
    %295 = vmatpush1.msra.mxu0 0.0
    %296 = vmatprep.subr.mxu0 0.0
    %297 = vmatpush1.msra.mxu0 0.0
    %298 = vmatprep.subr.mxu0 0.0
    %299 = vmatpush1.msra.mxu0 0.0
    %300 = vmatprep.subr.mxu0 0.0
    %301 = vmatpush1.msra.mxu0 0.0
    %302 = vmatprep.mubr.f32.mxu0 0.0
    %303 = vmatmul.mubr.f32.gmra.mrb[0].mxu0 %v236
    %v304 = vpop.f32.mrb[0].mxu0
    %v305 = vadd.f32 %v232, %v304
    %v306 = vpop.f32.mrb[0].mxu0
    %307 = vdwg.mxu0
    %v308 = vtanh.pop %v305
    %v309 = vld [vmem:[%s13] sm:$0xff]
    %v310 = vld [vmem:[%s13 + $0x8] sm:$0xff]
    %v311 = vld [vmem:[%s15] sm:$0x1]
    %v313 = vlaneseq
    %v314 = vshrl.u32 %v313, 7
    %v315 = vsub.s32 0, %v314
    %v316 = vrot.slane %v311, %v315
    %318 = vmatprep.subr.mxu0 0.0
    %319 = vmatpush1.msra.mxu0 %v309
    %320 = vmatprep.subr.mxu0 0.0
    %321 = vmatpush1.msra.mxu0 %v310
    %322 = vmatprep.subr.mxu0 0.0
    %323 = vmatpush1.msra.mxu0 0.0
    %324 = vmatprep.subr.mxu0 0.0
    %325 = vmatpush1.msra.mxu0 0.0
    %326 = vmatprep.subr.mxu0 0.0
    %327 = vmatpush1.msra.mxu0 0.0
    %328 = vmatprep.subr.mxu0 0.0
    %329 = vmatpush1.msra.mxu0 0.0
    %330 = vmatprep.subr.mxu0 0.0
    %331 = vmatpush1.msra.mxu0 0.0
    %332 = vmatprep.subr.mxu0 0.0
    %333 = vmatpush1.msra.mxu0 0.0
    %334 = vmatprep.subr.mxu0 0.0
    %335 = vmatpush1.msra.mxu0 0.0
    %336 = vmatprep.subr.mxu0 0.0
    %337 = vmatpush1.msra.mxu0 0.0
    %338 = vmatprep.subr.mxu0 0.0
    %339 = vmatpush1.msra.mxu0 0.0
    %340 = vmatprep.subr.mxu0 0.0
    %341 = vmatpush1.msra.mxu0 0.0
    %342 = vmatprep.subr.mxu0 0.0
    %343 = vmatpush1.msra.mxu0 0.0
    %344 = vmatprep.subr.mxu0 0.0
    %345 = vmatpush1.msra.mxu0 0.0
    %346 = vmatprep.subr.mxu0 0.0
    %347 = vmatpush1.msra.mxu0 0.0
    %348 = vmatprep.subr.mxu0 0.0
    %349 = vmatpush1.msra.mxu0 0.0
    %350 = vmatprep.subr.mxu0 0.0
    %351 = vmatpush1.msra.mxu0 0.0
    %352 = vmatprep.subr.mxu0 0.0
    %353 = vmatpush1.msra.mxu0 0.0
    %354 = vmatprep.subr.mxu0 0.0
    %355 = vmatpush1.msra.mxu0 0.0
    %356 = vmatprep.subr.mxu0 0.0
    %357 = vmatpush1.msra.mxu0 0.0
    %358 = vmatprep.subr.mxu0 0.0
    %359 = vmatpush1.msra.mxu0 0.0
    %360 = vmatprep.subr.mxu0 0.0
    %361 = vmatpush1.msra.mxu0 0.0
    %362 = vmatprep.subr.mxu0 0.0
    %363 = vmatpush1.msra.mxu0 0.0
    %364 = vmatprep.subr.mxu0 0.0
    %365 = vmatpush1.msra.mxu0 0.0
    %366 = vmatprep.subr.mxu0 0.0
    %367 = vmatpush1.msra.mxu0 0.0
    %368 = vmatprep.subr.mxu0 0.0
    %369 = vmatpush1.msra.mxu0 0.0
    %370 = vmatprep.subr.mxu0 0.0
    %371 = vmatpush1.msra.mxu0 0.0
    %372 = vmatprep.subr.mxu0 0.0
    %373 = vmatpush1.msra.mxu0 0.0
    %374 = vmatprep.subr.mxu0 0.0
    %375 = vmatpush1.msra.mxu0 0.0
    %376 = vmatprep.subr.mxu0 0.0
    %377 = vmatpush1.msra.mxu0 0.0
    %378 = vmatprep.subr.mxu0 0.0
    %379 = vmatpush1.msra.mxu0 0.0
    %380 = vmatprep.subr.mxu0 0.0
    %381 = vmatpush1.msra.mxu0 0.0
    %382 = vmatprep.mubr.f32.mxu0 0.0
    %383 = vmatmul.mubr.f32.gmra.mrb[0].mxu0 %v236
    %v384 = vpop.f32.mrb[0].mxu0
    %v385 = vadd.f32 %v316, %v384
    %v386 = vpop.f32.mrb[0].mxu0
    %387 = vdwg.mxu0
    %v388 = vtanh.pop %v385
    %v389 = vld [vmem:[%s17] sm:$0xff]
    %v390 = vld [vmem:[%s17 + $0x8] sm:$0xff]
    %v391 = vld [vmem:[%s19] sm:$0x1]
    %v393 = vlaneseq
    %v394 = vshrl.u32 %v393, 7
    %v395 = vsub.s32 0, %v394
    %v396 = vrot.slane %v391, %v395
    %398 = vmatprep.subr.mxu0 0.0
    %399 = vmatpush1.msra.mxu0 %v389
    %400 = vmatprep.subr.mxu0 0.0
    %401 = vmatpush1.msra.mxu0 %v390
    %402 = vmatprep.subr.mxu0 0.0
    %403 = vmatpush1.msra.mxu0 0.0
    %404 = vmatprep.subr.mxu0 0.0
    %405 = vmatpush1.msra.mxu0 0.0
    %406 = vmatprep.subr.mxu0 0.0
    %407 = vmatpush1.msra.mxu0 0.0
    %408 = vmatprep.subr.mxu0 0.0
    %409 = vmatpush1.msra.mxu0 0.0
    %410 = vmatprep.subr.mxu0 0.0
    %411 = vmatpush1.msra.mxu0 0.0
    %412 = vmatprep.subr.mxu0 0.0
    %413 = vmatpush1.msra.mxu0 0.0
    %414 = vmatprep.subr.mxu0 0.0
    %415 = vmatpush1.msra.mxu0 0.0
    %416 = vmatprep.subr.mxu0 0.0
    %417 = vmatpush1.msra.mxu0 0.0
    %418 = vmatprep.subr.mxu0 0.0
    %419 = vmatpush1.msra.mxu0 0.0
    %420 = vmatprep.subr.mxu0 0.0
    %421 = vmatpush1.msra.mxu0 0.0
    %422 = vmatprep.subr.mxu0 0.0
    %423 = vmatpush1.msra.mxu0 0.0
    %424 = vmatprep.subr.mxu0 0.0
    %425 = vmatpush1.msra.mxu0 0.0
    %426 = vmatprep.subr.mxu0 0.0
    %427 = vmatpush1.msra.mxu0 0.0
    %428 = vmatprep.subr.mxu0 0.0
    %429 = vmatpush1.msra.mxu0 0.0
    %430 = vmatprep.subr.mxu0 0.0
    %431 = vmatpush1.msra.mxu0 0.0
    %432 = vmatprep.subr.mxu0 0.0
    %433 = vmatpush1.msra.mxu0 0.0
    %434 = vmatprep.subr.mxu0 0.0
    %435 = vmatpush1.msra.mxu0 0.0
    %436 = vmatprep.subr.mxu0 0.0
    %437 = vmatpush1.msra.mxu0 0.0
    %438 = vmatprep.subr.mxu0 0.0
    %439 = vmatpush1.msra.mxu0 0.0
    %440 = vmatprep.subr.mxu0 0.0
    %441 = vmatpush1.msra.mxu0 0.0
    %442 = vmatprep.subr.mxu0 0.0
    %443 = vmatpush1.msra.mxu0 0.0
    %444 = vmatprep.subr.mxu0 0.0
    %445 = vmatpush1.msra.mxu0 0.0
    %446 = vmatprep.subr.mxu0 0.0
    %447 = vmatpush1.msra.mxu0 0.0
    %448 = vmatprep.subr.mxu0 0.0
    %449 = vmatpush1.msra.mxu0 0.0
    %450 = vmatprep.subr.mxu0 0.0
    %451 = vmatpush1.msra.mxu0 0.0
    %452 = vmatprep.subr.mxu0 0.0
    %453 = vmatpush1.msra.mxu0 0.0
    %454 = vmatprep.subr.mxu0 0.0
    %455 = vmatpush1.msra.mxu0 0.0
    %456 = vmatprep.subr.mxu0 0.0
    %457 = vmatpush1.msra.mxu0 0.0
    %458 = vmatprep.subr.mxu0 0.0
    %459 = vmatpush1.msra.mxu0 0.0
    %460 = vmatprep.subr.mxu0 0.0
    %461 = vmatpush1.msra.mxu0 0.0
    %462 = vmatprep.mubr.f32.mxu0 0.0
    %463 = vmatmul.mubr.f32.gmra.mrb[0].mxu0 %v236
    %v464 = vpop.f32.mrb[0].mxu0
    %v465 = vadd.f32 %v396, %v464
    %v466 = vpop.f32.mrb[0].mxu0
    %467 = vdwg.mxu0
    %v468 = vtanh.pop %v465
    %v469 = vld [vmem:[%s21] sm:$0xff]
    %v470 = vld [vmem:[%s21 + $0x8] sm:$0xff]
    %v471 = vld [vmem:[%s21 + $0x10] sm:$0xff]
    %v472 = vld [vmem:[%s21 + $0x18] sm:$0xff]
    %v473 = vld [vmem:[%s25] sm:$0x1]
    %v475 = vlaneseq
    %v476 = vshrl.u32 %v475, 7
    %v477 = vsub.s32 0, %v476
    %v478 = vrot.slane %v473, %v477
    %vm480 = vcmask 261120
    %v482 = vsel %vm480, %v219, 0
    %v485 = vsel %vm480, %v220, 0
    %487 = vmatprep.subr.mxu0 0.0
    %488 = vmatpush1.msra.mxu0 %v469
    %489 = vmatprep.subr.mxu0 0.0
    %490 = vmatpush1.msra.mxu0 %v470
    %491 = vmatprep.subr.mxu0 0.0
    %492 = vmatpush1.msra.mxu0 %v471
    %493 = vmatprep.subr.mxu0 0.0
    %494 = vmatpush1.msra.mxu0 %v472
    %495 = vmatprep.subr.mxu0 0.0
    %496 = vmatpush1.msra.mxu0 0.0
    %497 = vmatprep.subr.mxu0 0.0
    %498 = vmatpush1.msra.mxu0 0.0
    %499 = vmatprep.subr.mxu0 0.0
    %500 = vmatpush1.msra.mxu0 0.0
    %501 = vmatprep.subr.mxu0 0.0
    %502 = vmatpush1.msra.mxu0 0.0
    %503 = vmatprep.subr.mxu0 0.0
    %504 = vmatpush1.msra.mxu0 0.0
    %505 = vmatprep.subr.mxu0 0.0
    %506 = vmatpush1.msra.mxu0 0.0
    %507 = vmatprep.subr.mxu0 0.0
    %508 = vmatpush1.msra.mxu0 0.0
    %509 = vmatprep.subr.mxu0 0.0
    %510 = vmatpush1.msra.mxu0 0.0
    %511 = vmatprep.subr.mxu0 0.0
    %512 = vmatpush1.msra.mxu0 0.0
    %513 = vmatprep.subr.mxu0 0.0
    %514 = vmatpush1.msra.mxu0 0.0
    %515 = vmatprep.subr.mxu0 0.0
    %516 = vmatpush1.msra.mxu0 0.0
    %517 = vmatprep.subr.mxu0 0.0
    %518 = vmatpush1.msra.mxu0 0.0
    %519 = vmatprep.subr.mxu0 0.0
    %520 = vmatpush1.msra.mxu0 0.0
    %521 = vmatprep.subr.mxu0 0.0
    %522 = vmatpush1.msra.mxu0 0.0
    %523 = vmatprep.subr.mxu0 0.0
    %524 = vmatpush1.msra.mxu0 0.0
    %525 = vmatprep.subr.mxu0 0.0
    %526 = vmatpush1.msra.mxu0 0.0
    %527 = vmatprep.subr.mxu0 0.0
    %528 = vmatpush1.msra.mxu0 0.0
    %529 = vmatprep.subr.mxu0 0.0
    %530 = vmatpush1.msra.mxu0 0.0
    %531 = vmatprep.subr.mxu0 0.0
    %532 = vmatpush1.msra.mxu0 0.0
    %533 = vmatprep.subr.mxu0 0.0
    %534 = vmatpush1.msra.mxu0 0.0
    %535 = vmatprep.subr.mxu0 0.0
    %536 = vmatpush1.msra.mxu0 0.0
    %537 = vmatprep.subr.mxu0 0.0
    %538 = vmatpush1.msra.mxu0 0.0
    %539 = vmatprep.subr.mxu0 0.0
    %540 = vmatpush1.msra.mxu0 0.0
    %541 = vmatprep.subr.mxu0 0.0
    %542 = vmatpush1.msra.mxu0 0.0
    %543 = vmatprep.subr.mxu0 0.0
    %544 = vmatpush1.msra.mxu0 0.0
    %545 = vmatprep.subr.mxu0 0.0
    %546 = vmatpush1.msra.mxu0 0.0
    %547 = vmatprep.subr.mxu0 0.0
    %548 = vmatpush1.msra.mxu0 0.0
    %549 = vmatprep.subr.mxu0 0.0
    %550 = vmatpush1.msra.mxu0 0.0
    %551 = vmatprep.mubr.f32.mxu0 0.0
    %552 = vmatmul.mubr.f32.gmra.mrb[0].mxu0 %v482
    %v553 = vpop.f32.mrb[0].mxu0
    %v554 = vadd.f32 %v478, %v553
    %v555 = vpop.f32.mrb[0].mxu0
    %556 = vmatprep.mubr.f32.mxu0 0.0
    %557 = vmatmul.mubr.f32.gmra.mrb[0].mxu0 %v485
    %v558 = vpop.f32.mrb[0].mxu0
    %v559 = vadd.f32 %v478, %v558
    %v560 = vpop.f32.mrb[0].mxu0
    %561 = vdwg.mxu0
    %v562 = vld [vmem:[%s29] sm:$0xff]
    %v563 = vld [vmem:[%s29 + $0x8] sm:$0xff]
    %v564 = vld [vmem:[%s29 + $0x10] sm:$0xff]
    %v565 = vld [vmem:[%s29 + $0x18] sm:$0xff]
    %v566 = vld [vmem:[%s33] sm:$0x1]
    %v568 = vlaneseq
    %v569 = vshrl.u32 %v568, 7
    %v570 = vsub.s32 0, %v569
    %v571 = vrot.slane %v566, %v570
    %573 = vmatprep.subr.mxu0 0.0
    %574 = vmatpush1.msra.mxu0 %v562
    %575 = vmatprep.subr.mxu0 0.0
    %576 = vmatpush1.msra.mxu0 %v563
    %577 = vmatprep.subr.mxu0 0.0
    %578 = vmatpush1.msra.mxu0 %v564
    %579 = vmatprep.subr.mxu0 0.0
    %580 = vmatpush1.msra.mxu0 %v565
    %581 = vmatprep.subr.mxu0 0.0
    %582 = vmatpush1.msra.mxu0 0.0
    %583 = vmatprep.subr.mxu0 0.0
    %584 = vmatpush1.msra.mxu0 0.0
    %585 = vmatprep.subr.mxu0 0.0
    %586 = vmatpush1.msra.mxu0 0.0
    %587 = vmatprep.subr.mxu0 0.0
    %588 = vmatpush1.msra.mxu0 0.0
    %589 = vmatprep.subr.mxu0 0.0
    %590 = vmatpush1.msra.mxu0 0.0
    %591 = vmatprep.subr.mxu0 0.0
    %592 = vmatpush1.msra.mxu0 0.0
    %593 = vmatprep.subr.mxu0 0.0
    %594 = vmatpush1.msra.mxu0 0.0
    %595 = vmatprep.subr.mxu0 0.0
    %596 = vmatpush1.msra.mxu0 0.0
    %597 = vmatprep.subr.mxu0 0.0
    %598 = vmatpush1.msra.mxu0 0.0
    %599 = vmatprep.subr.mxu0 0.0
    %600 = vmatpush1.msra.mxu0 0.0
    %601 = vmatprep.subr.mxu0 0.0
    %602 = vmatpush1.msra.mxu0 0.0
    %603 = vmatprep.subr.mxu0 0.0
    %604 = vmatpush1.msra.mxu0 0.0
    %605 = vmatprep.subr.mxu0 0.0
    %606 = vmatpush1.msra.mxu0 0.0
    %607 = vmatprep.subr.mxu0 0.0
    %608 = vmatpush1.msra.mxu0 0.0
    %609 = vmatprep.subr.mxu0 0.0
    %610 = vmatpush1.msra.mxu0 0.0
    %611 = vmatprep.subr.mxu0 0.0
    %612 = vmatpush1.msra.mxu0 0.0
    %613 = vmatprep.subr.mxu0 0.0
    %614 = vmatpush1.msra.mxu0 0.0
    %615 = vmatprep.subr.mxu0 0.0
    %616 = vmatpush1.msra.mxu0 0.0
    %617 = vmatprep.subr.mxu0 0.0
    %618 = vmatpush1.msra.mxu0 0.0
    %619 = vmatprep.subr.mxu0 0.0
    %620 = vmatpush1.msra.mxu0 0.0
    %621 = vmatprep.subr.mxu0 0.0
    %622 = vmatpush1.msra.mxu0 0.0
    %623 = vmatprep.subr.mxu0 0.0
    %624 = vmatpush1.msra.mxu0 0.0
    %625 = vmatprep.subr.mxu0 0.0
    %626 = vmatpush1.msra.mxu0 0.0
    %627 = vmatprep.subr.mxu0 0.0
    %628 = vmatpush1.msra.mxu0 0.0
    %629 = vmatprep.subr.mxu0 0.0
    %630 = vmatpush1.msra.mxu0 0.0
    %631 = vmatprep.subr.mxu0 0.0
    %632 = vmatpush1.msra.mxu0 0.0
    %633 = vmatprep.subr.mxu0 0.0
    %634 = vmatpush1.msra.mxu0 0.0
    %635 = vmatprep.subr.mxu0 0.0
    %636 = vmatpush1.msra.mxu0 0.0
    %637 = vmatprep.mubr.f32.mxu0 0.0
    %638 = vmatmul.mubr.f32.gmra.mrb[0].mxu0 %v482
    %v639 = vpop.f32.mrb[0].mxu0
    %v640 = vadd.f32 %v571, %v639
    %v641 = vpop.f32.mrb[0].mxu0
    %642 = vmatprep.mubr.f32.mxu0 0.0
    %643 = vmatmul.mubr.f32.gmra.mrb[0].mxu0 %v485
    %v644 = vpop.f32.mrb[0].mxu0
    %v645 = vadd.f32 %v571, %v644
    %v646 = vpop.f32.mrb[0].mxu0
    %647 = vdwg.mxu0
    %v648 = vld [vmem:[%s23] sm:$0xff]
    %v649 = vld [vmem:[%s23 + $0x8] sm:$0xff]
    %v650 = vld [vmem:[%s23 + $0x10] sm:$0xff]
    %v651 = vld [vmem:[%s23 + $0x18] sm:$0xff]
    %v652 = vld [vmem:[%s31] sm:$0xff]
    %v653 = vld [vmem:[%s31 + $0x8] sm:$0xff]
    %v654 = vld [vmem:[%s31 + $0x10] sm:$0xff]
    %v655 = vld [vmem:[%s31 + $0x18] sm:$0xff]
    %v656 = vld [vmem:[%s27] sm:$0x1]
    %v658 = vlaneseq
    %v659 = vshrl.u32 %v658, 7
    %v660 = vsub.s32 0, %v659
    %v661 = vrot.slane %v656, %v660
    %v663 = vld [vmem:[%s35] sm:$0x1]
    %v665 = vlaneseq
    %v666 = vshrl.u32 %v665, 7
    %v667 = vsub.s32 0, %v666
    %v668 = vrot.slane %v663, %v667
    %v671 = vsel %vm480, %v308, 0
    %673 = vmatprep.subr.mxu0 0.0
    %674 = vmatpush1.msra.mxu0 %v648
    %675 = vmatprep.subr.mxu0 0.0
    %676 = vmatpush1.msra.mxu0 %v649
    %677 = vmatprep.subr.mxu0 0.0
    %678 = vmatpush1.msra.mxu0 %v650
    %679 = vmatprep.subr.mxu0 0.0
    %680 = vmatpush1.msra.mxu0 %v651
    %681 = vmatprep.subr.mxu0 0.0
    %682 = vmatpush1.msra.mxu0 0.0
    %683 = vmatprep.subr.mxu0 0.0
    %684 = vmatpush1.msra.mxu0 0.0
    %685 = vmatprep.subr.mxu0 0.0
    %686 = vmatpush1.msra.mxu0 0.0
    %687 = vmatprep.subr.mxu0 0.0
    %688 = vmatpush1.msra.mxu0 0.0
    %689 = vmatprep.subr.mxu0 0.0
    %690 = vmatpush1.msra.mxu0 0.0
    %691 = vmatprep.subr.mxu0 0.0
    %692 = vmatpush1.msra.mxu0 0.0
    %693 = vmatprep.subr.mxu0 0.0
    %694 = vmatpush1.msra.mxu0 0.0
    %695 = vmatprep.subr.mxu0 0.0
    %696 = vmatpush1.msra.mxu0 0.0
    %697 = vmatprep.subr.mxu0 0.0
    %698 = vmatpush1.msra.mxu0 0.0
    %699 = vmatprep.subr.mxu0 0.0
    %700 = vmatpush1.msra.mxu0 0.0
    %701 = vmatprep.subr.mxu0 0.0
    %702 = vmatpush1.msra.mxu0 0.0
    %703 = vmatprep.subr.mxu0 0.0
    %704 = vmatpush1.msra.mxu0 0.0
    %705 = vmatprep.subr.mxu0 0.0
    %706 = vmatpush1.msra.mxu0 0.0
    %707 = vmatprep.subr.mxu0 0.0
    %708 = vmatpush1.msra.mxu0 0.0
    %709 = vmatprep.subr.mxu0 0.0
    %710 = vmatpush1.msra.mxu0 0.0
    %711 = vmatprep.subr.mxu0 0.0
    %712 = vmatpush1.msra.mxu0 0.0
    %713 = vmatprep.subr.mxu0 0.0
    %714 = vmatpush1.msra.mxu0 0.0
    %715 = vmatprep.subr.mxu0 0.0
    %716 = vmatpush1.msra.mxu0 0.0
    %717 = vmatprep.subr.mxu0 0.0
    %718 = vmatpush1.msra.mxu0 0.0
    %719 = vmatprep.subr.mxu0 0.0
    %720 = vmatpush1.msra.mxu0 0.0
    %721 = vmatprep.subr.mxu0 0.0
    %722 = vmatpush1.msra.mxu0 0.0
    %723 = vmatprep.subr.mxu0 0.0
    %724 = vmatpush1.msra.mxu0 0.0
    %725 = vmatprep.subr.mxu0 0.0
    %726 = vmatpush1.msra.mxu0 0.0
    %727 = vmatprep.subr.mxu0 0.0
    %728 = vmatpush1.msra.mxu0 0.0
    %729 = vmatprep.subr.mxu0 0.0
    %730 = vmatpush1.msra.mxu0 0.0
    %731 = vmatprep.subr.mxu0 0.0
    %732 = vmatpush1.msra.mxu0 0.0
    %733 = vmatprep.subr.mxu0 0.0
    %734 = vmatpush1.msra.mxu0 0.0
    %735 = vmatprep.subr.mxu0 0.0
    %736 = vmatpush1.msra.mxu0 0.0
    %737 = vmatprep.mubr.f32.mxu0 0.0
    %738 = vmatmul.mubr.f32.gmra.mrb[0].mxu0 %v671
    %v739 = vpop.f32.mrb[0].mxu0
    %v740 = vadd.f32 %v661, %v739
    %v741 = vpop.f32.mrb[0].mxu0
    %742 = vdwg.mxu0
    %v744 = vrot.slane %v740, 1
    %v747 = vadd.f32 %v554, %v740
    %v748 = vadd.f32 %v559, %v744
    %v749 = vxor.u32 %v747, 2147483648
    %v750 = vxor.u32 %v748, 2147483648
    %v751 = vmul.f32 %v749, 1.442695
    %v752 = vpow.pop %v751
    %v753 = vmul.f32 %v750, 1.442695
    %v754 = vpow.pop %v753
    %v755 = vadd.f32 %v752, 1.0
    %v756 = vadd.f32 %v754, 1.0
    %v757 = vrcp.pop %v755
    %v758 = vmul.f32 1.0, %v757
    %v759 = vrcp.pop %v756
    %v760 = vmul.f32 1.0, %v759
    %761 = vrot.lane.b32.xlu0 %v740, 64
    %v762 = vpop.permute.xlu0 %761
    %763 = vrot.lane.b32.xlu0 %v744, 64
    %v764 = vpop.permute.xlu0 %763
    %v767 = vmul.f32 %v758, %v762
    %v768 = vmul.f32 %v760, %v764
    %771 = vrot.lane.b32.xlu0 %v767, 64
    %v772 = vpop.permute.xlu0 %771
    %773 = vrot.lane.b32.xlu0 %v768, 64
    %v774 = vpop.permute.xlu0 %773
    %v777 = vadd.f32 %v554, %v772
    %v778 = vadd.f32 %v559, %v774
    %v779 = vtanh.pop %v777
    %v780 = vtanh.pop %v778
    %v781 = vsub.f32 1.0, %v758
    %v782 = vsub.f32 1.0, %v760
    %785 = vrot.lane.b32.xlu0 %v779, 96
    %v786 = vpop.permute.xlu0 %785
    %787 = vrot.lane.b32.xlu0 %v780, 96
    %v788 = vpop.permute.xlu0 %787
    %v791 = vmul.f32 %v781, %v786
    %v792 = vmul.f32 %v782, %v788
    %v793 = vrot.slane %v308, 1
    %794 = vrot.lane.b32.xlu0 %v308, 32
    %v795 = vpop.permute.xlu0 %794
    %796 = vrot.lane.b32.xlu0 %v793, 32
    %v797 = vpop.permute.xlu0 %796
    %v800 = vmul.f32 %v758, %v795
    %v801 = vmul.f32 %v760, %v797
    %v802 = vadd.f32 %v791, %v800
    %v803 = vadd.f32 %v792, %v801
    %806 = vrot.lane.b32.xlu0 %v802, 96
    %v807 = vpop.permute.xlu0 %806
    %808 = vrot.lane.b32.xlu0 %v803, 96
    %v809 = vpop.permute.xlu0 %808
    %vm812 = vcmask 253952
    %813 = vst.msk [vmem:[#allocation2] sm:$0x1] %vm812, %v807
    %814 = vst.msk [vmem:[#allocation2 + $0x8] sm:$0x1] %vm812, %v809
    %v815 = vrot.slane %v803, 7
    %vm816 = vcmask 1041409
    %v817 = vsel %vm816, %v815, %v802
    %818 = vrot.lane.b32.xlu0 %v817, 96
    %v819 = vpop.permute.xlu0 %818
    %v820 = vsel %vm480, %v819, 0
    %822 = vmatprep.subr.mxu0 0.0
    %823 = vmatpush1.msra.mxu0 %v648
    %824 = vmatprep.subr.mxu0 0.0
    %825 = vmatpush1.msra.mxu0 %v649
    %826 = vmatprep.subr.mxu0 0.0
    %827 = vmatpush1.msra.mxu0 %v650
    %828 = vmatprep.subr.mxu0 0.0
    %829 = vmatpush1.msra.mxu0 %v651
    %830 = vmatprep.subr.mxu0 0.0
    %831 = vmatpush1.msra.mxu0 0.0
    %832 = vmatprep.subr.mxu0 0.0
    %833 = vmatpush1.msra.mxu0 0.0
    %834 = vmatprep.subr.mxu0 0.0
    %835 = vmatpush1.msra.mxu0 0.0
    %836 = vmatprep.subr.mxu0 0.0
    %837 = vmatpush1.msra.mxu0 0.0
    %838 = vmatprep.subr.mxu0 0.0
    %839 = vmatpush1.msra.mxu0 0.0
    %840 = vmatprep.subr.mxu0 0.0
    %841 = vmatpush1.msra.mxu0 0.0
    %842 = vmatprep.subr.mxu0 0.0
    %843 = vmatpush1.msra.mxu0 0.0
    %844 = vmatprep.subr.mxu0 0.0
    %845 = vmatpush1.msra.mxu0 0.0
    %846 = vmatprep.subr.mxu0 0.0
    %847 = vmatpush1.msra.mxu0 0.0
    %848 = vmatprep.subr.mxu0 0.0
    %849 = vmatpush1.msra.mxu0 0.0
    %850 = vmatprep.subr.mxu0 0.0
    %851 = vmatpush1.msra.mxu0 0.0
    %852 = vmatprep.subr.mxu0 0.0
    %853 = vmatpush1.msra.mxu0 0.0
    %854 = vmatprep.subr.mxu0 0.0
    %855 = vmatpush1.msra.mxu0 0.0
    %856 = vmatprep.subr.mxu0 0.0
    %857 = vmatpush1.msra.mxu0 0.0
    %858 = vmatprep.subr.mxu0 0.0
    %859 = vmatpush1.msra.mxu0 0.0
    %860 = vmatprep.subr.mxu0 0.0
    %861 = vmatpush1.msra.mxu0 0.0
    %862 = vmatprep.subr.mxu0 0.0
    %863 = vmatpush1.msra.mxu0 0.0
    %864 = vmatprep.subr.mxu0 0.0
    %865 = vmatpush1.msra.mxu0 0.0
    %866 = vmatprep.subr.mxu0 0.0
    %867 = vmatpush1.msra.mxu0 0.0
    %868 = vmatprep.subr.mxu0 0.0
    %869 = vmatpush1.msra.mxu0 0.0
    %870 = vmatprep.subr.mxu0 0.0
    %871 = vmatpush1.msra.mxu0 0.0
    %872 = vmatprep.subr.mxu0 0.0
    %873 = vmatpush1.msra.mxu0 0.0
    %874 = vmatprep.subr.mxu0 0.0
    %875 = vmatpush1.msra.mxu0 0.0
    %876 = vmatprep.subr.mxu0 0.0
    %877 = vmatpush1.msra.mxu0 0.0
    %878 = vmatprep.subr.mxu0 0.0
    %879 = vmatpush1.msra.mxu0 0.0
    %880 = vmatprep.subr.mxu0 0.0
    %881 = vmatpush1.msra.mxu0 0.0
    %882 = vmatprep.subr.mxu0 0.0
    %883 = vmatpush1.msra.mxu0 0.0
    %884 = vmatprep.subr.mxu0 0.0
    %885 = vmatpush1.msra.mxu0 0.0
    %886 = vmatprep.mubr.f32.mxu0 0.0
    %887 = vmatmul.mubr.f32.gmra.mrb[0].mxu0 %v820
    %v888 = vpop.f32.mrb[0].mxu0
    %v889 = vadd.f32 %v661, %v888
    %v890 = vpop.f32.mrb[0].mxu0
    %891 = vdwg.mxu0
    %v893 = vrot.slane %v889, 7
    %v896 = vadd.f32 %v554, %v893
    %v897 = vadd.f32 %v559, %v889
    %v898 = vxor.u32 %v896, 2147483648
    %v899 = vxor.u32 %v897, 2147483648
    %v900 = vmul.f32 %v898, 1.442695
    %v901 = vpow.pop %v900
    %v902 = vmul.f32 %v899, 1.442695
    %v903 = vpow.pop %v902
    %v904 = vadd.f32 %v901, 1.0
    %v905 = vadd.f32 %v903, 1.0
    %v906 = vrcp.pop %v904
    %v907 = vmul.f32 1.0, %v906
    %v908 = vrcp.pop %v905
    %v909 = vmul.f32 1.0, %v908
    %910 = vrot.lane.b32.xlu0 %v893, 64
    %v911 = vpop.permute.xlu0 %910
    %912 = vrot.lane.b32.xlu0 %v889, 64
    %v913 = vpop.permute.xlu0 %912
    %v916 = vmul.f32 %v907, %v911
    %v917 = vmul.f32 %v909, %v913
    %920 = vrot.lane.b32.xlu0 %v916, 64
    %v921 = vpop.permute.xlu0 %920
    %922 = vrot.lane.b32.xlu0 %v917, 64
    %v923 = vpop.permute.xlu0 %922
    %v926 = vadd.f32 %v554, %v921
    %v927 = vadd.f32 %v559, %v923
    %v928 = vtanh.pop %v926
    %v929 = vtanh.pop %v927
    %v930 = vsub.f32 1.0, %v907
    %v931 = vsub.f32 1.0, %v909
    %934 = vrot.lane.b32.xlu0 %v928, 96
    %v935 = vpop.permute.xlu0 %934
    %936 = vrot.lane.b32.xlu0 %v929, 96
    %v937 = vpop.permute.xlu0 %936
    %v940 = vmul.f32 %v930, %v935
    %v941 = vmul.f32 %v931, %v937
    %v942 = vrot.slane %v802, 7
    %v945 = vmul.f32 %v907, %v942
    %v946 = vmul.f32 %v909, %v815
    %v947 = vadd.f32 %v940, %v945
    %v948 = vadd.f32 %v941, %v946
    %951 = vrot.lane.b32.xlu0 %v947, 96
    %v952 = vpop.permute.xlu0 %951
    %953 = vrot.lane.b32.xlu0 %v948, 96
    %v954 = vpop.permute.xlu0 %953
    %vm957 = vcmask 254977
    %958 = vst.msk [vmem:[#allocation2] sm:$0x2] %vm957, %v952
    %959 = vst.msk [vmem:[#allocation2 + $0x8] sm:$0x2] %vm957, %v954
    %v960 = vrot.slane %v947, 1
    %v961 = vsel %vm816, %v948, %v960
    %962 = vrot.lane.b32.xlu0 %v961, 96
    %v963 = vpop.permute.xlu0 %962
    %v964 = vsel %vm480, %v963, 0
    %966 = vmatprep.subr.mxu0 0.0
    %967 = vmatpush1.msra.mxu0 %v648
    %968 = vmatprep.subr.mxu0 0.0
    %969 = vmatpush1.msra.mxu0 %v649
    %970 = vmatprep.subr.mxu0 0.0
    %971 = vmatpush1.msra.mxu0 %v650
    %972 = vmatprep.subr.mxu0 0.0
    %973 = vmatpush1.msra.mxu0 %v651
    %974 = vmatprep.subr.mxu0 0.0
    %975 = vmatpush1.msra.mxu0 0.0
    %976 = vmatprep.subr.mxu0 0.0
    %977 = vmatpush1.msra.mxu0 0.0
    %978 = vmatprep.subr.mxu0 0.0
    %979 = vmatpush1.msra.mxu0 0.0
    %980 = vmatprep.subr.mxu0 0.0
    %981 = vmatpush1.msra.mxu0 0.0
    %982 = vmatprep.subr.mxu0 0.0
    %983 = vmatpush1.msra.mxu0 0.0
    %984 = vmatprep.subr.mxu0 0.0
    %985 = vmatpush1.msra.mxu0 0.0
    %986 = vmatprep.subr.mxu0 0.0
    %987 = vmatpush1.msra.mxu0 0.0
    %988 = vmatprep.subr.mxu0 0.0
    %989 = vmatpush1.msra.mxu0 0.0
    %990 = vmatprep.subr.mxu0 0.0
    %991 = vmatpush1.msra.mxu0 0.0
    %992 = vmatprep.subr.mxu0 0.0
    %993 = vmatpush1.msra.mxu0 0.0
    %994 = vmatprep.subr.mxu0 0.0
    %995 = vmatpush1.msra.mxu0 0.0
    %996 = vmatprep.subr.mxu0 0.0
    %997 = vmatpush1.msra.mxu0 0.0
    %998 = vmatprep.subr.mxu0 0.0
    %999 = vmatpush1.msra.mxu0 0.0
    %1000 = vmatprep.subr.mxu0 0.0
    %1001 = vmatpush1.msra.mxu0 0.0
    %1002 = vmatprep.subr.mxu0 0.0
    %1003 = vmatpush1.msra.mxu0 0.0
    %1004 = vmatprep.subr.mxu0 0.0
    %1005 = vmatpush1.msra.mxu0 0.0
    %1006 = vmatprep.subr.mxu0 0.0
    %1007 = vmatpush1.msra.mxu0 0.0
    %1008 = vmatprep.subr.mxu0 0.0
    %1009 = vmatpush1.msra.mxu0 0.0
    %1010 = vmatprep.subr.mxu0 0.0
    %1011 = vmatpush1.msra.mxu0 0.0
    %1012 = vmatprep.subr.mxu0 0.0
    %1013 = vmatpush1.msra.mxu0 0.0
    %1014 = vmatprep.subr.mxu0 0.0
    %1015 = vmatpush1.msra.mxu0 0.0
    %1016 = vmatprep.subr.mxu0 0.0
    %1017 = vmatpush1.msra.mxu0 0.0
    %1018 = vmatprep.subr.mxu0 0.0
    %1019 = vmatpush1.msra.mxu0 0.0
    %1020 = vmatprep.subr.mxu0 0.0
    %1021 = vmatpush1.msra.mxu0 0.0
    %1022 = vmatprep.subr.mxu0 0.0
    %1023 = vmatpush1.msra.mxu0 0.0
    %1024 = vmatprep.subr.mxu0 0.0
    %1025 = vmatpush1.msra.mxu0 0.0
    %1026 = vmatprep.subr.mxu0 0.0
    %1027 = vmatpush1.msra.mxu0 0.0
    %1028 = vmatprep.subr.mxu0 0.0
    %1029 = vmatpush1.msra.mxu0 0.0
    %1030 = vmatprep.mubr.f32.mxu0 0.0
    %1031 = vmatmul.mubr.f32.gmra.mrb[0].mxu0 %v964
    %v1032 = vpop.f32.mrb[0].mxu0
    %v1033 = vadd.f32 %v661, %v1032
    %v1034 = vpop.f32.mrb[0].mxu0
    %1035 = vdwg.mxu0
    %v1037 = vrot.slane %v1033, 6
    %v1038 = vrot.slane %v1033, 7
    %v1041 = vadd.f32 %v554, %v1037
    %v1042 = vadd.f32 %v559, %v1038
    %v1043 = vxor.u32 %v1041, 2147483648
    %v1044 = vxor.u32 %v1042, 2147483648
    %v1045 = vmul.f32 %v1043, 1.442695
    %v1046 = vpow.pop %v1045
    %v1047 = vmul.f32 %v1044, 1.442695
    %v1048 = vpow.pop %v1047
    %v1049 = vadd.f32 %v1046, 1.0
    %v1050 = vadd.f32 %v1048, 1.0
    %v1051 = vrcp.pop %v1049
    %v1052 = vmul.f32 1.0, %v1051
    %v1053 = vrcp.pop %v1050
    %v1054 = vmul.f32 1.0, %v1053
    %1055 = vrot.lane.b32.xlu0 %v1037, 64
    %v1056 = vpop.permute.xlu0 %1055
    %1057 = vrot.lane.b32.xlu0 %v1038, 64
    %v1058 = vpop.permute.xlu0 %1057
    %v1061 = vmul.f32 %v1052, %v1056
    %v1062 = vmul.f32 %v1054, %v1058
    %1065 = vrot.lane.b32.xlu0 %v1061, 64
    %v1066 = vpop.permute.xlu0 %1065
    %1067 = vrot.lane.b32.xlu0 %v1062, 64
    %v1068 = vpop.permute.xlu0 %1067
    %v1071 = vadd.f32 %v554, %v1066
    %v1072 = vadd.f32 %v559, %v1068
    %v1073 = vtanh.pop %v1071
    %v1074 = vtanh.pop %v1072
    %v1075 = vsub.f32 1.0, %v1052
    %v1076 = vsub.f32 1.0, %v1054
    %1079 = vrot.lane.b32.xlu0 %v1073, 96
    %v1080 = vpop.permute.xlu0 %1079
    %1081 = vrot.lane.b32.xlu0 %v1074, 96
    %v1082 = vpop.permute.xlu0 %1081
    %v1085 = vmul.f32 %v1075, %v1080
    %v1086 = vmul.f32 %v1076, %v1082
    %v1087 = vrot.slane %v947, 7
    %v1088 = vrot.slane %v948, 7
    %v1091 = vmul.f32 %v1052, %v1087
    %v1092 = vmul.f32 %v1054, %v1088
    %v1093 = vadd.f32 %v1085, %v1091
    %v1094 = vadd.f32 %v1086, %v1092
    %1097 = vrot.lane.b32.xlu0 %v1093, 96
    %v1098 = vpop.permute.xlu0 %1097
    %1099 = vrot.lane.b32.xlu0 %v1094, 96
    %v1100 = vpop.permute.xlu0 %1099
    %vm1103 = vcmask 256002
    %1104 = vst.msk [vmem:[#allocation2] sm:$0x4] %vm1103, %v1098
    %1105 = vst.msk [vmem:[#allocation2 + $0x8] sm:$0x4] %vm1103, %v1100
    %v1106 = vrot.slane %v1093, 2
    %v1107 = vrot.slane %v1094, 1
    %v1108 = vsel %vm816, %v1107, %v1106
    %1109 = vrot.lane.b32.xlu0 %v1108, 96
    %v1110 = vpop.permute.xlu0 %1109
    %v1111 = vsel %vm480, %v1110, 0
    %1113 = vmatprep.subr.mxu0 0.0
    %1114 = vmatpush1.msra.mxu0 %v648
    %1115 = vmatprep.subr.mxu0 0.0
    %1116 = vmatpush1.msra.mxu0 %v649
    %1117 = vmatprep.subr.mxu0 0.0
    %1118 = vmatpush1.msra.mxu0 %v650
    %1119 = vmatprep.subr.mxu0 0.0
    %1120 = vmatpush1.msra.mxu0 %v651
    %1121 = vmatprep.subr.mxu0 0.0
    %1122 = vmatpush1.msra.mxu0 0.0
    %1123 = vmatprep.subr.mxu0 0.0
    %1124 = vmatpush1.msra.mxu0 0.0
    %1125 = vmatprep.subr.mxu0 0.0
    %1126 = vmatpush1.msra.mxu0 0.0
    %1127 = vmatprep.subr.mxu0 0.0
    %1128 = vmatpush1.msra.mxu0 0.0
    %1129 = vmatprep.subr.mxu0 0.0
    %1130 = vmatpush1.msra.mxu0 0.0
    %1131 = vmatprep.subr.mxu0 0.0
    %1132 = vmatpush1.msra.mxu0 0.0
    %1133 = vmatprep.subr.mxu0 0.0
    %1134 = vmatpush1.msra.mxu0 0.0
    %1135 = vmatprep.subr.mxu0 0.0
    %1136 = vmatpush1.msra.mxu0 0.0
    %1137 = vmatprep.subr.mxu0 0.0
    %1138 = vmatpush1.msra.mxu0 0.0
    %1139 = vmatprep.subr.mxu0 0.0
    %1140 = vmatpush1.msra.mxu0 0.0
    %1141 = vmatprep.subr.mxu0 0.0
    %1142 = vmatpush1.msra.mxu0 0.0
    %1143 = vmatprep.subr.mxu0 0.0
    %1144 = vmatpush1.msra.mxu0 0.0
    %1145 = vmatprep.subr.mxu0 0.0
    %1146 = vmatpush1.msra.mxu0 0.0
    %1147 = vmatprep.subr.mxu0 0.0
    %1148 = vmatpush1.msra.mxu0 0.0
    %1149 = vmatprep.subr.mxu0 0.0
    %1150 = vmatpush1.msra.mxu0 0.0
    %1151 = vmatprep.subr.mxu0 0.0
    %1152 = vmatpush1.msra.mxu0 0.0
    %1153 = vmatprep.subr.mxu0 0.0
    %1154 = vmatpush1.msra.mxu0 0.0
    %1155 = vmatprep.subr.mxu0 0.0
    %1156 = vmatpush1.msra.mxu0 0.0
    %1157 = vmatprep.subr.mxu0 0.0
    %1158 = vmatpush1.msra.mxu0 0.0
    %1159 = vmatprep.subr.mxu0 0.0
    %1160 = vmatpush1.msra.mxu0 0.0
    %1161 = vmatprep.subr.mxu0 0.0
    %1162 = vmatpush1.msra.mxu0 0.0
    %1163 = vmatprep.subr.mxu0 0.0
    %1164 = vmatpush1.msra.mxu0 0.0
    %1165 = vmatprep.subr.mxu0 0.0
    %1166 = vmatpush1.msra.mxu0 0.0
    %1167 = vmatprep.subr.mxu0 0.0
    %1168 = vmatpush1.msra.mxu0 0.0
    %1169 = vmatprep.subr.mxu0 0.0
    %1170 = vmatpush1.msra.mxu0 0.0
    %1171 = vmatprep.subr.mxu0 0.0
    %1172 = vmatpush1.msra.mxu0 0.0
    %1173 = vmatprep.subr.mxu0 0.0
    %1174 = vmatpush1.msra.mxu0 0.0
    %1175 = vmatprep.subr.mxu0 0.0
    %1176 = vmatpush1.msra.mxu0 0.0
    %1177 = vmatprep.mubr.f32.mxu0 0.0
    %1178 = vmatmul.mubr.f32.gmra.mrb[0].mxu0 %v1111
    %v1179 = vpop.f32.mrb[0].mxu0
    %v1180 = vadd.f32 %v661, %v1179
    %v1181 = vpop.f32.mrb[0].mxu0
    %1182 = vdwg.mxu0
    %v1184 = vrot.slane %v1180, 5
    %v1185 = vrot.slane %v1180, 6
    %v1188 = vadd.f32 %v554, %v1184
    %v1189 = vadd.f32 %v559, %v1185
    %v1190 = vxor.u32 %v1188, 2147483648
    %v1191 = vxor.u32 %v1189, 2147483648
    %v1192 = vmul.f32 %v1190, 1.442695
    %v1193 = vpow.pop %v1192
    %v1194 = vmul.f32 %v1191, 1.442695
    %v1195 = vpow.pop %v1194
    %v1196 = vadd.f32 %v1193, 1.0
    %v1197 = vadd.f32 %v1195, 1.0
    %v1198 = vrcp.pop %v1196
    %v1199 = vmul.f32 1.0, %v1198
    %v1200 = vrcp.pop %v1197
    %v1201 = vmul.f32 1.0, %v1200
    %1202 = vrot.lane.b32.xlu0 %v1184, 64
    %v1203 = vpop.permute.xlu0 %1202
    %1204 = vrot.lane.b32.xlu0 %v1185, 64
    %v1205 = vpop.permute.xlu0 %1204
    %v1208 = vmul.f32 %v1199, %v1203
    %v1209 = vmul.f32 %v1201, %v1205
    %1212 = vrot.lane.b32.xlu0 %v1208, 64
    %v1213 = vpop.permute.xlu0 %1212
    %1214 = vrot.lane.b32.xlu0 %v1209, 64
    %v1215 = vpop.permute.xlu0 %1214
    %v1218 = vadd.f32 %v554, %v1213
    %v1219 = vadd.f32 %v559, %v1215
    %v1220 = vtanh.pop %v1218
    %v1221 = vtanh.pop %v1219
    %v1222 = vsub.f32 1.0, %v1199
    %v1223 = vsub.f32 1.0, %v1201
    %1226 = vrot.lane.b32.xlu0 %v1220, 96
    %v1227 = vpop.permute.xlu0 %1226
    %1228 = vrot.lane.b32.xlu0 %v1221, 96
    %v1229 = vpop.permute.xlu0 %1228
    %v1232 = vmul.f32 %v1222, %v1227
    %v1233 = vmul.f32 %v1223, %v1229
    %v1234 = vrot.slane %v1093, 7
    %v1235 = vrot.slane %v1094, 7
    %v1238 = vmul.f32 %v1199, %v1234
    %v1239 = vmul.f32 %v1201, %v1235
    %v1240 = vadd.f32 %v1232, %v1238
    %v1241 = vadd.f32 %v1233, %v1239
    %1244 = vrot.lane.b32.xlu0 %v1240, 96
    %v1245 = vpop.permute.xlu0 %1244
    %1246 = vrot.lane.b32.xlu0 %v1241, 96
    %v1247 = vpop.permute.xlu0 %1246
    %vm1250 = vcmask 257027
    %1251 = vst.msk [vmem:[#allocation2] sm:$0x8] %vm1250, %v1245
    %1252 = vst.msk [vmem:[#allocation2 + $0x8] sm:$0x8] %vm1250, %v1247
    %v1253 = vrot.slane %v1240, 3
    %v1254 = vrot.slane %v1241, 2
    %v1255 = vsel %vm816, %v1254, %v1253
    %1256 = vrot.lane.b32.xlu0 %v1255, 96
    %v1257 = vpop.permute.xlu0 %1256
    %v1258 = vsel %vm480, %v1257, 0
    %1260 = vmatprep.subr.mxu0 0.0
    %1261 = vmatpush1.msra.mxu0 %v648
    %1262 = vmatprep.subr.mxu0 0.0
    %1263 = vmatpush1.msra.mxu0 %v649
    %1264 = vmatprep.subr.mxu0 0.0
    %1265 = vmatpush1.msra.mxu0 %v650
    %1266 = vmatprep.subr.mxu0 0.0
    %1267 = vmatpush1.msra.mxu0 %v651
    %1268 = vmatprep.subr.mxu0 0.0
    %1269 = vmatpush1.msra.mxu0 0.0
    %1270 = vmatprep.subr.mxu0 0.0
    %1271 = vmatpush1.msra.mxu0 0.0
    %1272 = vmatprep.subr.mxu0 0.0
    %1273 = vmatpush1.msra.mxu0 0.0
    %1274 = vmatprep.subr.mxu0 0.0
    %1275 = vmatpush1.msra.mxu0 0.0
    %1276 = vmatprep.subr.mxu0 0.0
    %1277 = vmatpush1.msra.mxu0 0.0
    %1278 = vmatprep.subr.mxu0 0.0
    %1279 = vmatpush1.msra.mxu0 0.0
    %1280 = vmatprep.subr.mxu0 0.0
    %1281 = vmatpush1.msra.mxu0 0.0
    %1282 = vmatprep.subr.mxu0 0.0
    %1283 = vmatpush1.msra.mxu0 0.0
    %1284 = vmatprep.subr.mxu0 0.0
    %1285 = vmatpush1.msra.mxu0 0.0
    %1286 = vmatprep.subr.mxu0 0.0
    %1287 = vmatpush1.msra.mxu0 0.0
    %1288 = vmatprep.subr.mxu0 0.0
    %1289 = vmatpush1.msra.mxu0 0.0
    %1290 = vmatprep.subr.mxu0 0.0
    %1291 = vmatpush1.msra.mxu0 0.0
    %1292 = vmatprep.subr.mxu0 0.0
    %1293 = vmatpush1.msra.mxu0 0.0
    %1294 = vmatprep.subr.mxu0 0.0
    %1295 = vmatpush1.msra.mxu0 0.0
    %1296 = vmatprep.subr.mxu0 0.0
    %1297 = vmatpush1.msra.mxu0 0.0
    %1298 = vmatprep.subr.mxu0 0.0
    %1299 = vmatpush1.msra.mxu0 0.0
    %1300 = vmatprep.subr.mxu0 0.0
    %1301 = vmatpush1.msra.mxu0 0.0
    %1302 = vmatprep.subr.mxu0 0.0
    %1303 = vmatpush1.msra.mxu0 0.0
    %1304 = vmatprep.subr.mxu0 0.0
    %1305 = vmatpush1.msra.mxu0 0.0
    %1306 = vmatprep.subr.mxu0 0.0
    %1307 = vmatpush1.msra.mxu0 0.0
    %1308 = vmatprep.subr.mxu0 0.0
    %1309 = vmatpush1.msra.mxu0 0.0
    %1310 = vmatprep.subr.mxu0 0.0
    %1311 = vmatpush1.msra.mxu0 0.0
    %1312 = vmatprep.subr.mxu0 0.0
    %1313 = vmatpush1.msra.mxu0 0.0
    %1314 = vmatprep.subr.mxu0 0.0
    %1315 = vmatpush1.msra.mxu0 0.0
    %1316 = vmatprep.subr.mxu0 0.0
    %1317 = vmatpush1.msra.mxu0 0.0
    %1318 = vmatprep.subr.mxu0 0.0
    %1319 = vmatpush1.msra.mxu0 0.0
    %1320 = vmatprep.subr.mxu0 0.0
    %1321 = vmatpush1.msra.mxu0 0.0
    %1322 = vmatprep.subr.mxu0 0.0
    %1323 = vmatpush1.msra.mxu0 0.0
    %1324 = vmatprep.mubr.f32.mxu0 0.0
    %1325 = vmatmul.mubr.f32.gmra.mrb[0].mxu0 %v1258
    %v1326 = vpop.f32.mrb[0].mxu0
    %v1327 = vadd.f32 %v661, %v1326
    %v1328 = vpop.f32.mrb[0].mxu0
    %1329 = vdwg.mxu0
    %v1331 = vrot.slane %v1327, 4
    %v1332 = vrot.slane %v1327, 5
    %v1335 = vadd.f32 %v554, %v1331
    %v1336 = vadd.f32 %v559, %v1332
    %v1337 = vxor.u32 %v1335, 2147483648
    %v1338 = vxor.u32 %v1336, 2147483648
    %v1339 = vmul.f32 %v1337, 1.442695
    %v1340 = vpow.pop %v1339
    %v1341 = vmul.f32 %v1338, 1.442695
    %v1342 = vpow.pop %v1341
    %v1343 = vadd.f32 %v1340, 1.0
    %v1344 = vadd.f32 %v1342, 1.0
    %v1345 = vrcp.pop %v1343
    %v1346 = vmul.f32 1.0, %v1345
    %v1347 = vrcp.pop %v1344
    %v1348 = vmul.f32 1.0, %v1347
    %1349 = vrot.lane.b32.xlu0 %v1331, 64
    %v1350 = vpop.permute.xlu0 %1349
    %1351 = vrot.lane.b32.xlu0 %v1332, 64
    %v1352 = vpop.permute.xlu0 %1351
    %v1355 = vmul.f32 %v1346, %v1350
    %v1356 = vmul.f32 %v1348, %v1352
    %1359 = vrot.lane.b32.xlu0 %v1355, 64
    %v1360 = vpop.permute.xlu0 %1359
    %1361 = vrot.lane.b32.xlu0 %v1356, 64
    %v1362 = vpop.permute.xlu0 %1361
    %v1365 = vadd.f32 %v554, %v1360
    %v1366 = vadd.f32 %v559, %v1362
    %v1367 = vtanh.pop %v1365
    %v1368 = vtanh.pop %v1366
    %v1369 = vsub.f32 1.0, %v1346
    %v1370 = vsub.f32 1.0, %v1348
    %1373 = vrot.lane.b32.xlu0 %v1367, 96
    %v1374 = vpop.permute.xlu0 %1373
    %1375 = vrot.lane.b32.xlu0 %v1368, 96
    %v1376 = vpop.permute.xlu0 %1375
    %v1379 = vmul.f32 %v1369, %v1374
    %v1380 = vmul.f32 %v1370, %v1376
    %v1381 = vrot.slane %v1240, 7
    %v1382 = vrot.slane %v1241, 7
    %v1385 = vmul.f32 %v1346, %v1381
    %v1386 = vmul.f32 %v1348, %v1382
    %v1387 = vadd.f32 %v1379, %v1385
    %v1388 = vadd.f32 %v1380, %v1386
    %1391 = vrot.lane.b32.xlu0 %v1387, 96
    %v1392 = vpop.permute.xlu0 %1391
    %1393 = vrot.lane.b32.xlu0 %v1388, 96
    %v1394 = vpop.permute.xlu0 %1393
    %vm1397 = vcmask 258052
    %1398 = vst.msk [vmem:[#allocation2] sm:$0x10] %vm1397, %v1392
    %1399 = vst.msk [vmem:[#allocation2 + $0x8] sm:$0x10] %vm1397, %v1394
    %v1400 = vrot.slane %v1387, 4
    %v1401 = vrot.slane %v1388, 3
    %v1402 = vsel %vm816, %v1401, %v1400
    %1403 = vrot.lane.b32.xlu0 %v1402, 96
    %v1404 = vpop.permute.xlu0 %1403
    %v1405 = vsel %vm480, %v1404, 0
    %1407 = vmatprep.subr.mxu0 0.0
    %1408 = vmatpush1.msra.mxu0 %v648
    %1409 = vmatprep.subr.mxu0 0.0
    %1410 = vmatpush1.msra.mxu0 %v649
    %1411 = vmatprep.subr.mxu0 0.0
    %1412 = vmatpush1.msra.mxu0 %v650
    %1413 = vmatprep.subr.mxu0 0.0
    %1414 = vmatpush1.msra.mxu0 %v651
    %1415 = vmatprep.subr.mxu0 0.0
    %1416 = vmatpush1.msra.mxu0 0.0
    %1417 = vmatprep.subr.mxu0 0.0
    %1418 = vmatpush1.msra.mxu0 0.0
    %1419 = vmatprep.subr.mxu0 0.0
    %1420 = vmatpush1.msra.mxu0 0.0
    %1421 = vmatprep.subr.mxu0 0.0
    %1422 = vmatpush1.msra.mxu0 0.0
    %1423 = vmatprep.subr.mxu0 0.0
    %1424 = vmatpush1.msra.mxu0 0.0
    %1425 = vmatprep.subr.mxu0 0.0
    %1426 = vmatpush1.msra.mxu0 0.0
    %1427 = vmatprep.subr.mxu0 0.0
    %1428 = vmatpush1.msra.mxu0 0.0
    %1429 = vmatprep.subr.mxu0 0.0
    %1430 = vmatpush1.msra.mxu0 0.0
    %1431 = vmatprep.subr.mxu0 0.0
    %1432 = vmatpush1.msra.mxu0 0.0
    %1433 = vmatprep.subr.mxu0 0.0
    %1434 = vmatpush1.msra.mxu0 0.0
    %1435 = vmatprep.subr.mxu0 0.0
    %1436 = vmatpush1.msra.mxu0 0.0
    %1437 = vmatprep.subr.mxu0 0.0
    %1438 = vmatpush1.msra.mxu0 0.0
    %1439 = vmatprep.subr.mxu0 0.0
    %1440 = vmatpush1.msra.mxu0 0.0
    %1441 = vmatprep.subr.mxu0 0.0
    %1442 = vmatpush1.msra.mxu0 0.0
    %1443 = vmatprep.subr.mxu0 0.0
    %1444 = vmatpush1.msra.mxu0 0.0
    %1445 = vmatprep.subr.mxu0 0.0
    %1446 = vmatpush1.msra.mxu0 0.0
    %1447 = vmatprep.subr.mxu0 0.0
    %1448 = vmatpush1.msra.mxu0 0.0
    %1449 = vmatprep.subr.mxu0 0.0
    %1450 = vmatpush1.msra.mxu0 0.0
    %1451 = vmatprep.subr.mxu0 0.0
    %1452 = vmatpush1.msra.mxu0 0.0
    %1453 = vmatprep.subr.mxu0 0.0
    %1454 = vmatpush1.msra.mxu0 0.0
    %1455 = vmatprep.subr.mxu0 0.0
    %1456 = vmatpush1.msra.mxu0 0.0
    %1457 = vmatprep.subr.mxu0 0.0
    %1458 = vmatpush1.msra.mxu0 0.0
    %1459 = vmatprep.subr.mxu0 0.0
    %1460 = vmatpush1.msra.mxu0 0.0
    %1461 = vmatprep.subr.mxu0 0.0
    %1462 = vmatpush1.msra.mxu0 0.0
    %1463 = vmatprep.subr.mxu0 0.0
    %1464 = vmatpush1.msra.mxu0 0.0
    %1465 = vmatprep.subr.mxu0 0.0
    %1466 = vmatpush1.msra.mxu0 0.0
    %1467 = vmatprep.subr.mxu0 0.0
    %1468 = vmatpush1.msra.mxu0 0.0
    %1469 = vmatprep.subr.mxu0 0.0
    %1470 = vmatpush1.msra.mxu0 0.0
    %1471 = vmatprep.mubr.f32.mxu0 0.0
    %1472 = vmatmul.mubr.f32.gmra.mrb[0].mxu0 %v1405
    %v1473 = vpop.f32.mrb[0].mxu0
    %v1474 = vadd.f32 %v661, %v1473
    %v1475 = vpop.f32.mrb[0].mxu0
    %1476 = vdwg.mxu0
    %v1478 = vrot.slane %v1474, 3
    %v1479 = vrot.slane %v1474, 4
    %v1482 = vadd.f32 %v554, %v1478
    %v1483 = vadd.f32 %v559, %v1479
    %v1484 = vxor.u32 %v1482, 2147483648
    %v1485 = vxor.u32 %v1483, 2147483648
    %v1486 = vmul.f32 %v1484, 1.442695
    %v1487 = vpow.pop %v1486
    %v1488 = vmul.f32 %v1485, 1.442695
    %v1489 = vpow.pop %v1488
    %v1490 = vadd.f32 %v1487, 1.0
    %v1491 = vadd.f32 %v1489, 1.0
    %v1492 = vrcp.pop %v1490
    %v1493 = vmul.f32 1.0, %v1492
    %v1494 = vrcp.pop %v1491
    %v1495 = vmul.f32 1.0, %v1494
    %1496 = vrot.lane.b32.xlu0 %v1478, 64
    %v1497 = vpop.permute.xlu0 %1496
    %1498 = vrot.lane.b32.xlu0 %v1479, 64
    %v1499 = vpop.permute.xlu0 %1498
    %v1502 = vmul.f32 %v1493, %v1497
    %v1503 = vmul.f32 %v1495, %v1499
    %1506 = vrot.lane.b32.xlu0 %v1502, 64
    %v1507 = vpop.permute.xlu0 %1506
    %1508 = vrot.lane.b32.xlu0 %v1503, 64
    %v1509 = vpop.permute.xlu0 %1508
    %v1512 = vadd.f32 %v554, %v1507
    %v1513 = vadd.f32 %v559, %v1509
    %v1514 = vtanh.pop %v1512
    %v1515 = vtanh.pop %v1513
    %v1516 = vsub.f32 1.0, %v1493
    %v1517 = vsub.f32 1.0, %v1495
    %1520 = vrot.lane.b32.xlu0 %v1514, 96
    %v1521 = vpop.permute.xlu0 %1520
    %1522 = vrot.lane.b32.xlu0 %v1515, 96
    %v1523 = vpop.permute.xlu0 %1522
    %v1526 = vmul.f32 %v1516, %v1521
    %v1527 = vmul.f32 %v1517, %v1523
    %v1528 = vrot.slane %v1387, 7
    %v1529 = vrot.slane %v1388, 7
    %v1532 = vmul.f32 %v1493, %v1528
    %v1533 = vmul.f32 %v1495, %v1529
    %v1534 = vadd.f32 %v1526, %v1532
    %v1535 = vadd.f32 %v1527, %v1533
    %1538 = vrot.lane.b32.xlu0 %v1534, 96
    %v1539 = vpop.permute.xlu0 %1538
    %1540 = vrot.lane.b32.xlu0 %v1535, 96
    %v1541 = vpop.permute.xlu0 %1540
    %vm1544 = vcmask 259077
    %1545 = vst.msk [vmem:[#allocation2] sm:$0x20] %vm1544, %v1539
    %1546 = vst.msk [vmem:[#allocation2 + $0x8] sm:$0x20] %vm1544, %v1541
    %v1547 = vrot.slane %v1534, 5
    %v1548 = vrot.slane %v1535, 4
    %v1549 = vsel %vm816, %v1548, %v1547
    %1550 = vrot.lane.b32.xlu0 %v1549, 96
    %v1551 = vpop.permute.xlu0 %1550
    %v1552 = vsel %vm480, %v1551, 0
    %1554 = vmatprep.subr.mxu0 0.0
    %1555 = vmatpush1.msra.mxu0 %v648
    %1556 = vmatprep.subr.mxu0 0.0
    %1557 = vmatpush1.msra.mxu0 %v649
    %1558 = vmatprep.subr.mxu0 0.0
    %1559 = vmatpush1.msra.mxu0 %v650
    %1560 = vmatprep.subr.mxu0 0.0
    %1561 = vmatpush1.msra.mxu0 %v651
    %1562 = vmatprep.subr.mxu0 0.0
    %1563 = vmatpush1.msra.mxu0 0.0
    %1564 = vmatprep.subr.mxu0 0.0
    %1565 = vmatpush1.msra.mxu0 0.0
    %1566 = vmatprep.subr.mxu0 0.0
    %1567 = vmatpush1.msra.mxu0 0.0
    %1568 = vmatprep.subr.mxu0 0.0
    %1569 = vmatpush1.msra.mxu0 0.0
    %1570 = vmatprep.subr.mxu0 0.0
    %1571 = vmatpush1.msra.mxu0 0.0
    %1572 = vmatprep.subr.mxu0 0.0
    %1573 = vmatpush1.msra.mxu0 0.0
    %1574 = vmatprep.subr.mxu0 0.0
    %1575 = vmatpush1.msra.mxu0 0.0
    %1576 = vmatprep.subr.mxu0 0.0
    %1577 = vmatpush1.msra.mxu0 0.0
    %1578 = vmatprep.subr.mxu0 0.0
    %1579 = vmatpush1.msra.mxu0 0.0
    %1580 = vmatprep.subr.mxu0 0.0
    %1581 = vmatpush1.msra.mxu0 0.0
    %1582 = vmatprep.subr.mxu0 0.0
    %1583 = vmatpush1.msra.mxu0 0.0
    %1584 = vmatprep.subr.mxu0 0.0
    %1585 = vmatpush1.msra.mxu0 0.0
    %1586 = vmatprep.subr.mxu0 0.0
    %1587 = vmatpush1.msra.mxu0 0.0
    %1588 = vmatprep.subr.mxu0 0.0
    %1589 = vmatpush1.msra.mxu0 0.0
    %1590 = vmatprep.subr.mxu0 0.0
    %1591 = vmatpush1.msra.mxu0 0.0
    %1592 = vmatprep.subr.mxu0 0.0
    %1593 = vmatpush1.msra.mxu0 0.0
    %1594 = vmatprep.subr.mxu0 0.0
    %1595 = vmatpush1.msra.mxu0 0.0
    %1596 = vmatprep.subr.mxu0 0.0
    %1597 = vmatpush1.msra.mxu0 0.0
    %1598 = vmatprep.subr.mxu0 0.0
    %1599 = vmatpush1.msra.mxu0 0.0
    %1600 = vmatprep.subr.mxu0 0.0
    %1601 = vmatpush1.msra.mxu0 0.0
    %1602 = vmatprep.subr.mxu0 0.0
    %1603 = vmatpush1.msra.mxu0 0.0
    %1604 = vmatprep.subr.mxu0 0.0
    %1605 = vmatpush1.msra.mxu0 0.0
    %1606 = vmatprep.subr.mxu0 0.0
    %1607 = vmatpush1.msra.mxu0 0.0
    %1608 = vmatprep.subr.mxu0 0.0
    %1609 = vmatpush1.msra.mxu0 0.0
    %1610 = vmatprep.subr.mxu0 0.0
    %1611 = vmatpush1.msra.mxu0 0.0
    %1612 = vmatprep.subr.mxu0 0.0
    %1613 = vmatpush1.msra.mxu0 0.0
    %1614 = vmatprep.subr.mxu0 0.0
    %1615 = vmatpush1.msra.mxu0 0.0
    %1616 = vmatprep.subr.mxu0 0.0
    %1617 = vmatpush1.msra.mxu0 0.0
    %1618 = vmatprep.mubr.f32.mxu0 0.0
    %1619 = vmatmul.mubr.f32.gmra.mrb[0].mxu0 %v1552
    %v1620 = vpop.f32.mrb[0].mxu0
    %v1621 = vadd.f32 %v661, %v1620
    %v1622 = vpop.f32.mrb[0].mxu0
    %1623 = vdwg.mxu0
    %v1625 = vrot.slane %v1621, 2
    %v1626 = vrot.slane %v1621, 3
    %v1629 = vadd.f32 %v554, %v1625
    %v1630 = vadd.f32 %v559, %v1626
    %v1631 = vxor.u32 %v1629, 2147483648
    %v1632 = vxor.u32 %v1630, 2147483648
    %v1633 = vmul.f32 %v1631, 1.442695
    %v1634 = vpow.pop %v1633
    %v1635 = vmul.f32 %v1632, 1.442695
    %v1636 = vpow.pop %v1635
    %v1637 = vadd.f32 %v1634, 1.0
    %v1638 = vadd.f32 %v1636, 1.0
    %v1639 = vrcp.pop %v1637
    %v1640 = vmul.f32 1.0, %v1639
    %v1641 = vrcp.pop %v1638
    %v1642 = vmul.f32 1.0, %v1641
    %1643 = vrot.lane.b32.xlu0 %v1625, 64
    %v1644 = vpop.permute.xlu0 %1643
    %1645 = vrot.lane.b32.xlu0 %v1626, 64
    %v1646 = vpop.permute.xlu0 %1645
    %v1649 = vmul.f32 %v1640, %v1644
    %v1650 = vmul.f32 %v1642, %v1646
    %1653 = vrot.lane.b32.xlu0 %v1649, 64
    %v1654 = vpop.permute.xlu0 %1653
    %1655 = vrot.lane.b32.xlu0 %v1650, 64
    %v1656 = vpop.permute.xlu0 %1655
    %v1659 = vadd.f32 %v554, %v1654
    %v1660 = vadd.f32 %v559, %v1656
    %v1661 = vtanh.pop %v1659
    %v1662 = vtanh.pop %v1660
    %v1663 = vsub.f32 1.0, %v1640
    %v1664 = vsub.f32 1.0, %v1642
    %1667 = vrot.lane.b32.xlu0 %v1661, 96
    %v1668 = vpop.permute.xlu0 %1667
    %1669 = vrot.lane.b32.xlu0 %v1662, 96
    %v1670 = vpop.permute.xlu0 %1669
    %v1673 = vmul.f32 %v1663, %v1668
    %v1674 = vmul.f32 %v1664, %v1670
    %v1675 = vrot.slane %v1534, 7
    %v1676 = vrot.slane %v1535, 7
    %v1679 = vmul.f32 %v1640, %v1675
    %v1680 = vmul.f32 %v1642, %v1676
    %v1681 = vadd.f32 %v1673, %v1679
    %v1682 = vadd.f32 %v1674, %v1680
    %1685 = vrot.lane.b32.xlu0 %v1681, 96
    %v1686 = vpop.permute.xlu0 %1685
    %1687 = vrot.lane.b32.xlu0 %v1682, 96
    %v1688 = vpop.permute.xlu0 %1687
    %vm1691 = vcmask 260102
    %1692 = vst.msk [vmem:[#allocation2] sm:$0x40] %vm1691, %v1686
    %1693 = vst.msk [vmem:[#allocation2 + $0x8] sm:$0x40] %vm1691, %v1688
    %v1694 = vrot.slane %v1681, 6
    %v1695 = vrot.slane %v1682, 5
    %v1696 = vsel %vm816, %v1695, %v1694
    %1697 = vrot.lane.b32.xlu0 %v1696, 96
    %v1698 = vpop.permute.xlu0 %1697
    %v1699 = vsel %vm480, %v1698, 0
    %1701 = vmatprep.subr.mxu0 0.0
    %1702 = vmatpush1.msra.mxu0 %v648
    %1703 = vmatprep.subr.mxu0 0.0
    %1704 = vmatpush1.msra.mxu0 %v649
    %1705 = vmatprep.subr.mxu0 0.0
    %1706 = vmatpush1.msra.mxu0 %v650
    %1707 = vmatprep.subr.mxu0 0.0
    %1708 = vmatpush1.msra.mxu0 %v651
    %1709 = vmatprep.subr.mxu0 0.0
    %1710 = vmatpush1.msra.mxu0 0.0
    %1711 = vmatprep.subr.mxu0 0.0
    %1712 = vmatpush1.msra.mxu0 0.0
    %1713 = vmatprep.subr.mxu0 0.0
    %1714 = vmatpush1.msra.mxu0 0.0
    %1715 = vmatprep.subr.mxu0 0.0
    %1716 = vmatpush1.msra.mxu0 0.0
    %1717 = vmatprep.subr.mxu0 0.0
    %1718 = vmatpush1.msra.mxu0 0.0
    %1719 = vmatprep.subr.mxu0 0.0
    %1720 = vmatpush1.msra.mxu0 0.0
    %1721 = vmatprep.subr.mxu0 0.0
    %1722 = vmatpush1.msra.mxu0 0.0
    %1723 = vmatprep.subr.mxu0 0.0
    %1724 = vmatpush1.msra.mxu0 0.0
    %1725 = vmatprep.subr.mxu0 0.0
    %1726 = vmatpush1.msra.mxu0 0.0
    %1727 = vmatprep.subr.mxu0 0.0
    %1728 = vmatpush1.msra.mxu0 0.0
    %1729 = vmatprep.subr.mxu0 0.0
    %1730 = vmatpush1.msra.mxu0 0.0
    %1731 = vmatprep.subr.mxu0 0.0
    %1732 = vmatpush1.msra.mxu0 0.0
    %1733 = vmatprep.subr.mxu0 0.0
    %1734 = vmatpush1.msra.mxu0 0.0
    %1735 = vmatprep.subr.mxu0 0.0
    %1736 = vmatpush1.msra.mxu0 0.0
    %1737 = vmatprep.subr.mxu0 0.0
    %1738 = vmatpush1.msra.mxu0 0.0
    %1739 = vmatprep.subr.mxu0 0.0
    %1740 = vmatpush1.msra.mxu0 0.0
    %1741 = vmatprep.subr.mxu0 0.0
    %1742 = vmatpush1.msra.mxu0 0.0
    %1743 = vmatprep.subr.mxu0 0.0
    %1744 = vmatpush1.msra.mxu0 0.0
    %1745 = vmatprep.subr.mxu0 0.0
    %1746 = vmatpush1.msra.mxu0 0.0
    %1747 = vmatprep.subr.mxu0 0.0
    %1748 = vmatpush1.msra.mxu0 0.0
    %1749 = vmatprep.subr.mxu0 0.0
    %1750 = vmatpush1.msra.mxu0 0.0
    %1751 = vmatprep.subr.mxu0 0.0
    %1752 = vmatpush1.msra.mxu0 0.0
    %1753 = vmatprep.subr.mxu0 0.0
    %1754 = vmatpush1.msra.mxu0 0.0
    %1755 = vmatprep.subr.mxu0 0.0
    %1756 = vmatpush1.msra.mxu0 0.0
    %1757 = vmatprep.subr.mxu0 0.0
    %1758 = vmatpush1.msra.mxu0 0.0
    %1759 = vmatprep.subr.mxu0 0.0
    %1760 = vmatpush1.msra.mxu0 0.0
    %1761 = vmatprep.subr.mxu0 0.0
    %1762 = vmatpush1.msra.mxu0 0.0
    %1763 = vmatprep.subr.mxu0 0.0
    %1764 = vmatpush1.msra.mxu0 0.0
    %1765 = vmatprep.mubr.f32.mxu0 0.0
    %1766 = vmatmul.mubr.f32.gmra.mrb[0].mxu0 %v1699
    %v1767 = vpop.f32.mrb[0].mxu0
    %v1768 = vadd.f32 %v661, %v1767
    %v1769 = vpop.f32.mrb[0].mxu0
    %1770 = vdwg.mxu0
    %v1772 = vrot.slane %v1768, 1
    %v1773 = vrot.slane %v1768, 2
    %v1776 = vadd.f32 %v554, %v1772
    %v1777 = vadd.f32 %v559, %v1773
    %v1778 = vxor.u32 %v1776, 2147483648
    %v1779 = vxor.u32 %v1777, 2147483648
    %v1780 = vmul.f32 %v1778, 1.442695
    %v1781 = vpow.pop %v1780
    %v1782 = vmul.f32 %v1779, 1.442695
    %v1783 = vpow.pop %v1782
    %v1784 = vadd.f32 %v1781, 1.0
    %v1785 = vadd.f32 %v1783, 1.0
    %v1786 = vrcp.pop %v1784
    %v1787 = vmul.f32 1.0, %v1786
    %v1788 = vrcp.pop %v1785
    %v1789 = vmul.f32 1.0, %v1788
    %1790 = vrot.lane.b32.xlu0 %v1772, 64
    %v1791 = vpop.permute.xlu0 %1790
    %1792 = vrot.lane.b32.xlu0 %v1773, 64
    %v1793 = vpop.permute.xlu0 %1792
    %v1796 = vmul.f32 %v1787, %v1791
    %v1797 = vmul.f32 %v1789, %v1793
    %1800 = vrot.lane.b32.xlu0 %v1796, 64
    %v1801 = vpop.permute.xlu0 %1800
    %1802 = vrot.lane.b32.xlu0 %v1797, 64
    %v1803 = vpop.permute.xlu0 %1802
    %v1806 = vadd.f32 %v554, %v1801
    %v1807 = vadd.f32 %v559, %v1803
    %v1808 = vtanh.pop %v1806
    %v1809 = vtanh.pop %v1807
    %v1810 = vsub.f32 1.0, %v1787
    %v1811 = vsub.f32 1.0, %v1789
    %1814 = vrot.lane.b32.xlu0 %v1808, 96
    %v1815 = vpop.permute.xlu0 %1814
    %1816 = vrot.lane.b32.xlu0 %v1809, 96
    %v1817 = vpop.permute.xlu0 %1816
    %v1820 = vmul.f32 %v1810, %v1815
    %v1821 = vmul.f32 %v1811, %v1817
    %v1822 = vrot.slane %v1681, 7
    %v1823 = vrot.slane %v1682, 7
    %v1826 = vmul.f32 %v1787, %v1822
    %v1827 = vmul.f32 %v1789, %v1823
    %v1828 = vadd.f32 %v1820, %v1826
    %v1829 = vadd.f32 %v1821, %v1827
    %1832 = vrot.lane.b32.xlu0 %v1828, 96
    %v1833 = vpop.permute.xlu0 %1832
    %1834 = vrot.lane.b32.xlu0 %v1829, 96
    %v1835 = vpop.permute.xlu0 %1834
    %vm1838 = vcmask 261127
    %1839 = vst.msk [vmem:[#allocation2] sm:$0x80] %vm1838, %v1833
    %1840 = vst.msk [vmem:[#allocation2 + $0x8] sm:$0x80] %vm1838, %v1835
    %1841 = vmatprep.subr.mxu0 0.0
    %1842 = vmatpush1.msra.mxu0 %v652
    %1843 = vmatprep.subr.mxu0 0.0
    %1844 = vmatpush1.msra.mxu0 %v653
    %1845 = vmatprep.subr.mxu0 0.0
    %1846 = vmatpush1.msra.mxu0 %v654
    %1847 = vmatprep.subr.mxu0 0.0
    %1848 = vmatpush1.msra.mxu0 %v655
    %1849 = vmatprep.subr.mxu0 0.0
    %1850 = vmatpush1.msra.mxu0 0.0
    %1851 = vmatprep.subr.mxu0 0.0
    %1852 = vmatpush1.msra.mxu0 0.0
    %1853 = vmatprep.subr.mxu0 0.0
    %1854 = vmatpush1.msra.mxu0 0.0
    %1855 = vmatprep.subr.mxu0 0.0
    %1856 = vmatpush1.msra.mxu0 0.0
    %1857 = vmatprep.subr.mxu0 0.0
    %1858 = vmatpush1.msra.mxu0 0.0
    %1859 = vmatprep.subr.mxu0 0.0
    %1860 = vmatpush1.msra.mxu0 0.0
    %1861 = vmatprep.subr.mxu0 0.0
    %1862 = vmatpush1.msra.mxu0 0.0
    %1863 = vmatprep.subr.mxu0 0.0
    %1864 = vmatpush1.msra.mxu0 0.0
    %1865 = vmatprep.subr.mxu0 0.0
    %1866 = vmatpush1.msra.mxu0 0.0
    %1867 = vmatprep.subr.mxu0 0.0
    %1868 = vmatpush1.msra.mxu0 0.0
    %1869 = vmatprep.subr.mxu0 0.0
    %1870 = vmatpush1.msra.mxu0 0.0
    %1871 = vmatprep.subr.mxu0 0.0
    %1872 = vmatpush1.msra.mxu0 0.0
    %1873 = vmatprep.subr.mxu0 0.0
    %1874 = vmatpush1.msra.mxu0 0.0
    %1875 = vmatprep.subr.mxu0 0.0
    %1876 = vmatpush1.msra.mxu0 0.0
    %1877 = vmatprep.subr.mxu0 0.0
    %1878 = vmatpush1.msra.mxu0 0.0
    %1879 = vmatprep.subr.mxu0 0.0
    %1880 = vmatpush1.msra.mxu0 0.0
    %1881 = vmatprep.subr.mxu0 0.0
    %1882 = vmatpush1.msra.mxu0 0.0
    %1883 = vmatprep.subr.mxu0 0.0
    %1884 = vmatpush1.msra.mxu0 0.0
    %1885 = vmatprep.subr.mxu0 0.0
    %1886 = vmatpush1.msra.mxu0 0.0
    %1887 = vmatprep.subr.mxu0 0.0
    %1888 = vmatpush1.msra.mxu0 0.0
    %1889 = vmatprep.subr.mxu0 0.0
    %1890 = vmatpush1.msra.mxu0 0.0
    %1891 = vmatprep.subr.mxu0 0.0
    %1892 = vmatpush1.msra.mxu0 0.0
    %1893 = vmatprep.subr.mxu0 0.0
    %1894 = vmatpush1.msra.mxu0 0.0
    %1895 = vmatprep.subr.mxu0 0.0
    %1896 = vmatpush1.msra.mxu0 0.0
    %1897 = vmatprep.subr.mxu0 0.0
    %1898 = vmatpush1.msra.mxu0 0.0
    %1899 = vmatprep.subr.mxu0 0.0
    %1900 = vmatpush1.msra.mxu0 0.0
    %1901 = vmatprep.subr.mxu0 0.0
    %1902 = vmatpush1.msra.mxu0 0.0
    %1903 = vmatprep.subr.mxu0 0.0
    %1904 = vmatpush1.msra.mxu0 0.0
    %1905 = vmatprep.mubr.f32.mxu0 0.0
    %1906 = vmatmul.mubr.f32.gmra.mrb[0].mxu0 %v671
    %v1907 = vpop.f32.mrb[0].mxu0
    %v1908 = vadd.f32 %v668, %v1907
    %v1909 = vpop.f32.mrb[0].mxu0
    %1910 = vdwg.mxu0
    %v1912 = vrot.slane %v1908, 1
    %v1913 = vrot.slane %v1908, 2
    %v1916 = vadd.f32 %v640, %v1912
    %v1917 = vadd.f32 %v645, %v1913
    %v1918 = vxor.u32 %v1916, 2147483648
    %v1919 = vxor.u32 %v1917, 2147483648
    %v1920 = vmul.f32 %v1918, 1.442695
    %v1921 = vpow.pop %v1920
    %v1922 = vmul.f32 %v1919, 1.442695
    %v1923 = vpow.pop %v1922
    %v1924 = vadd.f32 %v1921, 1.0
    %v1925 = vadd.f32 %v1923, 1.0
    %v1926 = vrcp.pop %v1924
    %v1927 = vmul.f32 1.0, %v1926
    %v1928 = vrcp.pop %v1925
    %v1929 = vmul.f32 1.0, %v1928
    %1930 = vrot.lane.b32.xlu0 %v1912, 64
    %v1931 = vpop.permute.xlu0 %1930
    %1932 = vrot.lane.b32.xlu0 %v1913, 64
    %v1933 = vpop.permute.xlu0 %1932
    %v1936 = vmul.f32 %v1927, %v1931
    %v1937 = vmul.f32 %v1929, %v1933
    %1940 = vrot.lane.b32.xlu0 %v1936, 64
    %v1941 = vpop.permute.xlu0 %1940
    %1942 = vrot.lane.b32.xlu0 %v1937, 64
    %v1943 = vpop.permute.xlu0 %1942
    %v1946 = vadd.f32 %v640, %v1941
    %v1947 = vadd.f32 %v645, %v1943
    %v1948 = vtanh.pop %v1946
    %v1949 = vtanh.pop %v1947
    %v1950 = vsub.f32 1.0, %v1927
    %v1951 = vsub.f32 1.0, %v1929
    %1954 = vrot.lane.b32.xlu0 %v1948, 96
    %v1955 = vpop.permute.xlu0 %1954
    %1956 = vrot.lane.b32.xlu0 %v1949, 96
    %v1957 = vpop.permute.xlu0 %1956
    %v1960 = vmul.f32 %v1950, %v1955
    %v1961 = vmul.f32 %v1951, %v1957
    %v1962 = vrot.slane %v308, 2
    %1963 = vrot.lane.b32.xlu0 %v1962, 32
    %v1964 = vpop.permute.xlu0 %1963
    %v1966 = vmul.f32 %v1927, %v797
    %v1967 = vmul.f32 %v1929, %v1964
    %v1968 = vadd.f32 %v1960, %v1966
    %v1969 = vadd.f32 %v1961, %v1967
    %1972 = vrot.lane.b32.xlu0 %v1968, 96
    %v1973 = vpop.permute.xlu0 %1972
    %1974 = vrot.lane.b32.xlu0 %v1969, 96
    %v1975 = vpop.permute.xlu0 %1974
    %1978 = vst.msk [vmem:[#allocation3] sm:$0x80] %vm1838, %v1973
    %1979 = vst.msk [vmem:[#allocation3 + $0x8] sm:$0x80] %vm1838, %v1975
    %v1980 = vrot.slane %v1968, 7
    %v1981 = vrot.slane %v1969, 6
    %v1982 = vsel %vm816, %v1981, %v1980
    %1983 = vrot.lane.b32.xlu0 %v1982, 96
    %v1984 = vpop.permute.xlu0 %1983
    %v1985 = vsel %vm480, %v1984, 0
    %1987 = vmatprep.subr.mxu0 0.0
    %1988 = vmatpush1.msra.mxu0 %v652
    %1989 = vmatprep.subr.mxu0 0.0
    %1990 = vmatpush1.msra.mxu0 %v653
    %1991 = vmatprep.subr.mxu0 0.0
    %1992 = vmatpush1.msra.mxu0 %v654
    %1993 = vmatprep.subr.mxu0 0.0
    %1994 = vmatpush1.msra.mxu0 %v655
    %1995 = vmatprep.subr.mxu0 0.0
    %1996 = vmatpush1.msra.mxu0 0.0
    %1997 = vmatprep.subr.mxu0 0.0
    %1998 = vmatpush1.msra.mxu0 0.0
    %1999 = vmatprep.subr.mxu0 0.0
    %2000 = vmatpush1.msra.mxu0 0.0
    %2001 = vmatprep.subr.mxu0 0.0
    %2002 = vmatpush1.msra.mxu0 0.0
    %2003 = vmatprep.subr.mxu0 0.0
    %2004 = vmatpush1.msra.mxu0 0.0
    %2005 = vmatprep.subr.mxu0 0.0
    %2006 = vmatpush1.msra.mxu0 0.0
    %2007 = vmatprep.subr.mxu0 0.0
    %2008 = vmatpush1.msra.mxu0 0.0
    %2009 = vmatprep.subr.mxu0 0.0
    %2010 = vmatpush1.msra.mxu0 0.0
    %2011 = vmatprep.subr.mxu0 0.0
    %2012 = vmatpush1.msra.mxu0 0.0
    %2013 = vmatprep.subr.mxu0 0.0
    %2014 = vmatpush1.msra.mxu0 0.0
    %2015 = vmatprep.subr.mxu0 0.0
    %2016 = vmatpush1.msra.mxu0 0.0
    %2017 = vmatprep.subr.mxu0 0.0
    %2018 = vmatpush1.msra.mxu0 0.0
    %2019 = vmatprep.subr.mxu0 0.0
    %2020 = vmatpush1.msra.mxu0 0.0
    %2021 = vmatprep.subr.mxu0 0.0
    %2022 = vmatpush1.msra.mxu0 0.0
    %2023 = vmatprep.subr.mxu0 0.0
    %2024 = vmatpush1.msra.mxu0 0.0
    %2025 = vmatprep.subr.mxu0 0.0
    %2026 = vmatpush1.msra.mxu0 0.0
    %2027 = vmatprep.subr.mxu0 0.0
    %2028 = vmatpush1.msra.mxu0 0.0
    %2029 = vmatprep.subr.mxu0 0.0
    %2030 = vmatpush1.msra.mxu0 0.0
    %2031 = vmatprep.subr.mxu0 0.0
    %2032 = vmatpush1.msra.mxu0 0.0
    %2033 = vmatprep.subr.mxu0 0.0
    %2034 = vmatpush1.msra.mxu0 0.0
    %2035 = vmatprep.subr.mxu0 0.0
    %2036 = vmatpush1.msra.mxu0 0.0
    %2037 = vmatprep.subr.mxu0 0.0
    %2038 = vmatpush1.msra.mxu0 0.0
    %2039 = vmatprep.subr.mxu0 0.0
    %2040 = vmatpush1.msra.mxu0 0.0
    %2041 = vmatprep.subr.mxu0 0.0
    %2042 = vmatpush1.msra.mxu0 0.0
    %2043 = vmatprep.subr.mxu0 0.0
    %2044 = vmatpush1.msra.mxu0 0.0
    %2045 = vmatprep.subr.mxu0 0.0
    %2046 = vmatpush1.msra.mxu0 0.0
    %2047 = vmatprep.subr.mxu0 0.0
    %2048 = vmatpush1.msra.mxu0 0.0
    %2049 = vmatprep.subr.mxu0 0.0
    %2050 = vmatpush1.msra.mxu0 0.0
    %2051 = vmatprep.mubr.f32.mxu0 0.0
    %2052 = vmatmul.mubr.f32.gmra.mrb[0].mxu0 %v1985
    %v2053 = vpop.f32.mrb[0].mxu0
    %v2054 = vadd.f32 %v668, %v2053
    %v2055 = vpop.f32.mrb[0].mxu0
    %2056 = vdwg.mxu0
    %v2058 = vrot.slane %v2054, 2
    %v2059 = vrot.slane %v2054, 3
    %v2062 = vadd.f32 %v640, %v2058
    %v2063 = vadd.f32 %v645, %v2059
    %v2064 = vxor.u32 %v2062, 2147483648
    %v2065 = vxor.u32 %v2063, 2147483648
    %v2066 = vmul.f32 %v2064, 1.442695
    %v2067 = vpow.pop %v2066
    %v2068 = vmul.f32 %v2065, 1.442695
    %v2069 = vpow.pop %v2068
    %v2070 = vadd.f32 %v2067, 1.0
    %v2071 = vadd.f32 %v2069, 1.0
    %v2072 = vrcp.pop %v2070
    %v2073 = vmul.f32 1.0, %v2072
    %v2074 = vrcp.pop %v2071
    %v2075 = vmul.f32 1.0, %v2074
    %2076 = vrot.lane.b32.xlu0 %v2058, 64
    %v2077 = vpop.permute.xlu0 %2076
    %2078 = vrot.lane.b32.xlu0 %v2059, 64
    %v2079 = vpop.permute.xlu0 %2078
    %v2082 = vmul.f32 %v2073, %v2077
    %v2083 = vmul.f32 %v2075, %v2079
    %2086 = vrot.lane.b32.xlu0 %v2082, 64
    %v2087 = vpop.permute.xlu0 %2086
    %2088 = vrot.lane.b32.xlu0 %v2083, 64
    %v2089 = vpop.permute.xlu0 %2088
    %v2092 = vadd.f32 %v640, %v2087
    %v2093 = vadd.f32 %v645, %v2089
    %v2094 = vtanh.pop %v2092
    %v2095 = vtanh.pop %v2093
    %v2096 = vsub.f32 1.0, %v2073
    %v2097 = vsub.f32 1.0, %v2075
    %2100 = vrot.lane.b32.xlu0 %v2094, 96
    %v2101 = vpop.permute.xlu0 %2100
    %2102 = vrot.lane.b32.xlu0 %v2095, 96
    %v2103 = vpop.permute.xlu0 %2102
    %v2106 = vmul.f32 %v2096, %v2101
    %v2107 = vmul.f32 %v2097, %v2103
    %v2108 = vrot.slane %v1968, 1
    %v2109 = vrot.slane %v1969, 1
    %v2112 = vmul.f32 %v2073, %v2108
    %v2113 = vmul.f32 %v2075, %v2109
    %v2114 = vadd.f32 %v2106, %v2112
    %v2115 = vadd.f32 %v2107, %v2113
    %2118 = vrot.lane.b32.xlu0 %v2114, 96
    %v2119 = vpop.permute.xlu0 %2118
    %2120 = vrot.lane.b32.xlu0 %v2115, 96
    %v2121 = vpop.permute.xlu0 %2120
    %2124 = vst.msk [vmem:[#allocation3] sm:$0x40] %vm1691, %v2119
    %2125 = vst.msk [vmem:[#allocation3 + $0x8] sm:$0x40] %vm1691, %v2121
    %v2126 = vrot.slane %v2114, 6
    %v2127 = vrot.slane %v2115, 5
    %v2128 = vsel %vm816, %v2127, %v2126
    %2129 = vrot.lane.b32.xlu0 %v2128, 96
    %v2130 = vpop.permute.xlu0 %2129
    %v2131 = vsel %vm480, %v2130, 0
    %2133 = vmatprep.subr.mxu0 0.0
    %2134 = vmatpush1.msra.mxu0 %v652
    %2135 = vmatprep.subr.mxu0 0.0
    %2136 = vmatpush1.msra.mxu0 %v653
    %2137 = vmatprep.subr.mxu0 0.0
    %2138 = vmatpush1.msra.mxu0 %v654
    %2139 = vmatprep.subr.mxu0 0.0
    %2140 = vmatpush1.msra.mxu0 %v655
    %2141 = vmatprep.subr.mxu0 0.0
    %2142 = vmatpush1.msra.mxu0 0.0
    %2143 = vmatprep.subr.mxu0 0.0
    %2144 = vmatpush1.msra.mxu0 0.0
    %2145 = vmatprep.subr.mxu0 0.0
    %2146 = vmatpush1.msra.mxu0 0.0
    %2147 = vmatprep.subr.mxu0 0.0
    %2148 = vmatpush1.msra.mxu0 0.0
    %2149 = vmatprep.subr.mxu0 0.0
    %2150 = vmatpush1.msra.mxu0 0.0
    %2151 = vmatprep.subr.mxu0 0.0
    %2152 = vmatpush1.msra.mxu0 0.0
    %2153 = vmatprep.subr.mxu0 0.0
    %2154 = vmatpush1.msra.mxu0 0.0
    %2155 = vmatprep.subr.mxu0 0.0
    %2156 = vmatpush1.msra.mxu0 0.0
    %2157 = vmatprep.subr.mxu0 0.0
    %2158 = vmatpush1.msra.mxu0 0.0
    %2159 = vmatprep.subr.mxu0 0.0
    %2160 = vmatpush1.msra.mxu0 0.0
    %2161 = vmatprep.subr.mxu0 0.0
    %2162 = vmatpush1.msra.mxu0 0.0
    %2163 = vmatprep.subr.mxu0 0.0
    %2164 = vmatpush1.msra.mxu0 0.0
    %2165 = vmatprep.subr.mxu0 0.0
    %2166 = vmatpush1.msra.mxu0 0.0
    %2167 = vmatprep.subr.mxu0 0.0
    %2168 = vmatpush1.msra.mxu0 0.0
    %2169 = vmatprep.subr.mxu0 0.0
    %2170 = vmatpush1.msra.mxu0 0.0
    %2171 = vmatprep.subr.mxu0 0.0
    %2172 = vmatpush1.msra.mxu0 0.0
    %2173 = vmatprep.subr.mxu0 0.0
    %2174 = vmatpush1.msra.mxu0 0.0
    %2175 = vmatprep.subr.mxu0 0.0
    %2176 = vmatpush1.msra.mxu0 0.0
    %2177 = vmatprep.subr.mxu0 0.0
    %2178 = vmatpush1.msra.mxu0 0.0
    %2179 = vmatprep.subr.mxu0 0.0
    %2180 = vmatpush1.msra.mxu0 0.0
    %2181 = vmatprep.subr.mxu0 0.0
    %2182 = vmatpush1.msra.mxu0 0.0
    %2183 = vmatprep.subr.mxu0 0.0
    %2184 = vmatpush1.msra.mxu0 0.0
    %2185 = vmatprep.subr.mxu0 0.0
    %2186 = vmatpush1.msra.mxu0 0.0
    %2187 = vmatprep.subr.mxu0 0.0
    %2188 = vmatpush1.msra.mxu0 0.0
    %2189 = vmatprep.subr.mxu0 0.0
    %2190 = vmatpush1.msra.mxu0 0.0
    %2191 = vmatprep.subr.mxu0 0.0
    %2192 = vmatpush1.msra.mxu0 0.0
    %2193 = vmatprep.subr.mxu0 0.0
    %2194 = vmatpush1.msra.mxu0 0.0
    %2195 = vmatprep.subr.mxu0 0.0
    %2196 = vmatpush1.msra.mxu0 0.0
    %2197 = vmatprep.mubr.f32.mxu0 0.0
    %2198 = vmatmul.mubr.f32.gmra.mrb[0].mxu0 %v2131
    %v2199 = vpop.f32.mrb[0].mxu0
    %v2200 = vadd.f32 %v668, %v2199
    %v2201 = vpop.f32.mrb[0].mxu0
    %2202 = vdwg.mxu0
    %v2204 = vrot.slane %v2200, 3
    %v2205 = vrot.slane %v2200, 4
    %v2208 = vadd.f32 %v640, %v2204
    %v2209 = vadd.f32 %v645, %v2205
    %v2210 = vxor.u32 %v2208, 2147483648
    %v2211 = vxor.u32 %v2209, 2147483648
    %v2212 = vmul.f32 %v2210, 1.442695
    %v2213 = vpow.pop %v2212
    %v2214 = vmul.f32 %v2211, 1.442695
    %v2215 = vpow.pop %v2214
    %v2216 = vadd.f32 %v2213, 1.0
    %v2217 = vadd.f32 %v2215, 1.0
    %v2218 = vrcp.pop %v2216
    %v2219 = vmul.f32 1.0, %v2218
    %v2220 = vrcp.pop %v2217
    %v2221 = vmul.f32 1.0, %v2220
    %2222 = vrot.lane.b32.xlu0 %v2204, 64
    %v2223 = vpop.permute.xlu0 %2222
    %2224 = vrot.lane.b32.xlu0 %v2205, 64
    %v2225 = vpop.permute.xlu0 %2224
    %v2228 = vmul.f32 %v2219, %v2223
    %v2229 = vmul.f32 %v2221, %v2225
    %2232 = vrot.lane.b32.xlu0 %v2228, 64
    %v2233 = vpop.permute.xlu0 %2232
    %2234 = vrot.lane.b32.xlu0 %v2229, 64
    %v2235 = vpop.permute.xlu0 %2234
    %v2238 = vadd.f32 %v640, %v2233
    %v2239 = vadd.f32 %v645, %v2235
    %v2240 = vtanh.pop %v2238
    %v2241 = vtanh.pop %v2239
    %v2242 = vsub.f32 1.0, %v2219
    %v2243 = vsub.f32 1.0, %v2221
    %2246 = vrot.lane.b32.xlu0 %v2240, 96
    %v2247 = vpop.permute.xlu0 %2246
    %2248 = vrot.lane.b32.xlu0 %v2241, 96
    %v2249 = vpop.permute.xlu0 %2248
    %v2252 = vmul.f32 %v2242, %v2247
    %v2253 = vmul.f32 %v2243, %v2249
    %v2254 = vrot.slane %v2114, 1
    %v2255 = vrot.slane %v2115, 1
    %v2258 = vmul.f32 %v2219, %v2254
    %v2259 = vmul.f32 %v2221, %v2255
    %v2260 = vadd.f32 %v2252, %v2258
    %v2261 = vadd.f32 %v2253, %v2259
    %2264 = vrot.lane.b32.xlu0 %v2260, 96
    %v2265 = vpop.permute.xlu0 %2264
    %2266 = vrot.lane.b32.xlu0 %v2261, 96
    %v2267 = vpop.permute.xlu0 %2266
    %2270 = vst.msk [vmem:[#allocation3] sm:$0x20] %vm1544, %v2265
    %2271 = vst.msk [vmem:[#allocation3 + $0x8] sm:$0x20] %vm1544, %v2267
    %v2272 = vrot.slane %v2260, 5
    %v2273 = vrot.slane %v2261, 4
    %v2274 = vsel %vm816, %v2273, %v2272
    %2275 = vrot.lane.b32.xlu0 %v2274, 96
    %v2276 = vpop.permute.xlu0 %2275
    %v2277 = vsel %vm480, %v2276, 0
    %2279 = vmatprep.subr.mxu0 0.0
    %2280 = vmatpush1.msra.mxu0 %v652
    %2281 = vmatprep.subr.mxu0 0.0
    %2282 = vmatpush1.msra.mxu0 %v653
    %2283 = vmatprep.subr.mxu0 0.0
    %2284 = vmatpush1.msra.mxu0 %v654
    %2285 = vmatprep.subr.mxu0 0.0
    %2286 = vmatpush1.msra.mxu0 %v655
    %2287 = vmatprep.subr.mxu0 0.0
    %2288 = vmatpush1.msra.mxu0 0.0
    %2289 = vmatprep.subr.mxu0 0.0
    %2290 = vmatpush1.msra.mxu0 0.0
    %2291 = vmatprep.subr.mxu0 0.0
    %2292 = vmatpush1.msra.mxu0 0.0
    %2293 = vmatprep.subr.mxu0 0.0
    %2294 = vmatpush1.msra.mxu0 0.0
    %2295 = vmatprep.subr.mxu0 0.0
    %2296 = vmatpush1.msra.mxu0 0.0
    %2297 = vmatprep.subr.mxu0 0.0
    %2298 = vmatpush1.msra.mxu0 0.0
    %2299 = vmatprep.subr.mxu0 0.0
    %2300 = vmatpush1.msra.mxu0 0.0
    %2301 = vmatprep.subr.mxu0 0.0
    %2302 = vmatpush1.msra.mxu0 0.0
    %2303 = vmatprep.subr.mxu0 0.0
    %2304 = vmatpush1.msra.mxu0 0.0
    %2305 = vmatprep.subr.mxu0 0.0
    %2306 = vmatpush1.msra.mxu0 0.0
    %2307 = vmatprep.subr.mxu0 0.0
    %2308 = vmatpush1.msra.mxu0 0.0
    %2309 = vmatprep.subr.mxu0 0.0
    %2310 = vmatpush1.msra.mxu0 0.0
    %2311 = vmatprep.subr.mxu0 0.0
    %2312 = vmatpush1.msra.mxu0 0.0
    %2313 = vmatprep.subr.mxu0 0.0
    %2314 = vmatpush1.msra.mxu0 0.0
    %2315 = vmatprep.subr.mxu0 0.0
    %2316 = vmatpush1.msra.mxu0 0.0
    %2317 = vmatprep.subr.mxu0 0.0
    %2318 = vmatpush1.msra.mxu0 0.0
    %2319 = vmatprep.subr.mxu0 0.0
    %2320 = vmatpush1.msra.mxu0 0.0
    %2321 = vmatprep.subr.mxu0 0.0
    %2322 = vmatpush1.msra.mxu0 0.0
    %2323 = vmatprep.subr.mxu0 0.0
    %2324 = vmatpush1.msra.mxu0 0.0
    %2325 = vmatprep.subr.mxu0 0.0
    %2326 = vmatpush1.msra.mxu0 0.0
    %2327 = vmatprep.subr.mxu0 0.0
    %2328 = vmatpush1.msra.mxu0 0.0
    %2329 = vmatprep.subr.mxu0 0.0
    %2330 = vmatpush1.msra.mxu0 0.0
    %2331 = vmatprep.subr.mxu0 0.0
    %2332 = vmatpush1.msra.mxu0 0.0
    %2333 = vmatprep.subr.mxu0 0.0
    %2334 = vmatpush1.msra.mxu0 0.0
    %2335 = vmatprep.subr.mxu0 0.0
    %2336 = vmatpush1.msra.mxu0 0.0
    %2337 = vmatprep.subr.mxu0 0.0
    %2338 = vmatpush1.msra.mxu0 0.0
    %2339 = vmatprep.subr.mxu0 0.0
    %2340 = vmatpush1.msra.mxu0 0.0
    %2341 = vmatprep.subr.mxu0 0.0
    %2342 = vmatpush1.msra.mxu0 0.0
    %2343 = vmatprep.mubr.f32.mxu0 0.0
    %2344 = vmatmul.mubr.f32.gmra.mrb[0].mxu0 %v2277
    %v2345 = vpop.f32.mrb[0].mxu0
    %v2346 = vadd.f32 %v668, %v2345
    %v2347 = vpop.f32.mrb[0].mxu0
    %2348 = vdwg.mxu0
    %v2350 = vrot.slane %v2346, 4
    %v2351 = vrot.slane %v2346, 5
    %v2354 = vadd.f32 %v640, %v2350
    %v2355 = vadd.f32 %v645, %v2351
    %v2356 = vxor.u32 %v2354, 2147483648
    %v2357 = vxor.u32 %v2355, 2147483648
    %v2358 = vmul.f32 %v2356, 1.442695
    %v2359 = vpow.pop %v2358
    %v2360 = vmul.f32 %v2357, 1.442695
    %v2361 = vpow.pop %v2360
    %v2362 = vadd.f32 %v2359, 1.0
    %v2363 = vadd.f32 %v2361, 1.0
    %v2364 = vrcp.pop %v2362
    %v2365 = vmul.f32 1.0, %v2364
    %v2366 = vrcp.pop %v2363
    %v2367 = vmul.f32 1.0, %v2366
    %2368 = vrot.lane.b32.xlu0 %v2350, 64
    %v2369 = vpop.permute.xlu0 %2368
    %2370 = vrot.lane.b32.xlu0 %v2351, 64
    %v2371 = vpop.permute.xlu0 %2370
    %v2374 = vmul.f32 %v2365, %v2369
    %v2375 = vmul.f32 %v2367, %v2371
    %2378 = vrot.lane.b32.xlu0 %v2374, 64
    %v2379 = vpop.permute.xlu0 %2378
    %2380 = vrot.lane.b32.xlu0 %v2375, 64
    %v2381 = vpop.permute.xlu0 %2380
    %v2384 = vadd.f32 %v640, %v2379
    %v2385 = vadd.f32 %v645, %v2381
    %v2386 = vtanh.pop %v2384
    %v2387 = vtanh.pop %v2385
    %v2388 = vsub.f32 1.0, %v2365
    %v2389 = vsub.f32 1.0, %v2367
    %2392 = vrot.lane.b32.xlu0 %v2386, 96
    %v2393 = vpop.permute.xlu0 %2392
    %2394 = vrot.lane.b32.xlu0 %v2387, 96
    %v2395 = vpop.permute.xlu0 %2394
    %v2398 = vmul.f32 %v2388, %v2393
    %v2399 = vmul.f32 %v2389, %v2395
    %v2400 = vrot.slane %v2260, 1
    %v2401 = vrot.slane %v2261, 1
    %v2404 = vmul.f32 %v2365, %v2400
    %v2405 = vmul.f32 %v2367, %v2401
    %v2406 = vadd.f32 %v2398, %v2404
    %v2407 = vadd.f32 %v2399, %v2405
    %2410 = vrot.lane.b32.xlu0 %v2406, 96
    %v2411 = vpop.permute.xlu0 %2410
    %2412 = vrot.lane.b32.xlu0 %v2407, 96
    %v2413 = vpop.permute.xlu0 %2412
    %2416 = vst.msk [vmem:[#allocation3] sm:$0x10] %vm1397, %v2411
    %2417 = vst.msk [vmem:[#allocation3 + $0x8] sm:$0x10] %vm1397, %v2413
    %v2418 = vrot.slane %v2406, 4
    %v2419 = vrot.slane %v2407, 3
    %v2420 = vsel %vm816, %v2419, %v2418
    %2421 = vrot.lane.b32.xlu0 %v2420, 96
    %v2422 = vpop.permute.xlu0 %2421
    %v2423 = vsel %vm480, %v2422, 0
    %2425 = vmatprep.subr.mxu0 0.0
    %2426 = vmatpush1.msra.mxu0 %v652
    %2427 = vmatprep.subr.mxu0 0.0
    %2428 = vmatpush1.msra.mxu0 %v653
    %2429 = vmatprep.subr.mxu0 0.0
    %2430 = vmatpush1.msra.mxu0 %v654
    %2431 = vmatprep.subr.mxu0 0.0
    %2432 = vmatpush1.msra.mxu0 %v655
    %2433 = vmatprep.subr.mxu0 0.0
    %2434 = vmatpush1.msra.mxu0 0.0
    %2435 = vmatprep.subr.mxu0 0.0
    %2436 = vmatpush1.msra.mxu0 0.0
    %2437 = vmatprep.subr.mxu0 0.0
    %2438 = vmatpush1.msra.mxu0 0.0
    %2439 = vmatprep.subr.mxu0 0.0
    %2440 = vmatpush1.msra.mxu0 0.0
    %2441 = vmatprep.subr.mxu0 0.0
    %2442 = vmatpush1.msra.mxu0 0.0
    %2443 = vmatprep.subr.mxu0 0.0
    %2444 = vmatpush1.msra.mxu0 0.0
    %2445 = vmatprep.subr.mxu0 0.0
    %2446 = vmatpush1.msra.mxu0 0.0
    %2447 = vmatprep.subr.mxu0 0.0
    %2448 = vmatpush1.msra.mxu0 0.0
    %2449 = vmatprep.subr.mxu0 0.0
    %2450 = vmatpush1.msra.mxu0 0.0
    %2451 = vmatprep.subr.mxu0 0.0
    %2452 = vmatpush1.msra.mxu0 0.0
    %2453 = vmatprep.subr.mxu0 0.0
    %2454 = vmatpush1.msra.mxu0 0.0
    %2455 = vmatprep.subr.mxu0 0.0
    %2456 = vmatpush1.msra.mxu0 0.0
    %2457 = vmatprep.subr.mxu0 0.0
    %2458 = vmatpush1.msra.mxu0 0.0
    %2459 = vmatprep.subr.mxu0 0.0
    %2460 = vmatpush1.msra.mxu0 0.0
    %2461 = vmatprep.subr.mxu0 0.0
    %2462 = vmatpush1.msra.mxu0 0.0
    %2463 = vmatprep.subr.mxu0 0.0
    %2464 = vmatpush1.msra.mxu0 0.0
    %2465 = vmatprep.subr.mxu0 0.0
    %2466 = vmatpush1.msra.mxu0 0.0
    %2467 = vmatprep.subr.mxu0 0.0
    %2468 = vmatpush1.msra.mxu0 0.0
    %2469 = vmatprep.subr.mxu0 0.0
    %2470 = vmatpush1.msra.mxu0 0.0
    %2471 = vmatprep.subr.mxu0 0.0
    %2472 = vmatpush1.msra.mxu0 0.0
    %2473 = vmatprep.subr.mxu0 0.0
    %2474 = vmatpush1.msra.mxu0 0.0
    %2475 = vmatprep.subr.mxu0 0.0
    %2476 = vmatpush1.msra.mxu0 0.0
    %2477 = vmatprep.subr.mxu0 0.0
    %2478 = vmatpush1.msra.mxu0 0.0
    %2479 = vmatprep.subr.mxu0 0.0
    %2480 = vmatpush1.msra.mxu0 0.0
    %2481 = vmatprep.subr.mxu0 0.0
    %2482 = vmatpush1.msra.mxu0 0.0
    %2483 = vmatprep.subr.mxu0 0.0
    %2484 = vmatpush1.msra.mxu0 0.0
    %2485 = vmatprep.subr.mxu0 0.0
    %2486 = vmatpush1.msra.mxu0 0.0
    %2487 = vmatprep.subr.mxu0 0.0
    %2488 = vmatpush1.msra.mxu0 0.0
    %2489 = vmatprep.mubr.f32.mxu0 0.0
    %2490 = vmatmul.mubr.f32.gmra.mrb[0].mxu0 %v2423
    %v2491 = vpop.f32.mrb[0].mxu0
    %v2492 = vadd.f32 %v668, %v2491
    %v2493 = vpop.f32.mrb[0].mxu0
    %2494 = vdwg.mxu0
    %v2496 = vrot.slane %v2492, 5
    %v2497 = vrot.slane %v2492, 6
    %v2500 = vadd.f32 %v640, %v2496
    %v2501 = vadd.f32 %v645, %v2497
    %v2502 = vxor.u32 %v2500, 2147483648
    %v2503 = vxor.u32 %v2501, 2147483648
    %v2504 = vmul.f32 %v2502, 1.442695
    %v2505 = vpow.pop %v2504
    %v2506 = vmul.f32 %v2503, 1.442695
    %v2507 = vpow.pop %v2506
    %v2508 = vadd.f32 %v2505, 1.0
    %v2509 = vadd.f32 %v2507, 1.0
    %v2510 = vrcp.pop %v2508
    %v2511 = vmul.f32 1.0, %v2510
    %v2512 = vrcp.pop %v2509
    %v2513 = vmul.f32 1.0, %v2512
    %2514 = vrot.lane.b32.xlu0 %v2496, 64
    %v2515 = vpop.permute.xlu0 %2514
    %2516 = vrot.lane.b32.xlu0 %v2497, 64
    %v2517 = vpop.permute.xlu0 %2516
    %v2520 = vmul.f32 %v2511, %v2515
    %v2521 = vmul.f32 %v2513, %v2517
    %2524 = vrot.lane.b32.xlu0 %v2520, 64
    %v2525 = vpop.permute.xlu0 %2524
    %2526 = vrot.lane.b32.xlu0 %v2521, 64
    %v2527 = vpop.permute.xlu0 %2526
    %v2530 = vadd.f32 %v640, %v2525
    %v2531 = vadd.f32 %v645, %v2527
    %v2532 = vtanh.pop %v2530
    %v2533 = vtanh.pop %v2531
    %v2534 = vsub.f32 1.0, %v2511
    %v2535 = vsub.f32 1.0, %v2513
    %2538 = vrot.lane.b32.xlu0 %v2532, 96
    %v2539 = vpop.permute.xlu0 %2538
    %2540 = vrot.lane.b32.xlu0 %v2533, 96
    %v2541 = vpop.permute.xlu0 %2540
    %v2544 = vmul.f32 %v2534, %v2539
    %v2545 = vmul.f32 %v2535, %v2541
    %v2546 = vrot.slane %v2406, 1
    %v2547 = vrot.slane %v2407, 1
    %v2550 = vmul.f32 %v2511, %v2546
    %v2551 = vmul.f32 %v2513, %v2547
    %v2552 = vadd.f32 %v2544, %v2550
    %v2553 = vadd.f32 %v2545, %v2551
    %2556 = vrot.lane.b32.xlu0 %v2552, 96
    %v2557 = vpop.permute.xlu0 %2556
    %2558 = vrot.lane.b32.xlu0 %v2553, 96
    %v2559 = vpop.permute.xlu0 %2558
    %2562 = vst.msk [vmem:[#allocation3] sm:$0x8] %vm1250, %v2557
    %2563 = vst.msk [vmem:[#allocation3 + $0x8] sm:$0x8] %vm1250, %v2559
    %v2564 = vrot.slane %v2552, 3
    %v2565 = vrot.slane %v2553, 2
    %v2566 = vsel %vm816, %v2565, %v2564
    %2567 = vrot.lane.b32.xlu0 %v2566, 96
    %v2568 = vpop.permute.xlu0 %2567
    %v2569 = vsel %vm480, %v2568, 0
    %2571 = vmatprep.subr.mxu0 0.0
    %2572 = vmatpush1.msra.mxu0 %v652
    %2573 = vmatprep.subr.mxu0 0.0
    %2574 = vmatpush1.msra.mxu0 %v653
    %2575 = vmatprep.subr.mxu0 0.0
    %2576 = vmatpush1.msra.mxu0 %v654
    %2577 = vmatprep.subr.mxu0 0.0
    %2578 = vmatpush1.msra.mxu0 %v655
    %2579 = vmatprep.subr.mxu0 0.0
    %2580 = vmatpush1.msra.mxu0 0.0
    %2581 = vmatprep.subr.mxu0 0.0
    %2582 = vmatpush1.msra.mxu0 0.0
    %2583 = vmatprep.subr.mxu0 0.0
    %2584 = vmatpush1.msra.mxu0 0.0
    %2585 = vmatprep.subr.mxu0 0.0
    %2586 = vmatpush1.msra.mxu0 0.0
    %2587 = vmatprep.subr.mxu0 0.0
    %2588 = vmatpush1.msra.mxu0 0.0
    %2589 = vmatprep.subr.mxu0 0.0
    %2590 = vmatpush1.msra.mxu0 0.0
    %2591 = vmatprep.subr.mxu0 0.0
    %2592 = vmatpush1.msra.mxu0 0.0
    %2593 = vmatprep.subr.mxu0 0.0
    %2594 = vmatpush1.msra.mxu0 0.0
    %2595 = vmatprep.subr.mxu0 0.0
    %2596 = vmatpush1.msra.mxu0 0.0
    %2597 = vmatprep.subr.mxu0 0.0
    %2598 = vmatpush1.msra.mxu0 0.0
    %2599 = vmatprep.subr.mxu0 0.0
    %2600 = vmatpush1.msra.mxu0 0.0
    %2601 = vmatprep.subr.mxu0 0.0
    %2602 = vmatpush1.msra.mxu0 0.0
    %2603 = vmatprep.subr.mxu0 0.0
    %2604 = vmatpush1.msra.mxu0 0.0
    %2605 = vmatprep.subr.mxu0 0.0
    %2606 = vmatpush1.msra.mxu0 0.0
    %2607 = vmatprep.subr.mxu0 0.0
    %2608 = vmatpush1.msra.mxu0 0.0
    %2609 = vmatprep.subr.mxu0 0.0
    %2610 = vmatpush1.msra.mxu0 0.0
    %2611 = vmatprep.subr.mxu0 0.0
    %2612 = vmatpush1.msra.mxu0 0.0
    %2613 = vmatprep.subr.mxu0 0.0
    %2614 = vmatpush1.msra.mxu0 0.0
    %2615 = vmatprep.subr.mxu0 0.0
    %2616 = vmatpush1.msra.mxu0 0.0
    %2617 = vmatprep.subr.mxu0 0.0
    %2618 = vmatpush1.msra.mxu0 0.0
    %2619 = vmatprep.subr.mxu0 0.0
    %2620 = vmatpush1.msra.mxu0 0.0
    %2621 = vmatprep.subr.mxu0 0.0
    %2622 = vmatpush1.msra.mxu0 0.0
    %2623 = vmatprep.subr.mxu0 0.0
    %2624 = vmatpush1.msra.mxu0 0.0
    %2625 = vmatprep.subr.mxu0 0.0
    %2626 = vmatpush1.msra.mxu0 0.0
    %2627 = vmatprep.subr.mxu0 0.0
    %2628 = vmatpush1.msra.mxu0 0.0
    %2629 = vmatprep.subr.mxu0 0.0
    %2630 = vmatpush1.msra.mxu0 0.0
    %2631 = vmatprep.subr.mxu0 0.0
    %2632 = vmatpush1.msra.mxu0 0.0
    %2633 = vmatprep.subr.mxu0 0.0
    %2634 = vmatpush1.msra.mxu0 0.0
    %2635 = vmatprep.mubr.f32.mxu0 0.0
    %2636 = vmatmul.mubr.f32.gmra.mrb[0].mxu0 %v2569
    %v2637 = vpop.f32.mrb[0].mxu0
    %v2638 = vadd.f32 %v668, %v2637
    %v2639 = vpop.f32.mrb[0].mxu0
    %2640 = vdwg.mxu0
    %v2642 = vrot.slane %v2638, 6
    %v2643 = vrot.slane %v2638, 7
    %v2646 = vadd.f32 %v640, %v2642
    %v2647 = vadd.f32 %v645, %v2643
    %v2648 = vxor.u32 %v2646, 2147483648
    %v2649 = vxor.u32 %v2647, 2147483648
    %v2650 = vmul.f32 %v2648, 1.442695
    %v2651 = vpow.pop %v2650
    %v2652 = vmul.f32 %v2649, 1.442695
    %v2653 = vpow.pop %v2652
    %v2654 = vadd.f32 %v2651, 1.0
    %v2655 = vadd.f32 %v2653, 1.0
    %v2656 = vrcp.pop %v2654
    %v2657 = vmul.f32 1.0, %v2656
    %v2658 = vrcp.pop %v2655
    %v2659 = vmul.f32 1.0, %v2658
    %2660 = vrot.lane.b32.xlu0 %v2642, 64
    %v2661 = vpop.permute.xlu0 %2660
    %2662 = vrot.lane.b32.xlu0 %v2643, 64
    %v2663 = vpop.permute.xlu0 %2662
    %v2666 = vmul.f32 %v2657, %v2661
    %v2667 = vmul.f32 %v2659, %v2663
    %2670 = vrot.lane.b32.xlu0 %v2666, 64
    %v2671 = vpop.permute.xlu0 %2670
    %2672 = vrot.lane.b32.xlu0 %v2667, 64
    %v2673 = vpop.permute.xlu0 %2672
    %v2676 = vadd.f32 %v640, %v2671
    %v2677 = vadd.f32 %v645, %v2673
    %v2678 = vtanh.pop %v2676
    %v2679 = vtanh.pop %v2677
    %v2680 = vsub.f32 1.0, %v2657
    %v2681 = vsub.f32 1.0, %v2659
    %2684 = vrot.lane.b32.xlu0 %v2678, 96
    %v2685 = vpop.permute.xlu0 %2684
    %2686 = vrot.lane.b32.xlu0 %v2679, 96
    %v2687 = vpop.permute.xlu0 %2686
    %v2690 = vmul.f32 %v2680, %v2685
    %v2691 = vmul.f32 %v2681, %v2687
    %v2692 = vrot.slane %v2552, 1
    %v2693 = vrot.slane %v2553, 1
    %v2696 = vmul.f32 %v2657, %v2692
    %v2697 = vmul.f32 %v2659, %v2693
    %v2698 = vadd.f32 %v2690, %v2696
    %v2699 = vadd.f32 %v2691, %v2697
    %2702 = vrot.lane.b32.xlu0 %v2698, 96
    %v2703 = vpop.permute.xlu0 %2702
    %2704 = vrot.lane.b32.xlu0 %v2699, 96
    %v2705 = vpop.permute.xlu0 %2704
    %2708 = vst.msk [vmem:[#allocation3] sm:$0x4] %vm1103, %v2703
    %2709 = vst.msk [vmem:[#allocation3 + $0x8] sm:$0x4] %vm1103, %v2705
    %v2710 = vrot.slane %v2698, 2
    %v2711 = vrot.slane %v2699, 1
    %v2712 = vsel %vm816, %v2711, %v2710
    %2713 = vrot.lane.b32.xlu0 %v2712, 96
    %v2714 = vpop.permute.xlu0 %2713
    %v2715 = vsel %vm480, %v2714, 0
    %2717 = vmatprep.subr.mxu0 0.0
    %2718 = vmatpush1.msra.mxu0 %v652
    %2719 = vmatprep.subr.mxu0 0.0
    %2720 = vmatpush1.msra.mxu0 %v653
    %2721 = vmatprep.subr.mxu0 0.0
    %2722 = vmatpush1.msra.mxu0 %v654
    %2723 = vmatprep.subr.mxu0 0.0
    %2724 = vmatpush1.msra.mxu0 %v655
    %2725 = vmatprep.subr.mxu0 0.0
    %2726 = vmatpush1.msra.mxu0 0.0
    %2727 = vmatprep.subr.mxu0 0.0
    %2728 = vmatpush1.msra.mxu0 0.0
    %2729 = vmatprep.subr.mxu0 0.0
    %2730 = vmatpush1.msra.mxu0 0.0
    %2731 = vmatprep.subr.mxu0 0.0
    %2732 = vmatpush1.msra.mxu0 0.0
    %2733 = vmatprep.subr.mxu0 0.0
    %2734 = vmatpush1.msra.mxu0 0.0
    %2735 = vmatprep.subr.mxu0 0.0
    %2736 = vmatpush1.msra.mxu0 0.0
    %2737 = vmatprep.subr.mxu0 0.0
    %2738 = vmatpush1.msra.mxu0 0.0
    %2739 = vmatprep.subr.mxu0 0.0
    %2740 = vmatpush1.msra.mxu0 0.0
    %2741 = vmatprep.subr.mxu0 0.0
    %2742 = vmatpush1.msra.mxu0 0.0
    %2743 = vmatprep.subr.mxu0 0.0
    %2744 = vmatpush1.msra.mxu0 0.0
    %2745 = vmatprep.subr.mxu0 0.0
    %2746 = vmatpush1.msra.mxu0 0.0
    %2747 = vmatprep.subr.mxu0 0.0
    %2748 = vmatpush1.msra.mxu0 0.0
    %2749 = vmatprep.subr.mxu0 0.0
    %2750 = vmatpush1.msra.mxu0 0.0
    %2751 = vmatprep.subr.mxu0 0.0
    %2752 = vmatpush1.msra.mxu0 0.0
    %2753 = vmatprep.subr.mxu0 0.0
    %2754 = vmatpush1.msra.mxu0 0.0
    %2755 = vmatprep.subr.mxu0 0.0
    %2756 = vmatpush1.msra.mxu0 0.0
    %2757 = vmatprep.subr.mxu0 0.0
    %2758 = vmatpush1.msra.mxu0 0.0
    %2759 = vmatprep.subr.mxu0 0.0
    %2760 = vmatpush1.msra.mxu0 0.0
    %2761 = vmatprep.subr.mxu0 0.0
    %2762 = vmatpush1.msra.mxu0 0.0
    %2763 = vmatprep.subr.mxu0 0.0
    %2764 = vmatpush1.msra.mxu0 0.0
    %2765 = vmatprep.subr.mxu0 0.0
    %2766 = vmatpush1.msra.mxu0 0.0
    %2767 = vmatprep.subr.mxu0 0.0
    %2768 = vmatpush1.msra.mxu0 0.0
    %2769 = vmatprep.subr.mxu0 0.0
    %2770 = vmatpush1.msra.mxu0 0.0
    %2771 = vmatprep.subr.mxu0 0.0
    %2772 = vmatpush1.msra.mxu0 0.0
    %2773 = vmatprep.subr.mxu0 0.0
    %2774 = vmatpush1.msra.mxu0 0.0
    %2775 = vmatprep.subr.mxu0 0.0
    %2776 = vmatpush1.msra.mxu0 0.0
    %2777 = vmatprep.subr.mxu0 0.0
    %2778 = vmatpush1.msra.mxu0 0.0
    %2779 = vmatprep.subr.mxu0 0.0
    %2780 = vmatpush1.msra.mxu0 0.0
    %2781 = vmatprep.mubr.f32.mxu0 0.0
    %2782 = vmatmul.mubr.f32.gmra.mrb[0].mxu0 %v2715
    %v2783 = vpop.f32.mrb[0].mxu0
    %v2784 = vadd.f32 %v668, %v2783
    %v2785 = vpop.f32.mrb[0].mxu0
    %2786 = vdwg.mxu0
    %v2788 = vrot.slane %v2784, 7
    %v2791 = vadd.f32 %v640, %v2788
    %v2792 = vadd.f32 %v645, %v2784
    %v2793 = vxor.u32 %v2791, 2147483648
    %v2794 = vxor.u32 %v2792, 2147483648
    %v2795 = vmul.f32 %v2793, 1.442695
    %v2796 = vpow.pop %v2795
    %v2797 = vmul.f32 %v2794, 1.442695
    %v2798 = vpow.pop %v2797
    %v2799 = vadd.f32 %v2796, 1.0
    %v2800 = vadd.f32 %v2798, 1.0
    %v2801 = vrcp.pop %v2799
    %v2802 = vmul.f32 1.0, %v2801
    %v2803 = vrcp.pop %v2800
    %v2804 = vmul.f32 1.0, %v2803
    %2805 = vrot.lane.b32.xlu0 %v2788, 64
    %v2806 = vpop.permute.xlu0 %2805
    %2807 = vrot.lane.b32.xlu0 %v2784, 64
    %v2808 = vpop.permute.xlu0 %2807
    %v2811 = vmul.f32 %v2802, %v2806
    %v2812 = vmul.f32 %v2804, %v2808
    %2815 = vrot.lane.b32.xlu0 %v2811, 64
    %v2816 = vpop.permute.xlu0 %2815
    %2817 = vrot.lane.b32.xlu0 %v2812, 64
    %v2818 = vpop.permute.xlu0 %2817
    %v2821 = vadd.f32 %v640, %v2816
    %v2822 = vadd.f32 %v645, %v2818
    %v2823 = vtanh.pop %v2821
    %v2824 = vtanh.pop %v2822
    %v2825 = vsub.f32 1.0, %v2802
    %v2826 = vsub.f32 1.0, %v2804
    %2829 = vrot.lane.b32.xlu0 %v2823, 96
    %v2830 = vpop.permute.xlu0 %2829
    %2831 = vrot.lane.b32.xlu0 %v2824, 96
    %v2832 = vpop.permute.xlu0 %2831
    %v2835 = vmul.f32 %v2825, %v2830
    %v2836 = vmul.f32 %v2826, %v2832
    %v2837 = vrot.slane %v2698, 1
    %v2840 = vmul.f32 %v2802, %v2837
    %v2841 = vmul.f32 %v2804, %v2711
    %v2842 = vadd.f32 %v2835, %v2840
    %v2843 = vadd.f32 %v2836, %v2841
    %2846 = vrot.lane.b32.xlu0 %v2842, 96
    %v2847 = vpop.permute.xlu0 %2846
    %2848 = vrot.lane.b32.xlu0 %v2843, 96
    %v2849 = vpop.permute.xlu0 %2848
    %2852 = vst.msk [vmem:[#allocation3] sm:$0x2] %vm957, %v2847
    %2853 = vst.msk [vmem:[#allocation3 + $0x8] sm:$0x2] %vm957, %v2849
    %v2854 = vrot.slane %v2842, 1
    %v2855 = vsel %vm816, %v2843, %v2854
    %2856 = vrot.lane.b32.xlu0 %v2855, 96
    %v2857 = vpop.permute.xlu0 %2856
    %v2858 = vsel %vm480, %v2857, 0
    %2860 = vmatprep.subr.mxu0 0.0
    %2861 = vmatpush1.msra.mxu0 %v652
    %2862 = vmatprep.subr.mxu0 0.0
    %2863 = vmatpush1.msra.mxu0 %v653
    %2864 = vmatprep.subr.mxu0 0.0
    %2865 = vmatpush1.msra.mxu0 %v654
    %2866 = vmatprep.subr.mxu0 0.0
    %2867 = vmatpush1.msra.mxu0 %v655
    %2868 = vmatprep.subr.mxu0 0.0
    %2869 = vmatpush1.msra.mxu0 0.0
    %2870 = vmatprep.subr.mxu0 0.0
    %2871 = vmatpush1.msra.mxu0 0.0
    %2872 = vmatprep.subr.mxu0 0.0
    %2873 = vmatpush1.msra.mxu0 0.0
    %2874 = vmatprep.subr.mxu0 0.0
    %2875 = vmatpush1.msra.mxu0 0.0
    %2876 = vmatprep.subr.mxu0 0.0
    %2877 = vmatpush1.msra.mxu0 0.0
    %2878 = vmatprep.subr.mxu0 0.0
    %2879 = vmatpush1.msra.mxu0 0.0
    %2880 = vmatprep.subr.mxu0 0.0
    %2881 = vmatpush1.msra.mxu0 0.0
    %2882 = vmatprep.subr.mxu0 0.0
    %2883 = vmatpush1.msra.mxu0 0.0
    %2884 = vmatprep.subr.mxu0 0.0
    %2885 = vmatpush1.msra.mxu0 0.0
    %2886 = vmatprep.subr.mxu0 0.0
    %2887 = vmatpush1.msra.mxu0 0.0
    %2888 = vmatprep.subr.mxu0 0.0
    %2889 = vmatpush1.msra.mxu0 0.0
    %2890 = vmatprep.subr.mxu0 0.0
    %2891 = vmatpush1.msra.mxu0 0.0
    %2892 = vmatprep.subr.mxu0 0.0
    %2893 = vmatpush1.msra.mxu0 0.0
    %2894 = vmatprep.subr.mxu0 0.0
    %2895 = vmatpush1.msra.mxu0 0.0
    %2896 = vmatprep.subr.mxu0 0.0
    %2897 = vmatpush1.msra.mxu0 0.0
    %2898 = vmatprep.subr.mxu0 0.0
    %2899 = vmatpush1.msra.mxu0 0.0
    %2900 = vmatprep.subr.mxu0 0.0
    %2901 = vmatpush1.msra.mxu0 0.0
    %2902 = vmatprep.subr.mxu0 0.0
    %2903 = vmatpush1.msra.mxu0 0.0
    %2904 = vmatprep.subr.mxu0 0.0
    %2905 = vmatpush1.msra.mxu0 0.0
    %2906 = vmatprep.subr.mxu0 0.0
    %2907 = vmatpush1.msra.mxu0 0.0
    %2908 = vmatprep.subr.mxu0 0.0
    %2909 = vmatpush1.msra.mxu0 0.0
    %2910 = vmatprep.subr.mxu0 0.0
    %2911 = vmatpush1.msra.mxu0 0.0
    %2912 = vmatprep.subr.mxu0 0.0
    %2913 = vmatpush1.msra.mxu0 0.0
    %2914 = vmatprep.subr.mxu0 0.0
    %2915 = vmatpush1.msra.mxu0 0.0
    %2916 = vmatprep.subr.mxu0 0.0
    %2917 = vmatpush1.msra.mxu0 0.0
    %2918 = vmatprep.subr.mxu0 0.0
    %2919 = vmatpush1.msra.mxu0 0.0
    %2920 = vmatprep.subr.mxu0 0.0
    %2921 = vmatpush1.msra.mxu0 0.0
    %2922 = vmatprep.subr.mxu0 0.0
    %2923 = vmatpush1.msra.mxu0 0.0
    %2924 = vmatprep.mubr.f32.mxu0 0.0
    %2925 = vmatmul.mubr.f32.gmra.mrb[0].mxu0 %v2858
    %v2926 = vpop.f32.mrb[0].mxu0
    %v2927 = vadd.f32 %v668, %v2926
    %v2928 = vpop.f32.mrb[0].mxu0
    %2929 = vdwg.mxu0
    %v2931 = vrot.slane %v2927, 1
    %v2934 = vadd.f32 %v640, %v2927
    %v2935 = vadd.f32 %v645, %v2931
    %v2936 = vxor.u32 %v2934, 2147483648
    %v2937 = vxor.u32 %v2935, 2147483648
    %v2938 = vmul.f32 %v2936, 1.442695
    %v2939 = vpow.pop %v2938
    %v2940 = vmul.f32 %v2937, 1.442695
    %v2941 = vpow.pop %v2940
    %v2942 = vadd.f32 %v2939, 1.0
    %v2943 = vadd.f32 %v2941, 1.0
    %v2944 = vrcp.pop %v2942
    %v2945 = vmul.f32 1.0, %v2944
    %v2946 = vrcp.pop %v2943
    %v2947 = vmul.f32 1.0, %v2946
    %2948 = vrot.lane.b32.xlu0 %v2927, 64
    %v2949 = vpop.permute.xlu0 %2948
    %2950 = vrot.lane.b32.xlu0 %v2931, 64
    %v2951 = vpop.permute.xlu0 %2950
    %v2954 = vmul.f32 %v2945, %v2949
    %v2955 = vmul.f32 %v2947, %v2951
    %2958 = vrot.lane.b32.xlu0 %v2954, 64
    %v2959 = vpop.permute.xlu0 %2958
    %2960 = vrot.lane.b32.xlu0 %v2955, 64
    %v2961 = vpop.permute.xlu0 %2960
    %v2964 = vadd.f32 %v640, %v2959
    %v2965 = vadd.f32 %v645, %v2961
    %v2966 = vtanh.pop %v2964
    %v2967 = vtanh.pop %v2965
    %v2968 = vsub.f32 1.0, %v2945
    %v2969 = vsub.f32 1.0, %v2947
    %2972 = vrot.lane.b32.xlu0 %v2966, 96
    %v2973 = vpop.permute.xlu0 %2972
    %2974 = vrot.lane.b32.xlu0 %v2967, 96
    %v2975 = vpop.permute.xlu0 %2974
    %v2978 = vmul.f32 %v2968, %v2973
    %v2979 = vmul.f32 %v2969, %v2975
    %v2980 = vrot.slane %v2843, 1
    %v2983 = vmul.f32 %v2945, %v2854
    %v2984 = vmul.f32 %v2947, %v2980
    %v2985 = vadd.f32 %v2978, %v2983
    %v2986 = vadd.f32 %v2979, %v2984
    %2989 = vrot.lane.b32.xlu0 %v2985, 96
    %v2990 = vpop.permute.xlu0 %2989
    %2991 = vrot.lane.b32.xlu0 %v2986, 96
    %v2992 = vpop.permute.xlu0 %2991
    %2995 = vst.msk [vmem:[#allocation3] sm:$0x1] %vm812, %v2990
    %2996 = vst.msk [vmem:[#allocation3 + $0x8] sm:$0x1] %vm812, %v2992
    %v2997 = vld [vmem:[#allocation2] sm:$0xff]
    %v2998 = vld [vmem:[#allocation2 + $0x8] sm:$0xff]
    %v2999 = vld [vmem:[#allocation3] sm:$0xff]
    %v3000 = vld [vmem:[#allocation3 + $0x8] sm:$0xff]
    %3003 = vrot.lane.b32.xlu0 %v2999, 32
    %v3004 = vpop.permute.xlu0 %3003
    %3005 = vrot.lane.b32.xlu0 %v3000, 32
    %v3006 = vpop.permute.xlu0 %3005
    %v3009 = vsel %vm480, %v2997, %v3004
    %v3010 = vsel %vm480, %v2998, %v3006
    %v3011 = vld [vmem:[%s37] sm:$0xff]
    %v3012 = vld [vmem:[%s37 + $0x8] sm:$0xff]
    %v3013 = vld [vmem:[%s37 + $0x10] sm:$0xff]
    %v3014 = vld [vmem:[%s37 + $0x18] sm:$0xff]
    %v3015 = vld [vmem:[%s37 + $0x20] sm:$0xff]
    %v3016 = vld [vmem:[%s37 + $0x28] sm:$0xff]
    %v3017 = vld [vmem:[%s37 + $0x30] sm:$0xff]
    %v3018 = vld [vmem:[%s37 + $0x38] sm:$0xff]
    %vm3019 = vcmask 523264
    %v3021 = vsel %vm3019, %v3009, 0
    %v3024 = vsel %vm3019, %v3010, 0
    %3026 = vmatprep.subr.mxu0 0.0
    %3027 = vmatpush1.msra.mxu0 %v3011
    %3028 = vmatprep.subr.mxu0 0.0
    %3029 = vmatpush1.msra.mxu0 %v3012
    %3030 = vmatprep.subr.mxu0 0.0
    %3031 = vmatpush1.msra.mxu0 %v3013
    %3032 = vmatprep.subr.mxu0 0.0
    %3033 = vmatpush1.msra.mxu0 %v3014
    %3034 = vmatprep.subr.mxu0 0.0
    %3035 = vmatpush1.msra.mxu0 %v3015
    %3036 = vmatprep.subr.mxu0 0.0
    %3037 = vmatpush1.msra.mxu0 %v3016
    %3038 = vmatprep.subr.mxu0 0.0
    %3039 = vmatpush1.msra.mxu0 %v3017
    %3040 = vmatprep.subr.mxu0 0.0
    %3041 = vmatpush1.msra.mxu0 %v3018
    %3042 = vmatprep.subr.mxu0 0.0
    %3043 = vmatpush1.msra.mxu0 0.0
    %3044 = vmatprep.subr.mxu0 0.0
    %3045 = vmatpush1.msra.mxu0 0.0
    %3046 = vmatprep.subr.mxu0 0.0
    %3047 = vmatpush1.msra.mxu0 0.0
    %3048 = vmatprep.subr.mxu0 0.0
    %3049 = vmatpush1.msra.mxu0 0.0
    %3050 = vmatprep.subr.mxu0 0.0
    %3051 = vmatpush1.msra.mxu0 0.0
    %3052 = vmatprep.subr.mxu0 0.0
    %3053 = vmatpush1.msra.mxu0 0.0
    %3054 = vmatprep.subr.mxu0 0.0
    %3055 = vmatpush1.msra.mxu0 0.0
    %3056 = vmatprep.subr.mxu0 0.0
    %3057 = vmatpush1.msra.mxu0 0.0
    %3058 = vmatprep.subr.mxu0 0.0
    %3059 = vmatpush1.msra.mxu0 0.0
    %3060 = vmatprep.subr.mxu0 0.0
    %3061 = vmatpush1.msra.mxu0 0.0
    %3062 = vmatprep.subr.mxu0 0.0
    %3063 = vmatpush1.msra.mxu0 0.0
    %3064 = vmatprep.subr.mxu0 0.0
    %3065 = vmatpush1.msra.mxu0 0.0
    %3066 = vmatprep.subr.mxu0 0.0
    %3067 = vmatpush1.msra.mxu0 0.0
    %3068 = vmatprep.subr.mxu0 0.0
    %3069 = vmatpush1.msra.mxu0 0.0
    %3070 = vmatprep.subr.mxu0 0.0
    %3071 = vmatpush1.msra.mxu0 0.0
    %3072 = vmatprep.subr.mxu0 0.0
    %3073 = vmatpush1.msra.mxu0 0.0
    %3074 = vmatprep.subr.mxu0 0.0
    %3075 = vmatpush1.msra.mxu0 0.0
    %3076 = vmatprep.subr.mxu0 0.0
    %3077 = vmatpush1.msra.mxu0 0.0
    %3078 = vmatprep.subr.mxu0 0.0
    %3079 = vmatpush1.msra.mxu0 0.0
    %3080 = vmatprep.subr.mxu0 0.0
    %3081 = vmatpush1.msra.mxu0 0.0
    %3082 = vmatprep.subr.mxu0 0.0
    %3083 = vmatpush1.msra.mxu0 0.0
    %3084 = vmatprep.subr.mxu0 0.0
    %3085 = vmatpush1.msra.mxu0 0.0
    %3086 = vmatprep.subr.mxu0 0.0
    %3087 = vmatpush1.msra.mxu0 0.0
    %3088 = vmatprep.subr.mxu0 0.0
    %3089 = vmatpush1.msra.mxu0 0.0
    %3090 = vmatprep.mubr.f32.mxu0 0.0
    %3091 = vmatmul.mubr.f32.gmra.mrb[0].mxu0 %v3021
    %v3092 = vpop.f32.mrb[0].mxu0
    %v3093 = vadd.f32 0.0, %v3092
    %v3094 = vpop.f32.mrb[0].mxu0
    %3095 = vmatprep.mubr.f32.mxu0 0.0
    %3096 = vmatmul.mubr.f32.gmra.mrb[0].mxu0 %v3024
    %v3097 = vpop.f32.mrb[0].mxu0
    %v3098 = vadd.f32 0.0, %v3097
    %v3099 = vpop.f32.mrb[0].mxu0
    %3100 = vdwg.mxu0
    %v3101 = vld [vmem:[%s41] sm:$0x1]
    %v3102 = vld [vmem:[%s39] sm:$0xff]
    %v3103 = vld [vmem:[%s39 + $0x8] sm:$0xff]
    %v3104 = vld [vmem:[%s39 + $0x10] sm:$0xff]
    %v3105 = vld [vmem:[%s39 + $0x18] sm:$0xff]
    %vm3106 = vcmp.gt.f32.partialorder %v223, 0.0
    %v3107 = vld [vmem:[%s43] sm:$0xff]
    %v3108 = vld [vmem:[%s43 + $0x8] sm:$0xff]
    %v3109 = vld [vmem:[%s43 + $0x10] sm:$0xff]
    %v3110 = vld [vmem:[%s43 + $0x18] sm:$0xff]
    %v3112 = vsel %vm480, %v221, 0
    %v3115 = vsel %vm480, %v222, 0
    %3117 = vmatprep.subr.mxu0 0.0
    %3118 = vmatpush1.msra.mxu0 %v3107
    %3119 = vmatprep.subr.mxu0 0.0
    %3120 = vmatpush1.msra.mxu0 %v3108
    %3121 = vmatprep.subr.mxu0 0.0
    %3122 = vmatpush1.msra.mxu0 %v3109
    %3123 = vmatprep.subr.mxu0 0.0
    %3124 = vmatpush1.msra.mxu0 %v3110
    %3125 = vmatprep.subr.mxu0 0.0
    %3126 = vmatpush1.msra.mxu0 0.0
    %3127 = vmatprep.subr.mxu0 0.0
    %3128 = vmatpush1.msra.mxu0 0.0
    %3129 = vmatprep.subr.mxu0 0.0
    %3130 = vmatpush1.msra.mxu0 0.0
    %3131 = vmatprep.subr.mxu0 0.0
    %3132 = vmatpush1.msra.mxu0 0.0
    %3133 = vmatprep.subr.mxu0 0.0
    %3134 = vmatpush1.msra.mxu0 0.0
    %3135 = vmatprep.subr.mxu0 0.0
    %3136 = vmatpush1.msra.mxu0 0.0
    %3137 = vmatprep.subr.mxu0 0.0
    %3138 = vmatpush1.msra.mxu0 0.0
    %3139 = vmatprep.subr.mxu0 0.0
    %3140 = vmatpush1.msra.mxu0 0.0
    %3141 = vmatprep.subr.mxu0 0.0
    %3142 = vmatpush1.msra.mxu0 0.0
    %3143 = vmatprep.subr.mxu0 0.0
    %3144 = vmatpush1.msra.mxu0 0.0
    %3145 = vmatprep.subr.mxu0 0.0
    %3146 = vmatpush1.msra.mxu0 0.0
    %3147 = vmatprep.subr.mxu0 0.0
    %3148 = vmatpush1.msra.mxu0 0.0
    %3149 = vmatprep.subr.mxu0 0.0
    %3150 = vmatpush1.msra.mxu0 0.0
    %3151 = vmatprep.subr.mxu0 0.0
    %3152 = vmatpush1.msra.mxu0 0.0
    %3153 = vmatprep.subr.mxu0 0.0
    %3154 = vmatpush1.msra.mxu0 0.0
    %3155 = vmatprep.subr.mxu0 0.0
    %3156 = vmatpush1.msra.mxu0 0.0
    %3157 = vmatprep.subr.mxu0 0.0
    %3158 = vmatpush1.msra.mxu0 0.0
    %3159 = vmatprep.subr.mxu0 0.0
    %3160 = vmatpush1.msra.mxu0 0.0
    %3161 = vmatprep.subr.mxu0 0.0
    %3162 = vmatpush1.msra.mxu0 0.0
    %3163 = vmatprep.subr.mxu0 0.0
    %3164 = vmatpush1.msra.mxu0 0.0
    %3165 = vmatprep.subr.mxu0 0.0
    %3166 = vmatpush1.msra.mxu0 0.0
    %3167 = vmatprep.subr.mxu0 0.0
    %3168 = vmatpush1.msra.mxu0 0.0
    %3169 = vmatprep.subr.mxu0 0.0
    %3170 = vmatpush1.msra.mxu0 0.0
    %3171 = vmatprep.subr.mxu0 0.0
    %3172 = vmatpush1.msra.mxu0 0.0
    %3173 = vmatprep.subr.mxu0 0.0
    %3174 = vmatpush1.msra.mxu0 0.0
    %3175 = vmatprep.subr.mxu0 0.0
    %3176 = vmatpush1.msra.mxu0 0.0
    %3177 = vmatprep.subr.mxu0 0.0
    %3178 = vmatpush1.msra.mxu0 0.0
    %3179 = vmatprep.subr.mxu0 0.0
    %3180 = vmatpush1.msra.mxu0 0.0
    %3181 = vmatprep.mubr.f32.mxu0 0.0
    %3182 = vmatmul.mubr.f32.gmra.mrb[0].mxu0 %v3112
    %v3183 = vpop.f32.mrb[0].mxu0
    %v3184 = vadd.f32 0.0, %v3183
    %v3185 = vpop.f32.mrb[0].mxu0
    %3186 = vmatprep.mubr.f32.mxu0 0.0
    %3187 = vmatmul.mubr.f32.gmra.mrb[0].mxu0 %v3115
    %v3188 = vpop.f32.mrb[0].mxu0
    %v3189 = vadd.f32 0.0, %v3188
    %v3190 = vpop.f32.mrb[0].mxu0
    %3191 = vdwg.mxu0
    %v3192 = vld [vmem:[%s47] sm:$0xff]
    %v3193 = vld [vmem:[%s47 + $0x8] sm:$0xff]
    %v3194 = vld [vmem:[%s51] sm:$0x1]
    %v3196 = vlaneseq
    %v3197 = vshrl.u32 %v3196, 7
    %v3198 = vsub.s32 0, %v3197
    %v3199 = vrot.slane %v3194, %v3198
    %3201 = vmatprep.subr.mxu0 0.0
    %3202 = vmatpush1.msra.mxu0 %v3192
    %3203 = vmatprep.subr.mxu0 0.0
    %3204 = vmatpush1.msra.mxu0 %v3193
    %3205 = vmatprep.subr.mxu0 0.0
    %3206 = vmatpush1.msra.mxu0 0.0
    %3207 = vmatprep.subr.mxu0 0.0
    %3208 = vmatpush1.msra.mxu0 0.0
    %3209 = vmatprep.subr.mxu0 0.0
    %3210 = vmatpush1.msra.mxu0 0.0
    %3211 = vmatprep.subr.mxu0 0.0
    %3212 = vmatpush1.msra.mxu0 0.0
    %3213 = vmatprep.subr.mxu0 0.0
    %3214 = vmatpush1.msra.mxu0 0.0
    %3215 = vmatprep.subr.mxu0 0.0
    %3216 = vmatpush1.msra.mxu0 0.0
    %3217 = vmatprep.subr.mxu0 0.0
    %3218 = vmatpush1.msra.mxu0 0.0
    %3219 = vmatprep.subr.mxu0 0.0
    %3220 = vmatpush1.msra.mxu0 0.0
    %3221 = vmatprep.subr.mxu0 0.0
    %3222 = vmatpush1.msra.mxu0 0.0
    %3223 = vmatprep.subr.mxu0 0.0
    %3224 = vmatpush1.msra.mxu0 0.0
    %3225 = vmatprep.subr.mxu0 0.0
    %3226 = vmatpush1.msra.mxu0 0.0
    %3227 = vmatprep.subr.mxu0 0.0
    %3228 = vmatpush1.msra.mxu0 0.0
    %3229 = vmatprep.subr.mxu0 0.0
    %3230 = vmatpush1.msra.mxu0 0.0
    %3231 = vmatprep.subr.mxu0 0.0
    %3232 = vmatpush1.msra.mxu0 0.0
    %3233 = vmatprep.subr.mxu0 0.0
    %3234 = vmatpush1.msra.mxu0 0.0
    %3235 = vmatprep.subr.mxu0 0.0
    %3236 = vmatpush1.msra.mxu0 0.0
    %3237 = vmatprep.subr.mxu0 0.0
    %3238 = vmatpush1.msra.mxu0 0.0
    %3239 = vmatprep.subr.mxu0 0.0
    %3240 = vmatpush1.msra.mxu0 0.0
    %3241 = vmatprep.subr.mxu0 0.0
    %3242 = vmatpush1.msra.mxu0 0.0
    %3243 = vmatprep.subr.mxu0 0.0
    %3244 = vmatpush1.msra.mxu0 0.0
    %3245 = vmatprep.subr.mxu0 0.0
    %3246 = vmatpush1.msra.mxu0 0.0
    %3247 = vmatprep.subr.mxu0 0.0
    %3248 = vmatpush1.msra.mxu0 0.0
    %3249 = vmatprep.subr.mxu0 0.0
    %3250 = vmatpush1.msra.mxu0 0.0
    %3251 = vmatprep.subr.mxu0 0.0
    %3252 = vmatpush1.msra.mxu0 0.0
    %3253 = vmatprep.subr.mxu0 0.0
    %3254 = vmatpush1.msra.mxu0 0.0
    %3255 = vmatprep.subr.mxu0 0.0
    %3256 = vmatpush1.msra.mxu0 0.0
    %3257 = vmatprep.subr.mxu0 0.0
    %3258 = vmatpush1.msra.mxu0 0.0
    %3259 = vmatprep.subr.mxu0 0.0
    %3260 = vmatpush1.msra.mxu0 0.0
    %3261 = vmatprep.subr.mxu0 0.0
    %3262 = vmatpush1.msra.mxu0 0.0
    %3263 = vmatprep.subr.mxu0 0.0
    %3264 = vmatpush1.msra.mxu0 0.0
    %3265 = vmatprep.mubr.f32.mxu0 0.0
    %3266 = vmatmul.mubr.f32.gmra.mrb[0].mxu0 %v236
    %v3267 = vpop.f32.mrb[0].mxu0
    %v3268 = vadd.f32 %v3199, %v3267
    %v3269 = vpop.f32.mrb[0].mxu0
    %3270 = vdwg.mxu0
    %v3271 = vld [vmem:[%s45] sm:$0xff]
    %v3272 = vld [vmem:[%s45 + $0x8] sm:$0xff]
    %v3273 = vld [vmem:[%s45 + $0x10] sm:$0xff]
    %v3274 = vld [vmem:[%s45 + $0x18] sm:$0xff]
    %v3275 = vld [vmem:[%s45 + $0x20] sm:$0xff]
    %v3276 = vld [vmem:[%s45 + $0x28] sm:$0xff]
    %v3277 = vld [vmem:[%s45 + $0x30] sm:$0xff]
    %v3278 = vld [vmem:[%s45 + $0x38] sm:$0xff]
    %v3279 = vld [vmem:[%s49] sm:$0xff]
    %v3280 = vld [vmem:[%s49 + $0x8] sm:$0xff]
    %v3281 = vld [vmem:[%s49 + $0x10] sm:$0xff]
    %v3282 = vld [vmem:[%s49 + $0x18] sm:$0xff]
    %v3283 = vld [vmem:[%s53] sm:$0x1]
    %v3285 = vlaneseq
    %v3286 = vshrl.u32 %v3285, 7
    %v3287 = vsub.s32 0, %v3286
    %v3288 = vrot.slane %v3283, %v3287
    %v3290 = vld [vmem:[%s55] sm:$0xff]
    %v3291 = vld [vmem:[%s55 + $0x8] sm:$0xff]
    %v3292 = vld [vmem:[%s55 + $0x10] sm:$0xff]
    %v3293 = vld [vmem:[%s55 + $0x18] sm:$0xff]
    %v3294 = vld [vmem:[%s61] sm:$0x1]
    %v3296 = vlaneseq
    %v3297 = vshrl.u32 %v3296, 7
    %v3298 = vsub.s32 0, %v3297
    %v3299 = vrot.slane %v3294, %v3298
    %3301 = vmatprep.subr.mxu0 0.0
    %3302 = vmatpush1.msra.mxu0 %v3290
    %3303 = vmatprep.subr.mxu0 0.0
    %3304 = vmatpush1.msra.mxu0 %v3291
    %3305 = vmatprep.subr.mxu0 0.0
    %3306 = vmatpush1.msra.mxu0 %v3292
    %3307 = vmatprep.subr.mxu0 0.0
    %3308 = vmatpush1.msra.mxu0 %v3293
    %3309 = vmatprep.subr.mxu0 0.0
    %3310 = vmatpush1.msra.mxu0 0.0
    %3311 = vmatprep.subr.mxu0 0.0
    %3312 = vmatpush1.msra.mxu0 0.0
    %3313 = vmatprep.subr.mxu0 0.0
    %3314 = vmatpush1.msra.mxu0 0.0
    %3315 = vmatprep.subr.mxu0 0.0
    %3316 = vmatpush1.msra.mxu0 0.0
    %3317 = vmatprep.subr.mxu0 0.0
    %3318 = vmatpush1.msra.mxu0 0.0
    %3319 = vmatprep.subr.mxu0 0.0
    %3320 = vmatpush1.msra.mxu0 0.0
    %3321 = vmatprep.subr.mxu0 0.0
    %3322 = vmatpush1.msra.mxu0 0.0
    %3323 = vmatprep.subr.mxu0 0.0
    %3324 = vmatpush1.msra.mxu0 0.0
    %3325 = vmatprep.subr.mxu0 0.0
    %3326 = vmatpush1.msra.mxu0 0.0
    %3327 = vmatprep.subr.mxu0 0.0
    %3328 = vmatpush1.msra.mxu0 0.0
    %3329 = vmatprep.subr.mxu0 0.0
    %3330 = vmatpush1.msra.mxu0 0.0
    %3331 = vmatprep.subr.mxu0 0.0
    %3332 = vmatpush1.msra.mxu0 0.0
    %3333 = vmatprep.subr.mxu0 0.0
    %3334 = vmatpush1.msra.mxu0 0.0
    %3335 = vmatprep.subr.mxu0 0.0
    %3336 = vmatpush1.msra.mxu0 0.0
    %3337 = vmatprep.subr.mxu0 0.0
    %3338 = vmatpush1.msra.mxu0 0.0
    %3339 = vmatprep.subr.mxu0 0.0
    %3340 = vmatpush1.msra.mxu0 0.0
    %3341 = vmatprep.subr.mxu0 0.0
    %3342 = vmatpush1.msra.mxu0 0.0
    %3343 = vmatprep.subr.mxu0 0.0
    %3344 = vmatpush1.msra.mxu0 0.0
    %3345 = vmatprep.subr.mxu0 0.0
    %3346 = vmatpush1.msra.mxu0 0.0
    %3347 = vmatprep.subr.mxu0 0.0
    %3348 = vmatpush1.msra.mxu0 0.0
    %3349 = vmatprep.subr.mxu0 0.0
    %3350 = vmatpush1.msra.mxu0 0.0
    %3351 = vmatprep.subr.mxu0 0.0
    %3352 = vmatpush1.msra.mxu0 0.0
    %3353 = vmatprep.subr.mxu0 0.0
    %3354 = vmatpush1.msra.mxu0 0.0
    %3355 = vmatprep.subr.mxu0 0.0
    %3356 = vmatpush1.msra.mxu0 0.0
    %3357 = vmatprep.subr.mxu0 0.0
    %3358 = vmatpush1.msra.mxu0 0.0
    %3359 = vmatprep.subr.mxu0 0.0
    %3360 = vmatpush1.msra.mxu0 0.0
    %3361 = vmatprep.subr.mxu0 0.0
    %3362 = vmatpush1.msra.mxu0 0.0
    %3363 = vmatprep.subr.mxu0 0.0
    %3364 = vmatpush1.msra.mxu0 0.0
    %3365 = vmatprep.mubr.f32.mxu0 0.0
    %3366 = vmatmul.mubr.f32.gmra.mrb[0].mxu0 %v3112
    %v3367 = vpop.f32.mrb[0].mxu0
    %v3368 = vadd.f32 %v3299, %v3367
    %v3369 = vpop.f32.mrb[0].mxu0
    %3370 = vmatprep.mubr.f32.mxu0 0.0
    %3371 = vmatmul.mubr.f32.gmra.mrb[0].mxu0 %v3115
    %v3372 = vpop.f32.mrb[0].mxu0
    %v3373 = vadd.f32 %v3299, %v3372
    %v3374 = vpop.f32.mrb[0].mxu0
    %3375 = vdwg.mxu0
    %v3376 = vld [vmem:[%s57] sm:$0xff]
    %v3377 = vld [vmem:[%s57 + $0x8] sm:$0xff]
    %v3378 = vld [vmem:[%s57 + $0x10] sm:$0xff]
    %v3379 = vld [vmem:[%s57 + $0x18] sm:$0xff]
    %v3380 = vld [vmem:[%s59] sm:$0xff]
    %v3381 = vld [vmem:[%s59 + $0x8] sm:$0xff]
    %v3382 = vld [vmem:[%s59 + $0x10] sm:$0xff]
    %v3383 = vld [vmem:[%s59 + $0x18] sm:$0xff]
    %v3384 = vld [vmem:[%s59 + $0x20] sm:$0xff]
    %v3385 = vld [vmem:[%s59 + $0x28] sm:$0xff]
    %v3386 = vld [vmem:[%s59 + $0x30] sm:$0xff]
    %v3387 = vld [vmem:[%s59 + $0x38] sm:$0xff]
    %v3389 = vsel %vm480, %v388, 0
    %3391 = vmatprep.subr.mxu0 0.0
    %3392 = vmatpush1.msra.mxu0 %v3102
    %3393 = vmatprep.subr.mxu0 0.0
    %3394 = vmatpush1.msra.mxu0 %v3103
    %3395 = vmatprep.subr.mxu0 0.0
    %3396 = vmatpush1.msra.mxu0 %v3104
    %3397 = vmatprep.subr.mxu0 0.0
    %3398 = vmatpush1.msra.mxu0 %v3105
    %3399 = vmatprep.subr.mxu0 0.0
    %3400 = vmatpush1.msra.mxu0 0.0
    %3401 = vmatprep.subr.mxu0 0.0
    %3402 = vmatpush1.msra.mxu0 0.0
    %3403 = vmatprep.subr.mxu0 0.0
    %3404 = vmatpush1.msra.mxu0 0.0
    %3405 = vmatprep.subr.mxu0 0.0
    %3406 = vmatpush1.msra.mxu0 0.0
    %3407 = vmatprep.subr.mxu0 0.0
    %3408 = vmatpush1.msra.mxu0 0.0
    %3409 = vmatprep.subr.mxu0 0.0
    %3410 = vmatpush1.msra.mxu0 0.0
    %3411 = vmatprep.subr.mxu0 0.0
    %3412 = vmatpush1.msra.mxu0 0.0
    %3413 = vmatprep.subr.mxu0 0.0
    %3414 = vmatpush1.msra.mxu0 0.0
    %3415 = vmatprep.subr.mxu0 0.0
    %3416 = vmatpush1.msra.mxu0 0.0
    %3417 = vmatprep.subr.mxu0 0.0
    %3418 = vmatpush1.msra.mxu0 0.0
    %3419 = vmatprep.subr.mxu0 0.0
    %3420 = vmatpush1.msra.mxu0 0.0
    %3421 = vmatprep.subr.mxu0 0.0
    %3422 = vmatpush1.msra.mxu0 0.0
    %3423 = vmatprep.subr.mxu0 0.0
    %3424 = vmatpush1.msra.mxu0 0.0
    %3425 = vmatprep.subr.mxu0 0.0
    %3426 = vmatpush1.msra.mxu0 0.0
    %3427 = vmatprep.subr.mxu0 0.0
    %3428 = vmatpush1.msra.mxu0 0.0
    %3429 = vmatprep.subr.mxu0 0.0
    %3430 = vmatpush1.msra.mxu0 0.0
    %3431 = vmatprep.subr.mxu0 0.0
    %3432 = vmatpush1.msra.mxu0 0.0
    %3433 = vmatprep.subr.mxu0 0.0
    %3434 = vmatpush1.msra.mxu0 0.0
    %3435 = vmatprep.subr.mxu0 0.0
    %3436 = vmatpush1.msra.mxu0 0.0
    %3437 = vmatprep.subr.mxu0 0.0
    %3438 = vmatpush1.msra.mxu0 0.0
    %3439 = vmatprep.subr.mxu0 0.0
    %3440 = vmatpush1.msra.mxu0 0.0
    %3441 = vmatprep.subr.mxu0 0.0
    %3442 = vmatpush1.msra.mxu0 0.0
    %3443 = vmatprep.subr.mxu0 0.0
    %3444 = vmatpush1.msra.mxu0 0.0
    %3445 = vmatprep.subr.mxu0 0.0
    %3446 = vmatpush1.msra.mxu0 0.0
    %3447 = vmatprep.subr.mxu0 0.0
    %3448 = vmatpush1.msra.mxu0 0.0
    %3449 = vmatprep.subr.mxu0 0.0
    %3450 = vmatpush1.msra.mxu0 0.0
    %3451 = vmatprep.subr.mxu0 0.0
    %3452 = vmatpush1.msra.mxu0 0.0
    %3453 = vmatprep.subr.mxu0 0.0
    %3454 = vmatpush1.msra.mxu0 0.0
    %3455 = vmatprep.mubr.f32.mxu0 0.0
    %3456 = vmatmul.mubr.f32.gmra.mrb[0].mxu0 %v3389
    %v3457 = vpop.f32.mrb[0].mxu0
    %v3458 = vadd.f32 0.0, %v3457
    %v3459 = vpop.f32.mrb[0].mxu0
    %3460 = vdwg.mxu0
    %v3463 = vunpack.c.l.s4 1966171168
    %v3464 = vunpack.c.0.s8 %v3463
    %v3465 = vlaneseq
    %v3466 = vshrl.u32 %v3465, 7
    %v3467 = vsub.s32 %v3464, %v3466
    %v3468 = vrot.slane %v3458, %v3467
    %v3469 = vcombine.high %v3468, %v3468
    %v3471 = vunpack.c.l.s4 1966171168
    %v3472 = vunpack.c.0.s8 %v3471
    %v3473 = vlaneseq
    %v3474 = vshrl.u32 %v3473, 7
    %v3475 = vsub.s32 %v3472, %v3474
    %v3476 = vrot.slane %v3468, %v3475
    %v3478 = vunpack.c.l.s4 1966171168
    %v3479 = vunpack.c.0.s8 %v3478
    %v3480 = vlaneseq
    %v3481 = vshrl.u32 %v3480, 7
    %v3482 = vsub.s32 %v3479, %v3481
    %v3483 = vrot.slane %v3469, %v3482
    %v3484 = vlaneseq
    %v3485 = vshrl.u32 %v3484, 7
    %v3486 = vsub.s32 0, %v3485
    %v3487 = vrot.slane %v3476, %v3486
    %v3488 = vlaneseq
    %v3489 = vshrl.u32 %v3488, 7
    %v3490 = vsub.s32 0, %v3489
    %v3491 = vrot.slane %v3483, %v3490
    %v3494 = vadd.f32 %v3093, %v3487
    %v3495 = vadd.f32 %v3098, %v3491
    %v3496 = vtanh.pop %v3494
    %v3497 = vtanh.pop %v3495
    %v3499 = vlaneseq
    %v3500 = vshrl.u32 %v3499, 7
    %v3501 = vsub.s32 0, %v3500
    %v3502 = vrot.slane %v3101, %v3501
    %v3504 = vmul.f32 %v3496, %v3502
    %v3505 = vmul.f32 %v3497, %v3502
    %v3506 = vsel %vm480, %v3504, 0.0
    %3507 = vadd.xlane.f32.xlu0 %v3506
    %v3508 = vpop.xlane.xlu0 %3507
    %v3509 = vsel %vm480, %v3505, 0.0
    %3510 = vadd.xlane.f32.xlu0 %v3509
    %v3511 = vpop.xlane.xlu0 %3510
    %v3514 = vlaneseq
    %v3515 = vand.u32 %v3514, 127
    %v3516 = vlaneseq
    %v3517 = vshrl.u32 %v3516, 7
    %v3518 = vsub.s32 %v3515, %v3517
    %v3519 = vrot.slane %v3508, %v3518
    %v3520 = vlaneseq
    %v3521 = vshrl.u32 %v3520, 7
    %v3522 = vsub.s32 %v3515, %v3521
    %v3523 = vrot.slane %v3511, %v3522
    %v3524 = vsel %vm816, %v3523, %v3519
    %v3526 = vsel %vm3106, %v3524, -1e+09
    %vm3527 = vcmask 58368
    %v3528 = vsel %vm3527, %v3526, -inf
    %3529 = vmax.xlane.f32.xlu0 %v3528
    %v3530 = vpop.xlane.xlu0 %3529
    %v3531 = vsub.f32 %v3526, %v3530
    %v3532 = vmul.f32 %v3531, 1.442695
    %v3533 = vpow.pop %v3532
    %v3534 = vsel %vm3527, %v3533, 0.0
    %3535 = vadd.xlane.f32.xlu0 %v3534
    %v3536 = vpop.xlane.xlu0 %3535
    %v3537 = vrcp.pop %v3536
    %v3538 = vmul.f32 %v3533, %v3537
    %v3539 = vlaneseq
    %v3540 = vshrl.u32 %v3539, 7
    %v3541 = vsub.s32 0, %v3540
    %v3542 = vrot.slane %v3538, %v3541
    %3544 = vbcast.lane.b32.xlu0 %v3542, 256
    %v3545 = vpop.permute.xlu0 %3544
    %v3546 = vlaneseq
    %v3547 = vshrl.u32 %v3546, 7
    %v3548 = vsub.s32 1, %v3547
    %v3549 = vrot.slane %v3538, %v3548
    %3551 = vbcast.lane.b32.xlu0 %v3549, 256
    %v3552 = vpop.permute.xlu0 %3551
    %v3553 = vmul.f32 %v3545, %v3009
    %v3554 = vmul.f32 %v3552, %v3010
    %v3555 = vsel %vm3019, %v3553, 0.0
    %v3556 = vrot.slane %v3555, 4
    %v3557 = vadd.f32 %v3555, %v3556
    %v3558 = vrot.slane %v3557, 2
    %v3559 = vadd.f32 %v3557, %v3558
    %v3560 = vrot.slane %v3559, 1
    %v3561 = vadd.f32 %v3559, %v3560
    %v3562 = vsel %vm3019, %v3554, 0.0
    %v3563 = vrot.slane %v3562, 4
    %v3564 = vadd.f32 %v3562, %v3563
    %v3565 = vrot.slane %v3564, 2
    %v3566 = vadd.f32 %v3564, %v3565
    %v3567 = vrot.slane %v3566, 1
    %v3568 = vadd.f32 %v3566, %v3567
    %v3570 = vrot.slane %v3268, 1
    %v3573 = vadd.f32 %v3184, %v3268
    %v3574 = vadd.f32 %v3189, %v3570
    %v3577 = vsel %vm816, %v3568, %v3561
    %v3578 = vsel %vm3019, %v3577, 0
    %3580 = vmatprep.subr.mxu0 0.0
    %3581 = vmatpush1.msra.mxu0 %v3271
    %3582 = vmatprep.subr.mxu0 0.0
    %3583 = vmatpush1.msra.mxu0 %v3272
    %3584 = vmatprep.subr.mxu0 0.0
    %3585 = vmatpush1.msra.mxu0 %v3273
    %3586 = vmatprep.subr.mxu0 0.0
    %3587 = vmatpush1.msra.mxu0 %v3274
    %3588 = vmatprep.subr.mxu0 0.0
    %3589 = vmatpush1.msra.mxu0 %v3275
    %3590 = vmatprep.subr.mxu0 0.0
    %3591 = vmatpush1.msra.mxu0 %v3276
    %3592 = vmatprep.subr.mxu0 0.0
    %3593 = vmatpush1.msra.mxu0 %v3277
    %3594 = vmatprep.subr.mxu0 0.0
    %3595 = vmatpush1.msra.mxu0 %v3278
    %3596 = vmatprep.subr.mxu0 0.0
    %3597 = vmatpush1.msra.mxu0 0.0
    %3598 = vmatprep.subr.mxu0 0.0
    %3599 = vmatpush1.msra.mxu0 0.0
    %3600 = vmatprep.subr.mxu0 0.0
    %3601 = vmatpush1.msra.mxu0 0.0
    %3602 = vmatprep.subr.mxu0 0.0
    %3603 = vmatpush1.msra.mxu0 0.0
    %3604 = vmatprep.subr.mxu0 0.0
    %3605 = vmatpush1.msra.mxu0 0.0
    %3606 = vmatprep.subr.mxu0 0.0
    %3607 = vmatpush1.msra.mxu0 0.0
    %3608 = vmatprep.subr.mxu0 0.0
    %3609 = vmatpush1.msra.mxu0 0.0
    %3610 = vmatprep.subr.mxu0 0.0
    %3611 = vmatpush1.msra.mxu0 0.0
    %3612 = vmatprep.subr.mxu0 0.0
    %3613 = vmatpush1.msra.mxu0 0.0
    %3614 = vmatprep.subr.mxu0 0.0
    %3615 = vmatpush1.msra.mxu0 0.0
    %3616 = vmatprep.subr.mxu0 0.0
    %3617 = vmatpush1.msra.mxu0 0.0
    %3618 = vmatprep.subr.mxu0 0.0
    %3619 = vmatpush1.msra.mxu0 0.0
    %3620 = vmatprep.subr.mxu0 0.0
    %3621 = vmatpush1.msra.mxu0 0.0
    %3622 = vmatprep.subr.mxu0 0.0
    %3623 = vmatpush1.msra.mxu0 0.0
    %3624 = vmatprep.subr.mxu0 0.0
    %3625 = vmatpush1.msra.mxu0 0.0
    %3626 = vmatprep.subr.mxu0 0.0
    %3627 = vmatpush1.msra.mxu0 0.0
    %3628 = vmatprep.subr.mxu0 0.0
    %3629 = vmatpush1.msra.mxu0 0.0
    %3630 = vmatprep.subr.mxu0 0.0
    %3631 = vmatpush1.msra.mxu0 0.0
    %3632 = vmatprep.subr.mxu0 0.0
    %3633 = vmatpush1.msra.mxu0 0.0
    %3634 = vmatprep.subr.mxu0 0.0
    %3635 = vmatpush1.msra.mxu0 0.0
    %3636 = vmatprep.subr.mxu0 0.0
    %3637 = vmatpush1.msra.mxu0 0.0
    %3638 = vmatprep.subr.mxu0 0.0
    %3639 = vmatpush1.msra.mxu0 0.0
    %3640 = vmatprep.subr.mxu0 0.0
    %3641 = vmatpush1.msra.mxu0 0.0
    %3642 = vmatprep.subr.mxu0 0.0
    %3643 = vmatpush1.msra.mxu0 0.0
    %3644 = vmatprep.mubr.f32.mxu0 0.0
    %3645 = vmatmul.mubr.f32.gmra.mrb[0].mxu0 %v3578
    %v3646 = vpop.f32.mrb[0].mxu0
    %v3647 = vadd.f32 0.0, %v3646
    %v3648 = vpop.f32.mrb[0].mxu0
    %3649 = vdwg.mxu0
    %v3651 = vrot.slane %v3647, 1
    %v3654 = vadd.f32 %v3573, %v3647
    %v3655 = vadd.f32 %v3574, %v3651
    %3656 = vmatprep.subr.mxu0 0.0
    %3657 = vmatpush1.msra.mxu0 %v3279
    %3658 = vmatprep.subr.mxu0 0.0
    %3659 = vmatpush1.msra.mxu0 %v3280
    %3660 = vmatprep.subr.mxu0 0.0
    %3661 = vmatpush1.msra.mxu0 %v3281
    %3662 = vmatprep.subr.mxu0 0.0
    %3663 = vmatpush1.msra.mxu0 %v3282
    %3664 = vmatprep.subr.mxu0 0.0
    %3665 = vmatpush1.msra.mxu0 0.0
    %3666 = vmatprep.subr.mxu0 0.0
    %3667 = vmatpush1.msra.mxu0 0.0
    %3668 = vmatprep.subr.mxu0 0.0
    %3669 = vmatpush1.msra.mxu0 0.0
    %3670 = vmatprep.subr.mxu0 0.0
    %3671 = vmatpush1.msra.mxu0 0.0
    %3672 = vmatprep.subr.mxu0 0.0
    %3673 = vmatpush1.msra.mxu0 0.0
    %3674 = vmatprep.subr.mxu0 0.0
    %3675 = vmatpush1.msra.mxu0 0.0
    %3676 = vmatprep.subr.mxu0 0.0
    %3677 = vmatpush1.msra.mxu0 0.0
    %3678 = vmatprep.subr.mxu0 0.0
    %3679 = vmatpush1.msra.mxu0 0.0
    %3680 = vmatprep.subr.mxu0 0.0
    %3681 = vmatpush1.msra.mxu0 0.0
    %3682 = vmatprep.subr.mxu0 0.0
    %3683 = vmatpush1.msra.mxu0 0.0
    %3684 = vmatprep.subr.mxu0 0.0
    %3685 = vmatpush1.msra.mxu0 0.0
    %3686 = vmatprep.subr.mxu0 0.0
    %3687 = vmatpush1.msra.mxu0 0.0
    %3688 = vmatprep.subr.mxu0 0.0
    %3689 = vmatpush1.msra.mxu0 0.0
    %3690 = vmatprep.subr.mxu0 0.0
    %3691 = vmatpush1.msra.mxu0 0.0
    %3692 = vmatprep.subr.mxu0 0.0
    %3693 = vmatpush1.msra.mxu0 0.0
    %3694 = vmatprep.subr.mxu0 0.0
    %3695 = vmatpush1.msra.mxu0 0.0
    %3696 = vmatprep.subr.mxu0 0.0
    %3697 = vmatpush1.msra.mxu0 0.0
    %3698 = vmatprep.subr.mxu0 0.0
    %3699 = vmatpush1.msra.mxu0 0.0
    %3700 = vmatprep.subr.mxu0 0.0
    %3701 = vmatpush1.msra.mxu0 0.0
    %3702 = vmatprep.subr.mxu0 0.0
    %3703 = vmatpush1.msra.mxu0 0.0
    %3704 = vmatprep.subr.mxu0 0.0
    %3705 = vmatpush1.msra.mxu0 0.0
    %3706 = vmatprep.subr.mxu0 0.0
    %3707 = vmatpush1.msra.mxu0 0.0
    %3708 = vmatprep.subr.mxu0 0.0
    %3709 = vmatpush1.msra.mxu0 0.0
    %3710 = vmatprep.subr.mxu0 0.0
    %3711 = vmatpush1.msra.mxu0 0.0
    %3712 = vmatprep.subr.mxu0 0.0
    %3713 = vmatpush1.msra.mxu0 0.0
    %3714 = vmatprep.subr.mxu0 0.0
    %3715 = vmatpush1.msra.mxu0 0.0
    %3716 = vmatprep.subr.mxu0 0.0
    %3717 = vmatpush1.msra.mxu0 0.0
    %3718 = vmatprep.subr.mxu0 0.0
    %3719 = vmatpush1.msra.mxu0 0.0
    %3720 = vmatprep.mubr.f32.mxu0 0.0
    %3721 = vmatmul.mubr.f32.gmra.mrb[0].mxu0 %v3389
    %v3722 = vpop.f32.mrb[0].mxu0
    %v3723 = vadd.f32 %v3288, %v3722
    %v3724 = vpop.f32.mrb[0].mxu0
    %3725 = vdwg.mxu0
    %v3727 = vrot.slane %v3723, 1
    %v3730 = vadd.f32 %v3654, %v3723
    %v3731 = vadd.f32 %v3655, %v3727
    %v3732 = vxor.u32 %v3730, 2147483648
    %v3733 = vxor.u32 %v3731, 2147483648
    %v3734 = vmul.f32 %v3732, 1.442695
    %v3735 = vpow.pop %v3734
    %v3736 = vmul.f32 %v3733, 1.442695
    %v3737 = vpow.pop %v3736
    %v3738 = vadd.f32 %v3735, 1.0
    %v3739 = vadd.f32 %v3737, 1.0
    %v3740 = vrcp.pop %v3738
    %v3741 = vmul.f32 1.0, %v3740
    %v3742 = vrcp.pop %v3739
    %v3743 = vmul.f32 1.0, %v3742
    %3744 = vrot.lane.b32.xlu0 %v3723, 64
    %v3745 = vpop.permute.xlu0 %3744
    %3746 = vrot.lane.b32.xlu0 %v3727, 64
    %v3747 = vpop.permute.xlu0 %3746
    %v3750 = vmul.f32 %v3741, %v3745
    %v3751 = vmul.f32 %v3743, %v3747
    %3754 = vrot.lane.b32.xlu0 %v3750, 64
    %v3755 = vpop.permute.xlu0 %3754
    %3756 = vrot.lane.b32.xlu0 %v3751, 64
    %v3757 = vpop.permute.xlu0 %3756
    %v3760 = vadd.f32 %v3654, %v3755
    %v3761 = vadd.f32 %v3655, %v3757
    %v3762 = vtanh.pop %v3760
    %v3763 = vtanh.pop %v3761
    %v3764 = vsub.f32 1.0, %v3741
    %v3765 = vsub.f32 1.0, %v3743
    %3768 = vrot.lane.b32.xlu0 %v3762, 96
    %v3769 = vpop.permute.xlu0 %3768
    %3770 = vrot.lane.b32.xlu0 %v3763, 96
    %v3771 = vpop.permute.xlu0 %3770
    %v3774 = vmul.f32 %v3764, %v3769
    %v3775 = vmul.f32 %v3765, %v3771
    %v3776 = vrot.slane %v388, 1
    %3777 = vrot.lane.b32.xlu0 %v388, 32
    %v3778 = vpop.permute.xlu0 %3777
    %3779 = vrot.lane.b32.xlu0 %v3776, 32
    %v3780 = vpop.permute.xlu0 %3779
    %v3783 = vmul.f32 %v3741, %v3778
    %v3784 = vmul.f32 %v3743, %v3780
    %v3785 = vadd.f32 %v3774, %v3783
    %v3786 = vadd.f32 %v3775, %v3784
    %v3789 = vrot.slane %v3786, 7
    %v3790 = vsel %vm816, %v3789, %v3785
    %3791 = vrot.lane.b32.xlu0 %v3790, 96
    %v3792 = vpop.permute.xlu0 %3791
    %v3793 = vsel %vm480, %v3792, 0
    %3795 = vmatprep.subr.mxu0 0.0
    %3796 = vmatpush1.msra.mxu0 %v3376
    %3797 = vmatprep.subr.mxu0 0.0
    %3798 = vmatpush1.msra.mxu0 %v3377
    %3799 = vmatprep.subr.mxu0 0.0
    %3800 = vmatpush1.msra.mxu0 %v3378
    %3801 = vmatprep.subr.mxu0 0.0
    %3802 = vmatpush1.msra.mxu0 %v3379
    %3803 = vmatprep.subr.mxu0 0.0
    %3804 = vmatpush1.msra.mxu0 0.0
    %3805 = vmatprep.subr.mxu0 0.0
    %3806 = vmatpush1.msra.mxu0 0.0
    %3807 = vmatprep.subr.mxu0 0.0
    %3808 = vmatpush1.msra.mxu0 0.0
    %3809 = vmatprep.subr.mxu0 0.0
    %3810 = vmatpush1.msra.mxu0 0.0
    %3811 = vmatprep.subr.mxu0 0.0
    %3812 = vmatpush1.msra.mxu0 0.0
    %3813 = vmatprep.subr.mxu0 0.0
    %3814 = vmatpush1.msra.mxu0 0.0
    %3815 = vmatprep.subr.mxu0 0.0
    %3816 = vmatpush1.msra.mxu0 0.0
    %3817 = vmatprep.subr.mxu0 0.0
    %3818 = vmatpush1.msra.mxu0 0.0
    %3819 = vmatprep.subr.mxu0 0.0
    %3820 = vmatpush1.msra.mxu0 0.0
    %3821 = vmatprep.subr.mxu0 0.0
    %3822 = vmatpush1.msra.mxu0 0.0
    %3823 = vmatprep.subr.mxu0 0.0
    %3824 = vmatpush1.msra.mxu0 0.0
    %3825 = vmatprep.subr.mxu0 0.0
    %3826 = vmatpush1.msra.mxu0 0.0
    %3827 = vmatprep.subr.mxu0 0.0
    %3828 = vmatpush1.msra.mxu0 0.0
    %3829 = vmatprep.subr.mxu0 0.0
    %3830 = vmatpush1.msra.mxu0 0.0
    %3831 = vmatprep.subr.mxu0 0.0
    %3832 = vmatpush1.msra.mxu0 0.0
    %3833 = vmatprep.subr.mxu0 0.0
    %3834 = vmatpush1.msra.mxu0 0.0
    %3835 = vmatprep.subr.mxu0 0.0
    %3836 = vmatpush1.msra.mxu0 0.0
    %3837 = vmatprep.subr.mxu0 0.0
    %3838 = vmatpush1.msra.mxu0 0.0
    %3839 = vmatprep.subr.mxu0 0.0
    %3840 = vmatpush1.msra.mxu0 0.0
    %3841 = vmatprep.subr.mxu0 0.0
    %3842 = vmatpush1.msra.mxu0 0.0
    %3843 = vmatprep.subr.mxu0 0.0
    %3844 = vmatpush1.msra.mxu0 0.0
    %3845 = vmatprep.subr.mxu0 0.0
    %3846 = vmatpush1.msra.mxu0 0.0
    %3847 = vmatprep.subr.mxu0 0.0
    %3848 = vmatpush1.msra.mxu0 0.0
    %3849 = vmatprep.subr.mxu0 0.0
    %3850 = vmatpush1.msra.mxu0 0.0
    %3851 = vmatprep.subr.mxu0 0.0
    %3852 = vmatpush1.msra.mxu0 0.0
    %3853 = vmatprep.subr.mxu0 0.0
    %3854 = vmatpush1.msra.mxu0 0.0
    %3855 = vmatprep.subr.mxu0 0.0
    %3856 = vmatpush1.msra.mxu0 0.0
    %3857 = vmatprep.subr.mxu0 0.0
    %3858 = vmatpush1.msra.mxu0 0.0
    %3859 = vmatprep.mubr.f32.mxu0 0.0
    %3860 = vmatmul.mubr.f32.gmra.mrb[0].mxu0 %v3793
    %v3861 = vpop.f32.mrb[0].mxu0
    %v3862 = vadd.f32 0.0, %v3861
    %v3863 = vpop.f32.mrb[0].mxu0
    %3864 = vdwg.mxu0
    %v3866 = vrot.slane %v3862, 1
    %v3869 = vadd.f32 %v3368, %v3862
    %v3870 = vadd.f32 %v3373, %v3866
    %3871 = vmatprep.subr.mxu0 0.0
    %3872 = vmatpush1.msra.mxu0 %v3380
    %3873 = vmatprep.subr.mxu0 0.0
    %3874 = vmatpush1.msra.mxu0 %v3381
    %3875 = vmatprep.subr.mxu0 0.0
    %3876 = vmatpush1.msra.mxu0 %v3382
    %3877 = vmatprep.subr.mxu0 0.0
    %3878 = vmatpush1.msra.mxu0 %v3383
    %3879 = vmatprep.subr.mxu0 0.0
    %3880 = vmatpush1.msra.mxu0 %v3384
    %3881 = vmatprep.subr.mxu0 0.0
    %3882 = vmatpush1.msra.mxu0 %v3385
    %3883 = vmatprep.subr.mxu0 0.0
    %3884 = vmatpush1.msra.mxu0 %v3386
    %3885 = vmatprep.subr.mxu0 0.0
    %3886 = vmatpush1.msra.mxu0 %v3387
    %3887 = vmatprep.subr.mxu0 0.0
    %3888 = vmatpush1.msra.mxu0 0.0
    %3889 = vmatprep.subr.mxu0 0.0
    %3890 = vmatpush1.msra.mxu0 0.0
    %3891 = vmatprep.subr.mxu0 0.0
    %3892 = vmatpush1.msra.mxu0 0.0
    %3893 = vmatprep.subr.mxu0 0.0
    %3894 = vmatpush1.msra.mxu0 0.0
    %3895 = vmatprep.subr.mxu0 0.0
    %3896 = vmatpush1.msra.mxu0 0.0
    %3897 = vmatprep.subr.mxu0 0.0
    %3898 = vmatpush1.msra.mxu0 0.0
    %3899 = vmatprep.subr.mxu0 0.0
    %3900 = vmatpush1.msra.mxu0 0.0
    %3901 = vmatprep.subr.mxu0 0.0
    %3902 = vmatpush1.msra.mxu0 0.0
    %3903 = vmatprep.subr.mxu0 0.0
    %3904 = vmatpush1.msra.mxu0 0.0
    %3905 = vmatprep.subr.mxu0 0.0
    %3906 = vmatpush1.msra.mxu0 0.0
    %3907 = vmatprep.subr.mxu0 0.0
    %3908 = vmatpush1.msra.mxu0 0.0
    %3909 = vmatprep.subr.mxu0 0.0
    %3910 = vmatpush1.msra.mxu0 0.0
    %3911 = vmatprep.subr.mxu0 0.0
    %3912 = vmatpush1.msra.mxu0 0.0
    %3913 = vmatprep.subr.mxu0 0.0
    %3914 = vmatpush1.msra.mxu0 0.0
    %3915 = vmatprep.subr.mxu0 0.0
    %3916 = vmatpush1.msra.mxu0 0.0
    %3917 = vmatprep.subr.mxu0 0.0
    %3918 = vmatpush1.msra.mxu0 0.0
    %3919 = vmatprep.subr.mxu0 0.0
    %3920 = vmatpush1.msra.mxu0 0.0
    %3921 = vmatprep.subr.mxu0 0.0
    %3922 = vmatpush1.msra.mxu0 0.0
    %3923 = vmatprep.subr.mxu0 0.0
    %3924 = vmatpush1.msra.mxu0 0.0
    %3925 = vmatprep.subr.mxu0 0.0
    %3926 = vmatpush1.msra.mxu0 0.0
    %3927 = vmatprep.subr.mxu0 0.0
    %3928 = vmatpush1.msra.mxu0 0.0
    %3929 = vmatprep.subr.mxu0 0.0
    %3930 = vmatpush1.msra.mxu0 0.0
    %3931 = vmatprep.subr.mxu0 0.0
    %3932 = vmatpush1.msra.mxu0 0.0
    %3933 = vmatprep.subr.mxu0 0.0
    %3934 = vmatpush1.msra.mxu0 0.0
    %3935 = vmatprep.mubr.f32.mxu0 0.0
    %3936 = vmatmul.mubr.f32.gmra.mrb[0].mxu0 %v3578
    %v3937 = vpop.f32.mrb[0].mxu0
    %v3938 = vadd.f32 0.0, %v3937
    %v3939 = vpop.f32.mrb[0].mxu0
    %3940 = vdwg.mxu0
    %v3942 = vrot.slane %v3938, 1
    %v3945 = vadd.f32 %v3869, %v3938
    %v3946 = vadd.f32 %v3870, %v3942
    %v3947 = vtanh.pop %v3945
    %v3948 = vtanh.pop %v3946
    %3949 = vst.msk [vmem:[#allocation4] sm:$0x1] %vm812, %v3947
    %3950 = vst.msk [vmem:[#allocation4 + $0x8] sm:$0x1] %vm812, %v3948
    %3951 = vmatprep.subr.mxu0 0.0
    %3952 = vmatpush1.msra.mxu0 %v3102
    %3953 = vmatprep.subr.mxu0 0.0
    %3954 = vmatpush1.msra.mxu0 %v3103
    %3955 = vmatprep.subr.mxu0 0.0
    %3956 = vmatpush1.msra.mxu0 %v3104
    %3957 = vmatprep.subr.mxu0 0.0
    %3958 = vmatpush1.msra.mxu0 %v3105
    %3959 = vmatprep.subr.mxu0 0.0
    %3960 = vmatpush1.msra.mxu0 0.0
    %3961 = vmatprep.subr.mxu0 0.0
    %3962 = vmatpush1.msra.mxu0 0.0
    %3963 = vmatprep.subr.mxu0 0.0
    %3964 = vmatpush1.msra.mxu0 0.0
    %3965 = vmatprep.subr.mxu0 0.0
    %3966 = vmatpush1.msra.mxu0 0.0
    %3967 = vmatprep.subr.mxu0 0.0
    %3968 = vmatpush1.msra.mxu0 0.0
    %3969 = vmatprep.subr.mxu0 0.0
    %3970 = vmatpush1.msra.mxu0 0.0
    %3971 = vmatprep.subr.mxu0 0.0
    %3972 = vmatpush1.msra.mxu0 0.0
    %3973 = vmatprep.subr.mxu0 0.0
    %3974 = vmatpush1.msra.mxu0 0.0
    %3975 = vmatprep.subr.mxu0 0.0
    %3976 = vmatpush1.msra.mxu0 0.0
    %3977 = vmatprep.subr.mxu0 0.0
    %3978 = vmatpush1.msra.mxu0 0.0
    %3979 = vmatprep.subr.mxu0 0.0
    %3980 = vmatpush1.msra.mxu0 0.0
    %3981 = vmatprep.subr.mxu0 0.0
    %3982 = vmatpush1.msra.mxu0 0.0
    %3983 = vmatprep.subr.mxu0 0.0
    %3984 = vmatpush1.msra.mxu0 0.0
    %3985 = vmatprep.subr.mxu0 0.0
    %3986 = vmatpush1.msra.mxu0 0.0
    %3987 = vmatprep.subr.mxu0 0.0
    %3988 = vmatpush1.msra.mxu0 0.0
    %3989 = vmatprep.subr.mxu0 0.0
    %3990 = vmatpush1.msra.mxu0 0.0
    %3991 = vmatprep.subr.mxu0 0.0
    %3992 = vmatpush1.msra.mxu0 0.0
    %3993 = vmatprep.subr.mxu0 0.0
    %3994 = vmatpush1.msra.mxu0 0.0
    %3995 = vmatprep.subr.mxu0 0.0
    %3996 = vmatpush1.msra.mxu0 0.0
    %3997 = vmatprep.subr.mxu0 0.0
    %3998 = vmatpush1.msra.mxu0 0.0
    %3999 = vmatprep.subr.mxu0 0.0
    %4000 = vmatpush1.msra.mxu0 0.0
    %4001 = vmatprep.subr.mxu0 0.0
    %4002 = vmatpush1.msra.mxu0 0.0
    %4003 = vmatprep.subr.mxu0 0.0
    %4004 = vmatpush1.msra.mxu0 0.0
    %4005 = vmatprep.subr.mxu0 0.0
    %4006 = vmatpush1.msra.mxu0 0.0
    %4007 = vmatprep.subr.mxu0 0.0
    %4008 = vmatpush1.msra.mxu0 0.0
    %4009 = vmatprep.subr.mxu0 0.0
    %4010 = vmatpush1.msra.mxu0 0.0
    %4011 = vmatprep.subr.mxu0 0.0
    %4012 = vmatpush1.msra.mxu0 0.0
    %4013 = vmatprep.subr.mxu0 0.0
    %4014 = vmatpush1.msra.mxu0 0.0
    %4015 = vmatprep.mubr.f32.mxu0 0.0
    %4016 = vmatmul.mubr.f32.gmra.mrb[0].mxu0 %v3793
    %v4017 = vpop.f32.mrb[0].mxu0
    %v4018 = vadd.f32 0.0, %v4017
    %v4019 = vpop.f32.mrb[0].mxu0
    %4020 = vdwg.mxu0
    %v4023 = vunpack.c.l.s4 1966171168
    %v4024 = vunpack.c.0.s8 %v4023
    %v4025 = vlaneseq
    %v4026 = vshrl.u32 %v4025, 7
    %v4027 = vsub.s32 %v4024, %v4026
    %v4028 = vrot.slane %v4018, %v4027
    %v4029 = vcombine.high %v4028, %v4028
    %v4031 = vunpack.c.l.s4 1966171168
    %v4032 = vunpack.c.0.s8 %v4031
    %v4033 = vlaneseq
    %v4034 = vshrl.u32 %v4033, 7
    %v4035 = vsub.s32 %v4032, %v4034
    %v4036 = vrot.slane %v4028, %v4035
    %v4038 = vunpack.c.l.s4 1966171168
    %v4039 = vunpack.c.0.s8 %v4038
    %v4040 = vlaneseq
    %v4041 = vshrl.u32 %v4040, 7
    %v4042 = vsub.s32 %v4039, %v4041
    %v4043 = vrot.slane %v4029, %v4042
    %v4044 = vlaneseq
    %v4045 = vshrl.u32 %v4044, 7
    %v4046 = vsub.s32 0, %v4045
    %v4047 = vrot.slane %v4036, %v4046
    %v4048 = vlaneseq
    %v4049 = vshrl.u32 %v4048, 7
    %v4050 = vsub.s32 0, %v4049
    %v4051 = vrot.slane %v4043, %v4050
    %v4054 = vadd.f32 %v3093, %v4047
    %v4055 = vadd.f32 %v3098, %v4051
    %v4056 = vtanh.pop %v4054
    %v4057 = vtanh.pop %v4055
    %v4058 = vmul.f32 %v4056, %v3502
    %v4059 = vmul.f32 %v4057, %v3502
    %v4060 = vsel %vm480, %v4058, 0.0
    %4061 = vadd.xlane.f32.xlu0 %v4060
    %v4062 = vpop.xlane.xlu0 %4061
    %v4063 = vsel %vm480, %v4059, 0.0
    %4064 = vadd.xlane.f32.xlu0 %v4063
    %v4065 = vpop.xlane.xlu0 %4064
    %v4068 = vlaneseq
    %v4069 = vshrl.u32 %v4068, 7
    %v4070 = vsub.s32 %v3515, %v4069
    %v4071 = vrot.slane %v4062, %v4070
    %v4072 = vlaneseq
    %v4073 = vshrl.u32 %v4072, 7
    %v4074 = vsub.s32 %v3515, %v4073
    %v4075 = vrot.slane %v4065, %v4074
    %v4076 = vsel %vm816, %v4075, %v4071
    %v4078 = vsel %vm3106, %v4076, -1e+09
    %v4079 = vsel %vm3527, %v4078, -inf
    %4080 = vmax.xlane.f32.xlu0 %v4079
    %v4081 = vpop.xlane.xlu0 %4080
    %v4082 = vsub.f32 %v4078, %v4081
    %v4083 = vmul.f32 %v4082, 1.442695
    %v4084 = vpow.pop %v4083
    %v4085 = vsel %vm3527, %v4084, 0.0
    %4086 = vadd.xlane.f32.xlu0 %v4085
    %v4087 = vpop.xlane.xlu0 %4086
    %v4088 = vrcp.pop %v4087
    %v4089 = vmul.f32 %v4084, %v4088
    %v4090 = vlaneseq
    %v4091 = vshrl.u32 %v4090, 7
    %v4092 = vsub.s32 0, %v4091
    %v4093 = vrot.slane %v4089, %v4092
    %4095 = vbcast.lane.b32.xlu0 %v4093, 256
    %v4096 = vpop.permute.xlu0 %4095
    %v4097 = vlaneseq
    %v4098 = vshrl.u32 %v4097, 7
    %v4099 = vsub.s32 1, %v4098
    %v4100 = vrot.slane %v4089, %v4099
    %4102 = vbcast.lane.b32.xlu0 %v4100, 256
    %v4103 = vpop.permute.xlu0 %4102
    %v4104 = vmul.f32 %v4096, %v3009
    %v4105 = vmul.f32 %v4103, %v3010
    %v4106 = vsel %vm3019, %v4104, 0.0
    %v4107 = vrot.slane %v4106, 4
    %v4108 = vadd.f32 %v4106, %v4107
    %v4109 = vrot.slane %v4108, 2
    %v4110 = vadd.f32 %v4108, %v4109
    %v4111 = vrot.slane %v4110, 1
    %v4112 = vadd.f32 %v4110, %v4111
    %v4113 = vsel %vm3019, %v4105, 0.0
    %v4114 = vrot.slane %v4113, 4
    %v4115 = vadd.f32 %v4113, %v4114
    %v4116 = vrot.slane %v4115, 2
    %v4117 = vadd.f32 %v4115, %v4116
    %v4118 = vrot.slane %v4117, 1
    %v4119 = vadd.f32 %v4117, %v4118
    %v4120 = vrot.slane %v3268, 7
    %v4122 = vadd.f32 %v3184, %v4120
    %v4123 = vadd.f32 %v3189, %v3268
    %v4126 = vsel %vm816, %v4119, %v4112
    %v4127 = vsel %vm3019, %v4126, 0
    %4129 = vmatprep.subr.mxu0 0.0
    %4130 = vmatpush1.msra.mxu0 %v3271
    %4131 = vmatprep.subr.mxu0 0.0
    %4132 = vmatpush1.msra.mxu0 %v3272
    %4133 = vmatprep.subr.mxu0 0.0
    %4134 = vmatpush1.msra.mxu0 %v3273
    %4135 = vmatprep.subr.mxu0 0.0
    %4136 = vmatpush1.msra.mxu0 %v3274
    %4137 = vmatprep.subr.mxu0 0.0
    %4138 = vmatpush1.msra.mxu0 %v3275
    %4139 = vmatprep.subr.mxu0 0.0
    %4140 = vmatpush1.msra.mxu0 %v3276
    %4141 = vmatprep.subr.mxu0 0.0
    %4142 = vmatpush1.msra.mxu0 %v3277
    %4143 = vmatprep.subr.mxu0 0.0
    %4144 = vmatpush1.msra.mxu0 %v3278
    %4145 = vmatprep.subr.mxu0 0.0
    %4146 = vmatpush1.msra.mxu0 0.0
    %4147 = vmatprep.subr.mxu0 0.0
    %4148 = vmatpush1.msra.mxu0 0.0
    %4149 = vmatprep.subr.mxu0 0.0
    %4150 = vmatpush1.msra.mxu0 0.0
    %4151 = vmatprep.subr.mxu0 0.0
    %4152 = vmatpush1.msra.mxu0 0.0
    %4153 = vmatprep.subr.mxu0 0.0
    %4154 = vmatpush1.msra.mxu0 0.0
    %4155 = vmatprep.subr.mxu0 0.0
    %4156 = vmatpush1.msra.mxu0 0.0
    %4157 = vmatprep.subr.mxu0 0.0
    %4158 = vmatpush1.msra.mxu0 0.0
    %4159 = vmatprep.subr.mxu0 0.0
    %4160 = vmatpush1.msra.mxu0 0.0
    %4161 = vmatprep.subr.mxu0 0.0
    %4162 = vmatpush1.msra.mxu0 0.0
    %4163 = vmatprep.subr.mxu0 0.0
    %4164 = vmatpush1.msra.mxu0 0.0
    %4165 = vmatprep.subr.mxu0 0.0
    %4166 = vmatpush1.msra.mxu0 0.0
    %4167 = vmatprep.subr.mxu0 0.0
    %4168 = vmatpush1.msra.mxu0 0.0
    %4169 = vmatprep.subr.mxu0 0.0
    %4170 = vmatpush1.msra.mxu0 0.0
    %4171 = vmatprep.subr.mxu0 0.0
    %4172 = vmatpush1.msra.mxu0 0.0
    %4173 = vmatprep.subr.mxu0 0.0
    %4174 = vmatpush1.msra.mxu0 0.0
    %4175 = vmatprep.subr.mxu0 0.0
    %4176 = vmatpush1.msra.mxu0 0.0
    %4177 = vmatprep.subr.mxu0 0.0
    %4178 = vmatpush1.msra.mxu0 0.0
    %4179 = vmatprep.subr.mxu0 0.0
    %4180 = vmatpush1.msra.mxu0 0.0
    %4181 = vmatprep.subr.mxu0 0.0
    %4182 = vmatpush1.msra.mxu0 0.0
    %4183 = vmatprep.subr.mxu0 0.0
    %4184 = vmatpush1.msra.mxu0 0.0
    %4185 = vmatprep.subr.mxu0 0.0
    %4186 = vmatpush1.msra.mxu0 0.0
    %4187 = vmatprep.subr.mxu0 0.0
    %4188 = vmatpush1.msra.mxu0 0.0
    %4189 = vmatprep.subr.mxu0 0.0
    %4190 = vmatpush1.msra.mxu0 0.0
    %4191 = vmatprep.subr.mxu0 0.0
    %4192 = vmatpush1.msra.mxu0 0.0
    %4193 = vmatprep.mubr.f32.mxu0 0.0
    %4194 = vmatmul.mubr.f32.gmra.mrb[0].mxu0 %v4127
    %v4195 = vpop.f32.mrb[0].mxu0
    %v4196 = vadd.f32 0.0, %v4195
    %v4197 = vpop.f32.mrb[0].mxu0
    %4198 = vdwg.mxu0
    %v4200 = vrot.slane %v4196, 7
    %v4203 = vadd.f32 %v4122, %v4200
    %v4204 = vadd.f32 %v4123, %v4196
    %4205 = vmatprep.subr.mxu0 0.0
    %4206 = vmatpush1.msra.mxu0 %v3279
    %4207 = vmatprep.subr.mxu0 0.0
    %4208 = vmatpush1.msra.mxu0 %v3280
    %4209 = vmatprep.subr.mxu0 0.0
    %4210 = vmatpush1.msra.mxu0 %v3281
    %4211 = vmatprep.subr.mxu0 0.0
    %4212 = vmatpush1.msra.mxu0 %v3282
    %4213 = vmatprep.subr.mxu0 0.0
    %4214 = vmatpush1.msra.mxu0 0.0
    %4215 = vmatprep.subr.mxu0 0.0
    %4216 = vmatpush1.msra.mxu0 0.0
    %4217 = vmatprep.subr.mxu0 0.0
    %4218 = vmatpush1.msra.mxu0 0.0
    %4219 = vmatprep.subr.mxu0 0.0
    %4220 = vmatpush1.msra.mxu0 0.0
    %4221 = vmatprep.subr.mxu0 0.0
    %4222 = vmatpush1.msra.mxu0 0.0
    %4223 = vmatprep.subr.mxu0 0.0
    %4224 = vmatpush1.msra.mxu0 0.0
    %4225 = vmatprep.subr.mxu0 0.0
    %4226 = vmatpush1.msra.mxu0 0.0
    %4227 = vmatprep.subr.mxu0 0.0
    %4228 = vmatpush1.msra.mxu0 0.0
    %4229 = vmatprep.subr.mxu0 0.0
    %4230 = vmatpush1.msra.mxu0 0.0
    %4231 = vmatprep.subr.mxu0 0.0
    %4232 = vmatpush1.msra.mxu0 0.0
    %4233 = vmatprep.subr.mxu0 0.0
    %4234 = vmatpush1.msra.mxu0 0.0
    %4235 = vmatprep.subr.mxu0 0.0
    %4236 = vmatpush1.msra.mxu0 0.0
    %4237 = vmatprep.subr.mxu0 0.0
    %4238 = vmatpush1.msra.mxu0 0.0
    %4239 = vmatprep.subr.mxu0 0.0
    %4240 = vmatpush1.msra.mxu0 0.0
    %4241 = vmatprep.subr.mxu0 0.0
    %4242 = vmatpush1.msra.mxu0 0.0
    %4243 = vmatprep.subr.mxu0 0.0
    %4244 = vmatpush1.msra.mxu0 0.0
    %4245 = vmatprep.subr.mxu0 0.0
    %4246 = vmatpush1.msra.mxu0 0.0
    %4247 = vmatprep.subr.mxu0 0.0
    %4248 = vmatpush1.msra.mxu0 0.0
    %4249 = vmatprep.subr.mxu0 0.0
    %4250 = vmatpush1.msra.mxu0 0.0
    %4251 = vmatprep.subr.mxu0 0.0
    %4252 = vmatpush1.msra.mxu0 0.0
    %4253 = vmatprep.subr.mxu0 0.0
    %4254 = vmatpush1.msra.mxu0 0.0
    %4255 = vmatprep.subr.mxu0 0.0
    %4256 = vmatpush1.msra.mxu0 0.0
    %4257 = vmatprep.subr.mxu0 0.0
    %4258 = vmatpush1.msra.mxu0 0.0
    %4259 = vmatprep.subr.mxu0 0.0
    %4260 = vmatpush1.msra.mxu0 0.0
    %4261 = vmatprep.subr.mxu0 0.0
    %4262 = vmatpush1.msra.mxu0 0.0
    %4263 = vmatprep.subr.mxu0 0.0
    %4264 = vmatpush1.msra.mxu0 0.0
    %4265 = vmatprep.subr.mxu0 0.0
    %4266 = vmatpush1.msra.mxu0 0.0
    %4267 = vmatprep.subr.mxu0 0.0
    %4268 = vmatpush1.msra.mxu0 0.0
    %4269 = vmatprep.mubr.f32.mxu0 0.0
    %4270 = vmatmul.mubr.f32.gmra.mrb[0].mxu0 %v3793
    %v4271 = vpop.f32.mrb[0].mxu0
    %v4272 = vadd.f32 %v3288, %v4271
    %v4273 = vpop.f32.mrb[0].mxu0
    %4274 = vdwg.mxu0
    %v4276 = vrot.slane %v4272, 7
    %v4279 = vadd.f32 %v4203, %v4276
    %v4280 = vadd.f32 %v4204, %v4272
    %v4281 = vxor.u32 %v4279, 2147483648
    %v4282 = vxor.u32 %v4280, 2147483648
    %v4283 = vmul.f32 %v4281, 1.442695
    %v4284 = vpow.pop %v4283
    %v4285 = vmul.f32 %v4282, 1.442695
    %v4286 = vpow.pop %v4285
    %v4287 = vadd.f32 %v4284, 1.0
    %v4288 = vadd.f32 %v4286, 1.0
    %v4289 = vrcp.pop %v4287
    %v4290 = vmul.f32 1.0, %v4289
    %v4291 = vrcp.pop %v4288
    %v4292 = vmul.f32 1.0, %v4291
    %4293 = vrot.lane.b32.xlu0 %v4276, 64
    %v4294 = vpop.permute.xlu0 %4293
    %4295 = vrot.lane.b32.xlu0 %v4272, 64
    %v4296 = vpop.permute.xlu0 %4295
    %v4299 = vmul.f32 %v4290, %v4294
    %v4300 = vmul.f32 %v4292, %v4296
    %4303 = vrot.lane.b32.xlu0 %v4299, 64
    %v4304 = vpop.permute.xlu0 %4303
    %4305 = vrot.lane.b32.xlu0 %v4300, 64
    %v4306 = vpop.permute.xlu0 %4305
    %v4309 = vadd.f32 %v4203, %v4304
    %v4310 = vadd.f32 %v4204, %v4306
    %v4311 = vtanh.pop %v4309
    %v4312 = vtanh.pop %v4310
    %v4313 = vsub.f32 1.0, %v4290
    %v4314 = vsub.f32 1.0, %v4292
    %4317 = vrot.lane.b32.xlu0 %v4311, 96
    %v4318 = vpop.permute.xlu0 %4317
    %4319 = vrot.lane.b32.xlu0 %v4312, 96
    %v4320 = vpop.permute.xlu0 %4319
    %v4323 = vmul.f32 %v4313, %v4318
    %v4324 = vmul.f32 %v4314, %v4320
    %v4325 = vrot.slane %v3785, 7
    %v4328 = vmul.f32 %v4290, %v4325
    %v4329 = vmul.f32 %v4292, %v3789
    %v4330 = vadd.f32 %v4323, %v4328
    %v4331 = vadd.f32 %v4324, %v4329
    %v4334 = vrot.slane %v4330, 1
    %v4335 = vsel %vm816, %v4331, %v4334
    %4336 = vrot.lane.b32.xlu0 %v4335, 96
    %v4337 = vpop.permute.xlu0 %4336
    %v4338 = vsel %vm480, %v4337, 0
    %4340 = vmatprep.subr.mxu0 0.0
    %4341 = vmatpush1.msra.mxu0 %v3376
    %4342 = vmatprep.subr.mxu0 0.0
    %4343 = vmatpush1.msra.mxu0 %v3377
    %4344 = vmatprep.subr.mxu0 0.0
    %4345 = vmatpush1.msra.mxu0 %v3378
    %4346 = vmatprep.subr.mxu0 0.0
    %4347 = vmatpush1.msra.mxu0 %v3379
    %4348 = vmatprep.subr.mxu0 0.0
    %4349 = vmatpush1.msra.mxu0 0.0
    %4350 = vmatprep.subr.mxu0 0.0
    %4351 = vmatpush1.msra.mxu0 0.0
    %4352 = vmatprep.subr.mxu0 0.0
    %4353 = vmatpush1.msra.mxu0 0.0
    %4354 = vmatprep.subr.mxu0 0.0
    %4355 = vmatpush1.msra.mxu0 0.0
    %4356 = vmatprep.subr.mxu0 0.0
    %4357 = vmatpush1.msra.mxu0 0.0
    %4358 = vmatprep.subr.mxu0 0.0
    %4359 = vmatpush1.msra.mxu0 0.0
    %4360 = vmatprep.subr.mxu0 0.0
    %4361 = vmatpush1.msra.mxu0 0.0
    %4362 = vmatprep.subr.mxu0 0.0
    %4363 = vmatpush1.msra.mxu0 0.0
    %4364 = vmatprep.subr.mxu0 0.0
    %4365 = vmatpush1.msra.mxu0 0.0
    %4366 = vmatprep.subr.mxu0 0.0
    %4367 = vmatpush1.msra.mxu0 0.0
    %4368 = vmatprep.subr.mxu0 0.0
    %4369 = vmatpush1.msra.mxu0 0.0
    %4370 = vmatprep.subr.mxu0 0.0
    %4371 = vmatpush1.msra.mxu0 0.0
    %4372 = vmatprep.subr.mxu0 0.0
    %4373 = vmatpush1.msra.mxu0 0.0
    %4374 = vmatprep.subr.mxu0 0.0
    %4375 = vmatpush1.msra.mxu0 0.0
    %4376 = vmatprep.subr.mxu0 0.0
    %4377 = vmatpush1.msra.mxu0 0.0
    %4378 = vmatprep.subr.mxu0 0.0
    %4379 = vmatpush1.msra.mxu0 0.0
    %4380 = vmatprep.subr.mxu0 0.0
    %4381 = vmatpush1.msra.mxu0 0.0
    %4382 = vmatprep.subr.mxu0 0.0
    %4383 = vmatpush1.msra.mxu0 0.0
    %4384 = vmatprep.subr.mxu0 0.0
    %4385 = vmatpush1.msra.mxu0 0.0
    %4386 = vmatprep.subr.mxu0 0.0
    %4387 = vmatpush1.msra.mxu0 0.0
    %4388 = vmatprep.subr.mxu0 0.0
    %4389 = vmatpush1.msra.mxu0 0.0
    %4390 = vmatprep.subr.mxu0 0.0
    %4391 = vmatpush1.msra.mxu0 0.0
    %4392 = vmatprep.subr.mxu0 0.0
    %4393 = vmatpush1.msra.mxu0 0.0
    %4394 = vmatprep.subr.mxu0 0.0
    %4395 = vmatpush1.msra.mxu0 0.0
    %4396 = vmatprep.subr.mxu0 0.0
    %4397 = vmatpush1.msra.mxu0 0.0
    %4398 = vmatprep.subr.mxu0 0.0
    %4399 = vmatpush1.msra.mxu0 0.0
    %4400 = vmatprep.subr.mxu0 0.0
    %4401 = vmatpush1.msra.mxu0 0.0
    %4402 = vmatprep.subr.mxu0 0.0
    %4403 = vmatpush1.msra.mxu0 0.0
    %4404 = vmatprep.mubr.f32.mxu0 0.0
    %4405 = vmatmul.mubr.f32.gmra.mrb[0].mxu0 %v4338
    %v4406 = vpop.f32.mrb[0].mxu0
    %v4407 = vadd.f32 0.0, %v4406
    %v4408 = vpop.f32.mrb[0].mxu0
    %4409 = vdwg.mxu0
    %v4411 = vrot.slane %v4407, 7
    %v4414 = vadd.f32 %v3368, %v4411
    %v4415 = vadd.f32 %v3373, %v4407
    %4416 = vmatprep.subr.mxu0 0.0
    %4417 = vmatpush1.msra.mxu0 %v3380
    %4418 = vmatprep.subr.mxu0 0.0
    %4419 = vmatpush1.msra.mxu0 %v3381
    %4420 = vmatprep.subr.mxu0 0.0
    %4421 = vmatpush1.msra.mxu0 %v3382
    %4422 = vmatprep.subr.mxu0 0.0
    %4423 = vmatpush1.msra.mxu0 %v3383
    %4424 = vmatprep.subr.mxu0 0.0
    %4425 = vmatpush1.msra.mxu0 %v3384
    %4426 = vmatprep.subr.mxu0 0.0
    %4427 = vmatpush1.msra.mxu0 %v3385
    %4428 = vmatprep.subr.mxu0 0.0
    %4429 = vmatpush1.msra.mxu0 %v3386
    %4430 = vmatprep.subr.mxu0 0.0
    %4431 = vmatpush1.msra.mxu0 %v3387
    %4432 = vmatprep.subr.mxu0 0.0
    %4433 = vmatpush1.msra.mxu0 0.0
    %4434 = vmatprep.subr.mxu0 0.0
    %4435 = vmatpush1.msra.mxu0 0.0
    %4436 = vmatprep.subr.mxu0 0.0
    %4437 = vmatpush1.msra.mxu0 0.0
    %4438 = vmatprep.subr.mxu0 0.0
    %4439 = vmatpush1.msra.mxu0 0.0
    %4440 = vmatprep.subr.mxu0 0.0
    %4441 = vmatpush1.msra.mxu0 0.0
    %4442 = vmatprep.subr.mxu0 0.0
    %4443 = vmatpush1.msra.mxu0 0.0
    %4444 = vmatprep.subr.mxu0 0.0
    %4445 = vmatpush1.msra.mxu0 0.0
    %4446 = vmatprep.subr.mxu0 0.0
    %4447 = vmatpush1.msra.mxu0 0.0
    %4448 = vmatprep.subr.mxu0 0.0
    %4449 = vmatpush1.msra.mxu0 0.0
    %4450 = vmatprep.subr.mxu0 0.0
    %4451 = vmatpush1.msra.mxu0 0.0
    %4452 = vmatprep.subr.mxu0 0.0
    %4453 = vmatpush1.msra.mxu0 0.0
    %4454 = vmatprep.subr.mxu0 0.0
    %4455 = vmatpush1.msra.mxu0 0.0
    %4456 = vmatprep.subr.mxu0 0.0
    %4457 = vmatpush1.msra.mxu0 0.0
    %4458 = vmatprep.subr.mxu0 0.0
    %4459 = vmatpush1.msra.mxu0 0.0
    %4460 = vmatprep.subr.mxu0 0.0
    %4461 = vmatpush1.msra.mxu0 0.0
    %4462 = vmatprep.subr.mxu0 0.0
    %4463 = vmatpush1.msra.mxu0 0.0
    %4464 = vmatprep.subr.mxu0 0.0
    %4465 = vmatpush1.msra.mxu0 0.0
    %4466 = vmatprep.subr.mxu0 0.0
    %4467 = vmatpush1.msra.mxu0 0.0
    %4468 = vmatprep.subr.mxu0 0.0
    %4469 = vmatpush1.msra.mxu0 0.0
    %4470 = vmatprep.subr.mxu0 0.0
    %4471 = vmatpush1.msra.mxu0 0.0
    %4472 = vmatprep.subr.mxu0 0.0
    %4473 = vmatpush1.msra.mxu0 0.0
    %4474 = vmatprep.subr.mxu0 0.0
    %4475 = vmatpush1.msra.mxu0 0.0
    %4476 = vmatprep.subr.mxu0 0.0
    %4477 = vmatpush1.msra.mxu0 0.0
    %4478 = vmatprep.subr.mxu0 0.0
    %4479 = vmatpush1.msra.mxu0 0.0
    %4480 = vmatprep.mubr.f32.mxu0 0.0
    %4481 = vmatmul.mubr.f32.gmra.mrb[0].mxu0 %v4127
    %v4482 = vpop.f32.mrb[0].mxu0
    %v4483 = vadd.f32 0.0, %v4482
    %v4484 = vpop.f32.mrb[0].mxu0
    %4485 = vdwg.mxu0
    %v4487 = vrot.slane %v4483, 7
    %v4490 = vadd.f32 %v4414, %v4487
    %v4491 = vadd.f32 %v4415, %v4483
    %v4492 = vtanh.pop %v4490
    %v4493 = vtanh.pop %v4491
    %4494 = vst.msk [vmem:[#allocation4] sm:$0x2] %vm957, %v4492
    %4495 = vst.msk [vmem:[#allocation4 + $0x8] sm:$0x2] %vm957, %v4493
    %4496 = vmatprep.subr.mxu0 0.0
    %4497 = vmatpush1.msra.mxu0 %v3102
    %4498 = vmatprep.subr.mxu0 0.0
    %4499 = vmatpush1.msra.mxu0 %v3103
    %4500 = vmatprep.subr.mxu0 0.0
    %4501 = vmatpush1.msra.mxu0 %v3104
    %4502 = vmatprep.subr.mxu0 0.0
    %4503 = vmatpush1.msra.mxu0 %v3105
    %4504 = vmatprep.subr.mxu0 0.0
    %4505 = vmatpush1.msra.mxu0 0.0
    %4506 = vmatprep.subr.mxu0 0.0
    %4507 = vmatpush1.msra.mxu0 0.0
    %4508 = vmatprep.subr.mxu0 0.0
    %4509 = vmatpush1.msra.mxu0 0.0
    %4510 = vmatprep.subr.mxu0 0.0
    %4511 = vmatpush1.msra.mxu0 0.0
    %4512 = vmatprep.subr.mxu0 0.0
    %4513 = vmatpush1.msra.mxu0 0.0
    %4514 = vmatprep.subr.mxu0 0.0
    %4515 = vmatpush1.msra.mxu0 0.0
    %4516 = vmatprep.subr.mxu0 0.0
    %4517 = vmatpush1.msra.mxu0 0.0
    %4518 = vmatprep.subr.mxu0 0.0
    %4519 = vmatpush1.msra.mxu0 0.0
    %4520 = vmatprep.subr.mxu0 0.0
    %4521 = vmatpush1.msra.mxu0 0.0
    %4522 = vmatprep.subr.mxu0 0.0
    %4523 = vmatpush1.msra.mxu0 0.0
    %4524 = vmatprep.subr.mxu0 0.0
    %4525 = vmatpush1.msra.mxu0 0.0
    %4526 = vmatprep.subr.mxu0 0.0
    %4527 = vmatpush1.msra.mxu0 0.0
    %4528 = vmatprep.subr.mxu0 0.0
    %4529 = vmatpush1.msra.mxu0 0.0
    %4530 = vmatprep.subr.mxu0 0.0
    %4531 = vmatpush1.msra.mxu0 0.0
    %4532 = vmatprep.subr.mxu0 0.0
    %4533 = vmatpush1.msra.mxu0 0.0
    %4534 = vmatprep.subr.mxu0 0.0
    %4535 = vmatpush1.msra.mxu0 0.0
    %4536 = vmatprep.subr.mxu0 0.0
    %4537 = vmatpush1.msra.mxu0 0.0
    %4538 = vmatprep.subr.mxu0 0.0
    %4539 = vmatpush1.msra.mxu0 0.0
    %4540 = vmatprep.subr.mxu0 0.0
    %4541 = vmatpush1.msra.mxu0 0.0
    %4542 = vmatprep.subr.mxu0 0.0
    %4543 = vmatpush1.msra.mxu0 0.0
    %4544 = vmatprep.subr.mxu0 0.0
    %4545 = vmatpush1.msra.mxu0 0.0
    %4546 = vmatprep.subr.mxu0 0.0
    %4547 = vmatpush1.msra.mxu0 0.0
    %4548 = vmatprep.subr.mxu0 0.0
    %4549 = vmatpush1.msra.mxu0 0.0
    %4550 = vmatprep.subr.mxu0 0.0
    %4551 = vmatpush1.msra.mxu0 0.0
    %4552 = vmatprep.subr.mxu0 0.0
    %4553 = vmatpush1.msra.mxu0 0.0
    %4554 = vmatprep.subr.mxu0 0.0
    %4555 = vmatpush1.msra.mxu0 0.0
    %4556 = vmatprep.subr.mxu0 0.0
    %4557 = vmatpush1.msra.mxu0 0.0
    %4558 = vmatprep.subr.mxu0 0.0
    %4559 = vmatpush1.msra.mxu0 0.0
    %4560 = vmatprep.mubr.f32.mxu0 0.0
    %4561 = vmatmul.mubr.f32.gmra.mrb[0].mxu0 %v4338
    %v4562 = vpop.f32.mrb[0].mxu0
    %v4563 = vadd.f32 0.0, %v4562
    %v4564 = vpop.f32.mrb[0].mxu0
    %4565 = vdwg.mxu0
    %v4568 = vunpack.c.l.s4 1966171168
    %v4569 = vunpack.c.0.s8 %v4568
    %v4570 = vlaneseq
    %v4571 = vshrl.u32 %v4570, 7
    %v4572 = vsub.s32 %v4569, %v4571
    %v4573 = vrot.slane %v4563, %v4572
    %v4574 = vcombine.high %v4573, %v4573
    %v4576 = vunpack.c.l.s4 1966171168
    %v4577 = vunpack.c.0.s8 %v4576
    %v4578 = vlaneseq
    %v4579 = vshrl.u32 %v4578, 7
    %v4580 = vsub.s32 %v4577, %v4579
    %v4581 = vrot.slane %v4573, %v4580
    %v4583 = vunpack.c.l.s4 1966171168
    %v4584 = vunpack.c.0.s8 %v4583
    %v4585 = vlaneseq
    %v4586 = vshrl.u32 %v4585, 7
    %v4587 = vsub.s32 %v4584, %v4586
    %v4588 = vrot.slane %v4574, %v4587
    %v4589 = vlaneseq
    %v4590 = vshrl.u32 %v4589, 7
    %v4591 = vsub.s32 0, %v4590
    %v4592 = vrot.slane %v4581, %v4591
    %v4593 = vlaneseq
    %v4594 = vshrl.u32 %v4593, 7
    %v4595 = vsub.s32 0, %v4594
    %v4596 = vrot.slane %v4588, %v4595
    %v4599 = vadd.f32 %v3093, %v4592
    %v4600 = vadd.f32 %v3098, %v4596
    %v4601 = vtanh.pop %v4599
    %v4602 = vtanh.pop %v4600
    %v4603 = vmul.f32 %v4601, %v3502
    %v4604 = vmul.f32 %v4602, %v3502
    %v4605 = vsel %vm480, %v4603, 0.0
    %4606 = vadd.xlane.f32.xlu0 %v4605
    %v4607 = vpop.xlane.xlu0 %4606
    %v4608 = vsel %vm480, %v4604, 0.0
    %4609 = vadd.xlane.f32.xlu0 %v4608
    %v4610 = vpop.xlane.xlu0 %4609
    %v4613 = vlaneseq
    %v4614 = vshrl.u32 %v4613, 7
    %v4615 = vsub.s32 %v3515, %v4614
    %v4616 = vrot.slane %v4607, %v4615
    %v4617 = vlaneseq
    %v4618 = vshrl.u32 %v4617, 7
    %v4619 = vsub.s32 %v3515, %v4618
    %v4620 = vrot.slane %v4610, %v4619
    %v4621 = vsel %vm816, %v4620, %v4616
    %v4623 = vsel %vm3106, %v4621, -1e+09
    %v4624 = vsel %vm3527, %v4623, -inf
    %4625 = vmax.xlane.f32.xlu0 %v4624
    %v4626 = vpop.xlane.xlu0 %4625
    %v4627 = vsub.f32 %v4623, %v4626
    %v4628 = vmul.f32 %v4627, 1.442695
    %v4629 = vpow.pop %v4628
    %v4630 = vsel %vm3527, %v4629, 0.0
    %4631 = vadd.xlane.f32.xlu0 %v4630
    %v4632 = vpop.xlane.xlu0 %4631
    %v4633 = vrcp.pop %v4632
    %v4634 = vmul.f32 %v4629, %v4633
    %v4635 = vlaneseq
    %v4636 = vshrl.u32 %v4635, 7
    %v4637 = vsub.s32 0, %v4636
    %v4638 = vrot.slane %v4634, %v4637
    %4640 = vbcast.lane.b32.xlu0 %v4638, 256
    %v4641 = vpop.permute.xlu0 %4640
    %v4642 = vlaneseq
    %v4643 = vshrl.u32 %v4642, 7
    %v4644 = vsub.s32 1, %v4643
    %v4645 = vrot.slane %v4634, %v4644
    %4647 = vbcast.lane.b32.xlu0 %v4645, 256
    %v4648 = vpop.permute.xlu0 %4647
    %v4649 = vmul.f32 %v4641, %v3009
    %v4650 = vmul.f32 %v4648, %v3010
    %v4651 = vsel %vm3019, %v4649, 0.0
    %v4652 = vrot.slane %v4651, 4
    %v4653 = vadd.f32 %v4651, %v4652
    %v4654 = vrot.slane %v4653, 2
    %v4655 = vadd.f32 %v4653, %v4654
    %v4656 = vrot.slane %v4655, 1
    %v4657 = vadd.f32 %v4655, %v4656
    %v4658 = vsel %vm3019, %v4650, 0.0
    %v4659 = vrot.slane %v4658, 4
    %v4660 = vadd.f32 %v4658, %v4659
    %v4661 = vrot.slane %v4660, 2
    %v4662 = vadd.f32 %v4660, %v4661
    %v4663 = vrot.slane %v4662, 1
    %v4664 = vadd.f32 %v4662, %v4663
    %v4665 = vrot.slane %v3268, 6
    %v4667 = vadd.f32 %v3184, %v4665
    %v4668 = vadd.f32 %v3189, %v4120
    %v4671 = vsel %vm816, %v4664, %v4657
    %v4672 = vsel %vm3019, %v4671, 0
    %4674 = vmatprep.subr.mxu0 0.0
    %4675 = vmatpush1.msra.mxu0 %v3271
    %4676 = vmatprep.subr.mxu0 0.0
    %4677 = vmatpush1.msra.mxu0 %v3272
    %4678 = vmatprep.subr.mxu0 0.0
    %4679 = vmatpush1.msra.mxu0 %v3273
    %4680 = vmatprep.subr.mxu0 0.0
    %4681 = vmatpush1.msra.mxu0 %v3274
    %4682 = vmatprep.subr.mxu0 0.0
    %4683 = vmatpush1.msra.mxu0 %v3275
    %4684 = vmatprep.subr.mxu0 0.0
    %4685 = vmatpush1.msra.mxu0 %v3276
    %4686 = vmatprep.subr.mxu0 0.0
    %4687 = vmatpush1.msra.mxu0 %v3277
    %4688 = vmatprep.subr.mxu0 0.0
    %4689 = vmatpush1.msra.mxu0 %v3278
    %4690 = vmatprep.subr.mxu0 0.0
    %4691 = vmatpush1.msra.mxu0 0.0
    %4692 = vmatprep.subr.mxu0 0.0
    %4693 = vmatpush1.msra.mxu0 0.0
    %4694 = vmatprep.subr.mxu0 0.0
    %4695 = vmatpush1.msra.mxu0 0.0
    %4696 = vmatprep.subr.mxu0 0.0
    %4697 = vmatpush1.msra.mxu0 0.0
    %4698 = vmatprep.subr.mxu0 0.0
    %4699 = vmatpush1.msra.mxu0 0.0
    %4700 = vmatprep.subr.mxu0 0.0
    %4701 = vmatpush1.msra.mxu0 0.0
    %4702 = vmatprep.subr.mxu0 0.0
    %4703 = vmatpush1.msra.mxu0 0.0
    %4704 = vmatprep.subr.mxu0 0.0
    %4705 = vmatpush1.msra.mxu0 0.0
    %4706 = vmatprep.subr.mxu0 0.0
    %4707 = vmatpush1.msra.mxu0 0.0
    %4708 = vmatprep.subr.mxu0 0.0
    %4709 = vmatpush1.msra.mxu0 0.0
    %4710 = vmatprep.subr.mxu0 0.0
    %4711 = vmatpush1.msra.mxu0 0.0
    %4712 = vmatprep.subr.mxu0 0.0
    %4713 = vmatpush1.msra.mxu0 0.0
    %4714 = vmatprep.subr.mxu0 0.0
    %4715 = vmatpush1.msra.mxu0 0.0
    %4716 = vmatprep.subr.mxu0 0.0
    %4717 = vmatpush1.msra.mxu0 0.0
    %4718 = vmatprep.subr.mxu0 0.0
    %4719 = vmatpush1.msra.mxu0 0.0
    %4720 = vmatprep.subr.mxu0 0.0
    %4721 = vmatpush1.msra.mxu0 0.0
    %4722 = vmatprep.subr.mxu0 0.0
    %4723 = vmatpush1.msra.mxu0 0.0
    %4724 = vmatprep.subr.mxu0 0.0
    %4725 = vmatpush1.msra.mxu0 0.0
    %4726 = vmatprep.subr.mxu0 0.0
    %4727 = vmatpush1.msra.mxu0 0.0
    %4728 = vmatprep.subr.mxu0 0.0
    %4729 = vmatpush1.msra.mxu0 0.0
    %4730 = vmatprep.subr.mxu0 0.0
    %4731 = vmatpush1.msra.mxu0 0.0
    %4732 = vmatprep.subr.mxu0 0.0
    %4733 = vmatpush1.msra.mxu0 0.0
    %4734 = vmatprep.subr.mxu0 0.0
    %4735 = vmatpush1.msra.mxu0 0.0
    %4736 = vmatprep.subr.mxu0 0.0
    %4737 = vmatpush1.msra.mxu0 0.0
    %4738 = vmatprep.mubr.f32.mxu0 0.0
    %4739 = vmatmul.mubr.f32.gmra.mrb[0].mxu0 %v4672
    %v4740 = vpop.f32.mrb[0].mxu0
    %v4741 = vadd.f32 0.0, %v4740
    %v4742 = vpop.f32.mrb[0].mxu0
    %4743 = vdwg.mxu0
    %v4745 = vrot.slane %v4741, 6
    %v4746 = vrot.slane %v4741, 7
    %v4749 = vadd.f32 %v4667, %v4745
    %v4750 = vadd.f32 %v4668, %v4746
    %4751 = vmatprep.subr.mxu0 0.0
    %4752 = vmatpush1.msra.mxu0 %v3279
    %4753 = vmatprep.subr.mxu0 0.0
    %4754 = vmatpush1.msra.mxu0 %v3280
    %4755 = vmatprep.subr.mxu0 0.0
    %4756 = vmatpush1.msra.mxu0 %v3281
    %4757 = vmatprep.subr.mxu0 0.0
    %4758 = vmatpush1.msra.mxu0 %v3282
    %4759 = vmatprep.subr.mxu0 0.0
    %4760 = vmatpush1.msra.mxu0 0.0
    %4761 = vmatprep.subr.mxu0 0.0
    %4762 = vmatpush1.msra.mxu0 0.0
    %4763 = vmatprep.subr.mxu0 0.0
    %4764 = vmatpush1.msra.mxu0 0.0
    %4765 = vmatprep.subr.mxu0 0.0
    %4766 = vmatpush1.msra.mxu0 0.0
    %4767 = vmatprep.subr.mxu0 0.0
    %4768 = vmatpush1.msra.mxu0 0.0
    %4769 = vmatprep.subr.mxu0 0.0
    %4770 = vmatpush1.msra.mxu0 0.0
    %4771 = vmatprep.subr.mxu0 0.0
    %4772 = vmatpush1.msra.mxu0 0.0
    %4773 = vmatprep.subr.mxu0 0.0
    %4774 = vmatpush1.msra.mxu0 0.0
    %4775 = vmatprep.subr.mxu0 0.0
    %4776 = vmatpush1.msra.mxu0 0.0
    %4777 = vmatprep.subr.mxu0 0.0
    %4778 = vmatpush1.msra.mxu0 0.0
    %4779 = vmatprep.subr.mxu0 0.0
    %4780 = vmatpush1.msra.mxu0 0.0
    %4781 = vmatprep.subr.mxu0 0.0
    %4782 = vmatpush1.msra.mxu0 0.0
    %4783 = vmatprep.subr.mxu0 0.0
    %4784 = vmatpush1.msra.mxu0 0.0
    %4785 = vmatprep.subr.mxu0 0.0
    %4786 = vmatpush1.msra.mxu0 0.0
    %4787 = vmatprep.subr.mxu0 0.0
    %4788 = vmatpush1.msra.mxu0 0.0
    %4789 = vmatprep.subr.mxu0 0.0
    %4790 = vmatpush1.msra.mxu0 0.0
    %4791 = vmatprep.subr.mxu0 0.0
    %4792 = vmatpush1.msra.mxu0 0.0
    %4793 = vmatprep.subr.mxu0 0.0
    %4794 = vmatpush1.msra.mxu0 0.0
    %4795 = vmatprep.subr.mxu0 0.0
    %4796 = vmatpush1.msra.mxu0 0.0
    %4797 = vmatprep.subr.mxu0 0.0
    %4798 = vmatpush1.msra.mxu0 0.0
    %4799 = vmatprep.subr.mxu0 0.0
    %4800 = vmatpush1.msra.mxu0 0.0
    %4801 = vmatprep.subr.mxu0 0.0
    %4802 = vmatpush1.msra.mxu0 0.0
    %4803 = vmatprep.subr.mxu0 0.0
    %4804 = vmatpush1.msra.mxu0 0.0
    %4805 = vmatprep.subr.mxu0 0.0
    %4806 = vmatpush1.msra.mxu0 0.0
    %4807 = vmatprep.subr.mxu0 0.0
    %4808 = vmatpush1.msra.mxu0 0.0
    %4809 = vmatprep.subr.mxu0 0.0
    %4810 = vmatpush1.msra.mxu0 0.0
    %4811 = vmatprep.subr.mxu0 0.0
    %4812 = vmatpush1.msra.mxu0 0.0
    %4813 = vmatprep.subr.mxu0 0.0
    %4814 = vmatpush1.msra.mxu0 0.0
    %4815 = vmatprep.mubr.f32.mxu0 0.0
    %4816 = vmatmul.mubr.f32.gmra.mrb[0].mxu0 %v4338
    %v4817 = vpop.f32.mrb[0].mxu0
    %v4818 = vadd.f32 %v3288, %v4817
    %v4819 = vpop.f32.mrb[0].mxu0
    %4820 = vdwg.mxu0
    %v4822 = vrot.slane %v4818, 6
    %v4823 = vrot.slane %v4818, 7
    %v4826 = vadd.f32 %v4749, %v4822
    %v4827 = vadd.f32 %v4750, %v4823
    %v4828 = vxor.u32 %v4826, 2147483648
    %v4829 = vxor.u32 %v4827, 2147483648
    %v4830 = vmul.f32 %v4828, 1.442695
    %v4831 = vpow.pop %v4830
    %v4832 = vmul.f32 %v4829, 1.442695
    %v4833 = vpow.pop %v4832
    %v4834 = vadd.f32 %v4831, 1.0
    %v4835 = vadd.f32 %v4833, 1.0
    %v4836 = vrcp.pop %v4834
    %v4837 = vmul.f32 1.0, %v4836
    %v4838 = vrcp.pop %v4835
    %v4839 = vmul.f32 1.0, %v4838
    %4840 = vrot.lane.b32.xlu0 %v4822, 64
    %v4841 = vpop.permute.xlu0 %4840
    %4842 = vrot.lane.b32.xlu0 %v4823, 64
    %v4843 = vpop.permute.xlu0 %4842
    %v4846 = vmul.f32 %v4837, %v4841
    %v4847 = vmul.f32 %v4839, %v4843
    %4850 = vrot.lane.b32.xlu0 %v4846, 64
    %v4851 = vpop.permute.xlu0 %4850
    %4852 = vrot.lane.b32.xlu0 %v4847, 64
    %v4853 = vpop.permute.xlu0 %4852
    %v4856 = vadd.f32 %v4749, %v4851
    %v4857 = vadd.f32 %v4750, %v4853
    %v4858 = vtanh.pop %v4856
    %v4859 = vtanh.pop %v4857
    %v4860 = vsub.f32 1.0, %v4837
    %v4861 = vsub.f32 1.0, %v4839
    %4864 = vrot.lane.b32.xlu0 %v4858, 96
    %v4865 = vpop.permute.xlu0 %4864
    %4866 = vrot.lane.b32.xlu0 %v4859, 96
    %v4867 = vpop.permute.xlu0 %4866
    %v4870 = vmul.f32 %v4860, %v4865
    %v4871 = vmul.f32 %v4861, %v4867
    %v4872 = vrot.slane %v4330, 7
    %v4873 = vrot.slane %v4331, 7
    %v4876 = vmul.f32 %v4837, %v4872
    %v4877 = vmul.f32 %v4839, %v4873
    %v4878 = vadd.f32 %v4870, %v4876
    %v4879 = vadd.f32 %v4871, %v4877
    %v4882 = vrot.slane %v4878, 2
    %v4883 = vrot.slane %v4879, 1
    %v4884 = vsel %vm816, %v4883, %v4882
    %4885 = vrot.lane.b32.xlu0 %v4884, 96
    %v4886 = vpop.permute.xlu0 %4885
    %v4887 = vsel %vm480, %v4886, 0
    %4889 = vmatprep.subr.mxu0 0.0
    %4890 = vmatpush1.msra.mxu0 %v3376
    %4891 = vmatprep.subr.mxu0 0.0
    %4892 = vmatpush1.msra.mxu0 %v3377
    %4893 = vmatprep.subr.mxu0 0.0
    %4894 = vmatpush1.msra.mxu0 %v3378
    %4895 = vmatprep.subr.mxu0 0.0
    %4896 = vmatpush1.msra.mxu0 %v3379
    %4897 = vmatprep.subr.mxu0 0.0
    %4898 = vmatpush1.msra.mxu0 0.0
    %4899 = vmatprep.subr.mxu0 0.0
    %4900 = vmatpush1.msra.mxu0 0.0
    %4901 = vmatprep.subr.mxu0 0.0
    %4902 = vmatpush1.msra.mxu0 0.0
    %4903 = vmatprep.subr.mxu0 0.0
    %4904 = vmatpush1.msra.mxu0 0.0
    %4905 = vmatprep.subr.mxu0 0.0
    %4906 = vmatpush1.msra.mxu0 0.0
    %4907 = vmatprep.subr.mxu0 0.0
    %4908 = vmatpush1.msra.mxu0 0.0
    %4909 = vmatprep.subr.mxu0 0.0
    %4910 = vmatpush1.msra.mxu0 0.0
    %4911 = vmatprep.subr.mxu0 0.0
    %4912 = vmatpush1.msra.mxu0 0.0
    %4913 = vmatprep.subr.mxu0 0.0
    %4914 = vmatpush1.msra.mxu0 0.0
    %4915 = vmatprep.subr.mxu0 0.0
    %4916 = vmatpush1.msra.mxu0 0.0
    %4917 = vmatprep.subr.mxu0 0.0
    %4918 = vmatpush1.msra.mxu0 0.0
    %4919 = vmatprep.subr.mxu0 0.0
    %4920 = vmatpush1.msra.mxu0 0.0
    %4921 = vmatprep.subr.mxu0 0.0
    %4922 = vmatpush1.msra.mxu0 0.0
    %4923 = vmatprep.subr.mxu0 0.0
    %4924 = vmatpush1.msra.mxu0 0.0
    %4925 = vmatprep.subr.mxu0 0.0
    %4926 = vmatpush1.msra.mxu0 0.0
    %4927 = vmatprep.subr.mxu0 0.0
    %4928 = vmatpush1.msra.mxu0 0.0
    %4929 = vmatprep.subr.mxu0 0.0
    %4930 = vmatpush1.msra.mxu0 0.0
    %4931 = vmatprep.subr.mxu0 0.0
    %4932 = vmatpush1.msra.mxu0 0.0
    %4933 = vmatprep.subr.mxu0 0.0
    %4934 = vmatpush1.msra.mxu0 0.0
    %4935 = vmatprep.subr.mxu0 0.0
    %4936 = vmatpush1.msra.mxu0 0.0
    %4937 = vmatprep.subr.mxu0 0.0
    %4938 = vmatpush1.msra.mxu0 0.0
    %4939 = vmatprep.subr.mxu0 0.0
    %4940 = vmatpush1.msra.mxu0 0.0
    %4941 = vmatprep.subr.mxu0 0.0
    %4942 = vmatpush1.msra.mxu0 0.0
    %4943 = vmatprep.subr.mxu0 0.0
    %4944 = vmatpush1.msra.mxu0 0.0
    %4945 = vmatprep.subr.mxu0 0.0
    %4946 = vmatpush1.msra.mxu0 0.0
    %4947 = vmatprep.subr.mxu0 0.0
    %4948 = vmatpush1.msra.mxu0 0.0
    %4949 = vmatprep.subr.mxu0 0.0
    %4950 = vmatpush1.msra.mxu0 0.0
    %4951 = vmatprep.subr.mxu0 0.0
    %4952 = vmatpush1.msra.mxu0 0.0
    %4953 = vmatprep.mubr.f32.mxu0 0.0
    %4954 = vmatmul.mubr.f32.gmra.mrb[0].mxu0 %v4887
    %v4955 = vpop.f32.mrb[0].mxu0
    %v4956 = vadd.f32 0.0, %v4955
    %v4957 = vpop.f32.mrb[0].mxu0
    %4958 = vdwg.mxu0
    %v4960 = vrot.slane %v4956, 6
    %v4961 = vrot.slane %v4956, 7
    %v4964 = vadd.f32 %v3368, %v4960
    %v4965 = vadd.f32 %v3373, %v4961
    %4966 = vmatprep.subr.mxu0 0.0
    %4967 = vmatpush1.msra.mxu0 %v3380
    %4968 = vmatprep.subr.mxu0 0.0
    %4969 = vmatpush1.msra.mxu0 %v3381
    %4970 = vmatprep.subr.mxu0 0.0
    %4971 = vmatpush1.msra.mxu0 %v3382
    %4972 = vmatprep.subr.mxu0 0.0
    %4973 = vmatpush1.msra.mxu0 %v3383
    %4974 = vmatprep.subr.mxu0 0.0
    %4975 = vmatpush1.msra.mxu0 %v3384
    %4976 = vmatprep.subr.mxu0 0.0
    %4977 = vmatpush1.msra.mxu0 %v3385
    %4978 = vmatprep.subr.mxu0 0.0
    %4979 = vmatpush1.msra.mxu0 %v3386
    %4980 = vmatprep.subr.mxu0 0.0
    %4981 = vmatpush1.msra.mxu0 %v3387
    %4982 = vmatprep.subr.mxu0 0.0
    %4983 = vmatpush1.msra.mxu0 0.0
    %4984 = vmatprep.subr.mxu0 0.0
    %4985 = vmatpush1.msra.mxu0 0.0
    %4986 = vmatprep.subr.mxu0 0.0
    %4987 = vmatpush1.msra.mxu0 0.0
    %4988 = vmatprep.subr.mxu0 0.0
    %4989 = vmatpush1.msra.mxu0 0.0
    %4990 = vmatprep.subr.mxu0 0.0
    %4991 = vmatpush1.msra.mxu0 0.0
    %4992 = vmatprep.subr.mxu0 0.0
    %4993 = vmatpush1.msra.mxu0 0.0
    %4994 = vmatprep.subr.mxu0 0.0
    %4995 = vmatpush1.msra.mxu0 0.0
    %4996 = vmatprep.subr.mxu0 0.0
    %4997 = vmatpush1.msra.mxu0 0.0
    %4998 = vmatprep.subr.mxu0 0.0
    %4999 = vmatpush1.msra.mxu0 0.0
    %5000 = vmatprep.subr.mxu0 0.0
    %5001 = vmatpush1.msra.mxu0 0.0
    %5002 = vmatprep.subr.mxu0 0.0
    %5003 = vmatpush1.msra.mxu0 0.0
    %5004 = vmatprep.subr.mxu0 0.0
    %5005 = vmatpush1.msra.mxu0 0.0
    %5006 = vmatprep.subr.mxu0 0.0
    %5007 = vmatpush1.msra.mxu0 0.0
    %5008 = vmatprep.subr.mxu0 0.0
    %5009 = vmatpush1.msra.mxu0 0.0
    %5010 = vmatprep.subr.mxu0 0.0
    %5011 = vmatpush1.msra.mxu0 0.0
    %5012 = vmatprep.subr.mxu0 0.0
    %5013 = vmatpush1.msra.mxu0 0.0
    %5014 = vmatprep.subr.mxu0 0.0
    %5015 = vmatpush1.msra.mxu0 0.0
    %5016 = vmatprep.subr.mxu0 0.0
    %5017 = vmatpush1.msra.mxu0 0.0
    %5018 = vmatprep.subr.mxu0 0.0
    %5019 = vmatpush1.msra.mxu0 0.0
    %5020 = vmatprep.subr.mxu0 0.0
    %5021 = vmatpush1.msra.mxu0 0.0
    %5022 = vmatprep.subr.mxu0 0.0
    %5023 = vmatpush1.msra.mxu0 0.0
    %5024 = vmatprep.subr.mxu0 0.0
    %5025 = vmatpush1.msra.mxu0 0.0
    %5026 = vmatprep.subr.mxu0 0.0
    %5027 = vmatpush1.msra.mxu0 0.0
    %5028 = vmatprep.subr.mxu0 0.0
    %5029 = vmatpush1.msra.mxu0 0.0
    %5030 = vmatprep.mubr.f32.mxu0 0.0
    %5031 = vmatmul.mubr.f32.gmra.mrb[0].mxu0 %v4672
    %v5032 = vpop.f32.mrb[0].mxu0
    %v5033 = vadd.f32 0.0, %v5032
    %v5034 = vpop.f32.mrb[0].mxu0
    %5035 = vdwg.mxu0
    %v5037 = vrot.slane %v5033, 6
    %v5038 = vrot.slane %v5033, 7
    %v5041 = vadd.f32 %v4964, %v5037
    %v5042 = vadd.f32 %v4965, %v5038
    %v5043 = vtanh.pop %v5041
    %v5044 = vtanh.pop %v5042
    %5045 = vst.msk [vmem:[#allocation4] sm:$0x4] %vm1103, %v5043
    %5046 = vst.msk [vmem:[#allocation4 + $0x8] sm:$0x4] %vm1103, %v5044
    %5047 = vmatprep.subr.mxu0 0.0
    %5048 = vmatpush1.msra.mxu0 %v3102
    %5049 = vmatprep.subr.mxu0 0.0
    %5050 = vmatpush1.msra.mxu0 %v3103
    %5051 = vmatprep.subr.mxu0 0.0
    %5052 = vmatpush1.msra.mxu0 %v3104
    %5053 = vmatprep.subr.mxu0 0.0
    %5054 = vmatpush1.msra.mxu0 %v3105
    %5055 = vmatprep.subr.mxu0 0.0
    %5056 = vmatpush1.msra.mxu0 0.0
    %5057 = vmatprep.subr.mxu0 0.0
    %5058 = vmatpush1.msra.mxu0 0.0
    %5059 = vmatprep.subr.mxu0 0.0
    %5060 = vmatpush1.msra.mxu0 0.0
    %5061 = vmatprep.subr.mxu0 0.0
    %5062 = vmatpush1.msra.mxu0 0.0
    %5063 = vmatprep.subr.mxu0 0.0
    %5064 = vmatpush1.msra.mxu0 0.0
    %5065 = vmatprep.subr.mxu0 0.0
    %5066 = vmatpush1.msra.mxu0 0.0
    %5067 = vmatprep.subr.mxu0 0.0
    %5068 = vmatpush1.msra.mxu0 0.0
    %5069 = vmatprep.subr.mxu0 0.0
    %5070 = vmatpush1.msra.mxu0 0.0
    %5071 = vmatprep.subr.mxu0 0.0
    %5072 = vmatpush1.msra.mxu0 0.0
    %5073 = vmatprep.subr.mxu0 0.0
    %5074 = vmatpush1.msra.mxu0 0.0
    %5075 = vmatprep.subr.mxu0 0.0
    %5076 = vmatpush1.msra.mxu0 0.0
    %5077 = vmatprep.subr.mxu0 0.0
    %5078 = vmatpush1.msra.mxu0 0.0
    %5079 = vmatprep.subr.mxu0 0.0
    %5080 = vmatpush1.msra.mxu0 0.0
    %5081 = vmatprep.subr.mxu0 0.0
    %5082 = vmatpush1.msra.mxu0 0.0
    %5083 = vmatprep.subr.mxu0 0.0
    %5084 = vmatpush1.msra.mxu0 0.0
    %5085 = vmatprep.subr.mxu0 0.0
    %5086 = vmatpush1.msra.mxu0 0.0
    %5087 = vmatprep.subr.mxu0 0.0
    %5088 = vmatpush1.msra.mxu0 0.0
    %5089 = vmatprep.subr.mxu0 0.0
    %5090 = vmatpush1.msra.mxu0 0.0
    %5091 = vmatprep.subr.mxu0 0.0
    %5092 = vmatpush1.msra.mxu0 0.0
    %5093 = vmatprep.subr.mxu0 0.0
    %5094 = vmatpush1.msra.mxu0 0.0
    %5095 = vmatprep.subr.mxu0 0.0
    %5096 = vmatpush1.msra.mxu0 0.0
    %5097 = vmatprep.subr.mxu0 0.0
    %5098 = vmatpush1.msra.mxu0 0.0
    %5099 = vmatprep.subr.mxu0 0.0
    %5100 = vmatpush1.msra.mxu0 0.0
    %5101 = vmatprep.subr.mxu0 0.0
    %5102 = vmatpush1.msra.mxu0 0.0
    %5103 = vmatprep.subr.mxu0 0.0
    %5104 = vmatpush1.msra.mxu0 0.0
    %5105 = vmatprep.subr.mxu0 0.0
    %5106 = vmatpush1.msra.mxu0 0.0
    %5107 = vmatprep.subr.mxu0 0.0
    %5108 = vmatpush1.msra.mxu0 0.0
    %5109 = vmatprep.subr.mxu0 0.0
    %5110 = vmatpush1.msra.mxu0 0.0
    %5111 = vmatprep.mubr.f32.mxu0 0.0
    %5112 = vmatmul.mubr.f32.gmra.mrb[0].mxu0 %v4887
    %v5113 = vpop.f32.mrb[0].mxu0
    %v5114 = vadd.f32 0.0, %v5113
    %v5115 = vpop.f32.mrb[0].mxu0
    %5116 = vdwg.mxu0
    %v5119 = vunpack.c.l.s4 1966171168
    %v5120 = vunpack.c.0.s8 %v5119
    %v5121 = vlaneseq
    %v5122 = vshrl.u32 %v5121, 7
    %v5123 = vsub.s32 %v5120, %v5122
    %v5124 = vrot.slane %v5114, %v5123
    %v5125 = vcombine.high %v5124, %v5124
    %v5127 = vunpack.c.l.s4 1966171168
    %v5128 = vunpack.c.0.s8 %v5127
    %v5129 = vlaneseq
    %v5130 = vshrl.u32 %v5129, 7
    %v5131 = vsub.s32 %v5128, %v5130
    %v5132 = vrot.slane %v5124, %v5131
    %v5134 = vunpack.c.l.s4 1966171168
    %v5135 = vunpack.c.0.s8 %v5134
    %v5136 = vlaneseq
    %v5137 = vshrl.u32 %v5136, 7
    %v5138 = vsub.s32 %v5135, %v5137
    %v5139 = vrot.slane %v5125, %v5138
    %v5140 = vlaneseq
    %v5141 = vshrl.u32 %v5140, 7
    %v5142 = vsub.s32 0, %v5141
    %v5143 = vrot.slane %v5132, %v5142
    %v5144 = vlaneseq
    %v5145 = vshrl.u32 %v5144, 7
    %v5146 = vsub.s32 0, %v5145
    %v5147 = vrot.slane %v5139, %v5146
    %v5150 = vadd.f32 %v3093, %v5143
    %v5151 = vadd.f32 %v3098, %v5147
    %v5152 = vtanh.pop %v5150
    %v5153 = vtanh.pop %v5151
    %v5154 = vmul.f32 %v5152, %v3502
    %v5155 = vmul.f32 %v5153, %v3502
    %v5156 = vsel %vm480, %v5154, 0.0
    %5157 = vadd.xlane.f32.xlu0 %v5156
    %v5158 = vpop.xlane.xlu0 %5157
    %v5159 = vsel %vm480, %v5155, 0.0
    %5160 = vadd.xlane.f32.xlu0 %v5159
    %v5161 = vpop.xlane.xlu0 %5160
    %v5164 = vlaneseq
    %v5165 = vshrl.u32 %v5164, 7
    %v5166 = vsub.s32 %v3515, %v5165
    %v5167 = vrot.slane %v5158, %v5166
    %v5168 = vlaneseq
    %v5169 = vshrl.u32 %v5168, 7
    %v5170 = vsub.s32 %v3515, %v5169
    %v5171 = vrot.slane %v5161, %v5170
    %v5172 = vsel %vm816, %v5171, %v5167
    %v5174 = vsel %vm3106, %v5172, -1e+09
    %v5175 = vsel %vm3527, %v5174, -inf
    %5176 = vmax.xlane.f32.xlu0 %v5175
    %v5177 = vpop.xlane.xlu0 %5176
    %v5178 = vsub.f32 %v5174, %v5177
    %v5179 = vmul.f32 %v5178, 1.442695
    %v5180 = vpow.pop %v5179
    %v5181 = vsel %vm3527, %v5180, 0.0
    %5182 = vadd.xlane.f32.xlu0 %v5181
    %v5183 = vpop.xlane.xlu0 %5182
    %v5184 = vrcp.pop %v5183
    %v5185 = vmul.f32 %v5180, %v5184
    %v5186 = vlaneseq
    %v5187 = vshrl.u32 %v5186, 7
    %v5188 = vsub.s32 0, %v5187
    %v5189 = vrot.slane %v5185, %v5188
    %5191 = vbcast.lane.b32.xlu0 %v5189, 256
    %v5192 = vpop.permute.xlu0 %5191
    %v5193 = vlaneseq
    %v5194 = vshrl.u32 %v5193, 7
    %v5195 = vsub.s32 1, %v5194
    %v5196 = vrot.slane %v5185, %v5195
    %5198 = vbcast.lane.b32.xlu0 %v5196, 256
    %v5199 = vpop.permute.xlu0 %5198
    %v5200 = vmul.f32 %v5192, %v3009
    %v5201 = vmul.f32 %v5199, %v3010
    %v5202 = vsel %vm3019, %v5200, 0.0
    %v5203 = vrot.slane %v5202, 4
    %v5204 = vadd.f32 %v5202, %v5203
    %v5205 = vrot.slane %v5204, 2
    %v5206 = vadd.f32 %v5204, %v5205
    %v5207 = vrot.slane %v5206, 1
    %v5208 = vadd.f32 %v5206, %v5207
    %v5209 = vsel %vm3019, %v5201, 0.0
    %v5210 = vrot.slane %v5209, 4
    %v5211 = vadd.f32 %v5209, %v5210
    %v5212 = vrot.slane %v5211, 2
    %v5213 = vadd.f32 %v5211, %v5212
    %v5214 = vrot.slane %v5213, 1
    %v5215 = vadd.f32 %v5213, %v5214
    %v5216 = vrot.slane %v3268, 5
    %v5218 = vadd.f32 %v3184, %v5216
    %v5219 = vadd.f32 %v3189, %v4665
    %v5222 = vsel %vm816, %v5215, %v5208
    %v5223 = vsel %vm3019, %v5222, 0
    %5225 = vmatprep.subr.mxu0 0.0
    %5226 = vmatpush1.msra.mxu0 %v3271
    %5227 = vmatprep.subr.mxu0 0.0
    %5228 = vmatpush1.msra.mxu0 %v3272
    %5229 = vmatprep.subr.mxu0 0.0
    %5230 = vmatpush1.msra.mxu0 %v3273
    %5231 = vmatprep.subr.mxu0 0.0
    %5232 = vmatpush1.msra.mxu0 %v3274
    %5233 = vmatprep.subr.mxu0 0.0
    %5234 = vmatpush1.msra.mxu0 %v3275
    %5235 = vmatprep.subr.mxu0 0.0
    %5236 = vmatpush1.msra.mxu0 %v3276
    %5237 = vmatprep.subr.mxu0 0.0
    %5238 = vmatpush1.msra.mxu0 %v3277
    %5239 = vmatprep.subr.mxu0 0.0
    %5240 = vmatpush1.msra.mxu0 %v3278
    %5241 = vmatprep.subr.mxu0 0.0
    %5242 = vmatpush1.msra.mxu0 0.0
    %5243 = vmatprep.subr.mxu0 0.0
    %5244 = vmatpush1.msra.mxu0 0.0
    %5245 = vmatprep.subr.mxu0 0.0
    %5246 = vmatpush1.msra.mxu0 0.0
    %5247 = vmatprep.subr.mxu0 0.0
    %5248 = vmatpush1.msra.mxu0 0.0
    %5249 = vmatprep.subr.mxu0 0.0
    %5250 = vmatpush1.msra.mxu0 0.0
    %5251 = vmatprep.subr.mxu0 0.0
    %5252 = vmatpush1.msra.mxu0 0.0
    %5253 = vmatprep.subr.mxu0 0.0
    %5254 = vmatpush1.msra.mxu0 0.0
    %5255 = vmatprep.subr.mxu0 0.0
    %5256 = vmatpush1.msra.mxu0 0.0
    %5257 = vmatprep.subr.mxu0 0.0
    %5258 = vmatpush1.msra.mxu0 0.0
    %5259 = vmatprep.subr.mxu0 0.0
    %5260 = vmatpush1.msra.mxu0 0.0
    %5261 = vmatprep.subr.mxu0 0.0
    %5262 = vmatpush1.msra.mxu0 0.0
    %5263 = vmatprep.subr.mxu0 0.0
    %5264 = vmatpush1.msra.mxu0 0.0
    %5265 = vmatprep.subr.mxu0 0.0
    %5266 = vmatpush1.msra.mxu0 0.0
    %5267 = vmatprep.subr.mxu0 0.0
    %5268 = vmatpush1.msra.mxu0 0.0
    %5269 = vmatprep.subr.mxu0 0.0
    %5270 = vmatpush1.msra.mxu0 0.0
    %5271 = vmatprep.subr.mxu0 0.0
    %5272 = vmatpush1.msra.mxu0 0.0
    %5273 = vmatprep.subr.mxu0 0.0
    %5274 = vmatpush1.msra.mxu0 0.0
    %5275 = vmatprep.subr.mxu0 0.0
    %5276 = vmatpush1.msra.mxu0 0.0
    %5277 = vmatprep.subr.mxu0 0.0
    %5278 = vmatpush1.msra.mxu0 0.0
    %5279 = vmatprep.subr.mxu0 0.0
    %5280 = vmatpush1.msra.mxu0 0.0
    %5281 = vmatprep.subr.mxu0 0.0
    %5282 = vmatpush1.msra.mxu0 0.0
    %5283 = vmatprep.subr.mxu0 0.0
    %5284 = vmatpush1.msra.mxu0 0.0
    %5285 = vmatprep.subr.mxu0 0.0
    %5286 = vmatpush1.msra.mxu0 0.0
    %5287 = vmatprep.subr.mxu0 0.0
    %5288 = vmatpush1.msra.mxu0 0.0
    %5289 = vmatprep.mubr.f32.mxu0 0.0
    %5290 = vmatmul.mubr.f32.gmra.mrb[0].mxu0 %v5223
    %v5291 = vpop.f32.mrb[0].mxu0
    %v5292 = vadd.f32 0.0, %v5291
    %v5293 = vpop.f32.mrb[0].mxu0
    %5294 = vdwg.mxu0
    %v5296 = vrot.slane %v5292, 5
    %v5297 = vrot.slane %v5292, 6
    %v5300 = vadd.f32 %v5218, %v5296
    %v5301 = vadd.f32 %v5219, %v5297
    %5302 = vmatprep.subr.mxu0 0.0
    %5303 = vmatpush1.msra.mxu0 %v3279
    %5304 = vmatprep.subr.mxu0 0.0
    %5305 = vmatpush1.msra.mxu0 %v3280
    %5306 = vmatprep.subr.mxu0 0.0
    %5307 = vmatpush1.msra.mxu0 %v3281
    %5308 = vmatprep.subr.mxu0 0.0
    %5309 = vmatpush1.msra.mxu0 %v3282
    %5310 = vmatprep.subr.mxu0 0.0
    %5311 = vmatpush1.msra.mxu0 0.0
    %5312 = vmatprep.subr.mxu0 0.0
    %5313 = vmatpush1.msra.mxu0 0.0
    %5314 = vmatprep.subr.mxu0 0.0
    %5315 = vmatpush1.msra.mxu0 0.0
    %5316 = vmatprep.subr.mxu0 0.0
    %5317 = vmatpush1.msra.mxu0 0.0
    %5318 = vmatprep.subr.mxu0 0.0
    %5319 = vmatpush1.msra.mxu0 0.0
    %5320 = vmatprep.subr.mxu0 0.0
    %5321 = vmatpush1.msra.mxu0 0.0
    %5322 = vmatprep.subr.mxu0 0.0
    %5323 = vmatpush1.msra.mxu0 0.0
    %5324 = vmatprep.subr.mxu0 0.0
    %5325 = vmatpush1.msra.mxu0 0.0
    %5326 = vmatprep.subr.mxu0 0.0
    %5327 = vmatpush1.msra.mxu0 0.0
    %5328 = vmatprep.subr.mxu0 0.0
    %5329 = vmatpush1.msra.mxu0 0.0
    %5330 = vmatprep.subr.mxu0 0.0
    %5331 = vmatpush1.msra.mxu0 0.0
    %5332 = vmatprep.subr.mxu0 0.0
    %5333 = vmatpush1.msra.mxu0 0.0
    %5334 = vmatprep.subr.mxu0 0.0
    %5335 = vmatpush1.msra.mxu0 0.0
    %5336 = vmatprep.subr.mxu0 0.0
    %5337 = vmatpush1.msra.mxu0 0.0
    %5338 = vmatprep.subr.mxu0 0.0
    %5339 = vmatpush1.msra.mxu0 0.0
    %5340 = vmatprep.subr.mxu0 0.0
    %5341 = vmatpush1.msra.mxu0 0.0
    %5342 = vmatprep.subr.mxu0 0.0
    %5343 = vmatpush1.msra.mxu0 0.0
    %5344 = vmatprep.subr.mxu0 0.0
    %5345 = vmatpush1.msra.mxu0 0.0
    %5346 = vmatprep.subr.mxu0 0.0
    %5347 = vmatpush1.msra.mxu0 0.0
    %5348 = vmatprep.subr.mxu0 0.0
    %5349 = vmatpush1.msra.mxu0 0.0
    %5350 = vmatprep.subr.mxu0 0.0
    %5351 = vmatpush1.msra.mxu0 0.0
    %5352 = vmatprep.subr.mxu0 0.0
    %5353 = vmatpush1.msra.mxu0 0.0
    %5354 = vmatprep.subr.mxu0 0.0
    %5355 = vmatpush1.msra.mxu0 0.0
    %5356 = vmatprep.subr.mxu0 0.0
    %5357 = vmatpush1.msra.mxu0 0.0
    %5358 = vmatprep.subr.mxu0 0.0
    %5359 = vmatpush1.msra.mxu0 0.0
    %5360 = vmatprep.subr.mxu0 0.0
    %5361 = vmatpush1.msra.mxu0 0.0
    %5362 = vmatprep.subr.mxu0 0.0
    %5363 = vmatpush1.msra.mxu0 0.0
    %5364 = vmatprep.subr.mxu0 0.0
    %5365 = vmatpush1.msra.mxu0 0.0
    %5366 = vmatprep.mubr.f32.mxu0 0.0
    %5367 = vmatmul.mubr.f32.gmra.mrb[0].mxu0 %v4887
    %v5368 = vpop.f32.mrb[0].mxu0
    %v5369 = vadd.f32 %v3288, %v5368
    %v5370 = vpop.f32.mrb[0].mxu0
    %5371 = vdwg.mxu0
    %v5373 = vrot.slane %v5369, 5
    %v5374 = vrot.slane %v5369, 6
    %v5377 = vadd.f32 %v5300, %v5373
    %v5378 = vadd.f32 %v5301, %v5374
    %v5379 = vxor.u32 %v5377, 2147483648
    %v5380 = vxor.u32 %v5378, 2147483648
    %v5381 = vmul.f32 %v5379, 1.442695
    %v5382 = vpow.pop %v5381
    %v5383 = vmul.f32 %v5380, 1.442695
    %v5384 = vpow.pop %v5383
    %v5385 = vadd.f32 %v5382, 1.0
    %v5386 = vadd.f32 %v5384, 1.0
    %v5387 = vrcp.pop %v5385
    %v5388 = vmul.f32 1.0, %v5387
    %v5389 = vrcp.pop %v5386
    %v5390 = vmul.f32 1.0, %v5389
    %5391 = vrot.lane.b32.xlu0 %v5373, 64
    %v5392 = vpop.permute.xlu0 %5391
    %5393 = vrot.lane.b32.xlu0 %v5374, 64
    %v5394 = vpop.permute.xlu0 %5393
    %v5397 = vmul.f32 %v5388, %v5392
    %v5398 = vmul.f32 %v5390, %v5394
    %5401 = vrot.lane.b32.xlu0 %v5397, 64
    %v5402 = vpop.permute.xlu0 %5401
    %5403 = vrot.lane.b32.xlu0 %v5398, 64
    %v5404 = vpop.permute.xlu0 %5403
    %v5407 = vadd.f32 %v5300, %v5402
    %v5408 = vadd.f32 %v5301, %v5404
    %v5409 = vtanh.pop %v5407
    %v5410 = vtanh.pop %v5408
    %v5411 = vsub.f32 1.0, %v5388
    %v5412 = vsub.f32 1.0, %v5390
    %5415 = vrot.lane.b32.xlu0 %v5409, 96
    %v5416 = vpop.permute.xlu0 %5415
    %5417 = vrot.lane.b32.xlu0 %v5410, 96
    %v5418 = vpop.permute.xlu0 %5417
    %v5421 = vmul.f32 %v5411, %v5416
    %v5422 = vmul.f32 %v5412, %v5418
    %v5423 = vrot.slane %v4878, 7
    %v5424 = vrot.slane %v4879, 7
    %v5427 = vmul.f32 %v5388, %v5423
    %v5428 = vmul.f32 %v5390, %v5424
    %v5429 = vadd.f32 %v5421, %v5427
    %v5430 = vadd.f32 %v5422, %v5428
    %v5433 = vrot.slane %v5429, 3
    %v5434 = vrot.slane %v5430, 2
    %v5435 = vsel %vm816, %v5434, %v5433
    %5436 = vrot.lane.b32.xlu0 %v5435, 96
    %v5437 = vpop.permute.xlu0 %5436
    %v5438 = vsel %vm480, %v5437, 0
    %5440 = vmatprep.subr.mxu0 0.0
    %5441 = vmatpush1.msra.mxu0 %v3376
    %5442 = vmatprep.subr.mxu0 0.0
    %5443 = vmatpush1.msra.mxu0 %v3377
    %5444 = vmatprep.subr.mxu0 0.0
    %5445 = vmatpush1.msra.mxu0 %v3378
    %5446 = vmatprep.subr.mxu0 0.0
    %5447 = vmatpush1.msra.mxu0 %v3379
    %5448 = vmatprep.subr.mxu0 0.0
    %5449 = vmatpush1.msra.mxu0 0.0
    %5450 = vmatprep.subr.mxu0 0.0
    %5451 = vmatpush1.msra.mxu0 0.0
    %5452 = vmatprep.subr.mxu0 0.0
    %5453 = vmatpush1.msra.mxu0 0.0
    %5454 = vmatprep.subr.mxu0 0.0
    %5455 = vmatpush1.msra.mxu0 0.0
    %5456 = vmatprep.subr.mxu0 0.0
    %5457 = vmatpush1.msra.mxu0 0.0
    %5458 = vmatprep.subr.mxu0 0.0
    %5459 = vmatpush1.msra.mxu0 0.0
    %5460 = vmatprep.subr.mxu0 0.0
    %5461 = vmatpush1.msra.mxu0 0.0
    %5462 = vmatprep.subr.mxu0 0.0
    %5463 = vmatpush1.msra.mxu0 0.0
    %5464 = vmatprep.subr.mxu0 0.0
    %5465 = vmatpush1.msra.mxu0 0.0
    %5466 = vmatprep.subr.mxu0 0.0
    %5467 = vmatpush1.msra.mxu0 0.0
    %5468 = vmatprep.subr.mxu0 0.0
    %5469 = vmatpush1.msra.mxu0 0.0
    %5470 = vmatprep.subr.mxu0 0.0
    %5471 = vmatpush1.msra.mxu0 0.0
    %5472 = vmatprep.subr.mxu0 0.0
    %5473 = vmatpush1.msra.mxu0 0.0
    %5474 = vmatprep.subr.mxu0 0.0
    %5475 = vmatpush1.msra.mxu0 0.0
    %5476 = vmatprep.subr.mxu0 0.0
    %5477 = vmatpush1.msra.mxu0 0.0
    %5478 = vmatprep.subr.mxu0 0.0
    %5479 = vmatpush1.msra.mxu0 0.0
    %5480 = vmatprep.subr.mxu0 0.0
    %5481 = vmatpush1.msra.mxu0 0.0
    %5482 = vmatprep.subr.mxu0 0.0
    %5483 = vmatpush1.msra.mxu0 0.0
    %5484 = vmatprep.subr.mxu0 0.0
    %5485 = vmatpush1.msra.mxu0 0.0
    %5486 = vmatprep.subr.mxu0 0.0
    %5487 = vmatpush1.msra.mxu0 0.0
    %5488 = vmatprep.subr.mxu0 0.0
    %5489 = vmatpush1.msra.mxu0 0.0
    %5490 = vmatprep.subr.mxu0 0.0
    %5491 = vmatpush1.msra.mxu0 0.0
    %5492 = vmatprep.subr.mxu0 0.0
    %5493 = vmatpush1.msra.mxu0 0.0
    %5494 = vmatprep.subr.mxu0 0.0
    %5495 = vmatpush1.msra.mxu0 0.0
    %5496 = vmatprep.subr.mxu0 0.0
    %5497 = vmatpush1.msra.mxu0 0.0
    %5498 = vmatprep.subr.mxu0 0.0
    %5499 = vmatpush1.msra.mxu0 0.0
    %5500 = vmatprep.subr.mxu0 0.0
    %5501 = vmatpush1.msra.mxu0 0.0
    %5502 = vmatprep.subr.mxu0 0.0
    %5503 = vmatpush1.msra.mxu0 0.0
    %5504 = vmatprep.mubr.f32.mxu0 0.0
    %5505 = vmatmul.mubr.f32.gmra.mrb[0].mxu0 %v5438
    %v5506 = vpop.f32.mrb[0].mxu0
    %v5507 = vadd.f32 0.0, %v5506
    %v5508 = vpop.f32.mrb[0].mxu0
    %5509 = vdwg.mxu0
    %v5511 = vrot.slane %v5507, 5
    %v5512 = vrot.slane %v5507, 6
    %v5515 = vadd.f32 %v3368, %v5511
    %v5516 = vadd.f32 %v3373, %v5512
    %5517 = vmatprep.subr.mxu0 0.0
    %5518 = vmatpush1.msra.mxu0 %v3380
    %5519 = vmatprep.subr.mxu0 0.0
    %5520 = vmatpush1.msra.mxu0 %v3381
    %5521 = vmatprep.subr.mxu0 0.0
    %5522 = vmatpush1.msra.mxu0 %v3382
    %5523 = vmatprep.subr.mxu0 0.0
    %5524 = vmatpush1.msra.mxu0 %v3383
    %5525 = vmatprep.subr.mxu0 0.0
    %5526 = vmatpush1.msra.mxu0 %v3384
    %5527 = vmatprep.subr.mxu0 0.0
    %5528 = vmatpush1.msra.mxu0 %v3385
    %5529 = vmatprep.subr.mxu0 0.0
    %5530 = vmatpush1.msra.mxu0 %v3386
    %5531 = vmatprep.subr.mxu0 0.0
    %5532 = vmatpush1.msra.mxu0 %v3387
    %5533 = vmatprep.subr.mxu0 0.0
    %5534 = vmatpush1.msra.mxu0 0.0
    %5535 = vmatprep.subr.mxu0 0.0
    %5536 = vmatpush1.msra.mxu0 0.0
    %5537 = vmatprep.subr.mxu0 0.0
    %5538 = vmatpush1.msra.mxu0 0.0
    %5539 = vmatprep.subr.mxu0 0.0
    %5540 = vmatpush1.msra.mxu0 0.0
    %5541 = vmatprep.subr.mxu0 0.0
    %5542 = vmatpush1.msra.mxu0 0.0
    %5543 = vmatprep.subr.mxu0 0.0
    %5544 = vmatpush1.msra.mxu0 0.0
    %5545 = vmatprep.subr.mxu0 0.0
    %5546 = vmatpush1.msra.mxu0 0.0
    %5547 = vmatprep.subr.mxu0 0.0
    %5548 = vmatpush1.msra.mxu0 0.0
    %5549 = vmatprep.subr.mxu0 0.0
    %5550 = vmatpush1.msra.mxu0 0.0
    %5551 = vmatprep.subr.mxu0 0.0
    %5552 = vmatpush1.msra.mxu0 0.0
    %5553 = vmatprep.subr.mxu0 0.0
    %5554 = vmatpush1.msra.mxu0 0.0
    %5555 = vmatprep.subr.mxu0 0.0
    %5556 = vmatpush1.msra.mxu0 0.0
    %5557 = vmatprep.subr.mxu0 0.0
    %5558 = vmatpush1.msra.mxu0 0.0
    %5559 = vmatprep.subr.mxu0 0.0
    %5560 = vmatpush1.msra.mxu0 0.0
    %5561 = vmatprep.subr.mxu0 0.0
    %5562 = vmatpush1.msra.mxu0 0.0
    %5563 = vmatprep.subr.mxu0 0.0
    %5564 = vmatpush1.msra.mxu0 0.0
    %5565 = vmatprep.subr.mxu0 0.0
    %5566 = vmatpush1.msra.mxu0 0.0
    %5567 = vmatprep.subr.mxu0 0.0
    %5568 = vmatpush1.msra.mxu0 0.0
    %5569 = vmatprep.subr.mxu0 0.0
    %5570 = vmatpush1.msra.mxu0 0.0
    %5571 = vmatprep.subr.mxu0 0.0
    %5572 = vmatpush1.msra.mxu0 0.0
    %5573 = vmatprep.subr.mxu0 0.0
    %5574 = vmatpush1.msra.mxu0 0.0
    %5575 = vmatprep.subr.mxu0 0.0
    %5576 = vmatpush1.msra.mxu0 0.0
    %5577 = vmatprep.subr.mxu0 0.0
    %5578 = vmatpush1.msra.mxu0 0.0
    %5579 = vmatprep.subr.mxu0 0.0
    %5580 = vmatpush1.msra.mxu0 0.0
    %5581 = vmatprep.mubr.f32.mxu0 0.0
    %5582 = vmatmul.mubr.f32.gmra.mrb[0].mxu0 %v5223
    %v5583 = vpop.f32.mrb[0].mxu0
    %v5584 = vadd.f32 0.0, %v5583
    %v5585 = vpop.f32.mrb[0].mxu0
    %5586 = vdwg.mxu0
    %v5588 = vrot.slane %v5584, 5
    %v5589 = vrot.slane %v5584, 6
    %v5592 = vadd.f32 %v5515, %v5588
    %v5593 = vadd.f32 %v5516, %v5589
    %v5594 = vtanh.pop %v5592
    %v5595 = vtanh.pop %v5593
    %5596 = vst.msk [vmem:[#allocation4] sm:$0x8] %vm1250, %v5594
    %5597 = vst.msk [vmem:[#allocation4 + $0x8] sm:$0x8] %vm1250, %v5595
    %5598 = vmatprep.subr.mxu0 0.0
    %5599 = vmatpush1.msra.mxu0 %v3102
    %5600 = vmatprep.subr.mxu0 0.0
    %5601 = vmatpush1.msra.mxu0 %v3103
    %5602 = vmatprep.subr.mxu0 0.0
    %5603 = vmatpush1.msra.mxu0 %v3104
    %5604 = vmatprep.subr.mxu0 0.0
    %5605 = vmatpush1.msra.mxu0 %v3105
    %5606 = vmatprep.subr.mxu0 0.0
    %5607 = vmatpush1.msra.mxu0 0.0
    %5608 = vmatprep.subr.mxu0 0.0
    %5609 = vmatpush1.msra.mxu0 0.0
    %5610 = vmatprep.subr.mxu0 0.0
    %5611 = vmatpush1.msra.mxu0 0.0
    %5612 = vmatprep.subr.mxu0 0.0
    %5613 = vmatpush1.msra.mxu0 0.0
    %5614 = vmatprep.subr.mxu0 0.0
    %5615 = vmatpush1.msra.mxu0 0.0
    %5616 = vmatprep.subr.mxu0 0.0
    %5617 = vmatpush1.msra.mxu0 0.0
    %5618 = vmatprep.subr.mxu0 0.0
    %5619 = vmatpush1.msra.mxu0 0.0
    %5620 = vmatprep.subr.mxu0 0.0
    %5621 = vmatpush1.msra.mxu0 0.0
    %5622 = vmatprep.subr.mxu0 0.0
    %5623 = vmatpush1.msra.mxu0 0.0
    %5624 = vmatprep.subr.mxu0 0.0
    %5625 = vmatpush1.msra.mxu0 0.0
    %5626 = vmatprep.subr.mxu0 0.0
    %5627 = vmatpush1.msra.mxu0 0.0
    %5628 = vmatprep.subr.mxu0 0.0
    %5629 = vmatpush1.msra.mxu0 0.0
    %5630 = vmatprep.subr.mxu0 0.0
    %5631 = vmatpush1.msra.mxu0 0.0
    %5632 = vmatprep.subr.mxu0 0.0
    %5633 = vmatpush1.msra.mxu0 0.0
    %5634 = vmatprep.subr.mxu0 0.0
    %5635 = vmatpush1.msra.mxu0 0.0
    %5636 = vmatprep.subr.mxu0 0.0
    %5637 = vmatpush1.msra.mxu0 0.0
    %5638 = vmatprep.subr.mxu0 0.0
    %5639 = vmatpush1.msra.mxu0 0.0
    %5640 = vmatprep.subr.mxu0 0.0
    %5641 = vmatpush1.msra.mxu0 0.0
    %5642 = vmatprep.subr.mxu0 0.0
    %5643 = vmatpush1.msra.mxu0 0.0
    %5644 = vmatprep.subr.mxu0 0.0
    %5645 = vmatpush1.msra.mxu0 0.0
    %5646 = vmatprep.subr.mxu0 0.0
    %5647 = vmatpush1.msra.mxu0 0.0
    %5648 = vmatprep.subr.mxu0 0.0
    %5649 = vmatpush1.msra.mxu0 0.0
    %5650 = vmatprep.subr.mxu0 0.0
    %5651 = vmatpush1.msra.mxu0 0.0
    %5652 = vmatprep.subr.mxu0 0.0
    %5653 = vmatpush1.msra.mxu0 0.0
    %5654 = vmatprep.subr.mxu0 0.0
    %5655 = vmatpush1.msra.mxu0 0.0
    %5656 = vmatprep.subr.mxu0 0.0
    %5657 = vmatpush1.msra.mxu0 0.0
    %5658 = vmatprep.subr.mxu0 0.0
    %5659 = vmatpush1.msra.mxu0 0.0
    %5660 = vmatprep.subr.mxu0 0.0
    %5661 = vmatpush1.msra.mxu0 0.0
    %5662 = vmatprep.mubr.f32.mxu0 0.0
    %5663 = vmatmul.mubr.f32.gmra.mrb[0].mxu0 %v5438
    %v5664 = vpop.f32.mrb[0].mxu0
    %v5665 = vadd.f32 0.0, %v5664
    %v5666 = vpop.f32.mrb[0].mxu0
    %5667 = vdwg.mxu0
    %v5670 = vunpack.c.l.s4 1966171168
    %v5671 = vunpack.c.0.s8 %v5670
    %v5672 = vlaneseq
    %v5673 = vshrl.u32 %v5672, 7
    %v5674 = vsub.s32 %v5671, %v5673
    %v5675 = vrot.slane %v5665, %v5674
    %v5676 = vcombine.high %v5675, %v5675
    %v5678 = vunpack.c.l.s4 1966171168
    %v5679 = vunpack.c.0.s8 %v5678
    %v5680 = vlaneseq
    %v5681 = vshrl.u32 %v5680, 7
    %v5682 = vsub.s32 %v5679, %v5681
    %v5683 = vrot.slane %v5675, %v5682
    %v5685 = vunpack.c.l.s4 1966171168
    %v5686 = vunpack.c.0.s8 %v5685
    %v5687 = vlaneseq
    %v5688 = vshrl.u32 %v5687, 7
    %v5689 = vsub.s32 %v5686, %v5688
    %v5690 = vrot.slane %v5676, %v5689
    %v5691 = vlaneseq
    %v5692 = vshrl.u32 %v5691, 7
    %v5693 = vsub.s32 0, %v5692
    %v5694 = vrot.slane %v5683, %v5693
    %v5695 = vlaneseq
    %v5696 = vshrl.u32 %v5695, 7
    %v5697 = vsub.s32 0, %v5696
    %v5698 = vrot.slane %v5690, %v5697
    %v5701 = vadd.f32 %v3093, %v5694
    %v5702 = vadd.f32 %v3098, %v5698
    %v5703 = vtanh.pop %v5701
    %v5704 = vtanh.pop %v5702
    %v5705 = vmul.f32 %v5703, %v3502
    %v5706 = vmul.f32 %v5704, %v3502
    %v5707 = vsel %vm480, %v5705, 0.0
    %5708 = vadd.xlane.f32.xlu0 %v5707
    %v5709 = vpop.xlane.xlu0 %5708
    %v5710 = vsel %vm480, %v5706, 0.0
    %5711 = vadd.xlane.f32.xlu0 %v5710
    %v5712 = vpop.xlane.xlu0 %5711
    %v5715 = vlaneseq
    %v5716 = vshrl.u32 %v5715, 7
    %v5717 = vsub.s32 %v3515, %v5716
    %v5718 = vrot.slane %v5709, %v5717
    %v5719 = vlaneseq
    %v5720 = vshrl.u32 %v5719, 7
    %v5721 = vsub.s32 %v3515, %v5720
    %v5722 = vrot.slane %v5712, %v5721
    %v5723 = vsel %vm816, %v5722, %v5718
    %v5725 = vsel %vm3106, %v5723, -1e+09
    %v5726 = vsel %vm3527, %v5725, -inf
    %5727 = vmax.xlane.f32.xlu0 %v5726
    %v5728 = vpop.xlane.xlu0 %5727
    %v5729 = vsub.f32 %v5725, %v5728
    %v5730 = vmul.f32 %v5729, 1.442695
    %v5731 = vpow.pop %v5730
    %v5732 = vsel %vm3527, %v5731, 0.0
    %5733 = vadd.xlane.f32.xlu0 %v5732
    %v5734 = vpop.xlane.xlu0 %5733
    %v5735 = vrcp.pop %v5734
    %v5736 = vmul.f32 %v5731, %v5735
    %v5737 = vlaneseq
    %v5738 = vshrl.u32 %v5737, 7
    %v5739 = vsub.s32 0, %v5738
    %v5740 = vrot.slane %v5736, %v5739
    %5742 = vbcast.lane.b32.xlu0 %v5740, 256
    %v5743 = vpop.permute.xlu0 %5742
    %v5744 = vlaneseq
    %v5745 = vshrl.u32 %v5744, 7
    %v5746 = vsub.s32 1, %v5745
    %v5747 = vrot.slane %v5736, %v5746
    %5749 = vbcast.lane.b32.xlu0 %v5747, 256
    %v5750 = vpop.permute.xlu0 %5749
    %v5751 = vmul.f32 %v5743, %v3009
    %v5752 = vmul.f32 %v5750, %v3010
    %v5753 = vsel %vm3019, %v5751, 0.0
    %v5754 = vrot.slane %v5753, 4
    %v5755 = vadd.f32 %v5753, %v5754
    %v5756 = vrot.slane %v5755, 2
    %v5757 = vadd.f32 %v5755, %v5756
    %v5758 = vrot.slane %v5757, 1
    %v5759 = vadd.f32 %v5757, %v5758
    %v5760 = vsel %vm3019, %v5752, 0.0
    %v5761 = vrot.slane %v5760, 4
    %v5762 = vadd.f32 %v5760, %v5761
    %v5763 = vrot.slane %v5762, 2
    %v5764 = vadd.f32 %v5762, %v5763
    %v5765 = vrot.slane %v5764, 1
    %v5766 = vadd.f32 %v5764, %v5765
    %v5767 = vrot.slane %v3268, 4
    %v5769 = vadd.f32 %v3184, %v5767
    %v5770 = vadd.f32 %v3189, %v5216
    %v5773 = vsel %vm816, %v5766, %v5759
    %v5774 = vsel %vm3019, %v5773, 0
    %5776 = vmatprep.subr.mxu0 0.0
    %5777 = vmatpush1.msra.mxu0 %v3271
    %5778 = vmatprep.subr.mxu0 0.0
    %5779 = vmatpush1.msra.mxu0 %v3272
    %5780 = vmatprep.subr.mxu0 0.0
    %5781 = vmatpush1.msra.mxu0 %v3273
    %5782 = vmatprep.subr.mxu0 0.0
    %5783 = vmatpush1.msra.mxu0 %v3274
    %5784 = vmatprep.subr.mxu0 0.0
    %5785 = vmatpush1.msra.mxu0 %v3275
    %5786 = vmatprep.subr.mxu0 0.0
    %5787 = vmatpush1.msra.mxu0 %v3276
    %5788 = vmatprep.subr.mxu0 0.0
    %5789 = vmatpush1.msra.mxu0 %v3277
    %5790 = vmatprep.subr.mxu0 0.0
    %5791 = vmatpush1.msra.mxu0 %v3278
    %5792 = vmatprep.subr.mxu0 0.0
    %5793 = vmatpush1.msra.mxu0 0.0
    %5794 = vmatprep.subr.mxu0 0.0
    %5795 = vmatpush1.msra.mxu0 0.0
    %5796 = vmatprep.subr.mxu0 0.0
    %5797 = vmatpush1.msra.mxu0 0.0
    %5798 = vmatprep.subr.mxu0 0.0
    %5799 = vmatpush1.msra.mxu0 0.0
    %5800 = vmatprep.subr.mxu0 0.0
    %5801 = vmatpush1.msra.mxu0 0.0
    %5802 = vmatprep.subr.mxu0 0.0
    %5803 = vmatpush1.msra.mxu0 0.0
    %5804 = vmatprep.subr.mxu0 0.0
    %5805 = vmatpush1.msra.mxu0 0.0
    %5806 = vmatprep.subr.mxu0 0.0
    %5807 = vmatpush1.msra.mxu0 0.0
    %5808 = vmatprep.subr.mxu0 0.0
    %5809 = vmatpush1.msra.mxu0 0.0
    %5810 = vmatprep.subr.mxu0 0.0
    %5811 = vmatpush1.msra.mxu0 0.0
    %5812 = vmatprep.subr.mxu0 0.0
    %5813 = vmatpush1.msra.mxu0 0.0
    %5814 = vmatprep.subr.mxu0 0.0
    %5815 = vmatpush1.msra.mxu0 0.0
    %5816 = vmatprep.subr.mxu0 0.0
    %5817 = vmatpush1.msra.mxu0 0.0
    %5818 = vmatprep.subr.mxu0 0.0
    %5819 = vmatpush1.msra.mxu0 0.0
    %5820 = vmatprep.subr.mxu0 0.0
    %5821 = vmatpush1.msra.mxu0 0.0
    %5822 = vmatprep.subr.mxu0 0.0
    %5823 = vmatpush1.msra.mxu0 0.0
    %5824 = vmatprep.subr.mxu0 0.0
    %5825 = vmatpush1.msra.mxu0 0.0
    %5826 = vmatprep.subr.mxu0 0.0
    %5827 = vmatpush1.msra.mxu0 0.0
    %5828 = vmatprep.subr.mxu0 0.0
    %5829 = vmatpush1.msra.mxu0 0.0
    %5830 = vmatprep.subr.mxu0 0.0
    %5831 = vmatpush1.msra.mxu0 0.0
    %5832 = vmatprep.subr.mxu0 0.0
    %5833 = vmatpush1.msra.mxu0 0.0
    %5834 = vmatprep.subr.mxu0 0.0
    %5835 = vmatpush1.msra.mxu0 0.0
    %5836 = vmatprep.subr.mxu0 0.0
    %5837 = vmatpush1.msra.mxu0 0.0
    %5838 = vmatprep.subr.mxu0 0.0
    %5839 = vmatpush1.msra.mxu0 0.0
    %5840 = vmatprep.mubr.f32.mxu0 0.0
    %5841 = vmatmul.mubr.f32.gmra.mrb[0].mxu0 %v5774
    %v5842 = vpop.f32.mrb[0].mxu0
    %v5843 = vadd.f32 0.0, %v5842
    %v5844 = vpop.f32.mrb[0].mxu0
    %5845 = vdwg.mxu0
    %v5847 = vrot.slane %v5843, 4
    %v5848 = vrot.slane %v5843, 5
    %v5851 = vadd.f32 %v5769, %v5847
    %v5852 = vadd.f32 %v5770, %v5848
    %5853 = vmatprep.subr.mxu0 0.0
    %5854 = vmatpush1.msra.mxu0 %v3279
    %5855 = vmatprep.subr.mxu0 0.0
    %5856 = vmatpush1.msra.mxu0 %v3280
    %5857 = vmatprep.subr.mxu0 0.0
    %5858 = vmatpush1.msra.mxu0 %v3281
    %5859 = vmatprep.subr.mxu0 0.0
    %5860 = vmatpush1.msra.mxu0 %v3282
    %5861 = vmatprep.subr.mxu0 0.0
    %5862 = vmatpush1.msra.mxu0 0.0
    %5863 = vmatprep.subr.mxu0 0.0
    %5864 = vmatpush1.msra.mxu0 0.0
    %5865 = vmatprep.subr.mxu0 0.0
    %5866 = vmatpush1.msra.mxu0 0.0
    %5867 = vmatprep.subr.mxu0 0.0
    %5868 = vmatpush1.msra.mxu0 0.0
    %5869 = vmatprep.subr.mxu0 0.0
    %5870 = vmatpush1.msra.mxu0 0.0
    %5871 = vmatprep.subr.mxu0 0.0
    %5872 = vmatpush1.msra.mxu0 0.0
    %5873 = vmatprep.subr.mxu0 0.0
    %5874 = vmatpush1.msra.mxu0 0.0
    %5875 = vmatprep.subr.mxu0 0.0
    %5876 = vmatpush1.msra.mxu0 0.0
    %5877 = vmatprep.subr.mxu0 0.0
    %5878 = vmatpush1.msra.mxu0 0.0
    %5879 = vmatprep.subr.mxu0 0.0
    %5880 = vmatpush1.msra.mxu0 0.0
    %5881 = vmatprep.subr.mxu0 0.0
    %5882 = vmatpush1.msra.mxu0 0.0
    %5883 = vmatprep.subr.mxu0 0.0
    %5884 = vmatpush1.msra.mxu0 0.0
    %5885 = vmatprep.subr.mxu0 0.0
    %5886 = vmatpush1.msra.mxu0 0.0
    %5887 = vmatprep.subr.mxu0 0.0
    %5888 = vmatpush1.msra.mxu0 0.0
    %5889 = vmatprep.subr.mxu0 0.0
    %5890 = vmatpush1.msra.mxu0 0.0
    %5891 = vmatprep.subr.mxu0 0.0
    %5892 = vmatpush1.msra.mxu0 0.0
    %5893 = vmatprep.subr.mxu0 0.0
    %5894 = vmatpush1.msra.mxu0 0.0
    %5895 = vmatprep.subr.mxu0 0.0
    %5896 = vmatpush1.msra.mxu0 0.0
    %5897 = vmatprep.subr.mxu0 0.0
    %5898 = vmatpush1.msra.mxu0 0.0
    %5899 = vmatprep.subr.mxu0 0.0
    %5900 = vmatpush1.msra.mxu0 0.0
    %5901 = vmatprep.subr.mxu0 0.0
    %5902 = vmatpush1.msra.mxu0 0.0
    %5903 = vmatprep.subr.mxu0 0.0
    %5904 = vmatpush1.msra.mxu0 0.0
    %5905 = vmatprep.subr.mxu0 0.0
    %5906 = vmatpush1.msra.mxu0 0.0
    %5907 = vmatprep.subr.mxu0 0.0
    %5908 = vmatpush1.msra.mxu0 0.0
    %5909 = vmatprep.subr.mxu0 0.0
    %5910 = vmatpush1.msra.mxu0 0.0
    %5911 = vmatprep.subr.mxu0 0.0
    %5912 = vmatpush1.msra.mxu0 0.0
    %5913 = vmatprep.subr.mxu0 0.0
    %5914 = vmatpush1.msra.mxu0 0.0
    %5915 = vmatprep.subr.mxu0 0.0
    %5916 = vmatpush1.msra.mxu0 0.0
    %5917 = vmatprep.mubr.f32.mxu0 0.0
    %5918 = vmatmul.mubr.f32.gmra.mrb[0].mxu0 %v5438
    %v5919 = vpop.f32.mrb[0].mxu0
    %v5920 = vadd.f32 %v3288, %v5919
    %v5921 = vpop.f32.mrb[0].mxu0
    %5922 = vdwg.mxu0
    %v5924 = vrot.slane %v5920, 4
    %v5925 = vrot.slane %v5920, 5
    %v5928 = vadd.f32 %v5851, %v5924
    %v5929 = vadd.f32 %v5852, %v5925
    %v5930 = vxor.u32 %v5928, 2147483648
    %v5931 = vxor.u32 %v5929, 2147483648
    %v5932 = vmul.f32 %v5930, 1.442695
    %v5933 = vpow.pop %v5932
    %v5934 = vmul.f32 %v5931, 1.442695
    %v5935 = vpow.pop %v5934
    %v5936 = vadd.f32 %v5933, 1.0
    %v5937 = vadd.f32 %v5935, 1.0
    %v5938 = vrcp.pop %v5936
    %v5939 = vmul.f32 1.0, %v5938
    %v5940 = vrcp.pop %v5937
    %v5941 = vmul.f32 1.0, %v5940
    %5942 = vrot.lane.b32.xlu0 %v5924, 64
    %v5943 = vpop.permute.xlu0 %5942
    %5944 = vrot.lane.b32.xlu0 %v5925, 64
    %v5945 = vpop.permute.xlu0 %5944
    %v5948 = vmul.f32 %v5939, %v5943
    %v5949 = vmul.f32 %v5941, %v5945
    %5952 = vrot.lane.b32.xlu0 %v5948, 64
    %v5953 = vpop.permute.xlu0 %5952
    %5954 = vrot.lane.b32.xlu0 %v5949, 64
    %v5955 = vpop.permute.xlu0 %5954
    %v5958 = vadd.f32 %v5851, %v5953
    %v5959 = vadd.f32 %v5852, %v5955
    %v5960 = vtanh.pop %v5958
    %v5961 = vtanh.pop %v5959
    %v5962 = vsub.f32 1.0, %v5939
    %v5963 = vsub.f32 1.0, %v5941
    %5966 = vrot.lane.b32.xlu0 %v5960, 96
    %v5967 = vpop.permute.xlu0 %5966
    %5968 = vrot.lane.b32.xlu0 %v5961, 96
    %v5969 = vpop.permute.xlu0 %5968
    %v5972 = vmul.f32 %v5962, %v5967
    %v5973 = vmul.f32 %v5963, %v5969
    %v5974 = vrot.slane %v5429, 7
    %v5975 = vrot.slane %v5430, 7
    %v5978 = vmul.f32 %v5939, %v5974
    %v5979 = vmul.f32 %v5941, %v5975
    %v5980 = vadd.f32 %v5972, %v5978
    %v5981 = vadd.f32 %v5973, %v5979
    %v5984 = vrot.slane %v5980, 4
    %v5985 = vrot.slane %v5981, 3
    %v5986 = vsel %vm816, %v5985, %v5984
    %5987 = vrot.lane.b32.xlu0 %v5986, 96
    %v5988 = vpop.permute.xlu0 %5987
    %v5989 = vsel %vm480, %v5988, 0
    %5991 = vmatprep.subr.mxu0 0.0
    %5992 = vmatpush1.msra.mxu0 %v3376
    %5993 = vmatprep.subr.mxu0 0.0
    %5994 = vmatpush1.msra.mxu0 %v3377
    %5995 = vmatprep.subr.mxu0 0.0
    %5996 = vmatpush1.msra.mxu0 %v3378
    %5997 = vmatprep.subr.mxu0 0.0
    %5998 = vmatpush1.msra.mxu0 %v3379
    %5999 = vmatprep.subr.mxu0 0.0
    %6000 = vmatpush1.msra.mxu0 0.0
    %6001 = vmatprep.subr.mxu0 0.0
    %6002 = vmatpush1.msra.mxu0 0.0
    %6003 = vmatprep.subr.mxu0 0.0
    %6004 = vmatpush1.msra.mxu0 0.0
    %6005 = vmatprep.subr.mxu0 0.0
    %6006 = vmatpush1.msra.mxu0 0.0
    %6007 = vmatprep.subr.mxu0 0.0
    %6008 = vmatpush1.msra.mxu0 0.0
    %6009 = vmatprep.subr.mxu0 0.0
    %6010 = vmatpush1.msra.mxu0 0.0
    %6011 = vmatprep.subr.mxu0 0.0
    %6012 = vmatpush1.msra.mxu0 0.0
    %6013 = vmatprep.subr.mxu0 0.0
    %6014 = vmatpush1.msra.mxu0 0.0
    %6015 = vmatprep.subr.mxu0 0.0
    %6016 = vmatpush1.msra.mxu0 0.0
    %6017 = vmatprep.subr.mxu0 0.0
    %6018 = vmatpush1.msra.mxu0 0.0
    %6019 = vmatprep.subr.mxu0 0.0
    %6020 = vmatpush1.msra.mxu0 0.0
    %6021 = vmatprep.subr.mxu0 0.0
    %6022 = vmatpush1.msra.mxu0 0.0
    %6023 = vmatprep.subr.mxu0 0.0
    %6024 = vmatpush1.msra.mxu0 0.0
    %6025 = vmatprep.subr.mxu0 0.0
    %6026 = vmatpush1.msra.mxu0 0.0
    %6027 = vmatprep.subr.mxu0 0.0
    %6028 = vmatpush1.msra.mxu0 0.0
    %6029 = vmatprep.subr.mxu0 0.0
    %6030 = vmatpush1.msra.mxu0 0.0
    %6031 = vmatprep.subr.mxu0 0.0
    %6032 = vmatpush1.msra.mxu0 0.0
    %6033 = vmatprep.subr.mxu0 0.0
    %6034 = vmatpush1.msra.mxu0 0.0
    %6035 = vmatprep.subr.mxu0 0.0
    %6036 = vmatpush1.msra.mxu0 0.0
    %6037 = vmatprep.subr.mxu0 0.0
    %6038 = vmatpush1.msra.mxu0 0.0
    %6039 = vmatprep.subr.mxu0 0.0
    %6040 = vmatpush1.msra.mxu0 0.0
    %6041 = vmatprep.subr.mxu0 0.0
    %6042 = vmatpush1.msra.mxu0 0.0
    %6043 = vmatprep.subr.mxu0 0.0
    %6044 = vmatpush1.msra.mxu0 0.0
    %6045 = vmatprep.subr.mxu0 0.0
    %6046 = vmatpush1.msra.mxu0 0.0
    %6047 = vmatprep.subr.mxu0 0.0
    %6048 = vmatpush1.msra.mxu0 0.0
    %6049 = vmatprep.subr.mxu0 0.0
    %6050 = vmatpush1.msra.mxu0 0.0
    %6051 = vmatprep.subr.mxu0 0.0
    %6052 = vmatpush1.msra.mxu0 0.0
    %6053 = vmatprep.subr.mxu0 0.0
    %6054 = vmatpush1.msra.mxu0 0.0
    %6055 = vmatprep.mubr.f32.mxu0 0.0
    %6056 = vmatmul.mubr.f32.gmra.mrb[0].mxu0 %v5989
    %v6057 = vpop.f32.mrb[0].mxu0
    %v6058 = vadd.f32 0.0, %v6057
    %v6059 = vpop.f32.mrb[0].mxu0
    %6060 = vdwg.mxu0
    %v6062 = vrot.slane %v6058, 4
    %v6063 = vrot.slane %v6058, 5
    %v6066 = vadd.f32 %v3368, %v6062
    %v6067 = vadd.f32 %v3373, %v6063
    %6068 = vmatprep.subr.mxu0 0.0
    %6069 = vmatpush1.msra.mxu0 %v3380
    %6070 = vmatprep.subr.mxu0 0.0
    %6071 = vmatpush1.msra.mxu0 %v3381
    %6072 = vmatprep.subr.mxu0 0.0
    %6073 = vmatpush1.msra.mxu0 %v3382
    %6074 = vmatprep.subr.mxu0 0.0
    %6075 = vmatpush1.msra.mxu0 %v3383
    %6076 = vmatprep.subr.mxu0 0.0
    %6077 = vmatpush1.msra.mxu0 %v3384
    %6078 = vmatprep.subr.mxu0 0.0
    %6079 = vmatpush1.msra.mxu0 %v3385
    %6080 = vmatprep.subr.mxu0 0.0
    %6081 = vmatpush1.msra.mxu0 %v3386
    %6082 = vmatprep.subr.mxu0 0.0
    %6083 = vmatpush1.msra.mxu0 %v3387
    %6084 = vmatprep.subr.mxu0 0.0
    %6085 = vmatpush1.msra.mxu0 0.0
    %6086 = vmatprep.subr.mxu0 0.0
    %6087 = vmatpush1.msra.mxu0 0.0
    %6088 = vmatprep.subr.mxu0 0.0
    %6089 = vmatpush1.msra.mxu0 0.0
    %6090 = vmatprep.subr.mxu0 0.0
    %6091 = vmatpush1.msra.mxu0 0.0
    %6092 = vmatprep.subr.mxu0 0.0
    %6093 = vmatpush1.msra.mxu0 0.0
    %6094 = vmatprep.subr.mxu0 0.0
    %6095 = vmatpush1.msra.mxu0 0.0
    %6096 = vmatprep.subr.mxu0 0.0
    %6097 = vmatpush1.msra.mxu0 0.0
    %6098 = vmatprep.subr.mxu0 0.0
    %6099 = vmatpush1.msra.mxu0 0.0
    %6100 = vmatprep.subr.mxu0 0.0
    %6101 = vmatpush1.msra.mxu0 0.0
    %6102 = vmatprep.subr.mxu0 0.0
    %6103 = vmatpush1.msra.mxu0 0.0
    %6104 = vmatprep.subr.mxu0 0.0
    %6105 = vmatpush1.msra.mxu0 0.0
    %6106 = vmatprep.subr.mxu0 0.0
    %6107 = vmatpush1.msra.mxu0 0.0
    %6108 = vmatprep.subr.mxu0 0.0
    %6109 = vmatpush1.msra.mxu0 0.0
    %6110 = vmatprep.subr.mxu0 0.0
    %6111 = vmatpush1.msra.mxu0 0.0
    %6112 = vmatprep.subr.mxu0 0.0
    %6113 = vmatpush1.msra.mxu0 0.0
    %6114 = vmatprep.subr.mxu0 0.0
    %6115 = vmatpush1.msra.mxu0 0.0
    %6116 = vmatprep.subr.mxu0 0.0
    %6117 = vmatpush1.msra.mxu0 0.0
    %6118 = vmatprep.subr.mxu0 0.0
    %6119 = vmatpush1.msra.mxu0 0.0
    %6120 = vmatprep.subr.mxu0 0.0
    %6121 = vmatpush1.msra.mxu0 0.0
    %6122 = vmatprep.subr.mxu0 0.0
    %6123 = vmatpush1.msra.mxu0 0.0
    %6124 = vmatprep.subr.mxu0 0.0
    %6125 = vmatpush1.msra.mxu0 0.0
    %6126 = vmatprep.subr.mxu0 0.0
    %6127 = vmatpush1.msra.mxu0 0.0
    %6128 = vmatprep.subr.mxu0 0.0
    %6129 = vmatpush1.msra.mxu0 0.0
    %6130 = vmatprep.subr.mxu0 0.0
    %6131 = vmatpush1.msra.mxu0 0.0
    %6132 = vmatprep.mubr.f32.mxu0 0.0
    %6133 = vmatmul.mubr.f32.gmra.mrb[0].mxu0 %v5774
    %v6134 = vpop.f32.mrb[0].mxu0
    %v6135 = vadd.f32 0.0, %v6134
    %v6136 = vpop.f32.mrb[0].mxu0
    %6137 = vdwg.mxu0
    %v6139 = vrot.slane %v6135, 4
    %v6140 = vrot.slane %v6135, 5
    %v6143 = vadd.f32 %v6066, %v6139
    %v6144 = vadd.f32 %v6067, %v6140
    %v6145 = vtanh.pop %v6143
    %v6146 = vtanh.pop %v6144
    %6147 = vst.msk [vmem:[#allocation4] sm:$0x10] %vm1397, %v6145
    %6148 = vst.msk [vmem:[#allocation4 + $0x8] sm:$0x10] %vm1397, %v6146
    %6149 = vmatprep.subr.mxu0 0.0
    %6150 = vmatpush1.msra.mxu0 %v3102
    %6151 = vmatprep.subr.mxu0 0.0
    %6152 = vmatpush1.msra.mxu0 %v3103
    %6153 = vmatprep.subr.mxu0 0.0
    %6154 = vmatpush1.msra.mxu0 %v3104
    %6155 = vmatprep.subr.mxu0 0.0
    %6156 = vmatpush1.msra.mxu0 %v3105
    %6157 = vmatprep.subr.mxu0 0.0
    %6158 = vmatpush1.msra.mxu0 0.0
    %6159 = vmatprep.subr.mxu0 0.0
    %6160 = vmatpush1.msra.mxu0 0.0
    %6161 = vmatprep.subr.mxu0 0.0
    %6162 = vmatpush1.msra.mxu0 0.0
    %6163 = vmatprep.subr.mxu0 0.0
    %6164 = vmatpush1.msra.mxu0 0.0
    %6165 = vmatprep.subr.mxu0 0.0
    %6166 = vmatpush1.msra.mxu0 0.0
    %6167 = vmatprep.subr.mxu0 0.0
    %6168 = vmatpush1.msra.mxu0 0.0
    %6169 = vmatprep.subr.mxu0 0.0
    %6170 = vmatpush1.msra.mxu0 0.0
    %6171 = vmatprep.subr.mxu0 0.0
    %6172 = vmatpush1.msra.mxu0 0.0
    %6173 = vmatprep.subr.mxu0 0.0
    %6174 = vmatpush1.msra.mxu0 0.0
    %6175 = vmatprep.subr.mxu0 0.0
    %6176 = vmatpush1.msra.mxu0 0.0
    %6177 = vmatprep.subr.mxu0 0.0
    %6178 = vmatpush1.msra.mxu0 0.0
    %6179 = vmatprep.subr.mxu0 0.0
    %6180 = vmatpush1.msra.mxu0 0.0
    %6181 = vmatprep.subr.mxu0 0.0
    %6182 = vmatpush1.msra.mxu0 0.0
    %6183 = vmatprep.subr.mxu0 0.0
    %6184 = vmatpush1.msra.mxu0 0.0
    %6185 = vmatprep.subr.mxu0 0.0
    %6186 = vmatpush1.msra.mxu0 0.0
    %6187 = vmatprep.subr.mxu0 0.0
    %6188 = vmatpush1.msra.mxu0 0.0
    %6189 = vmatprep.subr.mxu0 0.0
    %6190 = vmatpush1.msra.mxu0 0.0
    %6191 = vmatprep.subr.mxu0 0.0
    %6192 = vmatpush1.msra.mxu0 0.0
    %6193 = vmatprep.subr.mxu0 0.0
    %6194 = vmatpush1.msra.mxu0 0.0
    %6195 = vmatprep.subr.mxu0 0.0
    %6196 = vmatpush1.msra.mxu0 0.0
    %6197 = vmatprep.subr.mxu0 0.0
    %6198 = vmatpush1.msra.mxu0 0.0
    %6199 = vmatprep.subr.mxu0 0.0
    %6200 = vmatpush1.msra.mxu0 0.0
    %6201 = vmatprep.subr.mxu0 0.0
    %6202 = vmatpush1.msra.mxu0 0.0
    %6203 = vmatprep.subr.mxu0 0.0
    %6204 = vmatpush1.msra.mxu0 0.0
    %6205 = vmatprep.subr.mxu0 0.0
    %6206 = vmatpush1.msra.mxu0 0.0
    %6207 = vmatprep.subr.mxu0 0.0
    %6208 = vmatpush1.msra.mxu0 0.0
    %6209 = vmatprep.subr.mxu0 0.0
    %6210 = vmatpush1.msra.mxu0 0.0
    %6211 = vmatprep.subr.mxu0 0.0
    %6212 = vmatpush1.msra.mxu0 0.0
    %6213 = vmatprep.mubr.f32.mxu0 0.0
    %6214 = vmatmul.mubr.f32.gmra.mrb[0].mxu0 %v5989
    %v6215 = vpop.f32.mrb[0].mxu0
    %v6216 = vadd.f32 0.0, %v6215
    %v6217 = vpop.f32.mrb[0].mxu0
    %6218 = vdwg.mxu0
    %v6221 = vunpack.c.l.s4 1966171168
    %v6222 = vunpack.c.0.s8 %v6221
    %v6223 = vlaneseq
    %v6224 = vshrl.u32 %v6223, 7
    %v6225 = vsub.s32 %v6222, %v6224
    %v6226 = vrot.slane %v6216, %v6225
    %v6227 = vcombine.high %v6226, %v6226
    %v6229 = vunpack.c.l.s4 1966171168
    %v6230 = vunpack.c.0.s8 %v6229
    %v6231 = vlaneseq
    %v6232 = vshrl.u32 %v6231, 7
    %v6233 = vsub.s32 %v6230, %v6232
    %v6234 = vrot.slane %v6226, %v6233
    %v6236 = vunpack.c.l.s4 1966171168
    %v6237 = vunpack.c.0.s8 %v6236
    %v6238 = vlaneseq
    %v6239 = vshrl.u32 %v6238, 7
    %v6240 = vsub.s32 %v6237, %v6239
    %v6241 = vrot.slane %v6227, %v6240
    %v6242 = vlaneseq
    %v6243 = vshrl.u32 %v6242, 7
    %v6244 = vsub.s32 0, %v6243
    %v6245 = vrot.slane %v6234, %v6244
    %v6246 = vlaneseq
    %v6247 = vshrl.u32 %v6246, 7
    %v6248 = vsub.s32 0, %v6247
    %v6249 = vrot.slane %v6241, %v6248
    %v6252 = vadd.f32 %v3093, %v6245
    %v6253 = vadd.f32 %v3098, %v6249
    %v6254 = vtanh.pop %v6252
    %v6255 = vtanh.pop %v6253
    %v6256 = vmul.f32 %v6254, %v3502
    %v6257 = vmul.f32 %v6255, %v3502
    %v6258 = vsel %vm480, %v6256, 0.0
    %6259 = vadd.xlane.f32.xlu0 %v6258
    %v6260 = vpop.xlane.xlu0 %6259
    %v6261 = vsel %vm480, %v6257, 0.0
    %6262 = vadd.xlane.f32.xlu0 %v6261
    %v6263 = vpop.xlane.xlu0 %6262
    %v6266 = vlaneseq
    %v6267 = vshrl.u32 %v6266, 7
    %v6268 = vsub.s32 %v3515, %v6267
    %v6269 = vrot.slane %v6260, %v6268
    %v6270 = vlaneseq
    %v6271 = vshrl.u32 %v6270, 7
    %v6272 = vsub.s32 %v3515, %v6271
    %v6273 = vrot.slane %v6263, %v6272
    %v6274 = vsel %vm816, %v6273, %v6269
    %v6276 = vsel %vm3106, %v6274, -1e+09
    %v6277 = vsel %vm3527, %v6276, -inf
    %6278 = vmax.xlane.f32.xlu0 %v6277
    %v6279 = vpop.xlane.xlu0 %6278
    %v6280 = vsub.f32 %v6276, %v6279
    %v6281 = vmul.f32 %v6280, 1.442695
    %v6282 = vpow.pop %v6281
    %v6283 = vsel %vm3527, %v6282, 0.0
    %6284 = vadd.xlane.f32.xlu0 %v6283
    %v6285 = vpop.xlane.xlu0 %6284
    %v6286 = vrcp.pop %v6285
    %v6287 = vmul.f32 %v6282, %v6286
    %v6288 = vlaneseq
    %v6289 = vshrl.u32 %v6288, 7
    %v6290 = vsub.s32 0, %v6289
    %v6291 = vrot.slane %v6287, %v6290
    %6293 = vbcast.lane.b32.xlu0 %v6291, 256
    %v6294 = vpop.permute.xlu0 %6293
    %v6295 = vlaneseq
    %v6296 = vshrl.u32 %v6295, 7
    %v6297 = vsub.s32 1, %v6296
    %v6298 = vrot.slane %v6287, %v6297
    %6300 = vbcast.lane.b32.xlu0 %v6298, 256
    %v6301 = vpop.permute.xlu0 %6300
    %v6302 = vmul.f32 %v6294, %v3009
    %v6303 = vmul.f32 %v6301, %v3010
    %v6304 = vsel %vm3019, %v6302, 0.0
    %v6305 = vrot.slane %v6304, 4
    %v6306 = vadd.f32 %v6304, %v6305
    %v6307 = vrot.slane %v6306, 2
    %v6308 = vadd.f32 %v6306, %v6307
    %v6309 = vrot.slane %v6308, 1
    %v6310 = vadd.f32 %v6308, %v6309
    %v6311 = vsel %vm3019, %v6303, 0.0
    %v6312 = vrot.slane %v6311, 4
    %v6313 = vadd.f32 %v6311, %v6312
    %v6314 = vrot.slane %v6313, 2
    %v6315 = vadd.f32 %v6313, %v6314
    %v6316 = vrot.slane %v6315, 1
    %v6317 = vadd.f32 %v6315, %v6316
    %v6318 = vrot.slane %v3268, 3
    %v6320 = vadd.f32 %v3184, %v6318
    %v6321 = vadd.f32 %v3189, %v5767
    %v6324 = vsel %vm816, %v6317, %v6310
    %v6325 = vsel %vm3019, %v6324, 0
    %6327 = vmatprep.subr.mxu0 0.0
    %6328 = vmatpush1.msra.mxu0 %v3271
    %6329 = vmatprep.subr.mxu0 0.0
    %6330 = vmatpush1.msra.mxu0 %v3272
    %6331 = vmatprep.subr.mxu0 0.0
    %6332 = vmatpush1.msra.mxu0 %v3273
    %6333 = vmatprep.subr.mxu0 0.0
    %6334 = vmatpush1.msra.mxu0 %v3274
    %6335 = vmatprep.subr.mxu0 0.0
    %6336 = vmatpush1.msra.mxu0 %v3275
    %6337 = vmatprep.subr.mxu0 0.0
    %6338 = vmatpush1.msra.mxu0 %v3276
    %6339 = vmatprep.subr.mxu0 0.0
    %6340 = vmatpush1.msra.mxu0 %v3277
    %6341 = vmatprep.subr.mxu0 0.0
    %6342 = vmatpush1.msra.mxu0 %v3278
    %6343 = vmatprep.subr.mxu0 0.0
    %6344 = vmatpush1.msra.mxu0 0.0
    %6345 = vmatprep.subr.mxu0 0.0
    %6346 = vmatpush1.msra.mxu0 0.0
    %6347 = vmatprep.subr.mxu0 0.0
    %6348 = vmatpush1.msra.mxu0 0.0
    %6349 = vmatprep.subr.mxu0 0.0
    %6350 = vmatpush1.msra.mxu0 0.0
    %6351 = vmatprep.subr.mxu0 0.0
    %6352 = vmatpush1.msra.mxu0 0.0
    %6353 = vmatprep.subr.mxu0 0.0
    %6354 = vmatpush1.msra.mxu0 0.0
    %6355 = vmatprep.subr.mxu0 0.0
    %6356 = vmatpush1.msra.mxu0 0.0
    %6357 = vmatprep.subr.mxu0 0.0
    %6358 = vmatpush1.msra.mxu0 0.0
    %6359 = vmatprep.subr.mxu0 0.0
    %6360 = vmatpush1.msra.mxu0 0.0
    %6361 = vmatprep.subr.mxu0 0.0
    %6362 = vmatpush1.msra.mxu0 0.0
    %6363 = vmatprep.subr.mxu0 0.0
    %6364 = vmatpush1.msra.mxu0 0.0
    %6365 = vmatprep.subr.mxu0 0.0
    %6366 = vmatpush1.msra.mxu0 0.0
    %6367 = vmatprep.subr.mxu0 0.0
    %6368 = vmatpush1.msra.mxu0 0.0
    %6369 = vmatprep.subr.mxu0 0.0
    %6370 = vmatpush1.msra.mxu0 0.0
    %6371 = vmatprep.subr.mxu0 0.0
    %6372 = vmatpush1.msra.mxu0 0.0
    %6373 = vmatprep.subr.mxu0 0.0
    %6374 = vmatpush1.msra.mxu0 0.0
    %6375 = vmatprep.subr.mxu0 0.0
    %6376 = vmatpush1.msra.mxu0 0.0
    %6377 = vmatprep.subr.mxu0 0.0
    %6378 = vmatpush1.msra.mxu0 0.0
    %6379 = vmatprep.subr.mxu0 0.0
    %6380 = vmatpush1.msra.mxu0 0.0
    %6381 = vmatprep.subr.mxu0 0.0
    %6382 = vmatpush1.msra.mxu0 0.0
    %6383 = vmatprep.subr.mxu0 0.0
    %6384 = vmatpush1.msra.mxu0 0.0
    %6385 = vmatprep.subr.mxu0 0.0
    %6386 = vmatpush1.msra.mxu0 0.0
    %6387 = vmatprep.subr.mxu0 0.0
    %6388 = vmatpush1.msra.mxu0 0.0
    %6389 = vmatprep.subr.mxu0 0.0
    %6390 = vmatpush1.msra.mxu0 0.0
    %6391 = vmatprep.mubr.f32.mxu0 0.0
    %6392 = vmatmul.mubr.f32.gmra.mrb[0].mxu0 %v6325
    %v6393 = vpop.f32.mrb[0].mxu0
    %v6394 = vadd.f32 0.0, %v6393
    %v6395 = vpop.f32.mrb[0].mxu0
    %6396 = vdwg.mxu0
    %v6398 = vrot.slane %v6394, 3
    %v6399 = vrot.slane %v6394, 4
    %v6402 = vadd.f32 %v6320, %v6398
    %v6403 = vadd.f32 %v6321, %v6399
    %6404 = vmatprep.subr.mxu0 0.0
    %6405 = vmatpush1.msra.mxu0 %v3279
    %6406 = vmatprep.subr.mxu0 0.0
    %6407 = vmatpush1.msra.mxu0 %v3280
    %6408 = vmatprep.subr.mxu0 0.0
    %6409 = vmatpush1.msra.mxu0 %v3281
    %6410 = vmatprep.subr.mxu0 0.0
    %6411 = vmatpush1.msra.mxu0 %v3282
    %6412 = vmatprep.subr.mxu0 0.0
    %6413 = vmatpush1.msra.mxu0 0.0
    %6414 = vmatprep.subr.mxu0 0.0
    %6415 = vmatpush1.msra.mxu0 0.0
    %6416 = vmatprep.subr.mxu0 0.0
    %6417 = vmatpush1.msra.mxu0 0.0
    %6418 = vmatprep.subr.mxu0 0.0
    %6419 = vmatpush1.msra.mxu0 0.0
    %6420 = vmatprep.subr.mxu0 0.0
    %6421 = vmatpush1.msra.mxu0 0.0
    %6422 = vmatprep.subr.mxu0 0.0
    %6423 = vmatpush1.msra.mxu0 0.0
    %6424 = vmatprep.subr.mxu0 0.0
    %6425 = vmatpush1.msra.mxu0 0.0
    %6426 = vmatprep.subr.mxu0 0.0
    %6427 = vmatpush1.msra.mxu0 0.0
    %6428 = vmatprep.subr.mxu0 0.0
    %6429 = vmatpush1.msra.mxu0 0.0
    %6430 = vmatprep.subr.mxu0 0.0
    %6431 = vmatpush1.msra.mxu0 0.0
    %6432 = vmatprep.subr.mxu0 0.0
    %6433 = vmatpush1.msra.mxu0 0.0
    %6434 = vmatprep.subr.mxu0 0.0
    %6435 = vmatpush1.msra.mxu0 0.0
    %6436 = vmatprep.subr.mxu0 0.0
    %6437 = vmatpush1.msra.mxu0 0.0
    %6438 = vmatprep.subr.mxu0 0.0
    %6439 = vmatpush1.msra.mxu0 0.0
    %6440 = vmatprep.subr.mxu0 0.0
    %6441 = vmatpush1.msra.mxu0 0.0
    %6442 = vmatprep.subr.mxu0 0.0
    %6443 = vmatpush1.msra.mxu0 0.0
    %6444 = vmatprep.subr.mxu0 0.0
    %6445 = vmatpush1.msra.mxu0 0.0
    %6446 = vmatprep.subr.mxu0 0.0
    %6447 = vmatpush1.msra.mxu0 0.0
    %6448 = vmatprep.subr.mxu0 0.0
    %6449 = vmatpush1.msra.mxu0 0.0
    %6450 = vmatprep.subr.mxu0 0.0
    %6451 = vmatpush1.msra.mxu0 0.0
    %6452 = vmatprep.subr.mxu0 0.0
    %6453 = vmatpush1.msra.mxu0 0.0
    %6454 = vmatprep.subr.mxu0 0.0
    %6455 = vmatpush1.msra.mxu0 0.0
    %6456 = vmatprep.subr.mxu0 0.0
    %6457 = vmatpush1.msra.mxu0 0.0
    %6458 = vmatprep.subr.mxu0 0.0
    %6459 = vmatpush1.msra.mxu0 0.0
    %6460 = vmatprep.subr.mxu0 0.0
    %6461 = vmatpush1.msra.mxu0 0.0
    %6462 = vmatprep.subr.mxu0 0.0
    %6463 = vmatpush1.msra.mxu0 0.0
    %6464 = vmatprep.subr.mxu0 0.0
    %6465 = vmatpush1.msra.mxu0 0.0
    %6466 = vmatprep.subr.mxu0 0.0
    %6467 = vmatpush1.msra.mxu0 0.0
    %6468 = vmatprep.mubr.f32.mxu0 0.0
    %6469 = vmatmul.mubr.f32.gmra.mrb[0].mxu0 %v5989
    %v6470 = vpop.f32.mrb[0].mxu0
    %v6471 = vadd.f32 %v3288, %v6470
    %v6472 = vpop.f32.mrb[0].mxu0
    %6473 = vdwg.mxu0
    %v6475 = vrot.slane %v6471, 3
    %v6476 = vrot.slane %v6471, 4
    %v6479 = vadd.f32 %v6402, %v6475
    %v6480 = vadd.f32 %v6403, %v6476
    %v6481 = vxor.u32 %v6479, 2147483648
    %v6482 = vxor.u32 %v6480, 2147483648
    %v6483 = vmul.f32 %v6481, 1.442695
    %v6484 = vpow.pop %v6483
    %v6485 = vmul.f32 %v6482, 1.442695
    %v6486 = vpow.pop %v6485
    %v6487 = vadd.f32 %v6484, 1.0
    %v6488 = vadd.f32 %v6486, 1.0
    %v6489 = vrcp.pop %v6487
    %v6490 = vmul.f32 1.0, %v6489
    %v6491 = vrcp.pop %v6488
    %v6492 = vmul.f32 1.0, %v6491
    %6493 = vrot.lane.b32.xlu0 %v6475, 64
    %v6494 = vpop.permute.xlu0 %6493
    %6495 = vrot.lane.b32.xlu0 %v6476, 64
    %v6496 = vpop.permute.xlu0 %6495
    %v6499 = vmul.f32 %v6490, %v6494
    %v6500 = vmul.f32 %v6492, %v6496
    %6503 = vrot.lane.b32.xlu0 %v6499, 64
    %v6504 = vpop.permute.xlu0 %6503
    %6505 = vrot.lane.b32.xlu0 %v6500, 64
    %v6506 = vpop.permute.xlu0 %6505
    %v6509 = vadd.f32 %v6402, %v6504
    %v6510 = vadd.f32 %v6403, %v6506
    %v6511 = vtanh.pop %v6509
    %v6512 = vtanh.pop %v6510
    %v6513 = vsub.f32 1.0, %v6490
    %v6514 = vsub.f32 1.0, %v6492
    %6517 = vrot.lane.b32.xlu0 %v6511, 96
    %v6518 = vpop.permute.xlu0 %6517
    %6519 = vrot.lane.b32.xlu0 %v6512, 96
    %v6520 = vpop.permute.xlu0 %6519
    %v6523 = vmul.f32 %v6513, %v6518
    %v6524 = vmul.f32 %v6514, %v6520
    %v6525 = vrot.slane %v5980, 7
    %v6526 = vrot.slane %v5981, 7
    %v6529 = vmul.f32 %v6490, %v6525
    %v6530 = vmul.f32 %v6492, %v6526
    %v6531 = vadd.f32 %v6523, %v6529
    %v6532 = vadd.f32 %v6524, %v6530
    %v6535 = vrot.slane %v6531, 5
    %v6536 = vrot.slane %v6532, 4
    %v6537 = vsel %vm816, %v6536, %v6535
    %6538 = vrot.lane.b32.xlu0 %v6537, 96
    %v6539 = vpop.permute.xlu0 %6538
    %v6540 = vsel %vm480, %v6539, 0
    %6542 = vmatprep.subr.mxu0 0.0
    %6543 = vmatpush1.msra.mxu0 %v3376
    %6544 = vmatprep.subr.mxu0 0.0
    %6545 = vmatpush1.msra.mxu0 %v3377
    %6546 = vmatprep.subr.mxu0 0.0
    %6547 = vmatpush1.msra.mxu0 %v3378
    %6548 = vmatprep.subr.mxu0 0.0
    %6549 = vmatpush1.msra.mxu0 %v3379
    %6550 = vmatprep.subr.mxu0 0.0
    %6551 = vmatpush1.msra.mxu0 0.0
    %6552 = vmatprep.subr.mxu0 0.0
    %6553 = vmatpush1.msra.mxu0 0.0
    %6554 = vmatprep.subr.mxu0 0.0
    %6555 = vmatpush1.msra.mxu0 0.0
    %6556 = vmatprep.subr.mxu0 0.0
    %6557 = vmatpush1.msra.mxu0 0.0
    %6558 = vmatprep.subr.mxu0 0.0
    %6559 = vmatpush1.msra.mxu0 0.0
    %6560 = vmatprep.subr.mxu0 0.0
    %6561 = vmatpush1.msra.mxu0 0.0
    %6562 = vmatprep.subr.mxu0 0.0
    %6563 = vmatpush1.msra.mxu0 0.0
    %6564 = vmatprep.subr.mxu0 0.0
    %6565 = vmatpush1.msra.mxu0 0.0
    %6566 = vmatprep.subr.mxu0 0.0
    %6567 = vmatpush1.msra.mxu0 0.0
    %6568 = vmatprep.subr.mxu0 0.0
    %6569 = vmatpush1.msra.mxu0 0.0
    %6570 = vmatprep.subr.mxu0 0.0
    %6571 = vmatpush1.msra.mxu0 0.0
    %6572 = vmatprep.subr.mxu0 0.0
    %6573 = vmatpush1.msra.mxu0 0.0
    %6574 = vmatprep.subr.mxu0 0.0
    %6575 = vmatpush1.msra.mxu0 0.0
    %6576 = vmatprep.subr.mxu0 0.0
    %6577 = vmatpush1.msra.mxu0 0.0
    %6578 = vmatprep.subr.mxu0 0.0
    %6579 = vmatpush1.msra.mxu0 0.0
    %6580 = vmatprep.subr.mxu0 0.0
    %6581 = vmatpush1.msra.mxu0 0.0
    %6582 = vmatprep.subr.mxu0 0.0
    %6583 = vmatpush1.msra.mxu0 0.0
    %6584 = vmatprep.subr.mxu0 0.0
    %6585 = vmatpush1.msra.mxu0 0.0
    %6586 = vmatprep.subr.mxu0 0.0
    %6587 = vmatpush1.msra.mxu0 0.0
    %6588 = vmatprep.subr.mxu0 0.0
    %6589 = vmatpush1.msra.mxu0 0.0
    %6590 = vmatprep.subr.mxu0 0.0
    %6591 = vmatpush1.msra.mxu0 0.0
    %6592 = vmatprep.subr.mxu0 0.0
    %6593 = vmatpush1.msra.mxu0 0.0
    %6594 = vmatprep.subr.mxu0 0.0
    %6595 = vmatpush1.msra.mxu0 0.0
    %6596 = vmatprep.subr.mxu0 0.0
    %6597 = vmatpush1.msra.mxu0 0.0
    %6598 = vmatprep.subr.mxu0 0.0
    %6599 = vmatpush1.msra.mxu0 0.0
    %6600 = vmatprep.subr.mxu0 0.0
    %6601 = vmatpush1.msra.mxu0 0.0
    %6602 = vmatprep.subr.mxu0 0.0
    %6603 = vmatpush1.msra.mxu0 0.0
    %6604 = vmatprep.subr.mxu0 0.0
    %6605 = vmatpush1.msra.mxu0 0.0
    %6606 = vmatprep.mubr.f32.mxu0 0.0
    %6607 = vmatmul.mubr.f32.gmra.mrb[0].mxu0 %v6540
    %v6608 = vpop.f32.mrb[0].mxu0
    %v6609 = vadd.f32 0.0, %v6608
    %v6610 = vpop.f32.mrb[0].mxu0
    %6611 = vdwg.mxu0
    %v6613 = vrot.slane %v6609, 3
    %v6614 = vrot.slane %v6609, 4
    %v6617 = vadd.f32 %v3368, %v6613
    %v6618 = vadd.f32 %v3373, %v6614
    %6619 = vmatprep.subr.mxu0 0.0
    %6620 = vmatpush1.msra.mxu0 %v3380
    %6621 = vmatprep.subr.mxu0 0.0
    %6622 = vmatpush1.msra.mxu0 %v3381
    %6623 = vmatprep.subr.mxu0 0.0
    %6624 = vmatpush1.msra.mxu0 %v3382
    %6625 = vmatprep.subr.mxu0 0.0
    %6626 = vmatpush1.msra.mxu0 %v3383
    %6627 = vmatprep.subr.mxu0 0.0
    %6628 = vmatpush1.msra.mxu0 %v3384
    %6629 = vmatprep.subr.mxu0 0.0
    %6630 = vmatpush1.msra.mxu0 %v3385
    %6631 = vmatprep.subr.mxu0 0.0
    %6632 = vmatpush1.msra.mxu0 %v3386
    %6633 = vmatprep.subr.mxu0 0.0
    %6634 = vmatpush1.msra.mxu0 %v3387
    %6635 = vmatprep.subr.mxu0 0.0
    %6636 = vmatpush1.msra.mxu0 0.0
    %6637 = vmatprep.subr.mxu0 0.0
    %6638 = vmatpush1.msra.mxu0 0.0
    %6639 = vmatprep.subr.mxu0 0.0
    %6640 = vmatpush1.msra.mxu0 0.0
    %6641 = vmatprep.subr.mxu0 0.0
    %6642 = vmatpush1.msra.mxu0 0.0
    %6643 = vmatprep.subr.mxu0 0.0
    %6644 = vmatpush1.msra.mxu0 0.0
    %6645 = vmatprep.subr.mxu0 0.0
    %6646 = vmatpush1.msra.mxu0 0.0
    %6647 = vmatprep.subr.mxu0 0.0
    %6648 = vmatpush1.msra.mxu0 0.0
    %6649 = vmatprep.subr.mxu0 0.0
    %6650 = vmatpush1.msra.mxu0 0.0
    %6651 = vmatprep.subr.mxu0 0.0
    %6652 = vmatpush1.msra.mxu0 0.0
    %6653 = vmatprep.subr.mxu0 0.0
    %6654 = vmatpush1.msra.mxu0 0.0
    %6655 = vmatprep.subr.mxu0 0.0
    %6656 = vmatpush1.msra.mxu0 0.0
    %6657 = vmatprep.subr.mxu0 0.0
    %6658 = vmatpush1.msra.mxu0 0.0
    %6659 = vmatprep.subr.mxu0 0.0
    %6660 = vmatpush1.msra.mxu0 0.0
    %6661 = vmatprep.subr.mxu0 0.0
    %6662 = vmatpush1.msra.mxu0 0.0
    %6663 = vmatprep.subr.mxu0 0.0
    %6664 = vmatpush1.msra.mxu0 0.0
    %6665 = vmatprep.subr.mxu0 0.0
    %6666 = vmatpush1.msra.mxu0 0.0
    %6667 = vmatprep.subr.mxu0 0.0
    %6668 = vmatpush1.msra.mxu0 0.0
    %6669 = vmatprep.subr.mxu0 0.0
    %6670 = vmatpush1.msra.mxu0 0.0
    %6671 = vmatprep.subr.mxu0 0.0
    %6672 = vmatpush1.msra.mxu0 0.0
    %6673 = vmatprep.subr.mxu0 0.0
    %6674 = vmatpush1.msra.mxu0 0.0
    %6675 = vmatprep.subr.mxu0 0.0
    %6676 = vmatpush1.msra.mxu0 0.0
    %6677 = vmatprep.subr.mxu0 0.0
    %6678 = vmatpush1.msra.mxu0 0.0
    %6679 = vmatprep.subr.mxu0 0.0
    %6680 = vmatpush1.msra.mxu0 0.0
    %6681 = vmatprep.subr.mxu0 0.0
    %6682 = vmatpush1.msra.mxu0 0.0
    %6683 = vmatprep.mubr.f32.mxu0 0.0
    %6684 = vmatmul.mubr.f32.gmra.mrb[0].mxu0 %v6325
    %v6685 = vpop.f32.mrb[0].mxu0
    %v6686 = vadd.f32 0.0, %v6685
    %v6687 = vpop.f32.mrb[0].mxu0
    %6688 = vdwg.mxu0
    %v6690 = vrot.slane %v6686, 3
    %v6691 = vrot.slane %v6686, 4
    %v6694 = vadd.f32 %v6617, %v6690
    %v6695 = vadd.f32 %v6618, %v6691
    %v6696 = vtanh.pop %v6694
    %v6697 = vtanh.pop %v6695
    %6698 = vst.msk [vmem:[#allocation4] sm:$0x20] %vm1544, %v6696
    %6699 = vst.msk [vmem:[#allocation4 + $0x8] sm:$0x20] %vm1544, %v6697
    %6700 = vmatprep.subr.mxu0 0.0
    %6701 = vmatpush1.msra.mxu0 %v3102
    %6702 = vmatprep.subr.mxu0 0.0
    %6703 = vmatpush1.msra.mxu0 %v3103
    %6704 = vmatprep.subr.mxu0 0.0
    %6705 = vmatpush1.msra.mxu0 %v3104
    %6706 = vmatprep.subr.mxu0 0.0
    %6707 = vmatpush1.msra.mxu0 %v3105
    %6708 = vmatprep.subr.mxu0 0.0
    %6709 = vmatpush1.msra.mxu0 0.0
    %6710 = vmatprep.subr.mxu0 0.0
    %6711 = vmatpush1.msra.mxu0 0.0
    %6712 = vmatprep.subr.mxu0 0.0
    %6713 = vmatpush1.msra.mxu0 0.0
    %6714 = vmatprep.subr.mxu0 0.0
    %6715 = vmatpush1.msra.mxu0 0.0
    %6716 = vmatprep.subr.mxu0 0.0
    %6717 = vmatpush1.msra.mxu0 0.0
    %6718 = vmatprep.subr.mxu0 0.0
    %6719 = vmatpush1.msra.mxu0 0.0
    %6720 = vmatprep.subr.mxu0 0.0
    %6721 = vmatpush1.msra.mxu0 0.0
    %6722 = vmatprep.subr.mxu0 0.0
    %6723 = vmatpush1.msra.mxu0 0.0
    %6724 = vmatprep.subr.mxu0 0.0
    %6725 = vmatpush1.msra.mxu0 0.0
    %6726 = vmatprep.subr.mxu0 0.0
    %6727 = vmatpush1.msra.mxu0 0.0
    %6728 = vmatprep.subr.mxu0 0.0
    %6729 = vmatpush1.msra.mxu0 0.0
    %6730 = vmatprep.subr.mxu0 0.0
    %6731 = vmatpush1.msra.mxu0 0.0
    %6732 = vmatprep.subr.mxu0 0.0
    %6733 = vmatpush1.msra.mxu0 0.0
    %6734 = vmatprep.subr.mxu0 0.0
    %6735 = vmatpush1.msra.mxu0 0.0
    %6736 = vmatprep.subr.mxu0 0.0
    %6737 = vmatpush1.msra.mxu0 0.0
    %6738 = vmatprep.subr.mxu0 0.0
    %6739 = vmatpush1.msra.mxu0 0.0
    %6740 = vmatprep.subr.mxu0 0.0
    %6741 = vmatpush1.msra.mxu0 0.0
    %6742 = vmatprep.subr.mxu0 0.0
    %6743 = vmatpush1.msra.mxu0 0.0
    %6744 = vmatprep.subr.mxu0 0.0
    %6745 = vmatpush1.msra.mxu0 0.0
    %6746 = vmatprep.subr.mxu0 0.0
    %6747 = vmatpush1.msra.mxu0 0.0
    %6748 = vmatprep.subr.mxu0 0.0
    %6749 = vmatpush1.msra.mxu0 0.0
    %6750 = vmatprep.subr.mxu0 0.0
    %6751 = vmatpush1.msra.mxu0 0.0
    %6752 = vmatprep.subr.mxu0 0.0
    %6753 = vmatpush1.msra.mxu0 0.0
    %6754 = vmatprep.subr.mxu0 0.0
    %6755 = vmatpush1.msra.mxu0 0.0
    %6756 = vmatprep.subr.mxu0 0.0
    %6757 = vmatpush1.msra.mxu0 0.0
    %6758 = vmatprep.subr.mxu0 0.0
    %6759 = vmatpush1.msra.mxu0 0.0
    %6760 = vmatprep.subr.mxu0 0.0
    %6761 = vmatpush1.msra.mxu0 0.0
    %6762 = vmatprep.subr.mxu0 0.0
    %6763 = vmatpush1.msra.mxu0 0.0
    %6764 = vmatprep.mubr.f32.mxu0 0.0
    %6765 = vmatmul.mubr.f32.gmra.mrb[0].mxu0 %v6540
    %v6766 = vpop.f32.mrb[0].mxu0
    %v6767 = vadd.f32 0.0, %v6766
    %v6768 = vpop.f32.mrb[0].mxu0
    %6769 = vdwg.mxu0
    %v6772 = vunpack.c.l.s4 1966171168
    %v6773 = vunpack.c.0.s8 %v6772
    %v6774 = vlaneseq
    %v6775 = vshrl.u32 %v6774, 7
    %v6776 = vsub.s32 %v6773, %v6775
    %v6777 = vrot.slane %v6767, %v6776
    %v6778 = vcombine.high %v6777, %v6777
    %v6780 = vunpack.c.l.s4 1966171168
    %v6781 = vunpack.c.0.s8 %v6780
    %v6782 = vlaneseq
    %v6783 = vshrl.u32 %v6782, 7
    %v6784 = vsub.s32 %v6781, %v6783
    %v6785 = vrot.slane %v6777, %v6784
    %v6787 = vunpack.c.l.s4 1966171168
    %v6788 = vunpack.c.0.s8 %v6787
    %v6789 = vlaneseq
    %v6790 = vshrl.u32 %v6789, 7
    %v6791 = vsub.s32 %v6788, %v6790
    %v6792 = vrot.slane %v6778, %v6791
    %v6793 = vlaneseq
    %v6794 = vshrl.u32 %v6793, 7
    %v6795 = vsub.s32 0, %v6794
    %v6796 = vrot.slane %v6785, %v6795
    %v6797 = vlaneseq
    %v6798 = vshrl.u32 %v6797, 7
    %v6799 = vsub.s32 0, %v6798
    %v6800 = vrot.slane %v6792, %v6799
    %v6803 = vadd.f32 %v3093, %v6796
    %v6804 = vadd.f32 %v3098, %v6800
    %v6805 = vtanh.pop %v6803
    %v6806 = vtanh.pop %v6804
    %v6807 = vmul.f32 %v6805, %v3502
    %v6808 = vmul.f32 %v6806, %v3502
    %v6809 = vsel %vm480, %v6807, 0.0
    %6810 = vadd.xlane.f32.xlu0 %v6809
    %v6811 = vpop.xlane.xlu0 %6810
    %v6812 = vsel %vm480, %v6808, 0.0
    %6813 = vadd.xlane.f32.xlu0 %v6812
    %v6814 = vpop.xlane.xlu0 %6813
    %v6817 = vlaneseq
    %v6818 = vshrl.u32 %v6817, 7
    %v6819 = vsub.s32 %v3515, %v6818
    %v6820 = vrot.slane %v6811, %v6819
    %v6821 = vlaneseq
    %v6822 = vshrl.u32 %v6821, 7
    %v6823 = vsub.s32 %v3515, %v6822
    %v6824 = vrot.slane %v6814, %v6823
    %v6825 = vsel %vm816, %v6824, %v6820
    %v6827 = vsel %vm3106, %v6825, -1e+09
    %v6828 = vsel %vm3527, %v6827, -inf
    %6829 = vmax.xlane.f32.xlu0 %v6828
    %v6830 = vpop.xlane.xlu0 %6829
    %v6831 = vsub.f32 %v6827, %v6830
    %v6832 = vmul.f32 %v6831, 1.442695
    %v6833 = vpow.pop %v6832
    %v6834 = vsel %vm3527, %v6833, 0.0
    %6835 = vadd.xlane.f32.xlu0 %v6834
    %v6836 = vpop.xlane.xlu0 %6835
    %v6837 = vrcp.pop %v6836
    %v6838 = vmul.f32 %v6833, %v6837
    %v6839 = vlaneseq
    %v6840 = vshrl.u32 %v6839, 7
    %v6841 = vsub.s32 0, %v6840
    %v6842 = vrot.slane %v6838, %v6841
    %6844 = vbcast.lane.b32.xlu0 %v6842, 256
    %v6845 = vpop.permute.xlu0 %6844
    %v6846 = vlaneseq
    %v6847 = vshrl.u32 %v6846, 7
    %v6848 = vsub.s32 1, %v6847
    %v6849 = vrot.slane %v6838, %v6848
    %6851 = vbcast.lane.b32.xlu0 %v6849, 256
    %v6852 = vpop.permute.xlu0 %6851
    %v6853 = vmul.f32 %v6845, %v3009
    %v6854 = vmul.f32 %v6852, %v3010
    %v6855 = vsel %vm3019, %v6853, 0.0
    %v6856 = vrot.slane %v6855, 4
    %v6857 = vadd.f32 %v6855, %v6856
    %v6858 = vrot.slane %v6857, 2
    %v6859 = vadd.f32 %v6857, %v6858
    %v6860 = vrot.slane %v6859, 1
    %v6861 = vadd.f32 %v6859, %v6860
    %v6862 = vsel %vm3019, %v6854, 0.0
    %v6863 = vrot.slane %v6862, 4
    %v6864 = vadd.f32 %v6862, %v6863
    %v6865 = vrot.slane %v6864, 2
    %v6866 = vadd.f32 %v6864, %v6865
    %v6867 = vrot.slane %v6866, 1
    %v6868 = vadd.f32 %v6866, %v6867
    %v6869 = vrot.slane %v3268, 2
    %v6871 = vadd.f32 %v3184, %v6869
    %v6872 = vadd.f32 %v3189, %v6318
    %v6875 = vsel %vm816, %v6868, %v6861
    %v6876 = vsel %vm3019, %v6875, 0
    %6878 = vmatprep.subr.mxu0 0.0
    %6879 = vmatpush1.msra.mxu0 %v3271
    %6880 = vmatprep.subr.mxu0 0.0
    %6881 = vmatpush1.msra.mxu0 %v3272
    %6882 = vmatprep.subr.mxu0 0.0
    %6883 = vmatpush1.msra.mxu0 %v3273
    %6884 = vmatprep.subr.mxu0 0.0
    %6885 = vmatpush1.msra.mxu0 %v3274
    %6886 = vmatprep.subr.mxu0 0.0
    %6887 = vmatpush1.msra.mxu0 %v3275
    %6888 = vmatprep.subr.mxu0 0.0
    %6889 = vmatpush1.msra.mxu0 %v3276
    %6890 = vmatprep.subr.mxu0 0.0
    %6891 = vmatpush1.msra.mxu0 %v3277
    %6892 = vmatprep.subr.mxu0 0.0
    %6893 = vmatpush1.msra.mxu0 %v3278
    %6894 = vmatprep.subr.mxu0 0.0
    %6895 = vmatpush1.msra.mxu0 0.0
    %6896 = vmatprep.subr.mxu0 0.0
    %6897 = vmatpush1.msra.mxu0 0.0
    %6898 = vmatprep.subr.mxu0 0.0
    %6899 = vmatpush1.msra.mxu0 0.0
    %6900 = vmatprep.subr.mxu0 0.0
    %6901 = vmatpush1.msra.mxu0 0.0
    %6902 = vmatprep.subr.mxu0 0.0
    %6903 = vmatpush1.msra.mxu0 0.0
    %6904 = vmatprep.subr.mxu0 0.0
    %6905 = vmatpush1.msra.mxu0 0.0
    %6906 = vmatprep.subr.mxu0 0.0
    %6907 = vmatpush1.msra.mxu0 0.0
    %6908 = vmatprep.subr.mxu0 0.0
    %6909 = vmatpush1.msra.mxu0 0.0
    %6910 = vmatprep.subr.mxu0 0.0
    %6911 = vmatpush1.msra.mxu0 0.0
    %6912 = vmatprep.subr.mxu0 0.0
    %6913 = vmatpush1.msra.mxu0 0.0
    %6914 = vmatprep.subr.mxu0 0.0
    %6915 = vmatpush1.msra.mxu0 0.0
    %6916 = vmatprep.subr.mxu0 0.0
    %6917 = vmatpush1.msra.mxu0 0.0
    %6918 = vmatprep.subr.mxu0 0.0
    %6919 = vmatpush1.msra.mxu0 0.0
    %6920 = vmatprep.subr.mxu0 0.0
    %6921 = vmatpush1.msra.mxu0 0.0
    %6922 = vmatprep.subr.mxu0 0.0
    %6923 = vmatpush1.msra.mxu0 0.0
    %6924 = vmatprep.subr.mxu0 0.0
    %6925 = vmatpush1.msra.mxu0 0.0
    %6926 = vmatprep.subr.mxu0 0.0
    %6927 = vmatpush1.msra.mxu0 0.0
    %6928 = vmatprep.subr.mxu0 0.0
    %6929 = vmatpush1.msra.mxu0 0.0
    %6930 = vmatprep.subr.mxu0 0.0
    %6931 = vmatpush1.msra.mxu0 0.0
    %6932 = vmatprep.subr.mxu0 0.0
    %6933 = vmatpush1.msra.mxu0 0.0
    %6934 = vmatprep.subr.mxu0 0.0
    %6935 = vmatpush1.msra.mxu0 0.0
    %6936 = vmatprep.subr.mxu0 0.0
    %6937 = vmatpush1.msra.mxu0 0.0
    %6938 = vmatprep.subr.mxu0 0.0
    %6939 = vmatpush1.msra.mxu0 0.0
    %6940 = vmatprep.subr.mxu0 0.0
    %6941 = vmatpush1.msra.mxu0 0.0
    %6942 = vmatprep.mubr.f32.mxu0 0.0
    %6943 = vmatmul.mubr.f32.gmra.mrb[0].mxu0 %v6876
    %v6944 = vpop.f32.mrb[0].mxu0
    %v6945 = vadd.f32 0.0, %v6944
    %v6946 = vpop.f32.mrb[0].mxu0
    %6947 = vdwg.mxu0
    %v6949 = vrot.slane %v6945, 2
    %v6950 = vrot.slane %v6945, 3
    %v6953 = vadd.f32 %v6871, %v6949
    %v6954 = vadd.f32 %v6872, %v6950
    %6955 = vmatprep.subr.mxu0 0.0
    %6956 = vmatpush1.msra.mxu0 %v3279
    %6957 = vmatprep.subr.mxu0 0.0
    %6958 = vmatpush1.msra.mxu0 %v3280
    %6959 = vmatprep.subr.mxu0 0.0
    %6960 = vmatpush1.msra.mxu0 %v3281
    %6961 = vmatprep.subr.mxu0 0.0
    %6962 = vmatpush1.msra.mxu0 %v3282
    %6963 = vmatprep.subr.mxu0 0.0
    %6964 = vmatpush1.msra.mxu0 0.0
    %6965 = vmatprep.subr.mxu0 0.0
    %6966 = vmatpush1.msra.mxu0 0.0
    %6967 = vmatprep.subr.mxu0 0.0
    %6968 = vmatpush1.msra.mxu0 0.0
    %6969 = vmatprep.subr.mxu0 0.0
    %6970 = vmatpush1.msra.mxu0 0.0
    %6971 = vmatprep.subr.mxu0 0.0
    %6972 = vmatpush1.msra.mxu0 0.0
    %6973 = vmatprep.subr.mxu0 0.0
    %6974 = vmatpush1.msra.mxu0 0.0
    %6975 = vmatprep.subr.mxu0 0.0
    %6976 = vmatpush1.msra.mxu0 0.0
    %6977 = vmatprep.subr.mxu0 0.0
    %6978 = vmatpush1.msra.mxu0 0.0
    %6979 = vmatprep.subr.mxu0 0.0
    %6980 = vmatpush1.msra.mxu0 0.0
    %6981 = vmatprep.subr.mxu0 0.0
    %6982 = vmatpush1.msra.mxu0 0.0
    %6983 = vmatprep.subr.mxu0 0.0
    %6984 = vmatpush1.msra.mxu0 0.0
    %6985 = vmatprep.subr.mxu0 0.0
    %6986 = vmatpush1.msra.mxu0 0.0
    %6987 = vmatprep.subr.mxu0 0.0
    %6988 = vmatpush1.msra.mxu0 0.0
    %6989 = vmatprep.subr.mxu0 0.0
    %6990 = vmatpush1.msra.mxu0 0.0
    %6991 = vmatprep.subr.mxu0 0.0
    %6992 = vmatpush1.msra.mxu0 0.0
    %6993 = vmatprep.subr.mxu0 0.0
    %6994 = vmatpush1.msra.mxu0 0.0
    %6995 = vmatprep.subr.mxu0 0.0
    %6996 = vmatpush1.msra.mxu0 0.0
    %6997 = vmatprep.subr.mxu0 0.0
    %6998 = vmatpush1.msra.mxu0 0.0
    %6999 = vmatprep.subr.mxu0 0.0
    %7000 = vmatpush1.msra.mxu0 0.0
    %7001 = vmatprep.subr.mxu0 0.0
    %7002 = vmatpush1.msra.mxu0 0.0
    %7003 = vmatprep.subr.mxu0 0.0
    %7004 = vmatpush1.msra.mxu0 0.0
    %7005 = vmatprep.subr.mxu0 0.0
    %7006 = vmatpush1.msra.mxu0 0.0
    %7007 = vmatprep.subr.mxu0 0.0
    %7008 = vmatpush1.msra.mxu0 0.0
    %7009 = vmatprep.subr.mxu0 0.0
    %7010 = vmatpush1.msra.mxu0 0.0
    %7011 = vmatprep.subr.mxu0 0.0
    %7012 = vmatpush1.msra.mxu0 0.0
    %7013 = vmatprep.subr.mxu0 0.0
    %7014 = vmatpush1.msra.mxu0 0.0
    %7015 = vmatprep.subr.mxu0 0.0
    %7016 = vmatpush1.msra.mxu0 0.0
    %7017 = vmatprep.subr.mxu0 0.0
    %7018 = vmatpush1.msra.mxu0 0.0
    %7019 = vmatprep.mubr.f32.mxu0 0.0
    %7020 = vmatmul.mubr.f32.gmra.mrb[0].mxu0 %v6540
    %v7021 = vpop.f32.mrb[0].mxu0
    %v7022 = vadd.f32 %v3288, %v7021
    %v7023 = vpop.f32.mrb[0].mxu0
    %7024 = vdwg.mxu0
    %v7026 = vrot.slane %v7022, 2
    %v7027 = vrot.slane %v7022, 3
    %v7030 = vadd.f32 %v6953, %v7026
    %v7031 = vadd.f32 %v6954, %v7027
    %v7032 = vxor.u32 %v7030, 2147483648
    %v7033 = vxor.u32 %v7031, 2147483648
    %v7034 = vmul.f32 %v7032, 1.442695
    %v7035 = vpow.pop %v7034
    %v7036 = vmul.f32 %v7033, 1.442695
    %v7037 = vpow.pop %v7036
    %v7038 = vadd.f32 %v7035, 1.0
    %v7039 = vadd.f32 %v7037, 1.0
    %v7040 = vrcp.pop %v7038
    %v7041 = vmul.f32 1.0, %v7040
    %v7042 = vrcp.pop %v7039
    %v7043 = vmul.f32 1.0, %v7042
    %7044 = vrot.lane.b32.xlu0 %v7026, 64
    %v7045 = vpop.permute.xlu0 %7044
    %7046 = vrot.lane.b32.xlu0 %v7027, 64
    %v7047 = vpop.permute.xlu0 %7046
    %v7050 = vmul.f32 %v7041, %v7045
    %v7051 = vmul.f32 %v7043, %v7047
    %7054 = vrot.lane.b32.xlu0 %v7050, 64
    %v7055 = vpop.permute.xlu0 %7054
    %7056 = vrot.lane.b32.xlu0 %v7051, 64
    %v7057 = vpop.permute.xlu0 %7056
    %v7060 = vadd.f32 %v6953, %v7055
    %v7061 = vadd.f32 %v6954, %v7057
    %v7062 = vtanh.pop %v7060
    %v7063 = vtanh.pop %v7061
    %v7064 = vsub.f32 1.0, %v7041
    %v7065 = vsub.f32 1.0, %v7043
    %7068 = vrot.lane.b32.xlu0 %v7062, 96
    %v7069 = vpop.permute.xlu0 %7068
    %7070 = vrot.lane.b32.xlu0 %v7063, 96
    %v7071 = vpop.permute.xlu0 %7070
    %v7074 = vmul.f32 %v7064, %v7069
    %v7075 = vmul.f32 %v7065, %v7071
    %v7076 = vrot.slane %v6531, 7
    %v7077 = vrot.slane %v6532, 7
    %v7080 = vmul.f32 %v7041, %v7076
    %v7081 = vmul.f32 %v7043, %v7077
    %v7082 = vadd.f32 %v7074, %v7080
    %v7083 = vadd.f32 %v7075, %v7081
    %v7086 = vrot.slane %v7082, 6
    %v7087 = vrot.slane %v7083, 5
    %v7088 = vsel %vm816, %v7087, %v7086
    %7089 = vrot.lane.b32.xlu0 %v7088, 96
    %v7090 = vpop.permute.xlu0 %7089
    %v7091 = vsel %vm480, %v7090, 0
    %7093 = vmatprep.subr.mxu0 0.0
    %7094 = vmatpush1.msra.mxu0 %v3376
    %7095 = vmatprep.subr.mxu0 0.0
    %7096 = vmatpush1.msra.mxu0 %v3377
    %7097 = vmatprep.subr.mxu0 0.0
    %7098 = vmatpush1.msra.mxu0 %v3378
    %7099 = vmatprep.subr.mxu0 0.0
    %7100 = vmatpush1.msra.mxu0 %v3379
    %7101 = vmatprep.subr.mxu0 0.0
    %7102 = vmatpush1.msra.mxu0 0.0
    %7103 = vmatprep.subr.mxu0 0.0
    %7104 = vmatpush1.msra.mxu0 0.0
    %7105 = vmatprep.subr.mxu0 0.0
    %7106 = vmatpush1.msra.mxu0 0.0
    %7107 = vmatprep.subr.mxu0 0.0
    %7108 = vmatpush1.msra.mxu0 0.0
    %7109 = vmatprep.subr.mxu0 0.0
    %7110 = vmatpush1.msra.mxu0 0.0
    %7111 = vmatprep.subr.mxu0 0.0
    %7112 = vmatpush1.msra.mxu0 0.0
    %7113 = vmatprep.subr.mxu0 0.0
    %7114 = vmatpush1.msra.mxu0 0.0
    %7115 = vmatprep.subr.mxu0 0.0
    %7116 = vmatpush1.msra.mxu0 0.0
    %7117 = vmatprep.subr.mxu0 0.0
    %7118 = vmatpush1.msra.mxu0 0.0
    %7119 = vmatprep.subr.mxu0 0.0
    %7120 = vmatpush1.msra.mxu0 0.0
    %7121 = vmatprep.subr.mxu0 0.0
    %7122 = vmatpush1.msra.mxu0 0.0
    %7123 = vmatprep.subr.mxu0 0.0
    %7124 = vmatpush1.msra.mxu0 0.0
    %7125 = vmatprep.subr.mxu0 0.0
    %7126 = vmatpush1.msra.mxu0 0.0
    %7127 = vmatprep.subr.mxu0 0.0
    %7128 = vmatpush1.msra.mxu0 0.0
    %7129 = vmatprep.subr.mxu0 0.0
    %7130 = vmatpush1.msra.mxu0 0.0
    %7131 = vmatprep.subr.mxu0 0.0
    %7132 = vmatpush1.msra.mxu0 0.0
    %7133 = vmatprep.subr.mxu0 0.0
    %7134 = vmatpush1.msra.mxu0 0.0
    %7135 = vmatprep.subr.mxu0 0.0
    %7136 = vmatpush1.msra.mxu0 0.0
    %7137 = vmatprep.subr.mxu0 0.0
    %7138 = vmatpush1.msra.mxu0 0.0
    %7139 = vmatprep.subr.mxu0 0.0
    %7140 = vmatpush1.msra.mxu0 0.0
    %7141 = vmatprep.subr.mxu0 0.0
    %7142 = vmatpush1.msra.mxu0 0.0
    %7143 = vmatprep.subr.mxu0 0.0
    %7144 = vmatpush1.msra.mxu0 0.0
    %7145 = vmatprep.subr.mxu0 0.0
    %7146 = vmatpush1.msra.mxu0 0.0
    %7147 = vmatprep.subr.mxu0 0.0
    %7148 = vmatpush1.msra.mxu0 0.0
    %7149 = vmatprep.subr.mxu0 0.0
    %7150 = vmatpush1.msra.mxu0 0.0
    %7151 = vmatprep.subr.mxu0 0.0
    %7152 = vmatpush1.msra.mxu0 0.0
    %7153 = vmatprep.subr.mxu0 0.0
    %7154 = vmatpush1.msra.mxu0 0.0
    %7155 = vmatprep.subr.mxu0 0.0
    %7156 = vmatpush1.msra.mxu0 0.0
    %7157 = vmatprep.mubr.f32.mxu0 0.0
    %7158 = vmatmul.mubr.f32.gmra.mrb[0].mxu0 %v7091
    %v7159 = vpop.f32.mrb[0].mxu0
    %v7160 = vadd.f32 0.0, %v7159
    %v7161 = vpop.f32.mrb[0].mxu0
    %7162 = vdwg.mxu0
    %v7164 = vrot.slane %v7160, 2
    %v7165 = vrot.slane %v7160, 3
    %v7168 = vadd.f32 %v3368, %v7164
    %v7169 = vadd.f32 %v3373, %v7165
    %7170 = vmatprep.subr.mxu0 0.0
    %7171 = vmatpush1.msra.mxu0 %v3380
    %7172 = vmatprep.subr.mxu0 0.0
    %7173 = vmatpush1.msra.mxu0 %v3381
    %7174 = vmatprep.subr.mxu0 0.0
    %7175 = vmatpush1.msra.mxu0 %v3382
    %7176 = vmatprep.subr.mxu0 0.0
    %7177 = vmatpush1.msra.mxu0 %v3383
    %7178 = vmatprep.subr.mxu0 0.0
    %7179 = vmatpush1.msra.mxu0 %v3384
    %7180 = vmatprep.subr.mxu0 0.0
    %7181 = vmatpush1.msra.mxu0 %v3385
    %7182 = vmatprep.subr.mxu0 0.0
    %7183 = vmatpush1.msra.mxu0 %v3386
    %7184 = vmatprep.subr.mxu0 0.0
    %7185 = vmatpush1.msra.mxu0 %v3387
    %7186 = vmatprep.subr.mxu0 0.0
    %7187 = vmatpush1.msra.mxu0 0.0
    %7188 = vmatprep.subr.mxu0 0.0
    %7189 = vmatpush1.msra.mxu0 0.0
    %7190 = vmatprep.subr.mxu0 0.0
    %7191 = vmatpush1.msra.mxu0 0.0
    %7192 = vmatprep.subr.mxu0 0.0
    %7193 = vmatpush1.msra.mxu0 0.0
    %7194 = vmatprep.subr.mxu0 0.0
    %7195 = vmatpush1.msra.mxu0 0.0
    %7196 = vmatprep.subr.mxu0 0.0
    %7197 = vmatpush1.msra.mxu0 0.0
    %7198 = vmatprep.subr.mxu0 0.0
    %7199 = vmatpush1.msra.mxu0 0.0
    %7200 = vmatprep.subr.mxu0 0.0
    %7201 = vmatpush1.msra.mxu0 0.0
    %7202 = vmatprep.subr.mxu0 0.0
    %7203 = vmatpush1.msra.mxu0 0.0
    %7204 = vmatprep.subr.mxu0 0.0
    %7205 = vmatpush1.msra.mxu0 0.0
    %7206 = vmatprep.subr.mxu0 0.0
    %7207 = vmatpush1.msra.mxu0 0.0
    %7208 = vmatprep.subr.mxu0 0.0
    %7209 = vmatpush1.msra.mxu0 0.0
    %7210 = vmatprep.subr.mxu0 0.0
    %7211 = vmatpush1.msra.mxu0 0.0
    %7212 = vmatprep.subr.mxu0 0.0
    %7213 = vmatpush1.msra.mxu0 0.0
    %7214 = vmatprep.subr.mxu0 0.0
    %7215 = vmatpush1.msra.mxu0 0.0
    %7216 = vmatprep.subr.mxu0 0.0
    %7217 = vmatpush1.msra.mxu0 0.0
    %7218 = vmatprep.subr.mxu0 0.0
    %7219 = vmatpush1.msra.mxu0 0.0
    %7220 = vmatprep.subr.mxu0 0.0
    %7221 = vmatpush1.msra.mxu0 0.0
    %7222 = vmatprep.subr.mxu0 0.0
    %7223 = vmatpush1.msra.mxu0 0.0
    %7224 = vmatprep.subr.mxu0 0.0
    %7225 = vmatpush1.msra.mxu0 0.0
    %7226 = vmatprep.subr.mxu0 0.0
    %7227 = vmatpush1.msra.mxu0 0.0
    %7228 = vmatprep.subr.mxu0 0.0
    %7229 = vmatpush1.msra.mxu0 0.0
    %7230 = vmatprep.subr.mxu0 0.0
    %7231 = vmatpush1.msra.mxu0 0.0
    %7232 = vmatprep.subr.mxu0 0.0
    %7233 = vmatpush1.msra.mxu0 0.0
    %7234 = vmatprep.mubr.f32.mxu0 0.0
    %7235 = vmatmul.mubr.f32.gmra.mrb[0].mxu0 %v6876
    %v7236 = vpop.f32.mrb[0].mxu0
    %v7237 = vadd.f32 0.0, %v7236
    %v7238 = vpop.f32.mrb[0].mxu0
    %7239 = vdwg.mxu0
    %v7241 = vrot.slane %v7237, 2
    %v7242 = vrot.slane %v7237, 3
    %v7245 = vadd.f32 %v7168, %v7241
    %v7246 = vadd.f32 %v7169, %v7242
    %v7247 = vtanh.pop %v7245
    %v7248 = vtanh.pop %v7246
    %7249 = vst.msk [vmem:[#allocation4] sm:$0x40] %vm1691, %v7247
    %7250 = vst.msk [vmem:[#allocation4 + $0x8] sm:$0x40] %vm1691, %v7248
    %7251 = vmatprep.subr.mxu0 0.0
    %7252 = vmatpush1.msra.mxu0 %v3102
    %7253 = vmatprep.subr.mxu0 0.0
    %7254 = vmatpush1.msra.mxu0 %v3103
    %7255 = vmatprep.subr.mxu0 0.0
    %7256 = vmatpush1.msra.mxu0 %v3104
    %7257 = vmatprep.subr.mxu0 0.0
    %7258 = vmatpush1.msra.mxu0 %v3105
    %7259 = vmatprep.subr.mxu0 0.0
    %7260 = vmatpush1.msra.mxu0 0.0
    %7261 = vmatprep.subr.mxu0 0.0
    %7262 = vmatpush1.msra.mxu0 0.0
    %7263 = vmatprep.subr.mxu0 0.0
    %7264 = vmatpush1.msra.mxu0 0.0
    %7265 = vmatprep.subr.mxu0 0.0
    %7266 = vmatpush1.msra.mxu0 0.0
    %7267 = vmatprep.subr.mxu0 0.0
    %7268 = vmatpush1.msra.mxu0 0.0
    %7269 = vmatprep.subr.mxu0 0.0
    %7270 = vmatpush1.msra.mxu0 0.0
    %7271 = vmatprep.subr.mxu0 0.0
    %7272 = vmatpush1.msra.mxu0 0.0
    %7273 = vmatprep.subr.mxu0 0.0
    %7274 = vmatpush1.msra.mxu0 0.0
    %7275 = vmatprep.subr.mxu0 0.0
    %7276 = vmatpush1.msra.mxu0 0.0
    %7277 = vmatprep.subr.mxu0 0.0
    %7278 = vmatpush1.msra.mxu0 0.0
    %7279 = vmatprep.subr.mxu0 0.0
    %7280 = vmatpush1.msra.mxu0 0.0
    %7281 = vmatprep.subr.mxu0 0.0
    %7282 = vmatpush1.msra.mxu0 0.0
    %7283 = vmatprep.subr.mxu0 0.0
    %7284 = vmatpush1.msra.mxu0 0.0
    %7285 = vmatprep.subr.mxu0 0.0
    %7286 = vmatpush1.msra.mxu0 0.0
    %7287 = vmatprep.subr.mxu0 0.0
    %7288 = vmatpush1.msra.mxu0 0.0
    %7289 = vmatprep.subr.mxu0 0.0
    %7290 = vmatpush1.msra.mxu0 0.0
    %7291 = vmatprep.subr.mxu0 0.0
    %7292 = vmatpush1.msra.mxu0 0.0
    %7293 = vmatprep.subr.mxu0 0.0
    %7294 = vmatpush1.msra.mxu0 0.0
    %7295 = vmatprep.subr.mxu0 0.0
    %7296 = vmatpush1.msra.mxu0 0.0
    %7297 = vmatprep.subr.mxu0 0.0
    %7298 = vmatpush1.msra.mxu0 0.0
    %7299 = vmatprep.subr.mxu0 0.0
    %7300 = vmatpush1.msra.mxu0 0.0
    %7301 = vmatprep.subr.mxu0 0.0
    %7302 = vmatpush1.msra.mxu0 0.0
    %7303 = vmatprep.subr.mxu0 0.0
    %7304 = vmatpush1.msra.mxu0 0.0
    %7305 = vmatprep.subr.mxu0 0.0
    %7306 = vmatpush1.msra.mxu0 0.0
    %7307 = vmatprep.subr.mxu0 0.0
    %7308 = vmatpush1.msra.mxu0 0.0
    %7309 = vmatprep.subr.mxu0 0.0
    %7310 = vmatpush1.msra.mxu0 0.0
    %7311 = vmatprep.subr.mxu0 0.0
    %7312 = vmatpush1.msra.mxu0 0.0
    %7313 = vmatprep.subr.mxu0 0.0
    %7314 = vmatpush1.msra.mxu0 0.0
    %7315 = vmatprep.mubr.f32.mxu0 0.0
    %7316 = vmatmul.mubr.f32.gmra.mrb[0].mxu0 %v7091
    %v7317 = vpop.f32.mrb[0].mxu0
    %v7318 = vadd.f32 0.0, %v7317
    %v7319 = vpop.f32.mrb[0].mxu0
    %7320 = vdwg.mxu0
    %v7323 = vunpack.c.l.s4 1966171168
    %v7324 = vunpack.c.0.s8 %v7323
    %v7325 = vlaneseq
    %v7326 = vshrl.u32 %v7325, 7
    %v7327 = vsub.s32 %v7324, %v7326
    %v7328 = vrot.slane %v7318, %v7327
    %v7329 = vcombine.high %v7328, %v7328
    %v7331 = vunpack.c.l.s4 1966171168
    %v7332 = vunpack.c.0.s8 %v7331
    %v7333 = vlaneseq
    %v7334 = vshrl.u32 %v7333, 7
    %v7335 = vsub.s32 %v7332, %v7334
    %v7336 = vrot.slane %v7328, %v7335
    %v7338 = vunpack.c.l.s4 1966171168
    %v7339 = vunpack.c.0.s8 %v7338
    %v7340 = vlaneseq
    %v7341 = vshrl.u32 %v7340, 7
    %v7342 = vsub.s32 %v7339, %v7341
    %v7343 = vrot.slane %v7329, %v7342
    %v7344 = vlaneseq
    %v7345 = vshrl.u32 %v7344, 7
    %v7346 = vsub.s32 0, %v7345
    %v7347 = vrot.slane %v7336, %v7346
    %v7348 = vlaneseq
    %v7349 = vshrl.u32 %v7348, 7
    %v7350 = vsub.s32 0, %v7349
    %v7351 = vrot.slane %v7343, %v7350
    %v7354 = vadd.f32 %v3093, %v7347
    %v7355 = vadd.f32 %v3098, %v7351
    %v7356 = vtanh.pop %v7354
    %v7357 = vtanh.pop %v7355
    %v7358 = vmul.f32 %v7356, %v3502
    %v7359 = vmul.f32 %v7357, %v3502
    %v7360 = vsel %vm480, %v7358, 0.0
    %7361 = vadd.xlane.f32.xlu0 %v7360
    %v7362 = vpop.xlane.xlu0 %7361
    %v7363 = vsel %vm480, %v7359, 0.0
    %7364 = vadd.xlane.f32.xlu0 %v7363
    %v7365 = vpop.xlane.xlu0 %7364
    %v7368 = vlaneseq
    %v7369 = vshrl.u32 %v7368, 7
    %v7370 = vsub.s32 %v3515, %v7369
    %v7371 = vrot.slane %v7362, %v7370
    %v7372 = vlaneseq
    %v7373 = vshrl.u32 %v7372, 7
    %v7374 = vsub.s32 %v3515, %v7373
    %v7375 = vrot.slane %v7365, %v7374
    %v7376 = vsel %vm816, %v7375, %v7371
    %v7378 = vsel %vm3106, %v7376, -1e+09
    %v7379 = vsel %vm3527, %v7378, -inf
    %7380 = vmax.xlane.f32.xlu0 %v7379
    %v7381 = vpop.xlane.xlu0 %7380
    %v7382 = vsub.f32 %v7378, %v7381
    %v7383 = vmul.f32 %v7382, 1.442695
    %v7384 = vpow.pop %v7383
    %v7385 = vsel %vm3527, %v7384, 0.0
    %7386 = vadd.xlane.f32.xlu0 %v7385
    %v7387 = vpop.xlane.xlu0 %7386
    %v7388 = vrcp.pop %v7387
    %v7389 = vmul.f32 %v7384, %v7388
    %v7390 = vlaneseq
    %v7391 = vshrl.u32 %v7390, 7
    %v7392 = vsub.s32 0, %v7391
    %v7393 = vrot.slane %v7389, %v7392
    %7395 = vbcast.lane.b32.xlu0 %v7393, 256
    %v7396 = vpop.permute.xlu0 %7395
    %v7397 = vlaneseq
    %v7398 = vshrl.u32 %v7397, 7
    %v7399 = vsub.s32 1, %v7398
    %v7400 = vrot.slane %v7389, %v7399
    %7402 = vbcast.lane.b32.xlu0 %v7400, 256
    %v7403 = vpop.permute.xlu0 %7402
    %v7404 = vmul.f32 %v7396, %v3009
    %v7405 = vmul.f32 %v7403, %v3010
    %v7406 = vsel %vm3019, %v7404, 0.0
    %v7407 = vrot.slane %v7406, 4
    %v7408 = vadd.f32 %v7406, %v7407
    %v7409 = vrot.slane %v7408, 2
    %v7410 = vadd.f32 %v7408, %v7409
    %v7411 = vrot.slane %v7410, 1
    %v7412 = vadd.f32 %v7410, %v7411
    %v7413 = vsel %vm3019, %v7405, 0.0
    %v7414 = vrot.slane %v7413, 4
    %v7415 = vadd.f32 %v7413, %v7414
    %v7416 = vrot.slane %v7415, 2
    %v7417 = vadd.f32 %v7415, %v7416
    %v7418 = vrot.slane %v7417, 1
    %v7419 = vadd.f32 %v7417, %v7418
    %v7420 = vadd.f32 %v3184, %v3570
    %v7421 = vadd.f32 %v3189, %v6869
    %v7424 = vsel %vm816, %v7419, %v7412
    %v7425 = vsel %vm3019, %v7424, 0
    %7427 = vmatprep.subr.mxu0 0.0
    %7428 = vmatpush1.msra.mxu0 %v3271
    %7429 = vmatprep.subr.mxu0 0.0
    %7430 = vmatpush1.msra.mxu0 %v3272
    %7431 = vmatprep.subr.mxu0 0.0
    %7432 = vmatpush1.msra.mxu0 %v3273
    %7433 = vmatprep.subr.mxu0 0.0
    %7434 = vmatpush1.msra.mxu0 %v3274
    %7435 = vmatprep.subr.mxu0 0.0
    %7436 = vmatpush1.msra.mxu0 %v3275
    %7437 = vmatprep.subr.mxu0 0.0
    %7438 = vmatpush1.msra.mxu0 %v3276
    %7439 = vmatprep.subr.mxu0 0.0
    %7440 = vmatpush1.msra.mxu0 %v3277
    %7441 = vmatprep.subr.mxu0 0.0
    %7442 = vmatpush1.msra.mxu0 %v3278
    %7443 = vmatprep.subr.mxu0 0.0
    %7444 = vmatpush1.msra.mxu0 0.0
    %7445 = vmatprep.subr.mxu0 0.0
    %7446 = vmatpush1.msra.mxu0 0.0
    %7447 = vmatprep.subr.mxu0 0.0
    %7448 = vmatpush1.msra.mxu0 0.0
    %7449 = vmatprep.subr.mxu0 0.0
    %7450 = vmatpush1.msra.mxu0 0.0
    %7451 = vmatprep.subr.mxu0 0.0
    %7452 = vmatpush1.msra.mxu0 0.0
    %7453 = vmatprep.subr.mxu0 0.0
    %7454 = vmatpush1.msra.mxu0 0.0
    %7455 = vmatprep.subr.mxu0 0.0
    %7456 = vmatpush1.msra.mxu0 0.0
    %7457 = vmatprep.subr.mxu0 0.0
    %7458 = vmatpush1.msra.mxu0 0.0
    %7459 = vmatprep.subr.mxu0 0.0
    %7460 = vmatpush1.msra.mxu0 0.0
    %7461 = vmatprep.subr.mxu0 0.0
    %7462 = vmatpush1.msra.mxu0 0.0
    %7463 = vmatprep.subr.mxu0 0.0
    %7464 = vmatpush1.msra.mxu0 0.0
    %7465 = vmatprep.subr.mxu0 0.0
    %7466 = vmatpush1.msra.mxu0 0.0
    %7467 = vmatprep.subr.mxu0 0.0
    %7468 = vmatpush1.msra.mxu0 0.0
    %7469 = vmatprep.subr.mxu0 0.0
    %7470 = vmatpush1.msra.mxu0 0.0
    %7471 = vmatprep.subr.mxu0 0.0
    %7472 = vmatpush1.msra.mxu0 0.0
    %7473 = vmatprep.subr.mxu0 0.0
    %7474 = vmatpush1.msra.mxu0 0.0
    %7475 = vmatprep.subr.mxu0 0.0
    %7476 = vmatpush1.msra.mxu0 0.0
    %7477 = vmatprep.subr.mxu0 0.0
    %7478 = vmatpush1.msra.mxu0 0.0
    %7479 = vmatprep.subr.mxu0 0.0
    %7480 = vmatpush1.msra.mxu0 0.0
    %7481 = vmatprep.subr.mxu0 0.0
    %7482 = vmatpush1.msra.mxu0 0.0
    %7483 = vmatprep.subr.mxu0 0.0
    %7484 = vmatpush1.msra.mxu0 0.0
    %7485 = vmatprep.subr.mxu0 0.0
    %7486 = vmatpush1.msra.mxu0 0.0
    %7487 = vmatprep.subr.mxu0 0.0
    %7488 = vmatpush1.msra.mxu0 0.0
    %7489 = vmatprep.subr.mxu0 0.0
    %7490 = vmatpush1.msra.mxu0 0.0
    %7491 = vmatprep.mubr.f32.mxu0 0.0
    %7492 = vmatmul.mubr.f32.gmra.mrb[0].mxu0 %v7425
    %v7493 = vpop.f32.mrb[0].mxu0
    %v7494 = vadd.f32 0.0, %v7493
    %v7495 = vpop.f32.mrb[0].mxu0
    %7496 = vdwg.mxu0
    %v7498 = vrot.slane %v7494, 1
    %v7499 = vrot.slane %v7494, 2
    %v7502 = vadd.f32 %v7420, %v7498
    %v7503 = vadd.f32 %v7421, %v7499
    %7504 = vmatprep.subr.mxu0 0.0
    %7505 = vmatpush1.msra.mxu0 %v3279
    %7506 = vmatprep.subr.mxu0 0.0
    %7507 = vmatpush1.msra.mxu0 %v3280
    %7508 = vmatprep.subr.mxu0 0.0
    %7509 = vmatpush1.msra.mxu0 %v3281
    %7510 = vmatprep.subr.mxu0 0.0
    %7511 = vmatpush1.msra.mxu0 %v3282
    %7512 = vmatprep.subr.mxu0 0.0
    %7513 = vmatpush1.msra.mxu0 0.0
    %7514 = vmatprep.subr.mxu0 0.0
    %7515 = vmatpush1.msra.mxu0 0.0
    %7516 = vmatprep.subr.mxu0 0.0
    %7517 = vmatpush1.msra.mxu0 0.0
    %7518 = vmatprep.subr.mxu0 0.0
    %7519 = vmatpush1.msra.mxu0 0.0
    %7520 = vmatprep.subr.mxu0 0.0
    %7521 = vmatpush1.msra.mxu0 0.0
    %7522 = vmatprep.subr.mxu0 0.0
    %7523 = vmatpush1.msra.mxu0 0.0
    %7524 = vmatprep.subr.mxu0 0.0
    %7525 = vmatpush1.msra.mxu0 0.0
    %7526 = vmatprep.subr.mxu0 0.0
    %7527 = vmatpush1.msra.mxu0 0.0
    %7528 = vmatprep.subr.mxu0 0.0
    %7529 = vmatpush1.msra.mxu0 0.0
    %7530 = vmatprep.subr.mxu0 0.0
    %7531 = vmatpush1.msra.mxu0 0.0
    %7532 = vmatprep.subr.mxu0 0.0
    %7533 = vmatpush1.msra.mxu0 0.0
    %7534 = vmatprep.subr.mxu0 0.0
    %7535 = vmatpush1.msra.mxu0 0.0
    %7536 = vmatprep.subr.mxu0 0.0
    %7537 = vmatpush1.msra.mxu0 0.0
    %7538 = vmatprep.subr.mxu0 0.0
    %7539 = vmatpush1.msra.mxu0 0.0
    %7540 = vmatprep.subr.mxu0 0.0
    %7541 = vmatpush1.msra.mxu0 0.0
    %7542 = vmatprep.subr.mxu0 0.0
    %7543 = vmatpush1.msra.mxu0 0.0
    %7544 = vmatprep.subr.mxu0 0.0
    %7545 = vmatpush1.msra.mxu0 0.0
    %7546 = vmatprep.subr.mxu0 0.0
    %7547 = vmatpush1.msra.mxu0 0.0
    %7548 = vmatprep.subr.mxu0 0.0
    %7549 = vmatpush1.msra.mxu0 0.0
    %7550 = vmatprep.subr.mxu0 0.0
    %7551 = vmatpush1.msra.mxu0 0.0
    %7552 = vmatprep.subr.mxu0 0.0
    %7553 = vmatpush1.msra.mxu0 0.0
    %7554 = vmatprep.subr.mxu0 0.0
    %7555 = vmatpush1.msra.mxu0 0.0
    %7556 = vmatprep.subr.mxu0 0.0
    %7557 = vmatpush1.msra.mxu0 0.0
    %7558 = vmatprep.subr.mxu0 0.0
    %7559 = vmatpush1.msra.mxu0 0.0
    %7560 = vmatprep.subr.mxu0 0.0
    %7561 = vmatpush1.msra.mxu0 0.0
    %7562 = vmatprep.subr.mxu0 0.0
    %7563 = vmatpush1.msra.mxu0 0.0
    %7564 = vmatprep.subr.mxu0 0.0
    %7565 = vmatpush1.msra.mxu0 0.0
    %7566 = vmatprep.subr.mxu0 0.0
    %7567 = vmatpush1.msra.mxu0 0.0
    %7568 = vmatprep.mubr.f32.mxu0 0.0
    %7569 = vmatmul.mubr.f32.gmra.mrb[0].mxu0 %v7091
    %v7570 = vpop.f32.mrb[0].mxu0
    %v7571 = vadd.f32 %v3288, %v7570
    %v7572 = vpop.f32.mrb[0].mxu0
    %7573 = vdwg.mxu0
    %v7575 = vrot.slane %v7571, 1
    %v7576 = vrot.slane %v7571, 2
    %v7579 = vadd.f32 %v7502, %v7575
    %v7580 = vadd.f32 %v7503, %v7576
    %v7581 = vxor.u32 %v7579, 2147483648
    %v7582 = vxor.u32 %v7580, 2147483648
    %v7583 = vmul.f32 %v7581, 1.442695
    %v7584 = vpow.pop %v7583
    %v7585 = vmul.f32 %v7582, 1.442695
    %v7586 = vpow.pop %v7585
    %v7587 = vadd.f32 %v7584, 1.0
    %v7588 = vadd.f32 %v7586, 1.0
    %v7589 = vrcp.pop %v7587
    %v7590 = vmul.f32 1.0, %v7589
    %v7591 = vrcp.pop %v7588
    %v7592 = vmul.f32 1.0, %v7591
    %7593 = vrot.lane.b32.xlu0 %v7575, 64
    %v7594 = vpop.permute.xlu0 %7593
    %7595 = vrot.lane.b32.xlu0 %v7576, 64
    %v7596 = vpop.permute.xlu0 %7595
    %v7599 = vmul.f32 %v7590, %v7594
    %v7600 = vmul.f32 %v7592, %v7596
    %7603 = vrot.lane.b32.xlu0 %v7599, 64
    %v7604 = vpop.permute.xlu0 %7603
    %7605 = vrot.lane.b32.xlu0 %v7600, 64
    %v7606 = vpop.permute.xlu0 %7605
    %v7609 = vadd.f32 %v7502, %v7604
    %v7610 = vadd.f32 %v7503, %v7606
    %v7611 = vtanh.pop %v7609
    %v7612 = vtanh.pop %v7610
    %v7613 = vsub.f32 1.0, %v7590
    %v7614 = vsub.f32 1.0, %v7592
    %7617 = vrot.lane.b32.xlu0 %v7611, 96
    %v7618 = vpop.permute.xlu0 %7617
    %7619 = vrot.lane.b32.xlu0 %v7612, 96
    %v7620 = vpop.permute.xlu0 %7619
    %v7623 = vmul.f32 %v7613, %v7618
    %v7624 = vmul.f32 %v7614, %v7620
    %v7625 = vrot.slane %v7082, 7
    %v7626 = vrot.slane %v7083, 7
    %v7629 = vmul.f32 %v7590, %v7625
    %v7630 = vmul.f32 %v7592, %v7626
    %v7631 = vadd.f32 %v7623, %v7629
    %v7632 = vadd.f32 %v7624, %v7630
    %v7635 = vrot.slane %v7631, 7
    %v7636 = vrot.slane %v7632, 6
    %v7637 = vsel %vm816, %v7636, %v7635
    %7638 = vrot.lane.b32.xlu0 %v7637, 96
    %v7639 = vpop.permute.xlu0 %7638
    %v7640 = vsel %vm480, %v7639, 0
    %7642 = vmatprep.subr.mxu0 0.0
    %7643 = vmatpush1.msra.mxu0 %v3376
    %7644 = vmatprep.subr.mxu0 0.0
    %7645 = vmatpush1.msra.mxu0 %v3377
    %7646 = vmatprep.subr.mxu0 0.0
    %7647 = vmatpush1.msra.mxu0 %v3378
    %7648 = vmatprep.subr.mxu0 0.0
    %7649 = vmatpush1.msra.mxu0 %v3379
    %7650 = vmatprep.subr.mxu0 0.0
    %7651 = vmatpush1.msra.mxu0 0.0
    %7652 = vmatprep.subr.mxu0 0.0
    %7653 = vmatpush1.msra.mxu0 0.0
    %7654 = vmatprep.subr.mxu0 0.0
    %7655 = vmatpush1.msra.mxu0 0.0
    %7656 = vmatprep.subr.mxu0 0.0
    %7657 = vmatpush1.msra.mxu0 0.0
    %7658 = vmatprep.subr.mxu0 0.0
    %7659 = vmatpush1.msra.mxu0 0.0
    %7660 = vmatprep.subr.mxu0 0.0
    %7661 = vmatpush1.msra.mxu0 0.0
    %7662 = vmatprep.subr.mxu0 0.0
    %7663 = vmatpush1.msra.mxu0 0.0
    %7664 = vmatprep.subr.mxu0 0.0
    %7665 = vmatpush1.msra.mxu0 0.0
    %7666 = vmatprep.subr.mxu0 0.0
    %7667 = vmatpush1.msra.mxu0 0.0
    %7668 = vmatprep.subr.mxu0 0.0
    %7669 = vmatpush1.msra.mxu0 0.0
    %7670 = vmatprep.subr.mxu0 0.0
    %7671 = vmatpush1.msra.mxu0 0.0
    %7672 = vmatprep.subr.mxu0 0.0
    %7673 = vmatpush1.msra.mxu0 0.0
    %7674 = vmatprep.subr.mxu0 0.0
    %7675 = vmatpush1.msra.mxu0 0.0
    %7676 = vmatprep.subr.mxu0 0.0
    %7677 = vmatpush1.msra.mxu0 0.0
    %7678 = vmatprep.subr.mxu0 0.0
    %7679 = vmatpush1.msra.mxu0 0.0
    %7680 = vmatprep.subr.mxu0 0.0
    %7681 = vmatpush1.msra.mxu0 0.0
    %7682 = vmatprep.subr.mxu0 0.0
    %7683 = vmatpush1.msra.mxu0 0.0
    %7684 = vmatprep.subr.mxu0 0.0
    %7685 = vmatpush1.msra.mxu0 0.0
    %7686 = vmatprep.subr.mxu0 0.0
    %7687 = vmatpush1.msra.mxu0 0.0
    %7688 = vmatprep.subr.mxu0 0.0
    %7689 = vmatpush1.msra.mxu0 0.0
    %7690 = vmatprep.subr.mxu0 0.0
    %7691 = vmatpush1.msra.mxu0 0.0
    %7692 = vmatprep.subr.mxu0 0.0
    %7693 = vmatpush1.msra.mxu0 0.0
    %7694 = vmatprep.subr.mxu0 0.0
    %7695 = vmatpush1.msra.mxu0 0.0
    %7696 = vmatprep.subr.mxu0 0.0
    %7697 = vmatpush1.msra.mxu0 0.0
    %7698 = vmatprep.subr.mxu0 0.0
    %7699 = vmatpush1.msra.mxu0 0.0
    %7700 = vmatprep.subr.mxu0 0.0
    %7701 = vmatpush1.msra.mxu0 0.0
    %7702 = vmatprep.subr.mxu0 0.0
    %7703 = vmatpush1.msra.mxu0 0.0
    %7704 = vmatprep.subr.mxu0 0.0
    %7705 = vmatpush1.msra.mxu0 0.0
    %7706 = vmatprep.mubr.f32.mxu0 0.0
    %7707 = vmatmul.mubr.f32.gmra.mrb[0].mxu0 %v7640
    %v7708 = vpop.f32.mrb[0].mxu0
    %v7709 = vadd.f32 0.0, %v7708
    %v7710 = vpop.f32.mrb[0].mxu0
    %7711 = vdwg.mxu0
    %v7713 = vrot.slane %v7709, 1
    %v7714 = vrot.slane %v7709, 2
    %v7717 = vadd.f32 %v3368, %v7713
    %v7718 = vadd.f32 %v3373, %v7714
    %7719 = vmatprep.subr.mxu0 0.0
    %7720 = vmatpush1.msra.mxu0 %v3380
    %7721 = vmatprep.subr.mxu0 0.0
    %7722 = vmatpush1.msra.mxu0 %v3381
    %7723 = vmatprep.subr.mxu0 0.0
    %7724 = vmatpush1.msra.mxu0 %v3382
    %7725 = vmatprep.subr.mxu0 0.0
    %7726 = vmatpush1.msra.mxu0 %v3383
    %7727 = vmatprep.subr.mxu0 0.0
    %7728 = vmatpush1.msra.mxu0 %v3384
    %7729 = vmatprep.subr.mxu0 0.0
    %7730 = vmatpush1.msra.mxu0 %v3385
    %7731 = vmatprep.subr.mxu0 0.0
    %7732 = vmatpush1.msra.mxu0 %v3386
    %7733 = vmatprep.subr.mxu0 0.0
    %7734 = vmatpush1.msra.mxu0 %v3387
    %7735 = vmatprep.subr.mxu0 0.0
    %7736 = vmatpush1.msra.mxu0 0.0
    %7737 = vmatprep.subr.mxu0 0.0
    %7738 = vmatpush1.msra.mxu0 0.0
    %7739 = vmatprep.subr.mxu0 0.0
    %7740 = vmatpush1.msra.mxu0 0.0
    %7741 = vmatprep.subr.mxu0 0.0
    %7742 = vmatpush1.msra.mxu0 0.0
    %7743 = vmatprep.subr.mxu0 0.0
    %7744 = vmatpush1.msra.mxu0 0.0
    %7745 = vmatprep.subr.mxu0 0.0
    %7746 = vmatpush1.msra.mxu0 0.0
    %7747 = vmatprep.subr.mxu0 0.0
    %7748 = vmatpush1.msra.mxu0 0.0
    %7749 = vmatprep.subr.mxu0 0.0
    %7750 = vmatpush1.msra.mxu0 0.0
    %7751 = vmatprep.subr.mxu0 0.0
    %7752 = vmatpush1.msra.mxu0 0.0
    %7753 = vmatprep.subr.mxu0 0.0
    %7754 = vmatpush1.msra.mxu0 0.0
    %7755 = vmatprep.subr.mxu0 0.0
    %7756 = vmatpush1.msra.mxu0 0.0
    %7757 = vmatprep.subr.mxu0 0.0
    %7758 = vmatpush1.msra.mxu0 0.0
    %7759 = vmatprep.subr.mxu0 0.0
    %7760 = vmatpush1.msra.mxu0 0.0
    %7761 = vmatprep.subr.mxu0 0.0
    %7762 = vmatpush1.msra.mxu0 0.0
    %7763 = vmatprep.subr.mxu0 0.0
    %7764 = vmatpush1.msra.mxu0 0.0
    %7765 = vmatprep.subr.mxu0 0.0
    %7766 = vmatpush1.msra.mxu0 0.0
    %7767 = vmatprep.subr.mxu0 0.0
    %7768 = vmatpush1.msra.mxu0 0.0
    %7769 = vmatprep.subr.mxu0 0.0
    %7770 = vmatpush1.msra.mxu0 0.0
    %7771 = vmatprep.subr.mxu0 0.0
    %7772 = vmatpush1.msra.mxu0 0.0
    %7773 = vmatprep.subr.mxu0 0.0
    %7774 = vmatpush1.msra.mxu0 0.0
    %7775 = vmatprep.subr.mxu0 0.0
    %7776 = vmatpush1.msra.mxu0 0.0
    %7777 = vmatprep.subr.mxu0 0.0
    %7778 = vmatpush1.msra.mxu0 0.0
    %7779 = vmatprep.subr.mxu0 0.0
    %7780 = vmatpush1.msra.mxu0 0.0
    %7781 = vmatprep.subr.mxu0 0.0
    %7782 = vmatpush1.msra.mxu0 0.0
    %7783 = vmatprep.mubr.f32.mxu0 0.0
    %7784 = vmatmul.mubr.f32.gmra.mrb[0].mxu0 %v7425
    %v7785 = vpop.f32.mrb[0].mxu0
    %v7786 = vadd.f32 0.0, %v7785
    %v7787 = vpop.f32.mrb[0].mxu0
    %7788 = vdwg.mxu0
    %v7790 = vrot.slane %v7786, 1
    %v7791 = vrot.slane %v7786, 2
    %v7794 = vadd.f32 %v7717, %v7790
    %v7795 = vadd.f32 %v7718, %v7791
    %v7796 = vtanh.pop %v7794
    %v7797 = vtanh.pop %v7795
    %7798 = vst.msk [vmem:[#allocation4] sm:$0x80] %vm1838, %v7796
    %7799 = vst.msk [vmem:[#allocation4 + $0x8] sm:$0x80] %vm1838, %v7797
    %v7800 = vld [vmem:[#allocation4] sm:$0xff]
    %v7801 = vld [vmem:[#allocation4 + $0x8] sm:$0xff]
    %v7802 = vld [vmem:[%s73] sm:$0xff]
    %v7803 = vld [vmem:[%s73 + $0x8] sm:$0xff]
    %v7804 = vld [vmem:[%s73 + $0x10] sm:$0xff]
    %v7805 = vld [vmem:[%s73 + $0x18] sm:$0xff]
    %v7807 = vsel %vm480, %v7800, 0
    %v7810 = vsel %vm480, %v7801, 0
    %7812 = vmatprep.subr.mxu0 0.0
    %7813 = vmatpush1.msra.mxu0 %v7802
    %7814 = vmatprep.subr.mxu0 0.0
    %7815 = vmatpush1.msra.mxu0 %v7803
    %7816 = vmatprep.subr.mxu0 0.0
    %7817 = vmatpush1.msra.mxu0 %v7804
    %7818 = vmatprep.subr.mxu0 0.0
    %7819 = vmatpush1.msra.mxu0 %v7805
    %7820 = vmatprep.subr.mxu0 0.0
    %7821 = vmatpush1.msra.mxu0 0.0
    %7822 = vmatprep.subr.mxu0 0.0
    %7823 = vmatpush1.msra.mxu0 0.0
    %7824 = vmatprep.subr.mxu0 0.0
    %7825 = vmatpush1.msra.mxu0 0.0
    %7826 = vmatprep.subr.mxu0 0.0
    %7827 = vmatpush1.msra.mxu0 0.0
    %7828 = vmatprep.subr.mxu0 0.0
    %7829 = vmatpush1.msra.mxu0 0.0
    %7830 = vmatprep.subr.mxu0 0.0
    %7831 = vmatpush1.msra.mxu0 0.0
    %7832 = vmatprep.subr.mxu0 0.0
    %7833 = vmatpush1.msra.mxu0 0.0
    %7834 = vmatprep.subr.mxu0 0.0
    %7835 = vmatpush1.msra.mxu0 0.0
    %7836 = vmatprep.subr.mxu0 0.0
    %7837 = vmatpush1.msra.mxu0 0.0
    %7838 = vmatprep.subr.mxu0 0.0
    %7839 = vmatpush1.msra.mxu0 0.0
    %7840 = vmatprep.subr.mxu0 0.0
    %7841 = vmatpush1.msra.mxu0 0.0
    %7842 = vmatprep.subr.mxu0 0.0
    %7843 = vmatpush1.msra.mxu0 0.0
    %7844 = vmatprep.subr.mxu0 0.0
    %7845 = vmatpush1.msra.mxu0 0.0
    %7846 = vmatprep.subr.mxu0 0.0
    %7847 = vmatpush1.msra.mxu0 0.0
    %7848 = vmatprep.subr.mxu0 0.0
    %7849 = vmatpush1.msra.mxu0 0.0
    %7850 = vmatprep.subr.mxu0 0.0
    %7851 = vmatpush1.msra.mxu0 0.0
    %7852 = vmatprep.subr.mxu0 0.0
    %7853 = vmatpush1.msra.mxu0 0.0
    %7854 = vmatprep.subr.mxu0 0.0
    %7855 = vmatpush1.msra.mxu0 0.0
    %7856 = vmatprep.subr.mxu0 0.0
    %7857 = vmatpush1.msra.mxu0 0.0
    %7858 = vmatprep.subr.mxu0 0.0
    %7859 = vmatpush1.msra.mxu0 0.0
    %7860 = vmatprep.subr.mxu0 0.0
    %7861 = vmatpush1.msra.mxu0 0.0
    %7862 = vmatprep.subr.mxu0 0.0
    %7863 = vmatpush1.msra.mxu0 0.0
    %7864 = vmatprep.subr.mxu0 0.0
    %7865 = vmatpush1.msra.mxu0 0.0
    %7866 = vmatprep.subr.mxu0 0.0
    %7867 = vmatpush1.msra.mxu0 0.0
    %7868 = vmatprep.subr.mxu0 0.0
    %7869 = vmatpush1.msra.mxu0 0.0
    %7870 = vmatprep.subr.mxu0 0.0
    %7871 = vmatpush1.msra.mxu0 0.0
    %7872 = vmatprep.subr.mxu0 0.0
    %7873 = vmatpush1.msra.mxu0 0.0
    %7874 = vmatprep.subr.mxu0 0.0
    %7875 = vmatpush1.msra.mxu0 0.0
    %7876 = vmatprep.mubr.f32.mxu0 0.0
    %7877 = vmatmul.mubr.f32.gmra.mrb[0].mxu0 %v7807
    %v7878 = vpop.f32.mrb[0].mxu0
    %v7879 = vadd.f32 0.0, %v7878
    %v7880 = vpop.f32.mrb[0].mxu0
    %7881 = vmatprep.mubr.f32.mxu0 0.0
    %7882 = vmatmul.mubr.f32.gmra.mrb[0].mxu0 %v7810
    %v7883 = vpop.f32.mrb[0].mxu0
    %v7884 = vadd.f32 0.0, %v7883
    %v7885 = vpop.f32.mrb[0].mxu0
    %7886 = vdwg.mxu0
    %7887 = vst.msk [vmem:[#allocation12] sm:$0xff] %vm3019, %v7879
    %7888 = vst.msk [vmem:[#allocation12 + $0x8] sm:$0xff] %vm3019, %v7884
    %v7889 = vld [vmem:[%s63] sm:$0xff]
    %v7890 = vld [vmem:[%s63 + $0x8] sm:$0xff]
    %v7891 = vld [vmem:[%s63 + $0x10] sm:$0xff]
    %v7892 = vld [vmem:[%s63 + $0x18] sm:$0xff]
    %7893 = vmatprep.subr.mxu0 0.0
    %7894 = vmatpush1.msra.mxu0 %v7889
    %7895 = vmatprep.subr.mxu0 0.0
    %7896 = vmatpush1.msra.mxu0 %v7890
    %7897 = vmatprep.subr.mxu0 0.0
    %7898 = vmatpush1.msra.mxu0 %v7891
    %7899 = vmatprep.subr.mxu0 0.0
    %7900 = vmatpush1.msra.mxu0 %v7892
    %7901 = vmatprep.subr.mxu0 0.0
    %7902 = vmatpush1.msra.mxu0 0.0
    %7903 = vmatprep.subr.mxu0 0.0
    %7904 = vmatpush1.msra.mxu0 0.0
    %7905 = vmatprep.subr.mxu0 0.0
    %7906 = vmatpush1.msra.mxu0 0.0
    %7907 = vmatprep.subr.mxu0 0.0
    %7908 = vmatpush1.msra.mxu0 0.0
    %7909 = vmatprep.subr.mxu0 0.0
    %7910 = vmatpush1.msra.mxu0 0.0
    %7911 = vmatprep.subr.mxu0 0.0
    %7912 = vmatpush1.msra.mxu0 0.0
    %7913 = vmatprep.subr.mxu0 0.0
    %7914 = vmatpush1.msra.mxu0 0.0
    %7915 = vmatprep.subr.mxu0 0.0
    %7916 = vmatpush1.msra.mxu0 0.0
    %7917 = vmatprep.subr.mxu0 0.0
    %7918 = vmatpush1.msra.mxu0 0.0
    %7919 = vmatprep.subr.mxu0 0.0
    %7920 = vmatpush1.msra.mxu0 0.0
    %7921 = vmatprep.subr.mxu0 0.0
    %7922 = vmatpush1.msra.mxu0 0.0
    %7923 = vmatprep.subr.mxu0 0.0
    %7924 = vmatpush1.msra.mxu0 0.0
    %7925 = vmatprep.subr.mxu0 0.0
    %7926 = vmatpush1.msra.mxu0 0.0
    %7927 = vmatprep.subr.mxu0 0.0
    %7928 = vmatpush1.msra.mxu0 0.0
    %7929 = vmatprep.subr.mxu0 0.0
    %7930 = vmatpush1.msra.mxu0 0.0
    %7931 = vmatprep.subr.mxu0 0.0
    %7932 = vmatpush1.msra.mxu0 0.0
    %7933 = vmatprep.subr.mxu0 0.0
    %7934 = vmatpush1.msra.mxu0 0.0
    %7935 = vmatprep.subr.mxu0 0.0
    %7936 = vmatpush1.msra.mxu0 0.0
    %7937 = vmatprep.subr.mxu0 0.0
    %7938 = vmatpush1.msra.mxu0 0.0
    %7939 = vmatprep.subr.mxu0 0.0
    %7940 = vmatpush1.msra.mxu0 0.0
    %7941 = vmatprep.subr.mxu0 0.0
    %7942 = vmatpush1.msra.mxu0 0.0
    %7943 = vmatprep.subr.mxu0 0.0
    %7944 = vmatpush1.msra.mxu0 0.0
    %7945 = vmatprep.subr.mxu0 0.0
    %7946 = vmatpush1.msra.mxu0 0.0
    %7947 = vmatprep.subr.mxu0 0.0
    %7948 = vmatpush1.msra.mxu0 0.0
    %7949 = vmatprep.subr.mxu0 0.0
    %7950 = vmatpush1.msra.mxu0 0.0
    %7951 = vmatprep.subr.mxu0 0.0
    %7952 = vmatpush1.msra.mxu0 0.0
    %7953 = vmatprep.subr.mxu0 0.0
    %7954 = vmatpush1.msra.mxu0 0.0
    %7955 = vmatprep.subr.mxu0 0.0
    %7956 = vmatpush1.msra.mxu0 0.0
    %7957 = vmatprep.mubr.f32.mxu0 0.0
    %7958 = vmatmul.mubr.f32.gmra.mrb[0].mxu0 %v482
    %v7959 = vpop.f32.mrb[0].mxu0
    %v7960 = vadd.f32 0.0, %v7959
    %v7961 = vpop.f32.mrb[0].mxu0
    %7962 = vmatprep.mubr.f32.mxu0 0.0
    %7963 = vmatmul.mubr.f32.gmra.mrb[0].mxu0 %v485
    %v7964 = vpop.f32.mrb[0].mxu0
    %v7965 = vadd.f32 0.0, %v7964
    %v7966 = vpop.f32.mrb[0].mxu0
    %7967 = vdwg.mxu0
    %v7968 = vld [vmem:[%s65] sm:$0xff]
    %v7969 = vld [vmem:[%s65 + $0x8] sm:$0xff]
    %v7970 = vld [vmem:[%s69] sm:$0x1]
    %v7972 = vlaneseq
    %v7973 = vshrl.u32 %v7972, 7
    %v7974 = vsub.s32 0, %v7973
    %v7975 = vrot.slane %v7970, %v7974
    %7977 = vmatprep.subr.mxu0 0.0
    %7978 = vmatpush1.msra.mxu0 %v7968
    %7979 = vmatprep.subr.mxu0 0.0
    %7980 = vmatpush1.msra.mxu0 %v7969
    %7981 = vmatprep.subr.mxu0 0.0
    %7982 = vmatpush1.msra.mxu0 0.0
    %7983 = vmatprep.subr.mxu0 0.0
    %7984 = vmatpush1.msra.mxu0 0.0
    %7985 = vmatprep.subr.mxu0 0.0
    %7986 = vmatpush1.msra.mxu0 0.0
    %7987 = vmatprep.subr.mxu0 0.0
    %7988 = vmatpush1.msra.mxu0 0.0
    %7989 = vmatprep.subr.mxu0 0.0
    %7990 = vmatpush1.msra.mxu0 0.0
    %7991 = vmatprep.subr.mxu0 0.0
    %7992 = vmatpush1.msra.mxu0 0.0
    %7993 = vmatprep.subr.mxu0 0.0
    %7994 = vmatpush1.msra.mxu0 0.0
    %7995 = vmatprep.subr.mxu0 0.0
    %7996 = vmatpush1.msra.mxu0 0.0
    %7997 = vmatprep.subr.mxu0 0.0
    %7998 = vmatpush1.msra.mxu0 0.0
    %7999 = vmatprep.subr.mxu0 0.0
    %8000 = vmatpush1.msra.mxu0 0.0
    %8001 = vmatprep.subr.mxu0 0.0
    %8002 = vmatpush1.msra.mxu0 0.0
    %8003 = vmatprep.subr.mxu0 0.0
    %8004 = vmatpush1.msra.mxu0 0.0
    %8005 = vmatprep.subr.mxu0 0.0
    %8006 = vmatpush1.msra.mxu0 0.0
    %8007 = vmatprep.subr.mxu0 0.0
    %8008 = vmatpush1.msra.mxu0 0.0
    %8009 = vmatprep.subr.mxu0 0.0
    %8010 = vmatpush1.msra.mxu0 0.0
    %8011 = vmatprep.subr.mxu0 0.0
    %8012 = vmatpush1.msra.mxu0 0.0
    %8013 = vmatprep.subr.mxu0 0.0
    %8014 = vmatpush1.msra.mxu0 0.0
    %8015 = vmatprep.subr.mxu0 0.0
    %8016 = vmatpush1.msra.mxu0 0.0
    %8017 = vmatprep.subr.mxu0 0.0
    %8018 = vmatpush1.msra.mxu0 0.0
    %8019 = vmatprep.subr.mxu0 0.0
    %8020 = vmatpush1.msra.mxu0 0.0
    %8021 = vmatprep.subr.mxu0 0.0
    %8022 = vmatpush1.msra.mxu0 0.0
    %8023 = vmatprep.subr.mxu0 0.0
    %8024 = vmatpush1.msra.mxu0 0.0
    %8025 = vmatprep.subr.mxu0 0.0
    %8026 = vmatpush1.msra.mxu0 0.0
    %8027 = vmatprep.subr.mxu0 0.0
    %8028 = vmatpush1.msra.mxu0 0.0
    %8029 = vmatprep.subr.mxu0 0.0
    %8030 = vmatpush1.msra.mxu0 0.0
    %8031 = vmatprep.subr.mxu0 0.0
    %8032 = vmatpush1.msra.mxu0 0.0
    %8033 = vmatprep.subr.mxu0 0.0
    %8034 = vmatpush1.msra.mxu0 0.0
    %8035 = vmatprep.subr.mxu0 0.0
    %8036 = vmatpush1.msra.mxu0 0.0
    %8037 = vmatprep.subr.mxu0 0.0
    %8038 = vmatpush1.msra.mxu0 0.0
    %8039 = vmatprep.subr.mxu0 0.0
    %8040 = vmatpush1.msra.mxu0 0.0
    %8041 = vmatprep.mubr.f32.mxu0 0.0
    %8042 = vmatmul.mubr.f32.gmra.mrb[0].mxu0 %v236
    %v8043 = vpop.f32.mrb[0].mxu0
    %v8044 = vadd.f32 %v7975, %v8043
    %v8045 = vpop.f32.mrb[0].mxu0
    %8046 = vdwg.mxu0
    %v8047 = vld [vmem:[%s67] sm:$0xff]
    %v8048 = vld [vmem:[%s67 + $0x8] sm:$0xff]
    %v8049 = vld [vmem:[%s67 + $0x10] sm:$0xff]
    %v8050 = vld [vmem:[%s67 + $0x18] sm:$0xff]
    %v8051 = vld [vmem:[#allocation6] sm:$0x1]
    %v8053 = vlaneseq
    %v8054 = vshrl.u32 %v8053, 7
    %v8055 = vsub.s32 0, %v8054
    %v8056 = vrot.slane %v8051, %v8055
    %v8059 = vrot.slane %v8044, 1
    %v8062 = vadd.f32 %v7960, %v8044
    %v8063 = vadd.f32 %v7965, %v8059
    %v8065 = vsel %vm480, %v468, 0
    %8067 = vmatprep.subr.mxu0 0.0
    %8068 = vmatpush1.msra.mxu0 %v8047
    %8069 = vmatprep.subr.mxu0 0.0
    %8070 = vmatpush1.msra.mxu0 %v8048
    %8071 = vmatprep.subr.mxu0 0.0
    %8072 = vmatpush1.msra.mxu0 %v8049
    %8073 = vmatprep.subr.mxu0 0.0
    %8074 = vmatpush1.msra.mxu0 %v8050
    %8075 = vmatprep.subr.mxu0 0.0
    %8076 = vmatpush1.msra.mxu0 0.0
    %8077 = vmatprep.subr.mxu0 0.0
    %8078 = vmatpush1.msra.mxu0 0.0
    %8079 = vmatprep.subr.mxu0 0.0
    %8080 = vmatpush1.msra.mxu0 0.0
    %8081 = vmatprep.subr.mxu0 0.0
    %8082 = vmatpush1.msra.mxu0 0.0
    %8083 = vmatprep.subr.mxu0 0.0
    %8084 = vmatpush1.msra.mxu0 0.0
    %8085 = vmatprep.subr.mxu0 0.0
    %8086 = vmatpush1.msra.mxu0 0.0
    %8087 = vmatprep.subr.mxu0 0.0
    %8088 = vmatpush1.msra.mxu0 0.0
    %8089 = vmatprep.subr.mxu0 0.0
    %8090 = vmatpush1.msra.mxu0 0.0
    %8091 = vmatprep.subr.mxu0 0.0
    %8092 = vmatpush1.msra.mxu0 0.0
    %8093 = vmatprep.subr.mxu0 0.0
    %8094 = vmatpush1.msra.mxu0 0.0
    %8095 = vmatprep.subr.mxu0 0.0
    %8096 = vmatpush1.msra.mxu0 0.0
    %8097 = vmatprep.subr.mxu0 0.0
    %8098 = vmatpush1.msra.mxu0 0.0
    %8099 = vmatprep.subr.mxu0 0.0
    %8100 = vmatpush1.msra.mxu0 0.0
    %8101 = vmatprep.subr.mxu0 0.0
    %8102 = vmatpush1.msra.mxu0 0.0
    %8103 = vmatprep.subr.mxu0 0.0
    %8104 = vmatpush1.msra.mxu0 0.0
    %8105 = vmatprep.subr.mxu0 0.0
    %8106 = vmatpush1.msra.mxu0 0.0
    %8107 = vmatprep.subr.mxu0 0.0
    %8108 = vmatpush1.msra.mxu0 0.0
    %8109 = vmatprep.subr.mxu0 0.0
    %8110 = vmatpush1.msra.mxu0 0.0
    %8111 = vmatprep.subr.mxu0 0.0
    %8112 = vmatpush1.msra.mxu0 0.0
    %8113 = vmatprep.subr.mxu0 0.0
    %8114 = vmatpush1.msra.mxu0 0.0
    %8115 = vmatprep.subr.mxu0 0.0
    %8116 = vmatpush1.msra.mxu0 0.0
    %8117 = vmatprep.subr.mxu0 0.0
    %8118 = vmatpush1.msra.mxu0 0.0
    %8119 = vmatprep.subr.mxu0 0.0
    %8120 = vmatpush1.msra.mxu0 0.0
    %8121 = vmatprep.subr.mxu0 0.0
    %8122 = vmatpush1.msra.mxu0 0.0
    %8123 = vmatprep.subr.mxu0 0.0
    %8124 = vmatpush1.msra.mxu0 0.0
    %8125 = vmatprep.subr.mxu0 0.0
    %8126 = vmatpush1.msra.mxu0 0.0
    %8127 = vmatprep.subr.mxu0 0.0
    %8128 = vmatpush1.msra.mxu0 0.0
    %8129 = vmatprep.subr.mxu0 0.0
    %8130 = vmatpush1.msra.mxu0 0.0
    %8131 = vmatprep.mubr.f32.mxu0 0.0
    %8132 = vmatmul.mubr.f32.gmra.mrb[0].mxu0 %v8065
    %v8133 = vpop.f32.mrb[0].mxu0
    %v8134 = vadd.f32 %v8056, %v8133
    %v8135 = vpop.f32.mrb[0].mxu0
    %8136 = vdwg.mxu0
    %v8138 = vrot.slane %v8134, 1
    %v8141 = vadd.f32 %v8062, %v8134
    %v8142 = vadd.f32 %v8063, %v8138
    %v8143 = vxor.u32 %v8141, 2147483648
    %v8144 = vxor.u32 %v8142, 2147483648
    %v8145 = vmul.f32 %v8143, 1.442695
    %v8146 = vpow.pop %v8145
    %v8147 = vmul.f32 %v8144, 1.442695
    %v8148 = vpow.pop %v8147
    %v8149 = vadd.f32 %v8146, 1.0
    %v8150 = vadd.f32 %v8148, 1.0
    %v8151 = vrcp.pop %v8149
    %v8152 = vmul.f32 1.0, %v8151
    %v8153 = vrcp.pop %v8150
    %v8154 = vmul.f32 1.0, %v8153
    %8155 = vrot.lane.b32.xlu0 %v8134, 64
    %v8156 = vpop.permute.xlu0 %8155
    %8157 = vrot.lane.b32.xlu0 %v8138, 64
    %v8158 = vpop.permute.xlu0 %8157
    %v8161 = vmul.f32 %v8152, %v8156
    %v8162 = vmul.f32 %v8154, %v8158
    %8165 = vrot.lane.b32.xlu0 %v8161, 64
    %v8166 = vpop.permute.xlu0 %8165
    %8167 = vrot.lane.b32.xlu0 %v8162, 64
    %v8168 = vpop.permute.xlu0 %8167
    %v8171 = vadd.f32 %v8062, %v8166
    %v8172 = vadd.f32 %v8063, %v8168
    %v8173 = vtanh.pop %v8171
    %v8174 = vtanh.pop %v8172
    %v8175 = vsub.f32 1.0, %v8152
    %v8176 = vsub.f32 1.0, %v8154
    %8179 = vrot.lane.b32.xlu0 %v8173, 96
    %v8180 = vpop.permute.xlu0 %8179
    %8181 = vrot.lane.b32.xlu0 %v8174, 96
    %v8182 = vpop.permute.xlu0 %8181
    %v8185 = vmul.f32 %v8175, %v8180
    %v8186 = vmul.f32 %v8176, %v8182
    %v8187 = vrot.slane %v468, 1
    %8188 = vrot.lane.b32.xlu0 %v468, 32
    %v8189 = vpop.permute.xlu0 %8188
    %8190 = vrot.lane.b32.xlu0 %v8187, 32
    %v8191 = vpop.permute.xlu0 %8190
    %v8194 = vmul.f32 %v8152, %v8189
    %v8195 = vmul.f32 %v8154, %v8191
    %v8196 = vadd.f32 %v8185, %v8194
    %v8197 = vadd.f32 %v8186, %v8195
    %8200 = vrot.lane.b32.xlu0 %v8196, 96
    %v8201 = vpop.permute.xlu0 %8200
    %8202 = vrot.lane.b32.xlu0 %v8197, 96
    %v8203 = vpop.permute.xlu0 %8202
    %8206 = vst.msk [vmem:[#allocation5] sm:$0x1] %vm812, %v8201
    %8207 = vst.msk [vmem:[#allocation5 + $0x8] sm:$0x1] %vm812, %v8203
    %v8208 = vrot.slane %v8044, 7
    %v8210 = vadd.f32 %v7960, %v8208
    %v8211 = vadd.f32 %v7965, %v8044
    %v8212 = vrot.slane %v8197, 7
    %v8213 = vsel %vm816, %v8212, %v8196
    %8214 = vrot.lane.b32.xlu0 %v8213, 96
    %v8215 = vpop.permute.xlu0 %8214
    %v8216 = vsel %vm480, %v8215, 0
    %8218 = vmatprep.subr.mxu0 0.0
    %8219 = vmatpush1.msra.mxu0 %v8047
    %8220 = vmatprep.subr.mxu0 0.0
    %8221 = vmatpush1.msra.mxu0 %v8048
    %8222 = vmatprep.subr.mxu0 0.0
    %8223 = vmatpush1.msra.mxu0 %v8049
    %8224 = vmatprep.subr.mxu0 0.0
    %8225 = vmatpush1.msra.mxu0 %v8050
    %8226 = vmatprep.subr.mxu0 0.0
    %8227 = vmatpush1.msra.mxu0 0.0
    %8228 = vmatprep.subr.mxu0 0.0
    %8229 = vmatpush1.msra.mxu0 0.0
    %8230 = vmatprep.subr.mxu0 0.0
    %8231 = vmatpush1.msra.mxu0 0.0
    %8232 = vmatprep.subr.mxu0 0.0
    %8233 = vmatpush1.msra.mxu0 0.0
    %8234 = vmatprep.subr.mxu0 0.0
    %8235 = vmatpush1.msra.mxu0 0.0
    %8236 = vmatprep.subr.mxu0 0.0
    %8237 = vmatpush1.msra.mxu0 0.0
    %8238 = vmatprep.subr.mxu0 0.0
    %8239 = vmatpush1.msra.mxu0 0.0
    %8240 = vmatprep.subr.mxu0 0.0
    %8241 = vmatpush1.msra.mxu0 0.0
    %8242 = vmatprep.subr.mxu0 0.0
    %8243 = vmatpush1.msra.mxu0 0.0
    %8244 = vmatprep.subr.mxu0 0.0
    %8245 = vmatpush1.msra.mxu0 0.0
    %8246 = vmatprep.subr.mxu0 0.0
    %8247 = vmatpush1.msra.mxu0 0.0
    %8248 = vmatprep.subr.mxu0 0.0
    %8249 = vmatpush1.msra.mxu0 0.0
    %8250 = vmatprep.subr.mxu0 0.0
    %8251 = vmatpush1.msra.mxu0 0.0
    %8252 = vmatprep.subr.mxu0 0.0
    %8253 = vmatpush1.msra.mxu0 0.0
    %8254 = vmatprep.subr.mxu0 0.0
    %8255 = vmatpush1.msra.mxu0 0.0
    %8256 = vmatprep.subr.mxu0 0.0
    %8257 = vmatpush1.msra.mxu0 0.0
    %8258 = vmatprep.subr.mxu0 0.0
    %8259 = vmatpush1.msra.mxu0 0.0
    %8260 = vmatprep.subr.mxu0 0.0
    %8261 = vmatpush1.msra.mxu0 0.0
    %8262 = vmatprep.subr.mxu0 0.0
    %8263 = vmatpush1.msra.mxu0 0.0
    %8264 = vmatprep.subr.mxu0 0.0
    %8265 = vmatpush1.msra.mxu0 0.0
    %8266 = vmatprep.subr.mxu0 0.0
    %8267 = vmatpush1.msra.mxu0 0.0
    %8268 = vmatprep.subr.mxu0 0.0
    %8269 = vmatpush1.msra.mxu0 0.0
    %8270 = vmatprep.subr.mxu0 0.0
    %8271 = vmatpush1.msra.mxu0 0.0
    %8272 = vmatprep.subr.mxu0 0.0
    %8273 = vmatpush1.msra.mxu0 0.0
    %8274 = vmatprep.subr.mxu0 0.0
    %8275 = vmatpush1.msra.mxu0 0.0
    %8276 = vmatprep.subr.mxu0 0.0
    %8277 = vmatpush1.msra.mxu0 0.0
    %8278 = vmatprep.subr.mxu0 0.0
    %8279 = vmatpush1.msra.mxu0 0.0
    %8280 = vmatprep.subr.mxu0 0.0
    %8281 = vmatpush1.msra.mxu0 0.0
    %8282 = vmatprep.mubr.f32.mxu0 0.0
    %8283 = vmatmul.mubr.f32.gmra.mrb[0].mxu0 %v8216
    %v8284 = vpop.f32.mrb[0].mxu0
    %v8285 = vadd.f32 %v8056, %v8284
    %v8286 = vpop.f32.mrb[0].mxu0
    %8287 = vdwg.mxu0
    %v8289 = vrot.slane %v8285, 7
    %v8292 = vadd.f32 %v8210, %v8289
    %v8293 = vadd.f32 %v8211, %v8285
    %v8294 = vxor.u32 %v8292, 2147483648
    %v8295 = vxor.u32 %v8293, 2147483648
    %v8296 = vmul.f32 %v8294, 1.442695
    %v8297 = vpow.pop %v8296
    %v8298 = vmul.f32 %v8295, 1.442695
    %v8299 = vpow.pop %v8298
    %v8300 = vadd.f32 %v8297, 1.0
    %v8301 = vadd.f32 %v8299, 1.0
    %v8302 = vrcp.pop %v8300
    %v8303 = vmul.f32 1.0, %v8302
    %v8304 = vrcp.pop %v8301
    %v8305 = vmul.f32 1.0, %v8304
    %8306 = vrot.lane.b32.xlu0 %v8289, 64
    %v8307 = vpop.permute.xlu0 %8306
    %8308 = vrot.lane.b32.xlu0 %v8285, 64
    %v8309 = vpop.permute.xlu0 %8308
    %v8312 = vmul.f32 %v8303, %v8307
    %v8313 = vmul.f32 %v8305, %v8309
    %8316 = vrot.lane.b32.xlu0 %v8312, 64
    %v8317 = vpop.permute.xlu0 %8316
    %8318 = vrot.lane.b32.xlu0 %v8313, 64
    %v8319 = vpop.permute.xlu0 %8318
    %v8322 = vadd.f32 %v8210, %v8317
    %v8323 = vadd.f32 %v8211, %v8319
    %v8324 = vtanh.pop %v8322
    %v8325 = vtanh.pop %v8323
    %v8326 = vsub.f32 1.0, %v8303
    %v8327 = vsub.f32 1.0, %v8305
    %8330 = vrot.lane.b32.xlu0 %v8324, 96
    %v8331 = vpop.permute.xlu0 %8330
    %8332 = vrot.lane.b32.xlu0 %v8325, 96
    %v8333 = vpop.permute.xlu0 %8332
    %v8336 = vmul.f32 %v8326, %v8331
    %v8337 = vmul.f32 %v8327, %v8333
    %v8338 = vrot.slane %v8196, 7
    %v8341 = vmul.f32 %v8303, %v8338
    %v8342 = vmul.f32 %v8305, %v8212
    %v8343 = vadd.f32 %v8336, %v8341
    %v8344 = vadd.f32 %v8337, %v8342
    %8347 = vrot.lane.b32.xlu0 %v8343, 96
    %v8348 = vpop.permute.xlu0 %8347
    %8349 = vrot.lane.b32.xlu0 %v8344, 96
    %v8350 = vpop.permute.xlu0 %8349
    %8353 = vst.msk [vmem:[#allocation5] sm:$0x2] %vm957, %v8348
    %8354 = vst.msk [vmem:[#allocation5 + $0x8] sm:$0x2] %vm957, %v8350
    %v8355 = vrot.slane %v8044, 6
    %v8357 = vadd.f32 %v7960, %v8355
    %v8358 = vadd.f32 %v7965, %v8208
    %v8359 = vrot.slane %v8343, 1
    %v8360 = vsel %vm816, %v8344, %v8359
    %8361 = vrot.lane.b32.xlu0 %v8360, 96
    %v8362 = vpop.permute.xlu0 %8361
    %v8363 = vsel %vm480, %v8362, 0
    %8365 = vmatprep.subr.mxu0 0.0
    %8366 = vmatpush1.msra.mxu0 %v8047
    %8367 = vmatprep.subr.mxu0 0.0
    %8368 = vmatpush1.msra.mxu0 %v8048
    %8369 = vmatprep.subr.mxu0 0.0
    %8370 = vmatpush1.msra.mxu0 %v8049
    %8371 = vmatprep.subr.mxu0 0.0
    %8372 = vmatpush1.msra.mxu0 %v8050
    %8373 = vmatprep.subr.mxu0 0.0
    %8374 = vmatpush1.msra.mxu0 0.0
    %8375 = vmatprep.subr.mxu0 0.0
    %8376 = vmatpush1.msra.mxu0 0.0
    %8377 = vmatprep.subr.mxu0 0.0
    %8378 = vmatpush1.msra.mxu0 0.0
    %8379 = vmatprep.subr.mxu0 0.0
    %8380 = vmatpush1.msra.mxu0 0.0
    %8381 = vmatprep.subr.mxu0 0.0
    %8382 = vmatpush1.msra.mxu0 0.0
    %8383 = vmatprep.subr.mxu0 0.0
    %8384 = vmatpush1.msra.mxu0 0.0
    %8385 = vmatprep.subr.mxu0 0.0
    %8386 = vmatpush1.msra.mxu0 0.0
    %8387 = vmatprep.subr.mxu0 0.0
    %8388 = vmatpush1.msra.mxu0 0.0
    %8389 = vmatprep.subr.mxu0 0.0
    %8390 = vmatpush1.msra.mxu0 0.0
    %8391 = vmatprep.subr.mxu0 0.0
    %8392 = vmatpush1.msra.mxu0 0.0
    %8393 = vmatprep.subr.mxu0 0.0
    %8394 = vmatpush1.msra.mxu0 0.0
    %8395 = vmatprep.subr.mxu0 0.0
    %8396 = vmatpush1.msra.mxu0 0.0
    %8397 = vmatprep.subr.mxu0 0.0
    %8398 = vmatpush1.msra.mxu0 0.0
    %8399 = vmatprep.subr.mxu0 0.0
    %8400 = vmatpush1.msra.mxu0 0.0
    %8401 = vmatprep.subr.mxu0 0.0
    %8402 = vmatpush1.msra.mxu0 0.0
    %8403 = vmatprep.subr.mxu0 0.0
    %8404 = vmatpush1.msra.mxu0 0.0
    %8405 = vmatprep.subr.mxu0 0.0
    %8406 = vmatpush1.msra.mxu0 0.0
    %8407 = vmatprep.subr.mxu0 0.0
    %8408 = vmatpush1.msra.mxu0 0.0
    %8409 = vmatprep.subr.mxu0 0.0
    %8410 = vmatpush1.msra.mxu0 0.0
    %8411 = vmatprep.subr.mxu0 0.0
    %8412 = vmatpush1.msra.mxu0 0.0
    %8413 = vmatprep.subr.mxu0 0.0
    %8414 = vmatpush1.msra.mxu0 0.0
    %8415 = vmatprep.subr.mxu0 0.0
    %8416 = vmatpush1.msra.mxu0 0.0
    %8417 = vmatprep.subr.mxu0 0.0
    %8418 = vmatpush1.msra.mxu0 0.0
    %8419 = vmatprep.subr.mxu0 0.0
    %8420 = vmatpush1.msra.mxu0 0.0
    %8421 = vmatprep.subr.mxu0 0.0
    %8422 = vmatpush1.msra.mxu0 0.0
    %8423 = vmatprep.subr.mxu0 0.0
    %8424 = vmatpush1.msra.mxu0 0.0
    %8425 = vmatprep.subr.mxu0 0.0
    %8426 = vmatpush1.msra.mxu0 0.0
    %8427 = vmatprep.subr.mxu0 0.0
    %8428 = vmatpush1.msra.mxu0 0.0
    %8429 = vmatprep.mubr.f32.mxu0 0.0
    %8430 = vmatmul.mubr.f32.gmra.mrb[0].mxu0 %v8363
    %v8431 = vpop.f32.mrb[0].mxu0
    %v8432 = vadd.f32 %v8056, %v8431
    %v8433 = vpop.f32.mrb[0].mxu0
    %8434 = vdwg.mxu0
    %v8436 = vrot.slane %v8432, 6
    %v8437 = vrot.slane %v8432, 7
    %v8440 = vadd.f32 %v8357, %v8436
    %v8441 = vadd.f32 %v8358, %v8437
    %v8442 = vxor.u32 %v8440, 2147483648
    %v8443 = vxor.u32 %v8441, 2147483648
    %v8444 = vmul.f32 %v8442, 1.442695
    %v8445 = vpow.pop %v8444
    %v8446 = vmul.f32 %v8443, 1.442695
    %v8447 = vpow.pop %v8446
    %v8448 = vadd.f32 %v8445, 1.0
    %v8449 = vadd.f32 %v8447, 1.0
    %v8450 = vrcp.pop %v8448
    %v8451 = vmul.f32 1.0, %v8450
    %v8452 = vrcp.pop %v8449
    %v8453 = vmul.f32 1.0, %v8452
    %8454 = vrot.lane.b32.xlu0 %v8436, 64
    %v8455 = vpop.permute.xlu0 %8454
    %8456 = vrot.lane.b32.xlu0 %v8437, 64
    %v8457 = vpop.permute.xlu0 %8456
    %v8460 = vmul.f32 %v8451, %v8455
    %v8461 = vmul.f32 %v8453, %v8457
    %8464 = vrot.lane.b32.xlu0 %v8460, 64
    %v8465 = vpop.permute.xlu0 %8464
    %8466 = vrot.lane.b32.xlu0 %v8461, 64
    %v8467 = vpop.permute.xlu0 %8466
    %v8470 = vadd.f32 %v8357, %v8465
    %v8471 = vadd.f32 %v8358, %v8467
    %v8472 = vtanh.pop %v8470
    %v8473 = vtanh.pop %v8471
    %v8474 = vsub.f32 1.0, %v8451
    %v8475 = vsub.f32 1.0, %v8453
    %8478 = vrot.lane.b32.xlu0 %v8472, 96
    %v8479 = vpop.permute.xlu0 %8478
    %8480 = vrot.lane.b32.xlu0 %v8473, 96
    %v8481 = vpop.permute.xlu0 %8480
    %v8484 = vmul.f32 %v8474, %v8479
    %v8485 = vmul.f32 %v8475, %v8481
    %v8486 = vrot.slane %v8343, 7
    %v8487 = vrot.slane %v8344, 7
    %v8490 = vmul.f32 %v8451, %v8486
    %v8491 = vmul.f32 %v8453, %v8487
    %v8492 = vadd.f32 %v8484, %v8490
    %v8493 = vadd.f32 %v8485, %v8491
    %8496 = vrot.lane.b32.xlu0 %v8492, 96
    %v8497 = vpop.permute.xlu0 %8496
    %8498 = vrot.lane.b32.xlu0 %v8493, 96
    %v8499 = vpop.permute.xlu0 %8498
    %8502 = vst.msk [vmem:[#allocation5] sm:$0x4] %vm1103, %v8497
    %8503 = vst.msk [vmem:[#allocation5 + $0x8] sm:$0x4] %vm1103, %v8499
    %v8504 = vrot.slane %v8044, 5
    %v8506 = vadd.f32 %v7960, %v8504
    %v8507 = vadd.f32 %v7965, %v8355
    %v8508 = vrot.slane %v8492, 2
    %v8509 = vrot.slane %v8493, 1
    %v8510 = vsel %vm816, %v8509, %v8508
    %8511 = vrot.lane.b32.xlu0 %v8510, 96
    %v8512 = vpop.permute.xlu0 %8511
    %v8513 = vsel %vm480, %v8512, 0
    %8515 = vmatprep.subr.mxu0 0.0
    %8516 = vmatpush1.msra.mxu0 %v8047
    %8517 = vmatprep.subr.mxu0 0.0
    %8518 = vmatpush1.msra.mxu0 %v8048
    %8519 = vmatprep.subr.mxu0 0.0
    %8520 = vmatpush1.msra.mxu0 %v8049
    %8521 = vmatprep.subr.mxu0 0.0
    %8522 = vmatpush1.msra.mxu0 %v8050
    %8523 = vmatprep.subr.mxu0 0.0
    %8524 = vmatpush1.msra.mxu0 0.0
    %8525 = vmatprep.subr.mxu0 0.0
    %8526 = vmatpush1.msra.mxu0 0.0
    %8527 = vmatprep.subr.mxu0 0.0
    %8528 = vmatpush1.msra.mxu0 0.0
    %8529 = vmatprep.subr.mxu0 0.0
    %8530 = vmatpush1.msra.mxu0 0.0
    %8531 = vmatprep.subr.mxu0 0.0
    %8532 = vmatpush1.msra.mxu0 0.0
    %8533 = vmatprep.subr.mxu0 0.0
    %8534 = vmatpush1.msra.mxu0 0.0
    %8535 = vmatprep.subr.mxu0 0.0
    %8536 = vmatpush1.msra.mxu0 0.0
    %8537 = vmatprep.subr.mxu0 0.0
    %8538 = vmatpush1.msra.mxu0 0.0
    %8539 = vmatprep.subr.mxu0 0.0
    %8540 = vmatpush1.msra.mxu0 0.0
    %8541 = vmatprep.subr.mxu0 0.0
    %8542 = vmatpush1.msra.mxu0 0.0
    %8543 = vmatprep.subr.mxu0 0.0
    %8544 = vmatpush1.msra.mxu0 0.0
    %8545 = vmatprep.subr.mxu0 0.0
    %8546 = vmatpush1.msra.mxu0 0.0
    %8547 = vmatprep.subr.mxu0 0.0
    %8548 = vmatpush1.msra.mxu0 0.0
    %8549 = vmatprep.subr.mxu0 0.0
    %8550 = vmatpush1.msra.mxu0 0.0
    %8551 = vmatprep.subr.mxu0 0.0
    %8552 = vmatpush1.msra.mxu0 0.0
    %8553 = vmatprep.subr.mxu0 0.0
    %8554 = vmatpush1.msra.mxu0 0.0
    %8555 = vmatprep.subr.mxu0 0.0
    %8556 = vmatpush1.msra.mxu0 0.0
    %8557 = vmatprep.subr.mxu0 0.0
    %8558 = vmatpush1.msra.mxu0 0.0
    %8559 = vmatprep.subr.mxu0 0.0
    %8560 = vmatpush1.msra.mxu0 0.0
    %8561 = vmatprep.subr.mxu0 0.0
    %8562 = vmatpush1.msra.mxu0 0.0
    %8563 = vmatprep.subr.mxu0 0.0
    %8564 = vmatpush1.msra.mxu0 0.0
    %8565 = vmatprep.subr.mxu0 0.0
    %8566 = vmatpush1.msra.mxu0 0.0
    %8567 = vmatprep.subr.mxu0 0.0
    %8568 = vmatpush1.msra.mxu0 0.0
    %8569 = vmatprep.subr.mxu0 0.0
    %8570 = vmatpush1.msra.mxu0 0.0
    %8571 = vmatprep.subr.mxu0 0.0
    %8572 = vmatpush1.msra.mxu0 0.0
    %8573 = vmatprep.subr.mxu0 0.0
    %8574 = vmatpush1.msra.mxu0 0.0
    %8575 = vmatprep.subr.mxu0 0.0
    %8576 = vmatpush1.msra.mxu0 0.0
    %8577 = vmatprep.subr.mxu0 0.0
    %8578 = vmatpush1.msra.mxu0 0.0
    %8579 = vmatprep.mubr.f32.mxu0 0.0
    %8580 = vmatmul.mubr.f32.gmra.mrb[0].mxu0 %v8513
    %v8581 = vpop.f32.mrb[0].mxu0
    %v8582 = vadd.f32 %v8056, %v8581
    %v8583 = vpop.f32.mrb[0].mxu0
    %8584 = vdwg.mxu0
    %v8586 = vrot.slane %v8582, 5
    %v8587 = vrot.slane %v8582, 6
    %v8590 = vadd.f32 %v8506, %v8586
    %v8591 = vadd.f32 %v8507, %v8587
    %v8592 = vxor.u32 %v8590, 2147483648
    %v8593 = vxor.u32 %v8591, 2147483648
    %v8594 = vmul.f32 %v8592, 1.442695
    %v8595 = vpow.pop %v8594
    %v8596 = vmul.f32 %v8593, 1.442695
    %v8597 = vpow.pop %v8596
    %v8598 = vadd.f32 %v8595, 1.0
    %v8599 = vadd.f32 %v8597, 1.0
    %v8600 = vrcp.pop %v8598
    %v8601 = vmul.f32 1.0, %v8600
    %v8602 = vrcp.pop %v8599
    %v8603 = vmul.f32 1.0, %v8602
    %8604 = vrot.lane.b32.xlu0 %v8586, 64
    %v8605 = vpop.permute.xlu0 %8604
    %8606 = vrot.lane.b32.xlu0 %v8587, 64
    %v8607 = vpop.permute.xlu0 %8606
    %v8610 = vmul.f32 %v8601, %v8605
    %v8611 = vmul.f32 %v8603, %v8607
    %8614 = vrot.lane.b32.xlu0 %v8610, 64
    %v8615 = vpop.permute.xlu0 %8614
    %8616 = vrot.lane.b32.xlu0 %v8611, 64
    %v8617 = vpop.permute.xlu0 %8616
    %v8620 = vadd.f32 %v8506, %v8615
    %v8621 = vadd.f32 %v8507, %v8617
    %v8622 = vtanh.pop %v8620
    %v8623 = vtanh.pop %v8621
    %v8624 = vsub.f32 1.0, %v8601
    %v8625 = vsub.f32 1.0, %v8603
    %8628 = vrot.lane.b32.xlu0 %v8622, 96
    %v8629 = vpop.permute.xlu0 %8628
    %8630 = vrot.lane.b32.xlu0 %v8623, 96
    %v8631 = vpop.permute.xlu0 %8630
    %v8634 = vmul.f32 %v8624, %v8629
    %v8635 = vmul.f32 %v8625, %v8631
    %v8636 = vrot.slane %v8492, 7
    %v8637 = vrot.slane %v8493, 7
    %v8640 = vmul.f32 %v8601, %v8636
    %v8641 = vmul.f32 %v8603, %v8637
    %v8642 = vadd.f32 %v8634, %v8640
    %v8643 = vadd.f32 %v8635, %v8641
    %8646 = vrot.lane.b32.xlu0 %v8642, 96
    %v8647 = vpop.permute.xlu0 %8646
    %8648 = vrot.lane.b32.xlu0 %v8643, 96
    %v8649 = vpop.permute.xlu0 %8648
    %8652 = vst.msk [vmem:[#allocation5] sm:$0x8] %vm1250, %v8647
    %8653 = vst.msk [vmem:[#allocation5 + $0x8] sm:$0x8] %vm1250, %v8649
    %v8654 = vrot.slane %v8044, 4
    %v8656 = vadd.f32 %v7960, %v8654
    %v8657 = vadd.f32 %v7965, %v8504
    %v8658 = vrot.slane %v8642, 3
    %v8659 = vrot.slane %v8643, 2
    %v8660 = vsel %vm816, %v8659, %v8658
    %8661 = vrot.lane.b32.xlu0 %v8660, 96
    %v8662 = vpop.permute.xlu0 %8661
    %v8663 = vsel %vm480, %v8662, 0
    %8665 = vmatprep.subr.mxu0 0.0
    %8666 = vmatpush1.msra.mxu0 %v8047
    %8667 = vmatprep.subr.mxu0 0.0
    %8668 = vmatpush1.msra.mxu0 %v8048
    %8669 = vmatprep.subr.mxu0 0.0
    %8670 = vmatpush1.msra.mxu0 %v8049
    %8671 = vmatprep.subr.mxu0 0.0
    %8672 = vmatpush1.msra.mxu0 %v8050
    %8673 = vmatprep.subr.mxu0 0.0
    %8674 = vmatpush1.msra.mxu0 0.0
    %8675 = vmatprep.subr.mxu0 0.0
    %8676 = vmatpush1.msra.mxu0 0.0
    %8677 = vmatprep.subr.mxu0 0.0
    %8678 = vmatpush1.msra.mxu0 0.0
    %8679 = vmatprep.subr.mxu0 0.0
    %8680 = vmatpush1.msra.mxu0 0.0
    %8681 = vmatprep.subr.mxu0 0.0
    %8682 = vmatpush1.msra.mxu0 0.0
    %8683 = vmatprep.subr.mxu0 0.0
    %8684 = vmatpush1.msra.mxu0 0.0
    %8685 = vmatprep.subr.mxu0 0.0
    %8686 = vmatpush1.msra.mxu0 0.0
    %8687 = vmatprep.subr.mxu0 0.0
    %8688 = vmatpush1.msra.mxu0 0.0
    %8689 = vmatprep.subr.mxu0 0.0
    %8690 = vmatpush1.msra.mxu0 0.0
    %8691 = vmatprep.subr.mxu0 0.0
    %8692 = vmatpush1.msra.mxu0 0.0
    %8693 = vmatprep.subr.mxu0 0.0
    %8694 = vmatpush1.msra.mxu0 0.0
    %8695 = vmatprep.subr.mxu0 0.0
    %8696 = vmatpush1.msra.mxu0 0.0
    %8697 = vmatprep.subr.mxu0 0.0
    %8698 = vmatpush1.msra.mxu0 0.0
    %8699 = vmatprep.subr.mxu0 0.0
    %8700 = vmatpush1.msra.mxu0 0.0
    %8701 = vmatprep.subr.mxu0 0.0
    %8702 = vmatpush1.msra.mxu0 0.0
    %8703 = vmatprep.subr.mxu0 0.0
    %8704 = vmatpush1.msra.mxu0 0.0
    %8705 = vmatprep.subr.mxu0 0.0
    %8706 = vmatpush1.msra.mxu0 0.0
    %8707 = vmatprep.subr.mxu0 0.0
    %8708 = vmatpush1.msra.mxu0 0.0
    %8709 = vmatprep.subr.mxu0 0.0
    %8710 = vmatpush1.msra.mxu0 0.0
    %8711 = vmatprep.subr.mxu0 0.0
    %8712 = vmatpush1.msra.mxu0 0.0
    %8713 = vmatprep.subr.mxu0 0.0
    %8714 = vmatpush1.msra.mxu0 0.0
    %8715 = vmatprep.subr.mxu0 0.0
    %8716 = vmatpush1.msra.mxu0 0.0
    %8717 = vmatprep.subr.mxu0 0.0
    %8718 = vmatpush1.msra.mxu0 0.0
    %8719 = vmatprep.subr.mxu0 0.0
    %8720 = vmatpush1.msra.mxu0 0.0
    %8721 = vmatprep.subr.mxu0 0.0
    %8722 = vmatpush1.msra.mxu0 0.0
    %8723 = vmatprep.subr.mxu0 0.0
    %8724 = vmatpush1.msra.mxu0 0.0
    %8725 = vmatprep.subr.mxu0 0.0
    %8726 = vmatpush1.msra.mxu0 0.0
    %8727 = vmatprep.subr.mxu0 0.0
    %8728 = vmatpush1.msra.mxu0 0.0
    %8729 = vmatprep.mubr.f32.mxu0 0.0
    %8730 = vmatmul.mubr.f32.gmra.mrb[0].mxu0 %v8663
    %v8731 = vpop.f32.mrb[0].mxu0
    %v8732 = vadd.f32 %v8056, %v8731
    %v8733 = vpop.f32.mrb[0].mxu0
    %8734 = vdwg.mxu0
    %v8736 = vrot.slane %v8732, 4
    %v8737 = vrot.slane %v8732, 5
    %v8740 = vadd.f32 %v8656, %v8736
    %v8741 = vadd.f32 %v8657, %v8737
    %v8742 = vxor.u32 %v8740, 2147483648
    %v8743 = vxor.u32 %v8741, 2147483648
    %v8744 = vmul.f32 %v8742, 1.442695
    %v8745 = vpow.pop %v8744
    %v8746 = vmul.f32 %v8743, 1.442695
    %v8747 = vpow.pop %v8746
    %v8748 = vadd.f32 %v8745, 1.0
    %v8749 = vadd.f32 %v8747, 1.0
    %v8750 = vrcp.pop %v8748
    %v8751 = vmul.f32 1.0, %v8750
    %v8752 = vrcp.pop %v8749
    %v8753 = vmul.f32 1.0, %v8752
    %8754 = vrot.lane.b32.xlu0 %v8736, 64
    %v8755 = vpop.permute.xlu0 %8754
    %8756 = vrot.lane.b32.xlu0 %v8737, 64
    %v8757 = vpop.permute.xlu0 %8756
    %v8760 = vmul.f32 %v8751, %v8755
    %v8761 = vmul.f32 %v8753, %v8757
    %8764 = vrot.lane.b32.xlu0 %v8760, 64
    %v8765 = vpop.permute.xlu0 %8764
    %8766 = vrot.lane.b32.xlu0 %v8761, 64
    %v8767 = vpop.permute.xlu0 %8766
    %v8770 = vadd.f32 %v8656, %v8765
    %v8771 = vadd.f32 %v8657, %v8767
    %v8772 = vtanh.pop %v8770
    %v8773 = vtanh.pop %v8771
    %v8774 = vsub.f32 1.0, %v8751
    %v8775 = vsub.f32 1.0, %v8753
    %8778 = vrot.lane.b32.xlu0 %v8772, 96
    %v8779 = vpop.permute.xlu0 %8778
    %8780 = vrot.lane.b32.xlu0 %v8773, 96
    %v8781 = vpop.permute.xlu0 %8780
    %v8784 = vmul.f32 %v8774, %v8779
    %v8785 = vmul.f32 %v8775, %v8781
    %v8786 = vrot.slane %v8642, 7
    %v8787 = vrot.slane %v8643, 7
    %v8790 = vmul.f32 %v8751, %v8786
    %v8791 = vmul.f32 %v8753, %v8787
    %v8792 = vadd.f32 %v8784, %v8790
    %v8793 = vadd.f32 %v8785, %v8791
    %8796 = vrot.lane.b32.xlu0 %v8792, 96
    %v8797 = vpop.permute.xlu0 %8796
    %8798 = vrot.lane.b32.xlu0 %v8793, 96
    %v8799 = vpop.permute.xlu0 %8798
    %8802 = vst.msk [vmem:[#allocation5] sm:$0x10] %vm1397, %v8797
    %8803 = vst.msk [vmem:[#allocation5 + $0x8] sm:$0x10] %vm1397, %v8799
    %v8804 = vrot.slane %v8044, 3
    %v8806 = vadd.f32 %v7960, %v8804
    %v8807 = vadd.f32 %v7965, %v8654
    %v8808 = vrot.slane %v8792, 4
    %v8809 = vrot.slane %v8793, 3
    %v8810 = vsel %vm816, %v8809, %v8808
    %8811 = vrot.lane.b32.xlu0 %v8810, 96
    %v8812 = vpop.permute.xlu0 %8811
    %v8813 = vsel %vm480, %v8812, 0
    %8815 = vmatprep.subr.mxu0 0.0
    %8816 = vmatpush1.msra.mxu0 %v8047
    %8817 = vmatprep.subr.mxu0 0.0
    %8818 = vmatpush1.msra.mxu0 %v8048
    %8819 = vmatprep.subr.mxu0 0.0
    %8820 = vmatpush1.msra.mxu0 %v8049
    %8821 = vmatprep.subr.mxu0 0.0
    %8822 = vmatpush1.msra.mxu0 %v8050
    %8823 = vmatprep.subr.mxu0 0.0
    %8824 = vmatpush1.msra.mxu0 0.0
    %8825 = vmatprep.subr.mxu0 0.0
    %8826 = vmatpush1.msra.mxu0 0.0
    %8827 = vmatprep.subr.mxu0 0.0
    %8828 = vmatpush1.msra.mxu0 0.0
    %8829 = vmatprep.subr.mxu0 0.0
    %8830 = vmatpush1.msra.mxu0 0.0
    %8831 = vmatprep.subr.mxu0 0.0
    %8832 = vmatpush1.msra.mxu0 0.0
    %8833 = vmatprep.subr.mxu0 0.0
    %8834 = vmatpush1.msra.mxu0 0.0
    %8835 = vmatprep.subr.mxu0 0.0
    %8836 = vmatpush1.msra.mxu0 0.0
    %8837 = vmatprep.subr.mxu0 0.0
    %8838 = vmatpush1.msra.mxu0 0.0
    %8839 = vmatprep.subr.mxu0 0.0
    %8840 = vmatpush1.msra.mxu0 0.0
    %8841 = vmatprep.subr.mxu0 0.0
    %8842 = vmatpush1.msra.mxu0 0.0
    %8843 = vmatprep.subr.mxu0 0.0
    %8844 = vmatpush1.msra.mxu0 0.0
    %8845 = vmatprep.subr.mxu0 0.0
    %8846 = vmatpush1.msra.mxu0 0.0
    %8847 = vmatprep.subr.mxu0 0.0
    %8848 = vmatpush1.msra.mxu0 0.0
    %8849 = vmatprep.subr.mxu0 0.0
    %8850 = vmatpush1.msra.mxu0 0.0
    %8851 = vmatprep.subr.mxu0 0.0
    %8852 = vmatpush1.msra.mxu0 0.0
    %8853 = vmatprep.subr.mxu0 0.0
    %8854 = vmatpush1.msra.mxu0 0.0
    %8855 = vmatprep.subr.mxu0 0.0
    %8856 = vmatpush1.msra.mxu0 0.0
    %8857 = vmatprep.subr.mxu0 0.0
    %8858 = vmatpush1.msra.mxu0 0.0
    %8859 = vmatprep.subr.mxu0 0.0
    %8860 = vmatpush1.msra.mxu0 0.0
    %8861 = vmatprep.subr.mxu0 0.0
    %8862 = vmatpush1.msra.mxu0 0.0
    %8863 = vmatprep.subr.mxu0 0.0
    %8864 = vmatpush1.msra.mxu0 0.0
    %8865 = vmatprep.subr.mxu0 0.0
    %8866 = vmatpush1.msra.mxu0 0.0
    %8867 = vmatprep.subr.mxu0 0.0
    %8868 = vmatpush1.msra.mxu0 0.0
    %8869 = vmatprep.subr.mxu0 0.0
    %8870 = vmatpush1.msra.mxu0 0.0
    %8871 = vmatprep.subr.mxu0 0.0
    %8872 = vmatpush1.msra.mxu0 0.0
    %8873 = vmatprep.subr.mxu0 0.0
    %8874 = vmatpush1.msra.mxu0 0.0
    %8875 = vmatprep.subr.mxu0 0.0
    %8876 = vmatpush1.msra.mxu0 0.0
    %8877 = vmatprep.subr.mxu0 0.0
    %8878 = vmatpush1.msra.mxu0 0.0
    %8879 = vmatprep.mubr.f32.mxu0 0.0
    %8880 = vmatmul.mubr.f32.gmra.mrb[0].mxu0 %v8813
    %v8881 = vpop.f32.mrb[0].mxu0
    %v8882 = vadd.f32 %v8056, %v8881
    %v8883 = vpop.f32.mrb[0].mxu0
    %8884 = vdwg.mxu0
    %v8886 = vrot.slane %v8882, 3
    %v8887 = vrot.slane %v8882, 4
    %v8890 = vadd.f32 %v8806, %v8886
    %v8891 = vadd.f32 %v8807, %v8887
    %v8892 = vxor.u32 %v8890, 2147483648
    %v8893 = vxor.u32 %v8891, 2147483648
    %v8894 = vmul.f32 %v8892, 1.442695
    %v8895 = vpow.pop %v8894
    %v8896 = vmul.f32 %v8893, 1.442695
    %v8897 = vpow.pop %v8896
    %v8898 = vadd.f32 %v8895, 1.0
    %v8899 = vadd.f32 %v8897, 1.0
    %v8900 = vrcp.pop %v8898
    %v8901 = vmul.f32 1.0, %v8900
    %v8902 = vrcp.pop %v8899
    %v8903 = vmul.f32 1.0, %v8902
    %8904 = vrot.lane.b32.xlu0 %v8886, 64
    %v8905 = vpop.permute.xlu0 %8904
    %8906 = vrot.lane.b32.xlu0 %v8887, 64
    %v8907 = vpop.permute.xlu0 %8906
    %v8910 = vmul.f32 %v8901, %v8905
    %v8911 = vmul.f32 %v8903, %v8907
    %8914 = vrot.lane.b32.xlu0 %v8910, 64
    %v8915 = vpop.permute.xlu0 %8914
    %8916 = vrot.lane.b32.xlu0 %v8911, 64
    %v8917 = vpop.permute.xlu0 %8916
    %v8920 = vadd.f32 %v8806, %v8915
    %v8921 = vadd.f32 %v8807, %v8917
    %v8922 = vtanh.pop %v8920
    %v8923 = vtanh.pop %v8921
    %v8924 = vsub.f32 1.0, %v8901
    %v8925 = vsub.f32 1.0, %v8903
    %8928 = vrot.lane.b32.xlu0 %v8922, 96
    %v8929 = vpop.permute.xlu0 %8928
    %8930 = vrot.lane.b32.xlu0 %v8923, 96
    %v8931 = vpop.permute.xlu0 %8930
    %v8934 = vmul.f32 %v8924, %v8929
    %v8935 = vmul.f32 %v8925, %v8931
    %v8936 = vrot.slane %v8792, 7
    %v8937 = vrot.slane %v8793, 7
    %v8940 = vmul.f32 %v8901, %v8936
    %v8941 = vmul.f32 %v8903, %v8937
    %v8942 = vadd.f32 %v8934, %v8940
    %v8943 = vadd.f32 %v8935, %v8941
    %8946 = vrot.lane.b32.xlu0 %v8942, 96
    %v8947 = vpop.permute.xlu0 %8946
    %8948 = vrot.lane.b32.xlu0 %v8943, 96
    %v8949 = vpop.permute.xlu0 %8948
    %8952 = vst.msk [vmem:[#allocation5] sm:$0x20] %vm1544, %v8947
    %8953 = vst.msk [vmem:[#allocation5 + $0x8] sm:$0x20] %vm1544, %v8949
    %v8954 = vrot.slane %v8044, 2
    %v8956 = vadd.f32 %v7960, %v8954
    %v8957 = vadd.f32 %v7965, %v8804
    %v8958 = vrot.slane %v8942, 5
    %v8959 = vrot.slane %v8943, 4
    %v8960 = vsel %vm816, %v8959, %v8958
    %8961 = vrot.lane.b32.xlu0 %v8960, 96
    %v8962 = vpop.permute.xlu0 %8961
    %v8963 = vsel %vm480, %v8962, 0
    %8965 = vmatprep.subr.mxu0 0.0
    %8966 = vmatpush1.msra.mxu0 %v8047
    %8967 = vmatprep.subr.mxu0 0.0
    %8968 = vmatpush1.msra.mxu0 %v8048
    %8969 = vmatprep.subr.mxu0 0.0
    %8970 = vmatpush1.msra.mxu0 %v8049
    %8971 = vmatprep.subr.mxu0 0.0
    %8972 = vmatpush1.msra.mxu0 %v8050
    %8973 = vmatprep.subr.mxu0 0.0
    %8974 = vmatpush1.msra.mxu0 0.0
    %8975 = vmatprep.subr.mxu0 0.0
    %8976 = vmatpush1.msra.mxu0 0.0
    %8977 = vmatprep.subr.mxu0 0.0
    %8978 = vmatpush1.msra.mxu0 0.0
    %8979 = vmatprep.subr.mxu0 0.0
    %8980 = vmatpush1.msra.mxu0 0.0
    %8981 = vmatprep.subr.mxu0 0.0
    %8982 = vmatpush1.msra.mxu0 0.0
    %8983 = vmatprep.subr.mxu0 0.0
    %8984 = vmatpush1.msra.mxu0 0.0
    %8985 = vmatprep.subr.mxu0 0.0
    %8986 = vmatpush1.msra.mxu0 0.0
    %8987 = vmatprep.subr.mxu0 0.0
    %8988 = vmatpush1.msra.mxu0 0.0
    %8989 = vmatprep.subr.mxu0 0.0
    %8990 = vmatpush1.msra.mxu0 0.0
    %8991 = vmatprep.subr.mxu0 0.0
    %8992 = vmatpush1.msra.mxu0 0.0
    %8993 = vmatprep.subr.mxu0 0.0
    %8994 = vmatpush1.msra.mxu0 0.0
    %8995 = vmatprep.subr.mxu0 0.0
    %8996 = vmatpush1.msra.mxu0 0.0
    %8997 = vmatprep.subr.mxu0 0.0
    %8998 = vmatpush1.msra.mxu0 0.0
    %8999 = vmatprep.subr.mxu0 0.0
    %9000 = vmatpush1.msra.mxu0 0.0
    %9001 = vmatprep.subr.mxu0 0.0
    %9002 = vmatpush1.msra.mxu0 0.0
    %9003 = vmatprep.subr.mxu0 0.0
    %9004 = vmatpush1.msra.mxu0 0.0
    %9005 = vmatprep.subr.mxu0 0.0
    %9006 = vmatpush1.msra.mxu0 0.0
    %9007 = vmatprep.subr.mxu0 0.0
    %9008 = vmatpush1.msra.mxu0 0.0
    %9009 = vmatprep.subr.mxu0 0.0
    %9010 = vmatpush1.msra.mxu0 0.0
    %9011 = vmatprep.subr.mxu0 0.0
    %9012 = vmatpush1.msra.mxu0 0.0
    %9013 = vmatprep.subr.mxu0 0.0
    %9014 = vmatpush1.msra.mxu0 0.0
    %9015 = vmatprep.subr.mxu0 0.0
    %9016 = vmatpush1.msra.mxu0 0.0
    %9017 = vmatprep.subr.mxu0 0.0
    %9018 = vmatpush1.msra.mxu0 0.0
    %9019 = vmatprep.subr.mxu0 0.0
    %9020 = vmatpush1.msra.mxu0 0.0
    %9021 = vmatprep.subr.mxu0 0.0
    %9022 = vmatpush1.msra.mxu0 0.0
    %9023 = vmatprep.subr.mxu0 0.0
    %9024 = vmatpush1.msra.mxu0 0.0
    %9025 = vmatprep.subr.mxu0 0.0
    %9026 = vmatpush1.msra.mxu0 0.0
    %9027 = vmatprep.subr.mxu0 0.0
    %9028 = vmatpush1.msra.mxu0 0.0
    %9029 = vmatprep.mubr.f32.mxu0 0.0
    %9030 = vmatmul.mubr.f32.gmra.mrb[0].mxu0 %v8963
    %v9031 = vpop.f32.mrb[0].mxu0
    %v9032 = vadd.f32 %v8056, %v9031
    %v9033 = vpop.f32.mrb[0].mxu0
    %9034 = vdwg.mxu0
    %v9036 = vrot.slane %v9032, 2
    %v9037 = vrot.slane %v9032, 3
    %v9040 = vadd.f32 %v8956, %v9036
    %v9041 = vadd.f32 %v8957, %v9037
    %v9042 = vxor.u32 %v9040, 2147483648
    %v9043 = vxor.u32 %v9041, 2147483648
    %v9044 = vmul.f32 %v9042, 1.442695
    %v9045 = vpow.pop %v9044
    %v9046 = vmul.f32 %v9043, 1.442695
    %v9047 = vpow.pop %v9046
    %v9048 = vadd.f32 %v9045, 1.0
    %v9049 = vadd.f32 %v9047, 1.0
    %v9050 = vrcp.pop %v9048
    %v9051 = vmul.f32 1.0, %v9050
    %v9052 = vrcp.pop %v9049
    %v9053 = vmul.f32 1.0, %v9052
    %9054 = vrot.lane.b32.xlu0 %v9036, 64
    %v9055 = vpop.permute.xlu0 %9054
    %9056 = vrot.lane.b32.xlu0 %v9037, 64
    %v9057 = vpop.permute.xlu0 %9056
    %v9060 = vmul.f32 %v9051, %v9055
    %v9061 = vmul.f32 %v9053, %v9057
    %9064 = vrot.lane.b32.xlu0 %v9060, 64
    %v9065 = vpop.permute.xlu0 %9064
    %9066 = vrot.lane.b32.xlu0 %v9061, 64
    %v9067 = vpop.permute.xlu0 %9066
    %v9070 = vadd.f32 %v8956, %v9065
    %v9071 = vadd.f32 %v8957, %v9067
    %v9072 = vtanh.pop %v9070
    %v9073 = vtanh.pop %v9071
    %v9074 = vsub.f32 1.0, %v9051
    %v9075 = vsub.f32 1.0, %v9053
    %9078 = vrot.lane.b32.xlu0 %v9072, 96
    %v9079 = vpop.permute.xlu0 %9078
    %9080 = vrot.lane.b32.xlu0 %v9073, 96
    %v9081 = vpop.permute.xlu0 %9080
    %v9084 = vmul.f32 %v9074, %v9079
    %v9085 = vmul.f32 %v9075, %v9081
    %v9086 = vrot.slane %v8942, 7
    %v9087 = vrot.slane %v8943, 7
    %v9090 = vmul.f32 %v9051, %v9086
    %v9091 = vmul.f32 %v9053, %v9087
    %v9092 = vadd.f32 %v9084, %v9090
    %v9093 = vadd.f32 %v9085, %v9091
    %9096 = vrot.lane.b32.xlu0 %v9092, 96
    %v9097 = vpop.permute.xlu0 %9096
    %9098 = vrot.lane.b32.xlu0 %v9093, 96
    %v9099 = vpop.permute.xlu0 %9098
    %9102 = vst.msk [vmem:[#allocation5] sm:$0x40] %vm1691, %v9097
    %9103 = vst.msk [vmem:[#allocation5 + $0x8] sm:$0x40] %vm1691, %v9099
    %v9104 = vadd.f32 %v7960, %v8059
    %v9105 = vadd.f32 %v7965, %v8954
    %v9106 = vrot.slane %v9092, 6
    %v9107 = vrot.slane %v9093, 5
    %v9108 = vsel %vm816, %v9107, %v9106
    %9109 = vrot.lane.b32.xlu0 %v9108, 96
    %v9110 = vpop.permute.xlu0 %9109
    %v9111 = vsel %vm480, %v9110, 0
    %9113 = vmatprep.subr.mxu0 0.0
    %9114 = vmatpush1.msra.mxu0 %v8047
    %9115 = vmatprep.subr.mxu0 0.0
    %9116 = vmatpush1.msra.mxu0 %v8048
    %9117 = vmatprep.subr.mxu0 0.0
    %9118 = vmatpush1.msra.mxu0 %v8049
    %9119 = vmatprep.subr.mxu0 0.0
    %9120 = vmatpush1.msra.mxu0 %v8050
    %9121 = vmatprep.subr.mxu0 0.0
    %9122 = vmatpush1.msra.mxu0 0.0
    %9123 = vmatprep.subr.mxu0 0.0
    %9124 = vmatpush1.msra.mxu0 0.0
    %9125 = vmatprep.subr.mxu0 0.0
    %9126 = vmatpush1.msra.mxu0 0.0
    %9127 = vmatprep.subr.mxu0 0.0
    %9128 = vmatpush1.msra.mxu0 0.0
    %9129 = vmatprep.subr.mxu0 0.0
    %9130 = vmatpush1.msra.mxu0 0.0
    %9131 = vmatprep.subr.mxu0 0.0
    %9132 = vmatpush1.msra.mxu0 0.0
    %9133 = vmatprep.subr.mxu0 0.0
    %9134 = vmatpush1.msra.mxu0 0.0
    %9135 = vmatprep.subr.mxu0 0.0
    %9136 = vmatpush1.msra.mxu0 0.0
    %9137 = vmatprep.subr.mxu0 0.0
    %9138 = vmatpush1.msra.mxu0 0.0
    %9139 = vmatprep.subr.mxu0 0.0
    %9140 = vmatpush1.msra.mxu0 0.0
    %9141 = vmatprep.subr.mxu0 0.0
    %9142 = vmatpush1.msra.mxu0 0.0
    %9143 = vmatprep.subr.mxu0 0.0
    %9144 = vmatpush1.msra.mxu0 0.0
    %9145 = vmatprep.subr.mxu0 0.0
    %9146 = vmatpush1.msra.mxu0 0.0
    %9147 = vmatprep.subr.mxu0 0.0
    %9148 = vmatpush1.msra.mxu0 0.0
    %9149 = vmatprep.subr.mxu0 0.0
    %9150 = vmatpush1.msra.mxu0 0.0
    %9151 = vmatprep.subr.mxu0 0.0
    %9152 = vmatpush1.msra.mxu0 0.0
    %9153 = vmatprep.subr.mxu0 0.0
    %9154 = vmatpush1.msra.mxu0 0.0
    %9155 = vmatprep.subr.mxu0 0.0
    %9156 = vmatpush1.msra.mxu0 0.0
    %9157 = vmatprep.subr.mxu0 0.0
    %9158 = vmatpush1.msra.mxu0 0.0
    %9159 = vmatprep.subr.mxu0 0.0
    %9160 = vmatpush1.msra.mxu0 0.0
    %9161 = vmatprep.subr.mxu0 0.0
    %9162 = vmatpush1.msra.mxu0 0.0
    %9163 = vmatprep.subr.mxu0 0.0
    %9164 = vmatpush1.msra.mxu0 0.0
    %9165 = vmatprep.subr.mxu0 0.0
    %9166 = vmatpush1.msra.mxu0 0.0
    %9167 = vmatprep.subr.mxu0 0.0
    %9168 = vmatpush1.msra.mxu0 0.0
    %9169 = vmatprep.subr.mxu0 0.0
    %9170 = vmatpush1.msra.mxu0 0.0
    %9171 = vmatprep.subr.mxu0 0.0
    %9172 = vmatpush1.msra.mxu0 0.0
    %9173 = vmatprep.subr.mxu0 0.0
    %9174 = vmatpush1.msra.mxu0 0.0
    %9175 = vmatprep.subr.mxu0 0.0
    %9176 = vmatpush1.msra.mxu0 0.0
    %9177 = vmatprep.mubr.f32.mxu0 0.0
    %9178 = vmatmul.mubr.f32.gmra.mrb[0].mxu0 %v9111
    %v9179 = vpop.f32.mrb[0].mxu0
    %v9180 = vadd.f32 %v8056, %v9179
    %v9181 = vpop.f32.mrb[0].mxu0
    %9182 = vdwg.mxu0
    %v9184 = vrot.slane %v9180, 1
    %v9185 = vrot.slane %v9180, 2
    %v9188 = vadd.f32 %v9104, %v9184
    %v9189 = vadd.f32 %v9105, %v9185
    %v9190 = vxor.u32 %v9188, 2147483648
    %v9191 = vxor.u32 %v9189, 2147483648
    %v9192 = vmul.f32 %v9190, 1.442695
    %v9193 = vpow.pop %v9192
    %v9194 = vmul.f32 %v9191, 1.442695
    %v9195 = vpow.pop %v9194
    %v9196 = vadd.f32 %v9193, 1.0
    %v9197 = vadd.f32 %v9195, 1.0
    %v9198 = vrcp.pop %v9196
    %v9199 = vmul.f32 1.0, %v9198
    %v9200 = vrcp.pop %v9197
    %v9201 = vmul.f32 1.0, %v9200
    %9202 = vrot.lane.b32.xlu0 %v9184, 64
    %v9203 = vpop.permute.xlu0 %9202
    %9204 = vrot.lane.b32.xlu0 %v9185, 64
    %v9205 = vpop.permute.xlu0 %9204
    %v9208 = vmul.f32 %v9199, %v9203
    %v9209 = vmul.f32 %v9201, %v9205
    %9212 = vrot.lane.b32.xlu0 %v9208, 64
    %v9213 = vpop.permute.xlu0 %9212
    %9214 = vrot.lane.b32.xlu0 %v9209, 64
    %v9215 = vpop.permute.xlu0 %9214
    %v9218 = vadd.f32 %v9104, %v9213
    %v9219 = vadd.f32 %v9105, %v9215
    %v9220 = vtanh.pop %v9218
    %v9221 = vtanh.pop %v9219
    %v9222 = vsub.f32 1.0, %v9199
    %v9223 = vsub.f32 1.0, %v9201
    %9226 = vrot.lane.b32.xlu0 %v9220, 96
    %v9227 = vpop.permute.xlu0 %9226
    %9228 = vrot.lane.b32.xlu0 %v9221, 96
    %v9229 = vpop.permute.xlu0 %9228
    %v9232 = vmul.f32 %v9222, %v9227
    %v9233 = vmul.f32 %v9223, %v9229
    %v9234 = vrot.slane %v9092, 7
    %v9235 = vrot.slane %v9093, 7
    %v9238 = vmul.f32 %v9199, %v9234
    %v9239 = vmul.f32 %v9201, %v9235
    %v9240 = vadd.f32 %v9232, %v9238
    %v9241 = vadd.f32 %v9233, %v9239
    %9244 = vrot.lane.b32.xlu0 %v9240, 96
    %v9245 = vpop.permute.xlu0 %9244
    %9246 = vrot.lane.b32.xlu0 %v9241, 96
    %v9247 = vpop.permute.xlu0 %9246
    %9250 = vst.msk [vmem:[#allocation5] sm:$0x80] %vm1838, %v9245
    %9251 = vst.msk [vmem:[#allocation5 + $0x8] sm:$0x80] %vm1838, %v9247
    %v9252 = vld [vmem:[#allocation5] sm:$0xff]
    %v9253 = vld [vmem:[#allocation5 + $0x8] sm:$0xff]
    %v9254 = vld [vmem:[%s75] sm:$0xff]
    %v9255 = vld [vmem:[%s75 + $0x8] sm:$0xff]
    %v9256 = vld [vmem:[%s75 + $0x10] sm:$0xff]
    %v9257 = vld [vmem:[%s75 + $0x18] sm:$0xff]
    %v9259 = vsel %vm480, %v9252, 0
    %v9262 = vsel %vm480, %v9253, 0
    %9264 = vmatprep.subr.mxu0 0.0
    %9265 = vmatpush1.msra.mxu0 %v9254
    %9266 = vmatprep.subr.mxu0 0.0
    %9267 = vmatpush1.msra.mxu0 %v9255
    %9268 = vmatprep.subr.mxu0 0.0
    %9269 = vmatpush1.msra.mxu0 %v9256
    %9270 = vmatprep.subr.mxu0 0.0
    %9271 = vmatpush1.msra.mxu0 %v9257
    %9272 = vmatprep.subr.mxu0 0.0
    %9273 = vmatpush1.msra.mxu0 0.0
    %9274 = vmatprep.subr.mxu0 0.0
    %9275 = vmatpush1.msra.mxu0 0.0
    %9276 = vmatprep.subr.mxu0 0.0
    %9277 = vmatpush1.msra.mxu0 0.0
    %9278 = vmatprep.subr.mxu0 0.0
    %9279 = vmatpush1.msra.mxu0 0.0
    %9280 = vmatprep.subr.mxu0 0.0
    %9281 = vmatpush1.msra.mxu0 0.0
    %9282 = vmatprep.subr.mxu0 0.0
    %9283 = vmatpush1.msra.mxu0 0.0
    %9284 = vmatprep.subr.mxu0 0.0
    %9285 = vmatpush1.msra.mxu0 0.0
    %9286 = vmatprep.subr.mxu0 0.0
    %9287 = vmatpush1.msra.mxu0 0.0
    %9288 = vmatprep.subr.mxu0 0.0
    %9289 = vmatpush1.msra.mxu0 0.0
    %9290 = vmatprep.subr.mxu0 0.0
    %9291 = vmatpush1.msra.mxu0 0.0
    %9292 = vmatprep.subr.mxu0 0.0
    %9293 = vmatpush1.msra.mxu0 0.0
    %9294 = vmatprep.subr.mxu0 0.0
    %9295 = vmatpush1.msra.mxu0 0.0
    %9296 = vmatprep.subr.mxu0 0.0
    %9297 = vmatpush1.msra.mxu0 0.0
    %9298 = vmatprep.subr.mxu0 0.0
    %9299 = vmatpush1.msra.mxu0 0.0
    %9300 = vmatprep.subr.mxu0 0.0
    %9301 = vmatpush1.msra.mxu0 0.0
    %9302 = vmatprep.subr.mxu0 0.0
    %9303 = vmatpush1.msra.mxu0 0.0
    %9304 = vmatprep.subr.mxu0 0.0
    %9305 = vmatpush1.msra.mxu0 0.0
    %9306 = vmatprep.subr.mxu0 0.0
    %9307 = vmatpush1.msra.mxu0 0.0
    %9308 = vmatprep.subr.mxu0 0.0
    %9309 = vmatpush1.msra.mxu0 0.0
    %9310 = vmatprep.subr.mxu0 0.0
    %9311 = vmatpush1.msra.mxu0 0.0
    %9312 = vmatprep.subr.mxu0 0.0
    %9313 = vmatpush1.msra.mxu0 0.0
    %9314 = vmatprep.subr.mxu0 0.0
    %9315 = vmatpush1.msra.mxu0 0.0
    %9316 = vmatprep.subr.mxu0 0.0
    %9317 = vmatpush1.msra.mxu0 0.0
    %9318 = vmatprep.subr.mxu0 0.0
    %9319 = vmatpush1.msra.mxu0 0.0
    %9320 = vmatprep.subr.mxu0 0.0
    %9321 = vmatpush1.msra.mxu0 0.0
    %9322 = vmatprep.subr.mxu0 0.0
    %9323 = vmatpush1.msra.mxu0 0.0
    %9324 = vmatprep.subr.mxu0 0.0
    %9325 = vmatpush1.msra.mxu0 0.0
    %9326 = vmatprep.subr.mxu0 0.0
    %9327 = vmatpush1.msra.mxu0 0.0
    %9328 = vmatprep.mubr.f32.mxu0 0.0
    %9329 = vmatmul.mubr.f32.gmra.mrb[0].mxu0 %v9259
    %v9330 = vpop.f32.mrb[0].mxu0
    %v9331 = vadd.f32 0.0, %v9330
    %v9332 = vpop.f32.mrb[0].mxu0
    %9333 = vmatprep.mubr.f32.mxu0 0.0
    %9334 = vmatmul.mubr.f32.gmra.mrb[0].mxu0 %v9262
    %v9335 = vpop.f32.mrb[0].mxu0
    %v9336 = vadd.f32 0.0, %v9335
    %v9337 = vpop.f32.mrb[0].mxu0
    %9338 = vdwg.mxu0
    %9339 = vst.msk [vmem:[#allocation13] sm:$0xff] %vm3019, %v9331
    %9340 = vst.msk [vmem:[#allocation13 + $0x8] sm:$0xff] %vm3019, %v9336
    %v9341 = vld [vmem:[%s77] sm:$0xff]
    %v9342 = vld [vmem:[%s77 + $0x8] sm:$0xff]
    %v9343 = vld [vmem:[#allocation9] sm:$0x1]
    %v9345 = vlaneseq
    %v9346 = vshrl.u32 %v9345, 7
    %v9347 = vsub.s32 0, %v9346
    %v9348 = vrot.slane %v9343, %v9347
    %9350 = vmatprep.subr.mxu0 0.0
    %9351 = vmatpush1.msra.mxu0 %v9341
    %9352 = vmatprep.subr.mxu0 0.0
    %9353 = vmatpush1.msra.mxu0 %v9342
    %9354 = vmatprep.subr.mxu0 0.0
    %9355 = vmatpush1.msra.mxu0 0.0
    %9356 = vmatprep.subr.mxu0 0.0
    %9357 = vmatpush1.msra.mxu0 0.0
    %9358 = vmatprep.subr.mxu0 0.0
    %9359 = vmatpush1.msra.mxu0 0.0
    %9360 = vmatprep.subr.mxu0 0.0
    %9361 = vmatpush1.msra.mxu0 0.0
    %9362 = vmatprep.subr.mxu0 0.0
    %9363 = vmatpush1.msra.mxu0 0.0
    %9364 = vmatprep.subr.mxu0 0.0
    %9365 = vmatpush1.msra.mxu0 0.0
    %9366 = vmatprep.subr.mxu0 0.0
    %9367 = vmatpush1.msra.mxu0 0.0
    %9368 = vmatprep.subr.mxu0 0.0
    %9369 = vmatpush1.msra.mxu0 0.0
    %9370 = vmatprep.subr.mxu0 0.0
    %9371 = vmatpush1.msra.mxu0 0.0
    %9372 = vmatprep.subr.mxu0 0.0
    %9373 = vmatpush1.msra.mxu0 0.0
    %9374 = vmatprep.subr.mxu0 0.0
    %9375 = vmatpush1.msra.mxu0 0.0
    %9376 = vmatprep.subr.mxu0 0.0
    %9377 = vmatpush1.msra.mxu0 0.0
    %9378 = vmatprep.subr.mxu0 0.0
    %9379 = vmatpush1.msra.mxu0 0.0
    %9380 = vmatprep.subr.mxu0 0.0
    %9381 = vmatpush1.msra.mxu0 0.0
    %9382 = vmatprep.subr.mxu0 0.0
    %9383 = vmatpush1.msra.mxu0 0.0
    %9384 = vmatprep.subr.mxu0 0.0
    %9385 = vmatpush1.msra.mxu0 0.0
    %9386 = vmatprep.subr.mxu0 0.0
    %9387 = vmatpush1.msra.mxu0 0.0
    %9388 = vmatprep.subr.mxu0 0.0
    %9389 = vmatpush1.msra.mxu0 0.0
    %9390 = vmatprep.subr.mxu0 0.0
    %9391 = vmatpush1.msra.mxu0 0.0
    %9392 = vmatprep.subr.mxu0 0.0
    %9393 = vmatpush1.msra.mxu0 0.0
    %9394 = vmatprep.subr.mxu0 0.0
    %9395 = vmatpush1.msra.mxu0 0.0
    %9396 = vmatprep.subr.mxu0 0.0
    %9397 = vmatpush1.msra.mxu0 0.0
    %9398 = vmatprep.subr.mxu0 0.0
    %9399 = vmatpush1.msra.mxu0 0.0
    %9400 = vmatprep.subr.mxu0 0.0
    %9401 = vmatpush1.msra.mxu0 0.0
    %9402 = vmatprep.subr.mxu0 0.0
    %9403 = vmatpush1.msra.mxu0 0.0
    %9404 = vmatprep.subr.mxu0 0.0
    %9405 = vmatpush1.msra.mxu0 0.0
    %9406 = vmatprep.subr.mxu0 0.0
    %9407 = vmatpush1.msra.mxu0 0.0
    %9408 = vmatprep.subr.mxu0 0.0
    %9409 = vmatpush1.msra.mxu0 0.0
    %9410 = vmatprep.subr.mxu0 0.0
    %9411 = vmatpush1.msra.mxu0 0.0
    %9412 = vmatprep.subr.mxu0 0.0
    %9413 = vmatpush1.msra.mxu0 0.0
    %9414 = vmatprep.mubr.f32.mxu0 0.0
    %9415 = vmatmul.mubr.f32.gmra.mrb[0].mxu0 %v236
    %v9416 = vpop.f32.mrb[0].mxu0
    %v9417 = vadd.f32 %v9348, %v9416
    %v9418 = vpop.f32.mrb[0].mxu0
    %9419 = vdwg.mxu0
    %vm9420 = vcmask 517120
    %9421 = vst.msk [vmem:[#allocation15] sm:$0x3] %vm9420, %v9417
    %v9422 = vld [vmem:[%s81] sm:$0xff]
    %v9423 = vld [vmem:[%s81 + $0x8] sm:$0xff]
    %v9424 = vld [vmem:[#allocation11] sm:$0x1]
    %v9426 = vlaneseq
    %v9427 = vshrl.u32 %v9426, 7
    %v9428 = vsub.s32 0, %v9427
    %v9429 = vrot.slane %v9424, %v9428
    %9431 = vmatprep.subr.mxu0 0.0
    %9432 = vmatpush1.msra.mxu0 %v9422
    %9433 = vmatprep.subr.mxu0 0.0
    %9434 = vmatpush1.msra.mxu0 %v9423
    %9435 = vmatprep.subr.mxu0 0.0
    %9436 = vmatpush1.msra.mxu0 0.0
    %9437 = vmatprep.subr.mxu0 0.0
    %9438 = vmatpush1.msra.mxu0 0.0
    %9439 = vmatprep.subr.mxu0 0.0
    %9440 = vmatpush1.msra.mxu0 0.0
    %9441 = vmatprep.subr.mxu0 0.0
    %9442 = vmatpush1.msra.mxu0 0.0
    %9443 = vmatprep.subr.mxu0 0.0
    %9444 = vmatpush1.msra.mxu0 0.0
    %9445 = vmatprep.subr.mxu0 0.0
    %9446 = vmatpush1.msra.mxu0 0.0
    %9447 = vmatprep.subr.mxu0 0.0
    %9448 = vmatpush1.msra.mxu0 0.0
    %9449 = vmatprep.subr.mxu0 0.0
    %9450 = vmatpush1.msra.mxu0 0.0
    %9451 = vmatprep.subr.mxu0 0.0
    %9452 = vmatpush1.msra.mxu0 0.0
    %9453 = vmatprep.subr.mxu0 0.0
    %9454 = vmatpush1.msra.mxu0 0.0
    %9455 = vmatprep.subr.mxu0 0.0
    %9456 = vmatpush1.msra.mxu0 0.0
    %9457 = vmatprep.subr.mxu0 0.0
    %9458 = vmatpush1.msra.mxu0 0.0
    %9459 = vmatprep.subr.mxu0 0.0
    %9460 = vmatpush1.msra.mxu0 0.0
    %9461 = vmatprep.subr.mxu0 0.0
    %9462 = vmatpush1.msra.mxu0 0.0
    %9463 = vmatprep.subr.mxu0 0.0
    %9464 = vmatpush1.msra.mxu0 0.0
    %9465 = vmatprep.subr.mxu0 0.0
    %9466 = vmatpush1.msra.mxu0 0.0
    %9467 = vmatprep.subr.mxu0 0.0
    %9468 = vmatpush1.msra.mxu0 0.0
    %9469 = vmatprep.subr.mxu0 0.0
    %9470 = vmatpush1.msra.mxu0 0.0
    %9471 = vmatprep.subr.mxu0 0.0
    %9472 = vmatpush1.msra.mxu0 0.0
    %9473 = vmatprep.subr.mxu0 0.0
    %9474 = vmatpush1.msra.mxu0 0.0
    %9475 = vmatprep.subr.mxu0 0.0
    %9476 = vmatpush1.msra.mxu0 0.0
    %9477 = vmatprep.subr.mxu0 0.0
    %9478 = vmatpush1.msra.mxu0 0.0
    %9479 = vmatprep.subr.mxu0 0.0
    %9480 = vmatpush1.msra.mxu0 0.0
    %9481 = vmatprep.subr.mxu0 0.0
    %9482 = vmatpush1.msra.mxu0 0.0
    %9483 = vmatprep.subr.mxu0 0.0
    %9484 = vmatpush1.msra.mxu0 0.0
    %9485 = vmatprep.subr.mxu0 0.0
    %9486 = vmatpush1.msra.mxu0 0.0
    %9487 = vmatprep.subr.mxu0 0.0
    %9488 = vmatpush1.msra.mxu0 0.0
    %9489 = vmatprep.subr.mxu0 0.0
    %9490 = vmatpush1.msra.mxu0 0.0
    %9491 = vmatprep.subr.mxu0 0.0
    %9492 = vmatpush1.msra.mxu0 0.0
    %9493 = vmatprep.subr.mxu0 0.0
    %9494 = vmatpush1.msra.mxu0 0.0
    %9495 = vmatprep.mubr.f32.mxu0 0.0
    %9496 = vmatmul.mubr.f32.gmra.mrb[0].mxu0 %v236
    %v9497 = vpop.f32.mrb[0].mxu0
    %v9498 = vadd.f32 %v9429, %v9497
    %v9499 = vpop.f32.mrb[0].mxu0
    %9500 = vdwg.mxu0
    %9501 = vst.msk [vmem:[#allocation16] sm:$0x3] %vm9420, %v9498
    // Predicated region
    $region182: #{aevnmt_forward.1} parent=1 // pred_check
      _
    $region183: #{aevnmt_forward.1} parent=1 // pred_check_branch
      %9503 = sbr.rel (0) target = $region185
    $region184: #{aevnmt_forward.1} parent=1 // pred_region
      %s9505 = ssub.s32 256, 256
      %9506 = vsyncadd [#allocation8], %s9505
      %s9507 = sshll.u32 [#allocation12], 4
      %s9508 = int_to_ptr.vmem [resolvable:$true] %s9507
      %9513 = dma.vmem_to_hbm [thread:$0]  %s9508, 256, %s85, [#allocation8], 128, 128, 8
    $region185: #{aevnmt_forward.1} parent=1 // pred_fallthru
      _
    // Predicated region
    $region186: #{aevnmt_forward.1} parent=1 // pred_check
      _
    $region187: #{aevnmt_forward.1} parent=1 // pred_check_branch
      %9515 = sbr.rel (0) target = $region189
    $region188: #{aevnmt_forward.1} parent=1 // pred_region
      %s9517 = ssub.s32 256, 256
      %9518 = vsyncadd [#allocation14], %s9517
      %s9519 = sshll.u32 [#allocation13], 4
      %s9520 = int_to_ptr.vmem [resolvable:$true] %s9519
      %9525 = dma.vmem_to_hbm [thread:$0]  %s9520, 256, %s87, [#allocation14], 128, 128, 8
    $region189: #{aevnmt_forward.1} parent=1 // pred_fallthru
      _
    // Predicated region
    $region190: #{aevnmt_forward.1} parent=1 // pred_check
      _
    $region191: #{aevnmt_forward.1} parent=1 // pred_check_branch
      %9527 = sbr.rel (0) target = $region193
    $region192: #{aevnmt_forward.1} parent=1 // pred_region
      %s9529 = ssub.s32 32, 32
      %9530 = vsyncadd [#allocation14], %s9529
      %s9532 = sshll.u32 [#allocation15], 4
      %s9533 = int_to_ptr.vmem [resolvable:$true] %s9532
      %9535 = dma.vmem_to_hbm [thread:$0]  %s9533, 32, %s89, [#allocation14]
    $region193: #{aevnmt_forward.1} parent=1 // pred_fallthru
      _
    // Predicated region
    $region194: #{aevnmt_forward.1} parent=1 // pred_check
      _
    $region195: #{aevnmt_forward.1} parent=1 // pred_check_branch
      %9537 = sbr.rel (0) target = $region197
    $region196: #{aevnmt_forward.1} parent=1 // pred_region
      %s9539 = ssub.s32 32, 32
      %9540 = vsyncadd [#allocation17], %s9539
      %s9542 = sshll.u32 [#allocation16], 4
      %s9543 = int_to_ptr.vmem [resolvable:$true] %s9542
      %9545 = dma.vmem_to_hbm [thread:$0]  %s9543, 32, %s91, [#allocation17]
    $region197: #{aevnmt_forward.1} parent=1 // pred_fallthru
      _
    // Predicated region
    $region198: #{aevnmt_forward.1} parent=1 // pred_check
      _
    $region199: #{aevnmt_forward.1} parent=1 // pred_check_branch
      %9547 = sbr.rel (0) target = $region201
    $region200: #{aevnmt_forward.1} parent=1 // pred_region
      %9548 = dma.done [#allocation8], 256
    $region201: #{aevnmt_forward.1} parent=1 // pred_fallthru
      _
    // Predicated region
    $region202: #{aevnmt_forward.1} parent=1 // pred_check
      _
    $region203: #{aevnmt_forward.1} parent=1 // pred_check_branch
      %9550 = sbr.rel (0) target = $region205
    $region204: #{aevnmt_forward.1} parent=1 // pred_region
      %9551 = dma.done [#allocation14], 256
    $region205: #{aevnmt_forward.1} parent=1 // pred_fallthru
      _
    // Predicated region
    $region206: #{aevnmt_forward.1} parent=1 // pred_check
      _
    $region207: #{aevnmt_forward.1} parent=1 // pred_check_branch
      %9553 = sbr.rel (0) target = $region209
    $region208: #{aevnmt_forward.1} parent=1 // pred_region
      %9554 = dma.done [#allocation14], 32
    $region209: #{aevnmt_forward.1} parent=1 // pred_fallthru
      _
    // Predicated region
    $region210: #{aevnmt_forward.1} parent=1 // pred_check
      _
    $region211: #{aevnmt_forward.1} parent=1 // pred_check_branch
      %9556 = sbr.rel (0) target = $region213
    $region212: #{aevnmt_forward.1} parent=1 // pred_region
      %9557 = dma.done [#allocation17], 32
    $region213: #{aevnmt_forward.1} parent=1 // pred_fallthru
      _
    %9558 = vsyncpa [#allocation7], 1
    %9559 = vsyncpa [#allocation10], 1
    %9560 = vsyncpa [#allocation8], 1
    %9561 = vsyncpa [#allocation14], 1
    %9562 = vsyncpa [#allocation17], 1

</llo_original>
